<compile_context>
chip_gen: v6e
topology: v6e:2x2x1
jax: 0.10.0
libtpu: 0.0.40
codegen_flags: <defaults>
</compile_context>

<pallas_src>
import jax
import jax.numpy as jnp
from jax.experimental import pallas as pl
from jax.experimental.pallas import tpu as pltpu

# ----------------------------- config (small) -------------------------------
VOCAB      = 64
EMB_DIM    = 32
CONV_HID   = 32                     # each conv branch; sentence vec = 3*CONV_HID
LSTM_HID   = 32
LSTM_LAYER = 1
BIDIR      = True
N_HOP      = 1
DROPOUT    = 0.0                    # p=0 -> identity

B   = 2                             # reports in batch
N_S = 8                             # sentences per report (sent_nums == N_S)
N_W = 16                            # words per sentence
N_T = 3                             # number of target sentences

SENT_DIM = 3 * CONV_HID             # 96
ENC_DIM  = LSTM_HID * (2 if BIDIR else 1)   # 64
KSIZES   = (3, 4, 5)

HIGH = jax.lax.Precision.HIGHEST


# =============================================================================
# Fused kernel: conv encoder -> bi-LSTM -> pointer LSTM -> attention scores
# =============================================================================
def _ptr_extract_kernel(
        tgt_ref,                                      # SMEM [B, N_T] int32
        emb_ref,                                      # VMEM [B*N_S, N_W, E]
        convw_ref, convb_ref,                         # [E, 12*CH], [1, 3*CH]
        awih_ref, awhh_ref, ab_ref, ah0_ref, ac0_ref,  # article bi-LSTM (packed)
        featw_ref,                                    # [ENC, 2*H] (attn_wm | hop_wm)
        pinit_ref, pwih_ref, pwhh_ref, pb_ref, ph0_ref, pc0_ref,  # pointer LSTM
        hop_wq_ref, hop_v_ref, attn_wq_ref, attn_v_ref,
        out_ref):                                     # [B, N_T+1, N_S]
    Bb, Nt = tgt_ref.shape
    S, W, E = emb_ref.shape
    Ns = S // Bb
    H = LSTM_HID
    CH = CONV_HID
    Tp = Nt + 1

    # ---- 1) ConvSentEncoder: one lane-dense [S*W,E] x [E,12*CH] matmul --------
    emb2d = emb_ref[...].reshape(S * W, E)
    taps = jnp.dot(emb2d, convw_ref[...],
                   preferred_element_type=jnp.float32).reshape(S, W, 12 * CH)
    bias = convb_ref[...]                             # [1, 3*CH]
    pooled = []
    tap0 = 0
    for bi, k in enumerate(KSIZES):
        L = W - k + 1
        acc = taps[:, 0:L, tap0 * CH:(tap0 + 1) * CH]
        for j in range(1, k):                         # static shift-add over taps
            acc = acc + taps[:, j:j + L, (tap0 + j) * CH:(tap0 + j + 1) * CH]
        act = jnp.maximum(acc + bias[:, bi * CH:(bi + 1) * CH], 0.0)
        pooled.append(jnp.max(act, axis=1))           # max-over-time -> [S, CH]
        tap0 += k
    enc_sent = jnp.concatenate(pooled, axis=1)        # [S, 3*CH]

    # ---- 2) bidirectional article LSTM (fwd+bwd fused, x@Wih hoisted) ---------
    gx = jnp.dot(enc_sent, awih_ref[...],
                 preferred_element_type=jnp.float32).reshape(Bb, Ns, 8 * H)
    awhh = awhh_ref[...]                              # [2H, 8H] block-diagonal
    ab = ab_ref[...]                                  # [1, 8H]
    h_cat = jnp.broadcast_to(ah0_ref[...], (Bb, 2 * H))   # [h_f | h_b]
    c_cat = jnp.broadcast_to(ac0_ref[...], (Bb, 2 * H))
    hf = [None] * Ns
    hb = [None] * Ns
    for t in range(Ns):                               # fully unrolled recurrence
        g_x = jnp.concatenate(
            [gx[:, t, 0:4 * H], gx[:, Ns - 1 - t, 4 * H:8 * H]], axis=1)
        gates = g_x + jnp.dot(h_cat, awhh, preferred_element_type=jnp.float32) + ab
        sg = jax.nn.sigmoid(gates)                    # full-width EUP pass
        th = jnp.tanh(gates)
        i_g = jnp.concatenate([sg[:, 0 * H:1 * H], sg[:, 4 * H:5 * H]], axis=1)
        f_g = jnp.concatenate([sg[:, 1 * H:2 * H], sg[:, 5 * H:6 * H]], axis=1)
        g_g = jnp.concatenate([th[:, 2 * H:3 * H], th[:, 6 * H:7 * H]], axis=1)
        o_g = jnp.concatenate([sg[:, 3 * H:4 * H], sg[:, 7 * H:8 * H]], axis=1)
        c_cat = f_g * c_cat + i_g * g_g
        h_cat = o_g * jnp.tanh(c_cat)
        hf[t] = h_cat[:, 0:H]                         # fwd hidden for sentence t
        hb[Ns - 1 - t] = h_cat[:, H:2 * H]            # bwd hidden for sentence Ns-1-t
    enc_out = jnp.stack(
        [jnp.concatenate([hf[s], hb[s]], axis=1) for s in range(Ns)], axis=1)
    enc2d = enc_out.reshape(S, 2 * H)                 # [B*Ns, ENC_DIM]

    # ---- 3) pointer-net feature projections (attn_wm | hop_wm fused) ----------
    feat = jnp.dot(enc2d, featw_ref[...], preferred_element_type=jnp.float32)
    attn_feat = feat[:, 0:H].reshape(Bb, Ns, H)
    hop_feat = feat[:, H:2 * H].reshape(Bb, Ns, H)

    # ---- 4) gather target sentence encodings: one-hot matmul on the MXU -------
    iota_n = jax.lax.broadcasted_iota(jnp.int32, (1, Ns), 1)
    rows = [jnp.broadcast_to(pinit_ref[...], (Bb, 2 * H))]       # t = 0 : init_i
    gathered = []
    for b in range(Bb):
        oh = jnp.concatenate(
            [(iota_n == tgt_ref[b, t]).astype(jnp.float32) for t in range(Nt)],
            axis=0)                                              # [Nt, Ns]
        gathered.append(jnp.dot(oh, enc_out[b], preferred_element_type=jnp.float32))
    for t in range(Nt):
        rows.append(jnp.concatenate(
            [gathered[b][t:t + 1, :] for b in range(Bb)], axis=0))
    ptr_x = jnp.concatenate(rows, axis=0)             # [(Nt+1)*B, ENC_DIM] time-major

    # ---- 5) pointer LSTM (x@Wih hoisted, unrolled) ----------------------------
    gxp = jnp.dot(ptr_x, pwih_ref[...],
                  preferred_element_type=jnp.float32).reshape(Tp, Bb, 4 * H)
    pwhh = pwhh_ref[...]
    pb = pb_ref[...]
    h = jnp.broadcast_to(ph0_ref[...], (Bb, H))
    c = jnp.broadcast_to(pc0_ref[...], (Bb, H))
    q_steps = []
    for t in range(Tp):
        gates = gxp[t] + jnp.dot(h, pwhh, preferred_element_type=jnp.float32) + pb
        sg = jax.nn.sigmoid(gates)
        th = jnp.tanh(gates)
        c = sg[:, H:2 * H] * c + sg[:, 0:H] * th[:, 2 * H:3 * H]
        h = sg[:, 3 * H:4 * H] * jnp.tanh(c)
        q_steps.append(h)
    query = jnp.stack(q_steps, axis=1)                # [B, Tp, H]

    # ---- 6) n_hop glimpse attention + final unnormalized scores ---------------
    def attn_scores(feat_bnh, q_bth, wq_ref, v_ref):
        qw = jnp.dot(q_bth.reshape(Bb * Tp, H), wq_ref[...],
                     preferred_element_type=jnp.float32).reshape(Bb, Tp, H)
        s = jnp.tanh(feat_bnh[:, None, :, :] + qw[:, :, None, :])     # [B,Tp,Ns,H]
        return jnp.sum(s * v_ref[...].reshape(1, 1, 1, H), axis=-1)   # [B,Tp,Ns]

    for _ in range(N_HOP):
        sc = attn_scores(hop_feat, query, hop_wq_ref, hop_v_ref)
        sc = sc - jnp.max(sc, axis=-1, keepdims=True)
        e = jnp.exp(sc)
        norm = e / jnp.sum(e, axis=-1, keepdims=True)   # softmax (full memory, no mask)
        query = jax.lax.dot_general(norm, hop_feat, (((2,), (1,)), ((0,), (0,))),
                                    preferred_element_type=jnp.float32)
    out_ref[...] = attn_scores(attn_feat, query, attn_wq_ref, attn_v_ref)


# =============================================================================
# Wrapper: embedding gather + parameter packing + single pallas_call
# =============================================================================
def ptr_extract_summ_forward(params, article_ids, target):
    Bb, Ns, Nw = article_ids.shape
    H = LSTM_HID
    # embedding row gather (padding_idx=0 row is zero); dropout p=0.0 -> identity
    emb_g = params['emb'][article_ids.reshape(Bb * Ns, Nw)]          # [B*Ns, Nw, E]

    # --- pack parameters into lane-dense slabs (layout glue, outside kernel) ---
    conv_w_cat = jnp.concatenate(
        [params['conv_w3'][j] for j in range(3)]
        + [params['conv_w4'][j] for j in range(4)]
        + [params['conv_w5'][j] for j in range(5)], axis=1)          # [E, 12*CH]
    conv_b_cat = jnp.concatenate(
        [params['conv_b3'], params['conv_b4'], params['conv_b5']], axis=1)

    art_wih_cat = jnp.concatenate([params['art_wih_f'], params['art_wih_b']], axis=1)
    art_whh_blk = jnp.zeros((2 * H, 8 * H), jnp.float32)
    art_whh_blk = art_whh_blk.at[0:H, 0:4 * H].set(params['art_whh_f'])
    art_whh_blk = art_whh_blk.at[H:2 * H, 4 * H:8 * H].set(params['art_whh_b'])
    art_b_cat = jnp.concatenate([params['art_b_f'], params['art_b_b']], axis=1)
    art_h0 = params['art_init_h'].reshape(1, 2 * H)
    art_c0 = params['art_init_c'].reshape(1, 2 * H)

    feat_w_cat = jnp.concatenate([params['attn_wm'], params['hop_wm']], axis=1)
    ptr_init_i = params['ptr_init_i'].reshape(1, ENC_DIM)
    ptr_h0 = params['ptr_init_h'][0].reshape(1, H)
    ptr_c0 = params['ptr_init_c'][0].reshape(1, H)

    vmem = pl.BlockSpec(memory_space=pltpu.MemorySpace.VMEM)
    smem = pl.BlockSpec(memory_space=pltpu.MemorySpace.SMEM)
    return pl.pallas_call(
        _ptr_extract_kernel,
        out_shape=jax.ShapeDtypeStruct((Bb, target.shape[1] + 1, Ns), jnp.float32),
        in_specs=[smem] + [vmem] * 19,
        out_specs=vmem,
    )(target, emb_g, conv_w_cat, conv_b_cat,
      art_wih_cat, art_whh_blk, art_b_cat, art_h0, art_c0,
      feat_w_cat, ptr_init_i, params['ptr_wih'], params['ptr_whh'], params['ptr_b'],
      ptr_h0, ptr_c0,
      params['hop_wq'], params['hop_v'], params['attn_wq'], params['attn_v'])


# =============================================================================
# Pure-JAX reference (for correctness check)
# =============================================================================
def ref_conv_sent_encode(emb, p):
    outs = []
    for k, wn, bn in [(3, 'conv_w3', 'conv_b3'), (4, 'conv_w4', 'conv_b4'),
                      (5, 'conv_w5', 'conv_b5')]:
        w, b = p[wn], p[bn]
        S, W, E = emb.shape
        L = W - k + 1
        acc = jnp.zeros((S, L, CONV_HID), jnp.float32)
        for j in range(k):
            acc = acc + jnp.einsum('swe,eh->swh', emb[:, j:j + L, :], w[j], precision=HIGH)
        outs.append(jnp.max(jnp.maximum(acc + b, 0.0), axis=1))
    return jnp.concatenate(outs, axis=1)


def ref_lstm_run(x, wih, whh, b, h0, c0):
    T = x.shape[0]
    H = h0.shape[1]
    h, c = h0, c0
    outs = []
    for t in range(T):
        gates = jnp.dot(x[t], wih, precision=HIGH) + jnp.dot(h, whh, precision=HIGH) + b
        i = jax.nn.sigmoid(gates[:, :H]); f = jax.nn.sigmoid(gates[:, H:2 * H])
        g = jnp.tanh(gates[:, 2 * H:3 * H]); o = jax.nn.sigmoid(gates[:, 3 * H:])
        c = f * c + i * g
        h = o * jnp.tanh(c)
        outs.append(h)
    return jnp.stack(outs, axis=0)


def _ref_scores(feat, q, wq, v):
    qw = jnp.einsum('bth,hk->btk', q, wq, precision=HIGH)
    s = jnp.tanh(feat[:, None, :, :] + qw[:, :, None, :])
    return jnp.sum(s * v.reshape(1, 1, 1, -1), axis=-1)


def forward_reference(params, article_ids, target):
    Bb, Ns, Nw = article_ids.shape
    emb = params['emb'][article_ids.reshape(Bb * Ns, Nw)]
    enc_sent = ref_conv_sent_encode(emb, params).reshape(Bb, Ns, SENT_DIM)

    x = jnp.transpose(enc_sent, (1, 0, 2))
    h0f = jnp.broadcast_to(params['art_init_h'][0], (Bb, LSTM_HID))
    c0f = jnp.broadcast_to(params['art_init_c'][0], (Bb, LSTM_HID))
    h0b = jnp.broadcast_to(params['art_init_h'][1], (Bb, LSTM_HID))
    c0b = jnp.broadcast_to(params['art_init_c'][1], (Bb, LSTM_HID))
    out_f = ref_lstm_run(x, params['art_wih_f'], params['art_whh_f'], params['art_b_f'],
                         h0f, c0f)
    out_b = ref_lstm_run(x[::-1], params['art_wih_b'], params['art_whh_b'],
                         params['art_b_b'], h0b, c0b)[::-1]
    enc_out = jnp.transpose(jnp.concatenate([out_f, out_b], axis=-1), (1, 0, 2))

    d = enc_out.shape[2]
    idx = jnp.broadcast_to(target[:, :, None], (Bb, target.shape[1], d))
    ptr_in = jnp.take_along_axis(enc_out, idx, axis=1)

    attn_feat = jnp.einsum('bnd,dh->bnh', enc_out, params['attn_wm'], precision=HIGH)
    hop_feat = jnp.einsum('bnd,dh->bnh', enc_out, params['hop_wm'], precision=HIGH)
    init_i = jnp.broadcast_to(params['ptr_init_i'][None, None, :], (Bb, 1, d))
    lstm_in = jnp.transpose(jnp.concatenate([init_i, ptr_in], axis=1), (1, 0, 2))
    h0 = jnp.broadcast_to(params['ptr_init_h'][0], (Bb, LSTM_HID))
    c0 = jnp.broadcast_to(params['ptr_init_c'][0], (Bb, LSTM_HID))
    q = ref_lstm_run(lstm_in, params['ptr_wih'], params['ptr_whh'], params['ptr_b'], h0, c0)
    query = jnp.transpose(q, (1, 0, 2))
    for _ in range(N_HOP):
        score = _ref_scores(hop_feat, query, params['hop_wq'], params['hop_v'])
        norm = jax.nn.softmax(score, axis=-1)
        query = jnp.einsum('btn,bnh->bth', norm, hop_feat, precision=HIGH)
    return _ref_scores(attn_feat, query, params['attn_wq'], params['attn_v'])


# =============================================================================
# Deterministic synthetic parameters
# =============================================================================
def init_params(key):
    ks = jax.random.split(key, 28)

    def u(k, shape, a):
        return jax.random.uniform(k, shape, jnp.float32, -a, a)

    p = {}
    emb = 0.1 * jax.random.normal(ks[0], (VOCAB, EMB_DIM), jnp.float32)
    p['emb'] = emb.at[0].set(0.0)                                  # padding_idx=0
    # Conv1d weights stored pre-transposed as [k, E, H] (PyTorch weight is [H, E, k])
    p['conv_w3'] = u(ks[1], (3, EMB_DIM, CONV_HID), 0.1)
    p['conv_w4'] = u(ks[2], (4, EMB_DIM, CONV_HID), 0.1)
    p['conv_w5'] = u(ks[3], (5, EMB_DIM, CONV_HID), 0.1)
    p['conv_b3'] = u(ks[4], (1, CONV_HID), 0.1)
    p['conv_b4'] = u(ks[5], (1, CONV_HID), 0.1)
    p['conv_b5'] = u(ks[6], (1, CONV_HID), 0.1)
    # article bi-LSTM (weights pre-transposed: x @ W == PyTorch x @ W_ih^T; bias = b_ih+b_hh)
    p['art_init_h'] = u(ks[7], (2, LSTM_HID), 0.01)
    p['art_init_c'] = u(ks[8], (2, LSTM_HID), 0.01)
    p['art_wih_f'] = u(ks[9], (SENT_DIM, 4 * LSTM_HID), 0.1)
    p['art_whh_f'] = u(ks[10], (LSTM_HID, 4 * LSTM_HID), 0.1)
    p['art_b_f'] = u(ks[11], (1, 4 * LSTM_HID), 0.1)
    p['art_wih_b'] = u(ks[12], (SENT_DIM, 4 * LSTM_HID), 0.1)
    p['art_whh_b'] = u(ks[13], (LSTM_HID, 4 * LSTM_HID), 0.1)
    p['art_b_b'] = u(ks[14], (1, 4 * LSTM_HID), 0.1)
    # pointer net
    p['ptr_init_h'] = u(ks[15], (LSTM_LAYER, LSTM_HID), 0.01)
    p['ptr_init_c'] = u(ks[16], (LSTM_LAYER, LSTM_HID), 0.01)
    p['ptr_init_i'] = u(ks[17], (ENC_DIM,), 0.1)
    p['ptr_wih'] = u(ks[18], (ENC_DIM, 4 * LSTM_HID), 0.1)
    p['ptr_whh'] = u(ks[19], (LSTM_HID, 4 * LSTM_HID), 0.1)
    p['ptr_b'] = u(ks[20], (1, 4 * LSTM_HID), 0.1)
    p['attn_wm'] = 0.1 * jax.random.normal(ks[21], (ENC_DIM, LSTM_HID), jnp.float32)
    p['attn_wq'] = 0.1 * jax.random.normal(ks[22], (LSTM_HID, LSTM_HID), jnp.float32)
    p['attn_v'] = u(ks[23], (1, LSTM_HID), 0.01)
    p['hop_wm'] = 0.1 * jax.random.normal(ks[24], (ENC_DIM, LSTM_HID), jnp.float32)
    p['hop_wq'] = 0.1 * jax.random.normal(ks[25], (LSTM_HID, LSTM_HID), jnp.float32)
    p['hop_v'] = u(ks[26], (1, LSTM_HID), 0.01)
    return p


if __name__ == "__main__":
    key = jax.random.PRNGKey(0)
    pkey, ikey, tkey = jax.random.split(key, 3)
    params = init_params(pkey)

    # article_sents: [B, N_S, N_W] token ids (sent_nums == N_S for every report)
    article_ids = jax.random.randint(ikey, (B, N_S, N_W), 0, VOCAB, dtype=jnp.int32)
    # target: [B, N_T] indices of ground-truth extracted sentences
    target = jax.random.randint(tkey, (B, N_T), 0, N_S, dtype=jnp.int32)

    out = ptr_extract_summ_forward(params, article_ids, target)
    out = jax.block_until_ready(out)
    assert out.shape == (B, N_T + 1, N_S), out.shape

    ref = forward_reference(params, article_ids, target)
    max_err = float(jnp.max(jnp.abs(out - ref)))
    assert max_err < 1e-2, f"mismatch vs reference: {max_err}"

    print("KERNEL_OK")
</pallas_src>

<mosaic_0001>
module attributes {stable_mosaic.version = 11 : i64} {
  func.func @_ptr_extract_kernel(%arg0: memref<2x3xi32, #tpu.memory_space<smem>>, %arg1: memref<16x16x32xf32, #tpu.memory_space<vmem>>, %arg2: memref<32x384xf32, #tpu.memory_space<vmem>>, %arg3: memref<1x96xf32, #tpu.memory_space<vmem>>, %arg4: memref<96x256xf32, #tpu.memory_space<vmem>>, %arg5: memref<64x256xf32, #tpu.memory_space<vmem>>, %arg6: memref<1x256xf32, #tpu.memory_space<vmem>>, %arg7: memref<1x64xf32, #tpu.memory_space<vmem>>, %arg8: memref<1x64xf32, #tpu.memory_space<vmem>>, %arg9: memref<64x64xf32, #tpu.memory_space<vmem>>, %arg10: memref<1x64xf32, #tpu.memory_space<vmem>>, %arg11: memref<64x128xf32, #tpu.memory_space<vmem>>, %arg12: memref<32x128xf32, #tpu.memory_space<vmem>>, %arg13: memref<1x128xf32, #tpu.memory_space<vmem>>, %arg14: memref<1x32xf32, #tpu.memory_space<vmem>>, %arg15: memref<1x32xf32, #tpu.memory_space<vmem>>, %arg16: memref<32x32xf32, #tpu.memory_space<vmem>>, %arg17: memref<1x32xf32, #tpu.memory_space<vmem>>, %arg18: memref<32x32xf32, #tpu.memory_space<vmem>>, %arg19: memref<1x32xf32, #tpu.memory_space<vmem>>, %arg20: memref<2x4x8xf32, #tpu.memory_space<vmem>>) attributes {dimension_semantics = [], scalar_prefetch = 0 : i64, scratch_operands = 0 : i64, tpu.core_type = #tpu.core_type<tc>} {
    %c0 = arith.constant 0 : index
    %c0_0 = arith.constant 0 : index
    %c0_1 = arith.constant 0 : index
    %0 = vector.load %arg1[%c0, %c0_0, %c0_1] : memref<16x16x32xf32, #tpu.memory_space<vmem>>, vector<16x16x32xf32>
    %1 = vector.shape_cast %0 : vector<16x16x32xf32> to vector<256x32xf32>
    %c0_2 = arith.constant 0 : index
    %c0_3 = arith.constant 0 : index
    %2 = vector.load %arg2[%c0_2, %c0_3] : memref<32x384xf32, #tpu.memory_space<vmem>>, vector<32x384xf32>
    %cst = arith.constant dense<0.000000e+00> : vector<256x384xf32>
    %3 = tpu.matmul %1, %2, %cst {dimension_numbers = #tpu.dot_dimension_numbers<[1], [0], [0], [1], [0, 0, 1, 1], [], []>} : vector<256x32xf32>, vector<32x384xf32>, vector<256x384xf32> -> vector<256x384xf32>
    %4 = vector.shape_cast %3 : vector<256x384xf32> to vector<16x16x384xf32>
    %c0_4 = arith.constant 0 : index
    %c0_5 = arith.constant 0 : index
    %5 = vector.load %arg3[%c0_4, %c0_5] : memref<1x96xf32, #tpu.memory_space<vmem>>, vector<1x96xf32>
    %6 = vector.extract_strided_slice %4 {offsets = [0, 0, 0], sizes = [16, 14, 32], strides = [1, 1, 1]} : vector<16x16x384xf32> to vector<16x14x32xf32>
    %7 = vector.extract_strided_slice %4 {offsets = [0, 1, 32], sizes = [16, 14, 32], strides = [1, 1, 1]} : vector<16x16x384xf32> to vector<16x14x32xf32>
    %8 = arith.addf %6, %7 : vector<16x14x32xf32>
    %9 = vector.extract_strided_slice %4 {offsets = [0, 2, 64], sizes = [16, 14, 32], strides = [1, 1, 1]} : vector<16x16x384xf32> to vector<16x14x32xf32>
    %10 = arith.addf %8, %9 : vector<16x14x32xf32>
    %11 = vector.extract_strided_slice %5 {offsets = [0, 0], sizes = [1, 32], strides = [1, 1]} : vector<1x96xf32> to vector<1x32xf32>
    %12 = vector.shape_cast %11 : vector<1x32xf32> to vector<1x1x32xf32>
    %13 = vector.broadcast %12 : vector<1x1x32xf32> to vector<16x14x32xf32>
    %14 = arith.addf %10, %13 : vector<16x14x32xf32>
    %cst_6 = arith.constant 0.000000e+00 : f32
    %15 = vector.broadcast %cst_6 : f32 to vector<16x14x32xf32>
    %16 = arith.maximumf %14, %15 : vector<16x14x32xf32>
    %cst_7 = arith.constant dense<0xFF800000> : vector<16x32xf32>
    %17 = vector.multi_reduction <maximumf>, %16, %cst_7 [1] : vector<16x14x32xf32> to vector<16x32xf32>
    %18 = vector.extract_strided_slice %4 {offsets = [0, 0, 96], sizes = [16, 13, 32], strides = [1, 1, 1]} : vector<16x16x384xf32> to vector<16x13x32xf32>
    %19 = vector.extract_strided_slice %4 {offsets = [0, 1, 128], sizes = [16, 13, 32], strides = [1, 1, 1]} : vector<16x16x384xf32> to vector<16x13x32xf32>
    %20 = arith.addf %18, %19 : vector<16x13x32xf32>
    %21 = vector.extract_strided_slice %4 {offsets = [0, 2, 160], sizes = [16, 13, 32], strides = [1, 1, 1]} : vector<16x16x384xf32> to vector<16x13x32xf32>
    %22 = arith.addf %20, %21 : vector<16x13x32xf32>
    %23 = vector.extract_strided_slice %4 {offsets = [0, 3, 192], sizes = [16, 13, 32], strides = [1, 1, 1]} : vector<16x16x384xf32> to vector<16x13x32xf32>
    %24 = arith.addf %22, %23 : vector<16x13x32xf32>
    %25 = vector.extract_strided_slice %5 {offsets = [0, 32], sizes = [1, 32], strides = [1, 1]} : vector<1x96xf32> to vector<1x32xf32>
    %26 = vector.shape_cast %25 : vector<1x32xf32> to vector<1x1x32xf32>
    %27 = vector.broadcast %26 : vector<1x1x32xf32> to vector<16x13x32xf32>
    %28 = arith.addf %24, %27 : vector<16x13x32xf32>
    %cst_8 = arith.constant 0.000000e+00 : f32
    %29 = vector.broadcast %cst_8 : f32 to vector<16x13x32xf32>
    %30 = arith.maximumf %28, %29 : vector<16x13x32xf32>
    %cst_9 = arith.constant dense<0xFF800000> : vector<16x32xf32>
    %31 = vector.multi_reduction <maximumf>, %30, %cst_9 [1] : vector<16x13x32xf32> to vector<16x32xf32>
    %32 = vector.extract_strided_slice %4 {offsets = [0, 0, 224], sizes = [16, 12, 32], strides = [1, 1, 1]} : vector<16x16x384xf32> to vector<16x12x32xf32>
    %33 = vector.extract_strided_slice %4 {offsets = [0, 1, 256], sizes = [16, 12, 32], strides = [1, 1, 1]} : vector<16x16x384xf32> to vector<16x12x32xf32>
    %34 = arith.addf %32, %33 : vector<16x12x32xf32>
    %35 = vector.extract_strided_slice %4 {offsets = [0, 2, 288], sizes = [16, 12, 32], strides = [1, 1, 1]} : vector<16x16x384xf32> to vector<16x12x32xf32>
    %36 = arith.addf %34, %35 : vector<16x12x32xf32>
    %37 = vector.extract_strided_slice %4 {offsets = [0, 3, 320], sizes = [16, 12, 32], strides = [1, 1, 1]} : vector<16x16x384xf32> to vector<16x12x32xf32>
    %38 = arith.addf %36, %37 : vector<16x12x32xf32>
    %39 = vector.extract_strided_slice %4 {offsets = [0, 4, 352], sizes = [16, 12, 32], strides = [1, 1, 1]} : vector<16x16x384xf32> to vector<16x12x32xf32>
    %40 = arith.addf %38, %39 : vector<16x12x32xf32>
    %41 = vector.extract_strided_slice %5 {offsets = [0, 64], sizes = [1, 32], strides = [1, 1]} : vector<1x96xf32> to vector<1x32xf32>
    %42 = vector.shape_cast %41 : vector<1x32xf32> to vector<1x1x32xf32>
    %43 = vector.broadcast %42 : vector<1x1x32xf32> to vector<16x12x32xf32>
    %44 = arith.addf %40, %43 : vector<16x12x32xf32>
    %cst_10 = arith.constant 0.000000e+00 : f32
    %45 = vector.broadcast %cst_10 : f32 to vector<16x12x32xf32>
    %46 = arith.maximumf %44, %45 : vector<16x12x32xf32>
    %cst_11 = arith.constant dense<0xFF800000> : vector<16x32xf32>
    %47 = vector.multi_reduction <maximumf>, %46, %cst_11 [1] : vector<16x12x32xf32> to vector<16x32xf32>
    %48 = tpu.concatenate %17, %31, %47 in 1 : vector<16x32xf32>, vector<16x32xf32>, vector<16x32xf32> -> vector<16x96xf32>
    %c0_12 = arith.constant 0 : index
    %c0_13 = arith.constant 0 : index
    %49 = vector.load %arg4[%c0_12, %c0_13] : memref<96x256xf32, #tpu.memory_space<vmem>>, vector<96x256xf32>
    %cst_14 = arith.constant dense<0.000000e+00> : vector<16x256xf32>
    %50 = tpu.matmul %48, %49, %cst_14 {dimension_numbers = #tpu.dot_dimension_numbers<[1], [0], [0], [1], [0, 0, 1, 1], [], []>} : vector<16x96xf32>, vector<96x256xf32>, vector<16x256xf32> -> vector<16x256xf32>
    %51 = vector.shape_cast %50 : vector<16x256xf32> to vector<2x8x256xf32>
    %c0_15 = arith.constant 0 : index
    %c0_16 = arith.constant 0 : index
    %52 = vector.load %arg5[%c0_15, %c0_16] : memref<64x256xf32, #tpu.memory_space<vmem>>, vector<64x256xf32>
    %c0_17 = arith.constant 0 : index
    %c0_18 = arith.constant 0 : index
    %53 = vector.load %arg6[%c0_17, %c0_18] : memref<1x256xf32, #tpu.memory_space<vmem>>, vector<1x256xf32>
    %c0_19 = arith.constant 0 : index
    %c0_20 = arith.constant 0 : index
    %54 = vector.load %arg7[%c0_19, %c0_20] : memref<1x64xf32, #tpu.memory_space<vmem>>, vector<1x64xf32>
    %55 = vector.shape_cast %54 : vector<1x64xf32> to vector<1x64xf32>
    %56 = vector.broadcast %55 : vector<1x64xf32> to vector<2x64xf32>
    %c0_21 = arith.constant 0 : index
    %c0_22 = arith.constant 0 : index
    %57 = vector.load %arg8[%c0_21, %c0_22] : memref<1x64xf32, #tpu.memory_space<vmem>>, vector<1x64xf32>
    %58 = vector.shape_cast %57 : vector<1x64xf32> to vector<1x64xf32>
    %59 = vector.broadcast %58 : vector<1x64xf32> to vector<2x64xf32>
    %60 = vector.extract_strided_slice %51 {offsets = [0, 0, 0], sizes = [2, 1, 128], strides = [1, 1, 1]} : vector<2x8x256xf32> to vector<2x1x128xf32>
    %61 = vector.shape_cast %60 : vector<2x1x128xf32> to vector<2x128xf32>
    %62 = vector.extract_strided_slice %51 {offsets = [0, 7, 128], sizes = [2, 1, 128], strides = [1, 1, 1]} : vector<2x8x256xf32> to vector<2x1x128xf32>
    %63 = vector.shape_cast %62 : vector<2x1x128xf32> to vector<2x128xf32>
    %64 = tpu.concatenate %61, %63 in 1 : vector<2x128xf32>, vector<2x128xf32> -> vector<2x256xf32>
    %cst_23 = arith.constant dense<0.000000e+00> : vector<2x256xf32>
    %65 = tpu.matmul %56, %52, %cst_23 {dimension_numbers = #tpu.dot_dimension_numbers<[1], [0], [0], [1], [0, 0, 1, 1], [], []>} : vector<2x64xf32>, vector<64x256xf32>, vector<2x256xf32> -> vector<2x256xf32>
    %66 = arith.addf %64, %65 : vector<2x256xf32>
    %67 = vector.broadcast %53 : vector<1x256xf32> to vector<2x256xf32>
    %68 = arith.addf %66, %67 : vector<2x256xf32>
    %69 = arith.negf %68 : vector<2x256xf32>
    %70 = math.exp %69 : vector<2x256xf32>
    %cst_24 = arith.constant 1.000000e+00 : f32
    %71 = vector.broadcast %cst_24 : f32 to vector<2x256xf32>
    %72 = arith.addf %71, %70 : vector<2x256xf32>
    %73 = arith.divf %71, %72 : vector<2x256xf32>
    %74 = math.tanh %68 : vector<2x256xf32>
    %75 = vector.extract_strided_slice %73 {offsets = [0, 0], sizes = [2, 32], strides = [1, 1]} : vector<2x256xf32> to vector<2x32xf32>
    %76 = vector.extract_strided_slice %73 {offsets = [0, 128], sizes = [2, 32], strides = [1, 1]} : vector<2x256xf32> to vector<2x32xf32>
    %77 = tpu.concatenate %75, %76 in 1 : vector<2x32xf32>, vector<2x32xf32> -> vector<2x64xf32>
    %78 = vector.extract_strided_slice %73 {offsets = [0, 32], sizes = [2, 32], strides = [1, 1]} : vector<2x256xf32> to vector<2x32xf32>
    %79 = vector.extract_strided_slice %73 {offsets = [0, 160], sizes = [2, 32], strides = [1, 1]} : vector<2x256xf32> to vector<2x32xf32>
    %80 = tpu.concatenate %78, %79 in 1 : vector<2x32xf32>, vector<2x32xf32> -> vector<2x64xf32>
    %81 = vector.extract_strided_slice %74 {offsets = [0, 64], sizes = [2, 32], strides = [1, 1]} : vector<2x256xf32> to vector<2x32xf32>
    %82 = vector.extract_strided_slice %74 {offsets = [0, 192], sizes = [2, 32], strides = [1, 1]} : vector<2x256xf32> to vector<2x32xf32>
    %83 = tpu.concatenate %81, %82 in 1 : vector<2x32xf32>, vector<2x32xf32> -> vector<2x64xf32>
    %84 = vector.extract_strided_slice %73 {offsets = [0, 96], sizes = [2, 32], strides = [1, 1]} : vector<2x256xf32> to vector<2x32xf32>
    %85 = vector.extract_strided_slice %73 {offsets = [0, 224], sizes = [2, 32], strides = [1, 1]} : vector<2x256xf32> to vector<2x32xf32>
    %86 = tpu.concatenate %84, %85 in 1 : vector<2x32xf32>, vector<2x32xf32> -> vector<2x64xf32>
    %87 = arith.mulf %80, %59 : vector<2x64xf32>
    %88 = arith.mulf %77, %83 : vector<2x64xf32>
    %89 = arith.addf %87, %88 : vector<2x64xf32>
    %90 = math.tanh %89 : vector<2x64xf32>
    %91 = arith.mulf %86, %90 : vector<2x64xf32>
    %92 = vector.extract_strided_slice %91 {offsets = [0, 0], sizes = [2, 32], strides = [1, 1]} : vector<2x64xf32> to vector<2x32xf32>
    %93 = vector.extract_strided_slice %91 {offsets = [0, 32], sizes = [2, 32], strides = [1, 1]} : vector<2x64xf32> to vector<2x32xf32>
    %94 = vector.extract_strided_slice %51 {offsets = [0, 1, 0], sizes = [2, 1, 128], strides = [1, 1, 1]} : vector<2x8x256xf32> to vector<2x1x128xf32>
    %95 = vector.shape_cast %94 : vector<2x1x128xf32> to vector<2x128xf32>
    %96 = vector.extract_strided_slice %51 {offsets = [0, 6, 128], sizes = [2, 1, 128], strides = [1, 1, 1]} : vector<2x8x256xf32> to vector<2x1x128xf32>
    %97 = vector.shape_cast %96 : vector<2x1x128xf32> to vector<2x128xf32>
    %98 = tpu.concatenate %95, %97 in 1 : vector<2x128xf32>, vector<2x128xf32> -> vector<2x256xf32>
    %cst_25 = arith.constant dense<0.000000e+00> : vector<2x256xf32>
    %99 = tpu.matmul %91, %52, %cst_25 {dimension_numbers = #tpu.dot_dimension_numbers<[1], [0], [0], [1], [0, 0, 1, 1], [], []>} : vector<2x64xf32>, vector<64x256xf32>, vector<2x256xf32> -> vector<2x256xf32>
    %100 = arith.addf %98, %99 : vector<2x256xf32>
    %101 = vector.broadcast %53 : vector<1x256xf32> to vector<2x256xf32>
    %102 = arith.addf %100, %101 : vector<2x256xf32>
    %103 = arith.negf %102 : vector<2x256xf32>
    %104 = math.exp %103 : vector<2x256xf32>
    %cst_26 = arith.constant 1.000000e+00 : f32
    %105 = vector.broadcast %cst_26 : f32 to vector<2x256xf32>
    %106 = arith.addf %105, %104 : vector<2x256xf32>
    %107 = arith.divf %105, %106 : vector<2x256xf32>
    %108 = math.tanh %102 : vector<2x256xf32>
    %109 = vector.extract_strided_slice %107 {offsets = [0, 0], sizes = [2, 32], strides = [1, 1]} : vector<2x256xf32> to vector<2x32xf32>
    %110 = vector.extract_strided_slice %107 {offsets = [0, 128], sizes = [2, 32], strides = [1, 1]} : vector<2x256xf32> to vector<2x32xf32>
    %111 = tpu.concatenate %109, %110 in 1 : vector<2x32xf32>, vector<2x32xf32> -> vector<2x64xf32>
    %112 = vector.extract_strided_slice %107 {offsets = [0, 32], sizes = [2, 32], strides = [1, 1]} : vector<2x256xf32> to vector<2x32xf32>
    %113 = vector.extract_strided_slice %107 {offsets = [0, 160], sizes = [2, 32], strides = [1, 1]} : vector<2x256xf32> to vector<2x32xf32>
    %114 = tpu.concatenate %112, %113 in 1 : vector<2x32xf32>, vector<2x32xf32> -> vector<2x64xf32>
    %115 = vector.extract_strided_slice %108 {offsets = [0, 64], sizes = [2, 32], strides = [1, 1]} : vector<2x256xf32> to vector<2x32xf32>
    %116 = vector.extract_strided_slice %108 {offsets = [0, 192], sizes = [2, 32], strides = [1, 1]} : vector<2x256xf32> to vector<2x32xf32>
    %117 = tpu.concatenate %115, %116 in 1 : vector<2x32xf32>, vector<2x32xf32> -> vector<2x64xf32>
    %118 = vector.extract_strided_slice %107 {offsets = [0, 96], sizes = [2, 32], strides = [1, 1]} : vector<2x256xf32> to vector<2x32xf32>
    %119 = vector.extract_strided_slice %107 {offsets = [0, 224], sizes = [2, 32], strides = [1, 1]} : vector<2x256xf32> to vector<2x32xf32>
    %120 = tpu.concatenate %118, %119 in 1 : vector<2x32xf32>, vector<2x32xf32> -> vector<2x64xf32>
    %121 = arith.mulf %114, %89 : vector<2x64xf32>
    %122 = arith.mulf %111, %117 : vector<2x64xf32>
    %123 = arith.addf %121, %122 : vector<2x64xf32>
    %124 = math.tanh %123 : vector<2x64xf32>
    %125 = arith.mulf %120, %124 : vector<2x64xf32>
    %126 = vector.extract_strided_slice %125 {offsets = [0, 0], sizes = [2, 32], strides = [1, 1]} : vector<2x64xf32> to vector<2x32xf32>
    %127 = vector.extract_strided_slice %125 {offsets = [0, 32], sizes = [2, 32], strides = [1, 1]} : vector<2x64xf32> to vector<2x32xf32>
    %128 = vector.extract_strided_slice %51 {offsets = [0, 2, 0], sizes = [2, 1, 128], strides = [1, 1, 1]} : vector<2x8x256xf32> to vector<2x1x128xf32>
    %129 = vector.shape_cast %128 : vector<2x1x128xf32> to vector<2x128xf32>
    %130 = vector.extract_strided_slice %51 {offsets = [0, 5, 128], sizes = [2, 1, 128], strides = [1, 1, 1]} : vector<2x8x256xf32> to vector<2x1x128xf32>
    %131 = vector.shape_cast %130 : vector<2x1x128xf32> to vector<2x128xf32>
    %132 = tpu.concatenate %129, %131 in 1 : vector<2x128xf32>, vector<2x128xf32> -> vector<2x256xf32>
    %cst_27 = arith.constant dense<0.000000e+00> : vector<2x256xf32>
    %133 = tpu.matmul %125, %52, %cst_27 {dimension_numbers = #tpu.dot_dimension_numbers<[1], [0], [0], [1], [0, 0, 1, 1], [], []>} : vector<2x64xf32>, vector<64x256xf32>, vector<2x256xf32> -> vector<2x256xf32>
    %134 = arith.addf %132, %133 : vector<2x256xf32>
    %135 = vector.broadcast %53 : vector<1x256xf32> to vector<2x256xf32>
    %136 = arith.addf %134, %135 : vector<2x256xf32>
    %137 = arith.negf %136 : vector<2x256xf32>
    %138 = math.exp %137 : vector<2x256xf32>
    %cst_28 = arith.constant 1.000000e+00 : f32
    %139 = vector.broadcast %cst_28 : f32 to vector<2x256xf32>
    %140 = arith.addf %139, %138 : vector<2x256xf32>
    %141 = arith.divf %139, %140 : vector<2x256xf32>
    %142 = math.tanh %136 : vector<2x256xf32>
    %143 = vector.extract_strided_slice %141 {offsets = [0, 0], sizes = [2, 32], strides = [1, 1]} : vector<2x256xf32> to vector<2x32xf32>
    %144 = vector.extract_strided_slice %141 {offsets = [0, 128], sizes = [2, 32], strides = [1, 1]} : vector<2x256xf32> to vector<2x32xf32>
    %145 = tpu.concatenate %143, %144 in 1 : vector<2x32xf32>, vector<2x32xf32> -> vector<2x64xf32>
    %146 = vector.extract_strided_slice %141 {offsets = [0, 32], sizes = [2, 32], strides = [1, 1]} : vector<2x256xf32> to vector<2x32xf32>
    %147 = vector.extract_strided_slice %141 {offsets = [0, 160], sizes = [2, 32], strides = [1, 1]} : vector<2x256xf32> to vector<2x32xf32>
    %148 = tpu.concatenate %146, %147 in 1 : vector<2x32xf32>, vector<2x32xf32> -> vector<2x64xf32>
    %149 = vector.extract_strided_slice %142 {offsets = [0, 64], sizes = [2, 32], strides = [1, 1]} : vector<2x256xf32> to vector<2x32xf32>
    %150 = vector.extract_strided_slice %142 {offsets = [0, 192], sizes = [2, 32], strides = [1, 1]} : vector<2x256xf32> to vector<2x32xf32>
    %151 = tpu.concatenate %149, %150 in 1 : vector<2x32xf32>, vector<2x32xf32> -> vector<2x64xf32>
    %152 = vector.extract_strided_slice %141 {offsets = [0, 96], sizes = [2, 32], strides = [1, 1]} : vector<2x256xf32> to vector<2x32xf32>
    %153 = vector.extract_strided_slice %141 {offsets = [0, 224], sizes = [2, 32], strides = [1, 1]} : vector<2x256xf32> to vector<2x32xf32>
    %154 = tpu.concatenate %152, %153 in 1 : vector<2x32xf32>, vector<2x32xf32> -> vector<2x64xf32>
    %155 = arith.mulf %148, %123 : vector<2x64xf32>
    %156 = arith.mulf %145, %151 : vector<2x64xf32>
    %157 = arith.addf %155, %156 : vector<2x64xf32>
    %158 = math.tanh %157 : vector<2x64xf32>
    %159 = arith.mulf %154, %158 : vector<2x64xf32>
    %160 = vector.extract_strided_slice %159 {offsets = [0, 0], sizes = [2, 32], strides = [1, 1]} : vector<2x64xf32> to vector<2x32xf32>
    %161 = vector.extract_strided_slice %159 {offsets = [0, 32], sizes = [2, 32], strides = [1, 1]} : vector<2x64xf32> to vector<2x32xf32>
    %162 = vector.extract_strided_slice %51 {offsets = [0, 3, 0], sizes = [2, 1, 128], strides = [1, 1, 1]} : vector<2x8x256xf32> to vector<2x1x128xf32>
    %163 = vector.shape_cast %162 : vector<2x1x128xf32> to vector<2x128xf32>
    %164 = vector.extract_strided_slice %51 {offsets = [0, 4, 128], sizes = [2, 1, 128], strides = [1, 1, 1]} : vector<2x8x256xf32> to vector<2x1x128xf32>
    %165 = vector.shape_cast %164 : vector<2x1x128xf32> to vector<2x128xf32>
    %166 = tpu.concatenate %163, %165 in 1 : vector<2x128xf32>, vector<2x128xf32> -> vector<2x256xf32>
    %cst_29 = arith.constant dense<0.000000e+00> : vector<2x256xf32>
    %167 = tpu.matmul %159, %52, %cst_29 {dimension_numbers = #tpu.dot_dimension_numbers<[1], [0], [0], [1], [0, 0, 1, 1], [], []>} : vector<2x64xf32>, vector<64x256xf32>, vector<2x256xf32> -> vector<2x256xf32>
    %168 = arith.addf %166, %167 : vector<2x256xf32>
    %169 = vector.broadcast %53 : vector<1x256xf32> to vector<2x256xf32>
    %170 = arith.addf %168, %169 : vector<2x256xf32>
    %171 = arith.negf %170 : vector<2x256xf32>
    %172 = math.exp %171 : vector<2x256xf32>
    %cst_30 = arith.constant 1.000000e+00 : f32
    %173 = vector.broadcast %cst_30 : f32 to vector<2x256xf32>
    %174 = arith.addf %173, %172 : vector<2x256xf32>
    %175 = arith.divf %173, %174 : vector<2x256xf32>
    %176 = math.tanh %170 : vector<2x256xf32>
    %177 = vector.extract_strided_slice %175 {offsets = [0, 0], sizes = [2, 32], strides = [1, 1]} : vector<2x256xf32> to vector<2x32xf32>
    %178 = vector.extract_strided_slice %175 {offsets = [0, 128], sizes = [2, 32], strides = [1, 1]} : vector<2x256xf32> to vector<2x32xf32>
    %179 = tpu.concatenate %177, %178 in 1 : vector<2x32xf32>, vector<2x32xf32> -> vector<2x64xf32>
    %180 = vector.extract_strided_slice %175 {offsets = [0, 32], sizes = [2, 32], strides = [1, 1]} : vector<2x256xf32> to vector<2x32xf32>
    %181 = vector.extract_strided_slice %175 {offsets = [0, 160], sizes = [2, 32], strides = [1, 1]} : vector<2x256xf32> to vector<2x32xf32>
    %182 = tpu.concatenate %180, %181 in 1 : vector<2x32xf32>, vector<2x32xf32> -> vector<2x64xf32>
    %183 = vector.extract_strided_slice %176 {offsets = [0, 64], sizes = [2, 32], strides = [1, 1]} : vector<2x256xf32> to vector<2x32xf32>
    %184 = vector.extract_strided_slice %176 {offsets = [0, 192], sizes = [2, 32], strides = [1, 1]} : vector<2x256xf32> to vector<2x32xf32>
    %185 = tpu.concatenate %183, %184 in 1 : vector<2x32xf32>, vector<2x32xf32> -> vector<2x64xf32>
    %186 = vector.extract_strided_slice %175 {offsets = [0, 96], sizes = [2, 32], strides = [1, 1]} : vector<2x256xf32> to vector<2x32xf32>
    %187 = vector.extract_strided_slice %175 {offsets = [0, 224], sizes = [2, 32], strides = [1, 1]} : vector<2x256xf32> to vector<2x32xf32>
    %188 = tpu.concatenate %186, %187 in 1 : vector<2x32xf32>, vector<2x32xf32> -> vector<2x64xf32>
    %189 = arith.mulf %182, %157 : vector<2x64xf32>
    %190 = arith.mulf %179, %185 : vector<2x64xf32>
    %191 = arith.addf %189, %190 : vector<2x64xf32>
    %192 = math.tanh %191 : vector<2x64xf32>
    %193 = arith.mulf %188, %192 : vector<2x64xf32>
    %194 = vector.extract_strided_slice %193 {offsets = [0, 0], sizes = [2, 32], strides = [1, 1]} : vector<2x64xf32> to vector<2x32xf32>
    %195 = vector.extract_strided_slice %193 {offsets = [0, 32], sizes = [2, 32], strides = [1, 1]} : vector<2x64xf32> to vector<2x32xf32>
    %196 = vector.extract_strided_slice %51 {offsets = [0, 4, 0], sizes = [2, 1, 128], strides = [1, 1, 1]} : vector<2x8x256xf32> to vector<2x1x128xf32>
    %197 = vector.shape_cast %196 : vector<2x1x128xf32> to vector<2x128xf32>
    %198 = vector.extract_strided_slice %51 {offsets = [0, 3, 128], sizes = [2, 1, 128], strides = [1, 1, 1]} : vector<2x8x256xf32> to vector<2x1x128xf32>
    %199 = vector.shape_cast %198 : vector<2x1x128xf32> to vector<2x128xf32>
    %200 = tpu.concatenate %197, %199 in 1 : vector<2x128xf32>, vector<2x128xf32> -> vector<2x256xf32>
    %cst_31 = arith.constant dense<0.000000e+00> : vector<2x256xf32>
    %201 = tpu.matmul %193, %52, %cst_31 {dimension_numbers = #tpu.dot_dimension_numbers<[1], [0], [0], [1], [0, 0, 1, 1], [], []>} : vector<2x64xf32>, vector<64x256xf32>, vector<2x256xf32> -> vector<2x256xf32>
    %202 = arith.addf %200, %201 : vector<2x256xf32>
    %203 = vector.broadcast %53 : vector<1x256xf32> to vector<2x256xf32>
    %204 = arith.addf %202, %203 : vector<2x256xf32>
    %205 = arith.negf %204 : vector<2x256xf32>
    %206 = math.exp %205 : vector<2x256xf32>
    %cst_32 = arith.constant 1.000000e+00 : f32
    %207 = vector.broadcast %cst_32 : f32 to vector<2x256xf32>
    %208 = arith.addf %207, %206 : vector<2x256xf32>
    %209 = arith.divf %207, %208 : vector<2x256xf32>
    %210 = math.tanh %204 : vector<2x256xf32>
    %211 = vector.extract_strided_slice %209 {offsets = [0, 0], sizes = [2, 32], strides = [1, 1]} : vector<2x256xf32> to vector<2x32xf32>
    %212 = vector.extract_strided_slice %209 {offsets = [0, 128], sizes = [2, 32], strides = [1, 1]} : vector<2x256xf32> to vector<2x32xf32>
    %213 = tpu.concatenate %211, %212 in 1 : vector<2x32xf32>, vector<2x32xf32> -> vector<2x64xf32>
    %214 = vector.extract_strided_slice %209 {offsets = [0, 32], sizes = [2, 32], strides = [1, 1]} : vector<2x256xf32> to vector<2x32xf32>
    %215 = vector.extract_strided_slice %209 {offsets = [0, 160], sizes = [2, 32], strides = [1, 1]} : vector<2x256xf32> to vector<2x32xf32>
    %216 = tpu.concatenate %214, %215 in 1 : vector<2x32xf32>, vector<2x32xf32> -> vector<2x64xf32>
    %217 = vector.extract_strided_slice %210 {offsets = [0, 64], sizes = [2, 32], strides = [1, 1]} : vector<2x256xf32> to vector<2x32xf32>
    %218 = vector.extract_strided_slice %210 {offsets = [0, 192], sizes = [2, 32], strides = [1, 1]} : vector<2x256xf32> to vector<2x32xf32>
    %219 = tpu.concatenate %217, %218 in 1 : vector<2x32xf32>, vector<2x32xf32> -> vector<2x64xf32>
    %220 = vector.extract_strided_slice %209 {offsets = [0, 96], sizes = [2, 32], strides = [1, 1]} : vector<2x256xf32> to vector<2x32xf32>
    %221 = vector.extract_strided_slice %209 {offsets = [0, 224], sizes = [2, 32], strides = [1, 1]} : vector<2x256xf32> to vector<2x32xf32>
    %222 = tpu.concatenate %220, %221 in 1 : vector<2x32xf32>, vector<2x32xf32> -> vector<2x64xf32>
    %223 = arith.mulf %216, %191 : vector<2x64xf32>
    %224 = arith.mulf %213, %219 : vector<2x64xf32>
    %225 = arith.addf %223, %224 : vector<2x64xf32>
    %226 = math.tanh %225 : vector<2x64xf32>
    %227 = arith.mulf %222, %226 : vector<2x64xf32>
    %228 = vector.extract_strided_slice %227 {offsets = [0, 0], sizes = [2, 32], strides = [1, 1]} : vector<2x64xf32> to vector<2x32xf32>
    %229 = vector.extract_strided_slice %227 {offsets = [0, 32], sizes = [2, 32], strides = [1, 1]} : vector<2x64xf32> to vector<2x32xf32>
    %230 = vector.extract_strided_slice %51 {offsets = [0, 5, 0], sizes = [2, 1, 128], strides = [1, 1, 1]} : vector<2x8x256xf32> to vector<2x1x128xf32>
    %231 = vector.shape_cast %230 : vector<2x1x128xf32> to vector<2x128xf32>
    %232 = vector.extract_strided_slice %51 {offsets = [0, 2, 128], sizes = [2, 1, 128], strides = [1, 1, 1]} : vector<2x8x256xf32> to vector<2x1x128xf32>
    %233 = vector.shape_cast %232 : vector<2x1x128xf32> to vector<2x128xf32>
    %234 = tpu.concatenate %231, %233 in 1 : vector<2x128xf32>, vector<2x128xf32> -> vector<2x256xf32>
    %cst_33 = arith.constant dense<0.000000e+00> : vector<2x256xf32>
    %235 = tpu.matmul %227, %52, %cst_33 {dimension_numbers = #tpu.dot_dimension_numbers<[1], [0], [0], [1], [0, 0, 1, 1], [], []>} : vector<2x64xf32>, vector<64x256xf32>, vector<2x256xf32> -> vector<2x256xf32>
    %236 = arith.addf %234, %235 : vector<2x256xf32>
    %237 = vector.broadcast %53 : vector<1x256xf32> to vector<2x256xf32>
    %238 = arith.addf %236, %237 : vector<2x256xf32>
    %239 = arith.negf %238 : vector<2x256xf32>
    %240 = math.exp %239 : vector<2x256xf32>
    %cst_34 = arith.constant 1.000000e+00 : f32
    %241 = vector.broadcast %cst_34 : f32 to vector<2x256xf32>
    %242 = arith.addf %241, %240 : vector<2x256xf32>
    %243 = arith.divf %241, %242 : vector<2x256xf32>
    %244 = math.tanh %238 : vector<2x256xf32>
    %245 = vector.extract_strided_slice %243 {offsets = [0, 0], sizes = [2, 32], strides = [1, 1]} : vector<2x256xf32> to vector<2x32xf32>
    %246 = vector.extract_strided_slice %243 {offsets = [0, 128], sizes = [2, 32], strides = [1, 1]} : vector<2x256xf32> to vector<2x32xf32>
    %247 = tpu.concatenate %245, %246 in 1 : vector<2x32xf32>, vector<2x32xf32> -> vector<2x64xf32>
    %248 = vector.extract_strided_slice %243 {offsets = [0, 32], sizes = [2, 32], strides = [1, 1]} : vector<2x256xf32> to vector<2x32xf32>
    %249 = vector.extract_strided_slice %243 {offsets = [0, 160], sizes = [2, 32], strides = [1, 1]} : vector<2x256xf32> to vector<2x32xf32>
    %250 = tpu.concatenate %248, %249 in 1 : vector<2x32xf32>, vector<2x32xf32> -> vector<2x64xf32>
    %251 = vector.extract_strided_slice %244 {offsets = [0, 64], sizes = [2, 32], strides = [1, 1]} : vector<2x256xf32> to vector<2x32xf32>
    %252 = vector.extract_strided_slice %244 {offsets = [0, 192], sizes = [2, 32], strides = [1, 1]} : vector<2x256xf32> to vector<2x32xf32>
    %253 = tpu.concatenate %251, %252 in 1 : vector<2x32xf32>, vector<2x32xf32> -> vector<2x64xf32>
    %254 = vector.extract_strided_slice %243 {offsets = [0, 96], sizes = [2, 32], strides = [1, 1]} : vector<2x256xf32> to vector<2x32xf32>
    %255 = vector.extract_strided_slice %243 {offsets = [0, 224], sizes = [2, 32], strides = [1, 1]} : vector<2x256xf32> to vector<2x32xf32>
    %256 = tpu.concatenate %254, %255 in 1 : vector<2x32xf32>, vector<2x32xf32> -> vector<2x64xf32>
    %257 = arith.mulf %250, %225 : vector<2x64xf32>
    %258 = arith.mulf %247, %253 : vector<2x64xf32>
    %259 = arith.addf %257, %258 : vector<2x64xf32>
    %260 = math.tanh %259 : vector<2x64xf32>
    %261 = arith.mulf %256, %260 : vector<2x64xf32>
    %262 = vector.extract_strided_slice %261 {offsets = [0, 0], sizes = [2, 32], strides = [1, 1]} : vector<2x64xf32> to vector<2x32xf32>
    %263 = vector.extract_strided_slice %261 {offsets = [0, 32], sizes = [2, 32], strides = [1, 1]} : vector<2x64xf32> to vector<2x32xf32>
    %264 = vector.extract_strided_slice %51 {offsets = [0, 6, 0], sizes = [2, 1, 128], strides = [1, 1, 1]} : vector<2x8x256xf32> to vector<2x1x128xf32>
    %265 = vector.shape_cast %264 : vector<2x1x128xf32> to vector<2x128xf32>
    %266 = vector.extract_strided_slice %51 {offsets = [0, 1, 128], sizes = [2, 1, 128], strides = [1, 1, 1]} : vector<2x8x256xf32> to vector<2x1x128xf32>
    %267 = vector.shape_cast %266 : vector<2x1x128xf32> to vector<2x128xf32>
    %268 = tpu.concatenate %265, %267 in 1 : vector<2x128xf32>, vector<2x128xf32> -> vector<2x256xf32>
    %cst_35 = arith.constant dense<0.000000e+00> : vector<2x256xf32>
    %269 = tpu.matmul %261, %52, %cst_35 {dimension_numbers = #tpu.dot_dimension_numbers<[1], [0], [0], [1], [0, 0, 1, 1], [], []>} : vector<2x64xf32>, vector<64x256xf32>, vector<2x256xf32> -> vector<2x256xf32>
    %270 = arith.addf %268, %269 : vector<2x256xf32>
    %271 = vector.broadcast %53 : vector<1x256xf32> to vector<2x256xf32>
    %272 = arith.addf %270, %271 : vector<2x256xf32>
    %273 = arith.negf %272 : vector<2x256xf32>
    %274 = math.exp %273 : vector<2x256xf32>
    %cst_36 = arith.constant 1.000000e+00 : f32
    %275 = vector.broadcast %cst_36 : f32 to vector<2x256xf32>
    %276 = arith.addf %275, %274 : vector<2x256xf32>
    %277 = arith.divf %275, %276 : vector<2x256xf32>
    %278 = math.tanh %272 : vector<2x256xf32>
    %279 = vector.extract_strided_slice %277 {offsets = [0, 0], sizes = [2, 32], strides = [1, 1]} : vector<2x256xf32> to vector<2x32xf32>
    %280 = vector.extract_strided_slice %277 {offsets = [0, 128], sizes = [2, 32], strides = [1, 1]} : vector<2x256xf32> to vector<2x32xf32>
    %281 = tpu.concatenate %279, %280 in 1 : vector<2x32xf32>, vector<2x32xf32> -> vector<2x64xf32>
    %282 = vector.extract_strided_slice %277 {offsets = [0, 32], sizes = [2, 32], strides = [1, 1]} : vector<2x256xf32> to vector<2x32xf32>
    %283 = vector.extract_strided_slice %277 {offsets = [0, 160], sizes = [2, 32], strides = [1, 1]} : vector<2x256xf32> to vector<2x32xf32>
    %284 = tpu.concatenate %282, %283 in 1 : vector<2x32xf32>, vector<2x32xf32> -> vector<2x64xf32>
    %285 = vector.extract_strided_slice %278 {offsets = [0, 64], sizes = [2, 32], strides = [1, 1]} : vector<2x256xf32> to vector<2x32xf32>
    %286 = vector.extract_strided_slice %278 {offsets = [0, 192], sizes = [2, 32], strides = [1, 1]} : vector<2x256xf32> to vector<2x32xf32>
    %287 = tpu.concatenate %285, %286 in 1 : vector<2x32xf32>, vector<2x32xf32> -> vector<2x64xf32>
    %288 = vector.extract_strided_slice %277 {offsets = [0, 96], sizes = [2, 32], strides = [1, 1]} : vector<2x256xf32> to vector<2x32xf32>
    %289 = vector.extract_strided_slice %277 {offsets = [0, 224], sizes = [2, 32], strides = [1, 1]} : vector<2x256xf32> to vector<2x32xf32>
    %290 = tpu.concatenate %288, %289 in 1 : vector<2x32xf32>, vector<2x32xf32> -> vector<2x64xf32>
    %291 = arith.mulf %284, %259 : vector<2x64xf32>
    %292 = arith.mulf %281, %287 : vector<2x64xf32>
    %293 = arith.addf %291, %292 : vector<2x64xf32>
    %294 = math.tanh %293 : vector<2x64xf32>
    %295 = arith.mulf %290, %294 : vector<2x64xf32>
    %296 = vector.extract_strided_slice %295 {offsets = [0, 0], sizes = [2, 32], strides = [1, 1]} : vector<2x64xf32> to vector<2x32xf32>
    %297 = vector.extract_strided_slice %295 {offsets = [0, 32], sizes = [2, 32], strides = [1, 1]} : vector<2x64xf32> to vector<2x32xf32>
    %298 = vector.extract_strided_slice %51 {offsets = [0, 7, 0], sizes = [2, 1, 128], strides = [1, 1, 1]} : vector<2x8x256xf32> to vector<2x1x128xf32>
    %299 = vector.shape_cast %298 : vector<2x1x128xf32> to vector<2x128xf32>
    %300 = vector.extract_strided_slice %51 {offsets = [0, 0, 128], sizes = [2, 1, 128], strides = [1, 1, 1]} : vector<2x8x256xf32> to vector<2x1x128xf32>
    %301 = vector.shape_cast %300 : vector<2x1x128xf32> to vector<2x128xf32>
    %302 = tpu.concatenate %299, %301 in 1 : vector<2x128xf32>, vector<2x128xf32> -> vector<2x256xf32>
    %cst_37 = arith.constant dense<0.000000e+00> : vector<2x256xf32>
    %303 = tpu.matmul %295, %52, %cst_37 {dimension_numbers = #tpu.dot_dimension_numbers<[1], [0], [0], [1], [0, 0, 1, 1], [], []>} : vector<2x64xf32>, vector<64x256xf32>, vector<2x256xf32> -> vector<2x256xf32>
    %304 = arith.addf %302, %303 : vector<2x256xf32>
    %305 = vector.broadcast %53 : vector<1x256xf32> to vector<2x256xf32>
    %306 = arith.addf %304, %305 : vector<2x256xf32>
    %307 = arith.negf %306 : vector<2x256xf32>
    %308 = math.exp %307 : vector<2x256xf32>
    %cst_38 = arith.constant 1.000000e+00 : f32
    %309 = vector.broadcast %cst_38 : f32 to vector<2x256xf32>
    %310 = arith.addf %309, %308 : vector<2x256xf32>
    %311 = arith.divf %309, %310 : vector<2x256xf32>
    %312 = math.tanh %306 : vector<2x256xf32>
    %313 = vector.extract_strided_slice %311 {offsets = [0, 0], sizes = [2, 32], strides = [1, 1]} : vector<2x256xf32> to vector<2x32xf32>
    %314 = vector.extract_strided_slice %311 {offsets = [0, 128], sizes = [2, 32], strides = [1, 1]} : vector<2x256xf32> to vector<2x32xf32>
    %315 = tpu.concatenate %313, %314 in 1 : vector<2x32xf32>, vector<2x32xf32> -> vector<2x64xf32>
    %316 = vector.extract_strided_slice %311 {offsets = [0, 32], sizes = [2, 32], strides = [1, 1]} : vector<2x256xf32> to vector<2x32xf32>
    %317 = vector.extract_strided_slice %311 {offsets = [0, 160], sizes = [2, 32], strides = [1, 1]} : vector<2x256xf32> to vector<2x32xf32>
    %318 = tpu.concatenate %316, %317 in 1 : vector<2x32xf32>, vector<2x32xf32> -> vector<2x64xf32>
    %319 = vector.extract_strided_slice %312 {offsets = [0, 64], sizes = [2, 32], strides = [1, 1]} : vector<2x256xf32> to vector<2x32xf32>
    %320 = vector.extract_strided_slice %312 {offsets = [0, 192], sizes = [2, 32], strides = [1, 1]} : vector<2x256xf32> to vector<2x32xf32>
    %321 = tpu.concatenate %319, %320 in 1 : vector<2x32xf32>, vector<2x32xf32> -> vector<2x64xf32>
    %322 = vector.extract_strided_slice %311 {offsets = [0, 96], sizes = [2, 32], strides = [1, 1]} : vector<2x256xf32> to vector<2x32xf32>
    %323 = vector.extract_strided_slice %311 {offsets = [0, 224], sizes = [2, 32], strides = [1, 1]} : vector<2x256xf32> to vector<2x32xf32>
    %324 = tpu.concatenate %322, %323 in 1 : vector<2x32xf32>, vector<2x32xf32> -> vector<2x64xf32>
    %325 = arith.mulf %318, %293 : vector<2x64xf32>
    %326 = arith.mulf %315, %321 : vector<2x64xf32>
    %327 = arith.addf %325, %326 : vector<2x64xf32>
    %328 = math.tanh %327 : vector<2x64xf32>
    %329 = arith.mulf %324, %328 : vector<2x64xf32>
    %330 = vector.extract_strided_slice %329 {offsets = [0, 0], sizes = [2, 32], strides = [1, 1]} : vector<2x64xf32> to vector<2x32xf32>
    %331 = vector.extract_strided_slice %329 {offsets = [0, 32], sizes = [2, 32], strides = [1, 1]} : vector<2x64xf32> to vector<2x32xf32>
    %332 = tpu.concatenate %92, %331 in 1 : vector<2x32xf32>, vector<2x32xf32> -> vector<2x64xf32>
    %333 = tpu.concatenate %126, %297 in 1 : vector<2x32xf32>, vector<2x32xf32> -> vector<2x64xf32>
    %334 = tpu.concatenate %160, %263 in 1 : vector<2x32xf32>, vector<2x32xf32> -> vector<2x64xf32>
    %335 = tpu.concatenate %194, %229 in 1 : vector<2x32xf32>, vector<2x32xf32> -> vector<2x64xf32>
    %336 = tpu.concatenate %228, %195 in 1 : vector<2x32xf32>, vector<2x32xf32> -> vector<2x64xf32>
    %337 = tpu.concatenate %262, %161 in 1 : vector<2x32xf32>, vector<2x32xf32> -> vector<2x64xf32>
    %338 = tpu.concatenate %296, %127 in 1 : vector<2x32xf32>, vector<2x32xf32> -> vector<2x64xf32>
    %339 = tpu.concatenate %330, %93 in 1 : vector<2x32xf32>, vector<2x32xf32> -> vector<2x64xf32>
    %340 = vector.shape_cast %332 : vector<2x64xf32> to vector<2x1x64xf32>
    %341 = vector.shape_cast %333 : vector<2x64xf32> to vector<2x1x64xf32>
    %342 = vector.shape_cast %334 : vector<2x64xf32> to vector<2x1x64xf32>
    %343 = vector.shape_cast %335 : vector<2x64xf32> to vector<2x1x64xf32>
    %344 = vector.shape_cast %336 : vector<2x64xf32> to vector<2x1x64xf32>
    %345 = vector.shape_cast %337 : vector<2x64xf32> to vector<2x1x64xf32>
    %346 = vector.shape_cast %338 : vector<2x64xf32> to vector<2x1x64xf32>
    %347 = vector.shape_cast %339 : vector<2x64xf32> to vector<2x1x64xf32>
    %348 = tpu.concatenate %340, %341, %342, %343, %344, %345, %346, %347 in 1 : vector<2x1x64xf32>, vector<2x1x64xf32>, vector<2x1x64xf32>, vector<2x1x64xf32>, vector<2x1x64xf32>, vector<2x1x64xf32>, vector<2x1x64xf32>, vector<2x1x64xf32> -> vector<2x8x64xf32>
    %349 = vector.shape_cast %348 : vector<2x8x64xf32> to vector<16x64xf32>
    %c0_39 = arith.constant 0 : index
    %c0_40 = arith.constant 0 : index
    %350 = vector.load %arg9[%c0_39, %c0_40] : memref<64x64xf32, #tpu.memory_space<vmem>>, vector<64x64xf32>
    %cst_41 = arith.constant dense<0.000000e+00> : vector<16x64xf32>
    %351 = tpu.matmul %349, %350, %cst_41 {dimension_numbers = #tpu.dot_dimension_numbers<[1], [0], [0], [1], [0, 0, 1, 1], [], []>} : vector<16x64xf32>, vector<64x64xf32>, vector<16x64xf32> -> vector<16x64xf32>
    %352 = vector.extract_strided_slice %351 {offsets = [0, 0], sizes = [16, 32], strides = [1, 1]} : vector<16x64xf32> to vector<16x32xf32>
    %353 = vector.shape_cast %352 : vector<16x32xf32> to vector<2x8x32xf32>
    %354 = vector.extract_strided_slice %351 {offsets = [0, 32], sizes = [16, 32], strides = [1, 1]} : vector<16x64xf32> to vector<16x32xf32>
    %355 = vector.shape_cast %354 : vector<16x32xf32> to vector<2x8x32xf32>
    %356 = tpu.iota {dimensions = array<i32: 1>} : vector<1x8xi32>
    %c0_42 = arith.constant 0 : index
    %c0_43 = arith.constant 0 : index
    %357 = vector.load %arg10[%c0_42, %c0_43] : memref<1x64xf32, #tpu.memory_space<vmem>>, vector<1x64xf32>
    %358 = vector.shape_cast %357 : vector<1x64xf32> to vector<1x64xf32>
    %359 = vector.broadcast %358 : vector<1x64xf32> to vector<2x64xf32>
    %c0_44 = arith.constant 0 : index
    %c0_45 = arith.constant 0 : index
    %360 = memref.load %arg0[%c0_44, %c0_45] : memref<2x3xi32, #tpu.memory_space<smem>>
    %361 = vector.broadcast %360 : i32 to vector<1x8xi32>
    %362 = arith.cmpi eq, %356, %361 : vector<1x8xi32>
    %363 = arith.extui %362 : vector<1x8xi1> to vector<1x8xi32>
    %364 = arith.sitofp %363 : vector<1x8xi32> to vector<1x8xf32>
    %c0_46 = arith.constant 0 : index
    %c1 = arith.constant 1 : index
    %365 = memref.load %arg0[%c0_46, %c1] : memref<2x3xi32, #tpu.memory_space<smem>>
    %366 = vector.broadcast %365 : i32 to vector<1x8xi32>
    %367 = arith.cmpi eq, %356, %366 : vector<1x8xi32>
    %368 = arith.extui %367 : vector<1x8xi1> to vector<1x8xi32>
    %369 = arith.sitofp %368 : vector<1x8xi32> to vector<1x8xf32>
    %c0_47 = arith.constant 0 : index
    %c2 = arith.constant 2 : index
    %370 = memref.load %arg0[%c0_47, %c2] : memref<2x3xi32, #tpu.memory_space<smem>>
    %371 = vector.broadcast %370 : i32 to vector<1x8xi32>
    %372 = arith.cmpi eq, %356, %371 : vector<1x8xi32>
    %373 = arith.extui %372 : vector<1x8xi1> to vector<1x8xi32>
    %374 = arith.sitofp %373 : vector<1x8xi32> to vector<1x8xf32>
    %375 = tpu.concatenate %364, %369, %374 in 0 : vector<1x8xf32>, vector<1x8xf32>, vector<1x8xf32> -> vector<3x8xf32>
    %376 = vector.extract_strided_slice %348 {offsets = [0, 0, 0], sizes = [1, 8, 64], strides = [1, 1, 1]} : vector<2x8x64xf32> to vector<1x8x64xf32>
    %377 = vector.shape_cast %376 : vector<1x8x64xf32> to vector<8x64xf32>
    %cst_48 = arith.constant dense<0.000000e+00> : vector<3x64xf32>
    %378 = tpu.matmul %375, %377, %cst_48 {dimension_numbers = #tpu.dot_dimension_numbers<[1], [0], [0], [1], [0, 0, 1, 1], [], []>} : vector<3x8xf32>, vector<8x64xf32>, vector<3x64xf32> -> vector<3x64xf32>
    %c1_49 = arith.constant 1 : index
    %c0_50 = arith.constant 0 : index
    %379 = memref.load %arg0[%c1_49, %c0_50] : memref<2x3xi32, #tpu.memory_space<smem>>
    %380 = vector.broadcast %379 : i32 to vector<1x8xi32>
    %381 = arith.cmpi eq, %356, %380 : vector<1x8xi32>
    %382 = arith.extui %381 : vector<1x8xi1> to vector<1x8xi32>
    %383 = arith.sitofp %382 : vector<1x8xi32> to vector<1x8xf32>
    %c1_51 = arith.constant 1 : index
    %c1_52 = arith.constant 1 : index
    %384 = memref.load %arg0[%c1_51, %c1_52] : memref<2x3xi32, #tpu.memory_space<smem>>
    %385 = vector.broadcast %384 : i32 to vector<1x8xi32>
    %386 = arith.cmpi eq, %356, %385 : vector<1x8xi32>
    %387 = arith.extui %386 : vector<1x8xi1> to vector<1x8xi32>
    %388 = arith.sitofp %387 : vector<1x8xi32> to vector<1x8xf32>
    %c1_53 = arith.constant 1 : index
    %c2_54 = arith.constant 2 : index
    %389 = memref.load %arg0[%c1_53, %c2_54] : memref<2x3xi32, #tpu.memory_space<smem>>
    %390 = vector.broadcast %389 : i32 to vector<1x8xi32>
    %391 = arith.cmpi eq, %356, %390 : vector<1x8xi32>
    %392 = arith.extui %391 : vector<1x8xi1> to vector<1x8xi32>
    %393 = arith.sitofp %392 : vector<1x8xi32> to vector<1x8xf32>
    %394 = tpu.concatenate %383, %388, %393 in 0 : vector<1x8xf32>, vector<1x8xf32>, vector<1x8xf32> -> vector<3x8xf32>
    %395 = vector.extract_strided_slice %348 {offsets = [1, 0, 0], sizes = [1, 8, 64], strides = [1, 1, 1]} : vector<2x8x64xf32> to vector<1x8x64xf32>
    %396 = vector.shape_cast %395 : vector<1x8x64xf32> to vector<8x64xf32>
    %cst_55 = arith.constant dense<0.000000e+00> : vector<3x64xf32>
    %397 = tpu.matmul %394, %396, %cst_55 {dimension_numbers = #tpu.dot_dimension_numbers<[1], [0], [0], [1], [0, 0, 1, 1], [], []>} : vector<3x8xf32>, vector<8x64xf32>, vector<3x64xf32> -> vector<3x64xf32>
    %398 = vector.extract_strided_slice %378 {offsets = [0, 0], sizes = [1, 64], strides = [1, 1]} : vector<3x64xf32> to vector<1x64xf32>
    %399 = vector.extract_strided_slice %397 {offsets = [0, 0], sizes = [1, 64], strides = [1, 1]} : vector<3x64xf32> to vector<1x64xf32>
    %400 = tpu.concatenate %398, %399 in 0 : vector<1x64xf32>, vector<1x64xf32> -> vector<2x64xf32>
    %401 = vector.extract_strided_slice %378 {offsets = [1, 0], sizes = [1, 64], strides = [1, 1]} : vector<3x64xf32> to vector<1x64xf32>
    %402 = vector.extract_strided_slice %397 {offsets = [1, 0], sizes = [1, 64], strides = [1, 1]} : vector<3x64xf32> to vector<1x64xf32>
    %403 = tpu.concatenate %401, %402 in 0 : vector<1x64xf32>, vector<1x64xf32> -> vector<2x64xf32>
    %404 = vector.extract_strided_slice %378 {offsets = [2, 0], sizes = [1, 64], strides = [1, 1]} : vector<3x64xf32> to vector<1x64xf32>
    %405 = vector.extract_strided_slice %397 {offsets = [2, 0], sizes = [1, 64], strides = [1, 1]} : vector<3x64xf32> to vector<1x64xf32>
    %406 = tpu.concatenate %404, %405 in 0 : vector<1x64xf32>, vector<1x64xf32> -> vector<2x64xf32>
    %407 = tpu.concatenate %359, %400, %403, %406 in 0 : vector<2x64xf32>, vector<2x64xf32>, vector<2x64xf32>, vector<2x64xf32> -> vector<8x64xf32>
    %c0_56 = arith.constant 0 : index
    %c0_57 = arith.constant 0 : index
    %408 = vector.load %arg11[%c0_56, %c0_57] : memref<64x128xf32, #tpu.memory_space<vmem>>, vector<64x128xf32>
    %cst_58 = arith.constant dense<0.000000e+00> : vector<8x128xf32>
    %409 = tpu.matmul %407, %408, %cst_58 {dimension_numbers = #tpu.dot_dimension_numbers<[1], [0], [0], [1], [0, 0, 1, 1], [], []>} : vector<8x64xf32>, vector<64x128xf32>, vector<8x128xf32> -> vector<8x128xf32>
    %410 = vector.shape_cast %409 : vector<8x128xf32> to vector<4x2x128xf32>
    %c0_59 = arith.constant 0 : index
    %c0_60 = arith.constant 0 : index
    %411 = vector.load %arg12[%c0_59, %c0_60] : memref<32x128xf32, #tpu.memory_space<vmem>>, vector<32x128xf32>
    %c0_61 = arith.constant 0 : index
    %c0_62 = arith.constant 0 : index
    %412 = vector.load %arg13[%c0_61, %c0_62] : memref<1x128xf32, #tpu.memory_space<vmem>>, vector<1x128xf32>
    %c0_63 = arith.constant 0 : index
    %c0_64 = arith.constant 0 : index
    %413 = vector.load %arg14[%c0_63, %c0_64] : memref<1x32xf32, #tpu.memory_space<vmem>>, vector<1x32xf32>
    %414 = vector.shape_cast %413 : vector<1x32xf32> to vector<1x32xf32>
    %415 = vector.broadcast %414 : vector<1x32xf32> to vector<2x32xf32>
    %c0_65 = arith.constant 0 : index
    %c0_66 = arith.constant 0 : index
    %416 = vector.load %arg15[%c0_65, %c0_66] : memref<1x32xf32, #tpu.memory_space<vmem>>, vector<1x32xf32>
    %417 = vector.shape_cast %416 : vector<1x32xf32> to vector<1x32xf32>
    %418 = vector.broadcast %417 : vector<1x32xf32> to vector<2x32xf32>
    %419 = vector.extract_strided_slice %410 {offsets = [0, 0, 0], sizes = [1, 2, 128], strides = [1, 1, 1]} : vector<4x2x128xf32> to vector<1x2x128xf32>
    %420 = vector.shape_cast %419 : vector<1x2x128xf32> to vector<2x128xf32>
    %cst_67 = arith.constant dense<0.000000e+00> : vector<2x128xf32>
    %421 = tpu.matmul %415, %411, %cst_67 {dimension_numbers = #tpu.dot_dimension_numbers<[1], [0], [0], [1], [0, 0, 1, 1], [], []>} : vector<2x32xf32>, vector<32x128xf32>, vector<2x128xf32> -> vector<2x128xf32>
    %422 = arith.addf %420, %421 : vector<2x128xf32>
    %423 = vector.broadcast %412 : vector<1x128xf32> to vector<2x128xf32>
    %424 = arith.addf %422, %423 : vector<2x128xf32>
    %425 = arith.negf %424 : vector<2x128xf32>
    %426 = math.exp %425 : vector<2x128xf32>
    %cst_68 = arith.constant 1.000000e+00 : f32
    %427 = vector.broadcast %cst_68 : f32 to vector<2x128xf32>
    %428 = arith.addf %427, %426 : vector<2x128xf32>
    %429 = arith.divf %427, %428 : vector<2x128xf32>
    %430 = math.tanh %424 : vector<2x128xf32>
    %431 = vector.extract_strided_slice %429 {offsets = [0, 32], sizes = [2, 32], strides = [1, 1]} : vector<2x128xf32> to vector<2x32xf32>
    %432 = arith.mulf %431, %418 : vector<2x32xf32>
    %433 = vector.extract_strided_slice %429 {offsets = [0, 0], sizes = [2, 32], strides = [1, 1]} : vector<2x128xf32> to vector<2x32xf32>
    %434 = vector.extract_strided_slice %430 {offsets = [0, 64], sizes = [2, 32], strides = [1, 1]} : vector<2x128xf32> to vector<2x32xf32>
    %435 = arith.mulf %433, %434 : vector<2x32xf32>
    %436 = arith.addf %432, %435 : vector<2x32xf32>
    %437 = vector.extract_strided_slice %429 {offsets = [0, 96], sizes = [2, 32], strides = [1, 1]} : vector<2x128xf32> to vector<2x32xf32>
    %438 = math.tanh %436 : vector<2x32xf32>
    %439 = arith.mulf %437, %438 : vector<2x32xf32>
    %440 = vector.extract_strided_slice %410 {offsets = [1, 0, 0], sizes = [1, 2, 128], strides = [1, 1, 1]} : vector<4x2x128xf32> to vector<1x2x128xf32>
    %441 = vector.shape_cast %440 : vector<1x2x128xf32> to vector<2x128xf32>
    %cst_69 = arith.constant dense<0.000000e+00> : vector<2x128xf32>
    %442 = tpu.matmul %439, %411, %cst_69 {dimension_numbers = #tpu.dot_dimension_numbers<[1], [0], [0], [1], [0, 0, 1, 1], [], []>} : vector<2x32xf32>, vector<32x128xf32>, vector<2x128xf32> -> vector<2x128xf32>
    %443 = arith.addf %441, %442 : vector<2x128xf32>
    %444 = vector.broadcast %412 : vector<1x128xf32> to vector<2x128xf32>
    %445 = arith.addf %443, %444 : vector<2x128xf32>
    %446 = arith.negf %445 : vector<2x128xf32>
    %447 = math.exp %446 : vector<2x128xf32>
    %cst_70 = arith.constant 1.000000e+00 : f32
    %448 = vector.broadcast %cst_70 : f32 to vector<2x128xf32>
    %449 = arith.addf %448, %447 : vector<2x128xf32>
    %450 = arith.divf %448, %449 : vector<2x128xf32>
    %451 = math.tanh %445 : vector<2x128xf32>
    %452 = vector.extract_strided_slice %450 {offsets = [0, 32], sizes = [2, 32], strides = [1, 1]} : vector<2x128xf32> to vector<2x32xf32>
    %453 = arith.mulf %452, %436 : vector<2x32xf32>
    %454 = vector.extract_strided_slice %450 {offsets = [0, 0], sizes = [2, 32], strides = [1, 1]} : vector<2x128xf32> to vector<2x32xf32>
    %455 = vector.extract_strided_slice %451 {offsets = [0, 64], sizes = [2, 32], strides = [1, 1]} : vector<2x128xf32> to vector<2x32xf32>
    %456 = arith.mulf %454, %455 : vector<2x32xf32>
    %457 = arith.addf %453, %456 : vector<2x32xf32>
    %458 = vector.extract_strided_slice %450 {offsets = [0, 96], sizes = [2, 32], strides = [1, 1]} : vector<2x128xf32> to vector<2x32xf32>
    %459 = math.tanh %457 : vector<2x32xf32>
    %460 = arith.mulf %458, %459 : vector<2x32xf32>
    %461 = vector.extract_strided_slice %410 {offsets = [2, 0, 0], sizes = [1, 2, 128], strides = [1, 1, 1]} : vector<4x2x128xf32> to vector<1x2x128xf32>
    %462 = vector.shape_cast %461 : vector<1x2x128xf32> to vector<2x128xf32>
    %cst_71 = arith.constant dense<0.000000e+00> : vector<2x128xf32>
    %463 = tpu.matmul %460, %411, %cst_71 {dimension_numbers = #tpu.dot_dimension_numbers<[1], [0], [0], [1], [0, 0, 1, 1], [], []>} : vector<2x32xf32>, vector<32x128xf32>, vector<2x128xf32> -> vector<2x128xf32>
    %464 = arith.addf %462, %463 : vector<2x128xf32>
    %465 = vector.broadcast %412 : vector<1x128xf32> to vector<2x128xf32>
    %466 = arith.addf %464, %465 : vector<2x128xf32>
    %467 = arith.negf %466 : vector<2x128xf32>
    %468 = math.exp %467 : vector<2x128xf32>
    %cst_72 = arith.constant 1.000000e+00 : f32
    %469 = vector.broadcast %cst_72 : f32 to vector<2x128xf32>
    %470 = arith.addf %469, %468 : vector<2x128xf32>
    %471 = arith.divf %469, %470 : vector<2x128xf32>
    %472 = math.tanh %466 : vector<2x128xf32>
    %473 = vector.extract_strided_slice %471 {offsets = [0, 32], sizes = [2, 32], strides = [1, 1]} : vector<2x128xf32> to vector<2x32xf32>
    %474 = arith.mulf %473, %457 : vector<2x32xf32>
    %475 = vector.extract_strided_slice %471 {offsets = [0, 0], sizes = [2, 32], strides = [1, 1]} : vector<2x128xf32> to vector<2x32xf32>
    %476 = vector.extract_strided_slice %472 {offsets = [0, 64], sizes = [2, 32], strides = [1, 1]} : vector<2x128xf32> to vector<2x32xf32>
    %477 = arith.mulf %475, %476 : vector<2x32xf32>
    %478 = arith.addf %474, %477 : vector<2x32xf32>
    %479 = vector.extract_strided_slice %471 {offsets = [0, 96], sizes = [2, 32], strides = [1, 1]} : vector<2x128xf32> to vector<2x32xf32>
    %480 = math.tanh %478 : vector<2x32xf32>
    %481 = arith.mulf %479, %480 : vector<2x32xf32>
    %482 = vector.extract_strided_slice %410 {offsets = [3, 0, 0], sizes = [1, 2, 128], strides = [1, 1, 1]} : vector<4x2x128xf32> to vector<1x2x128xf32>
    %483 = vector.shape_cast %482 : vector<1x2x128xf32> to vector<2x128xf32>
    %cst_73 = arith.constant dense<0.000000e+00> : vector<2x128xf32>
    %484 = tpu.matmul %481, %411, %cst_73 {dimension_numbers = #tpu.dot_dimension_numbers<[1], [0], [0], [1], [0, 0, 1, 1], [], []>} : vector<2x32xf32>, vector<32x128xf32>, vector<2x128xf32> -> vector<2x128xf32>
    %485 = arith.addf %483, %484 : vector<2x128xf32>
    %486 = vector.broadcast %412 : vector<1x128xf32> to vector<2x128xf32>
    %487 = arith.addf %485, %486 : vector<2x128xf32>
    %488 = arith.negf %487 : vector<2x128xf32>
    %489 = math.exp %488 : vector<2x128xf32>
    %cst_74 = arith.constant 1.000000e+00 : f32
    %490 = vector.broadcast %cst_74 : f32 to vector<2x128xf32>
    %491 = arith.addf %490, %489 : vector<2x128xf32>
    %492 = arith.divf %490, %491 : vector<2x128xf32>
    %493 = math.tanh %487 : vector<2x128xf32>
    %494 = vector.extract_strided_slice %492 {offsets = [0, 32], sizes = [2, 32], strides = [1, 1]} : vector<2x128xf32> to vector<2x32xf32>
    %495 = arith.mulf %494, %478 : vector<2x32xf32>
    %496 = vector.extract_strided_slice %492 {offsets = [0, 0], sizes = [2, 32], strides = [1, 1]} : vector<2x128xf32> to vector<2x32xf32>
    %497 = vector.extract_strided_slice %493 {offsets = [0, 64], sizes = [2, 32], strides = [1, 1]} : vector<2x128xf32> to vector<2x32xf32>
    %498 = arith.mulf %496, %497 : vector<2x32xf32>
    %499 = arith.addf %495, %498 : vector<2x32xf32>
    %500 = vector.extract_strided_slice %492 {offsets = [0, 96], sizes = [2, 32], strides = [1, 1]} : vector<2x128xf32> to vector<2x32xf32>
    %501 = math.tanh %499 : vector<2x32xf32>
    %502 = arith.mulf %500, %501 : vector<2x32xf32>
    %503 = vector.shape_cast %439 : vector<2x32xf32> to vector<2x1x32xf32>
    %504 = vector.shape_cast %460 : vector<2x32xf32> to vector<2x1x32xf32>
    %505 = vector.shape_cast %481 : vector<2x32xf32> to vector<2x1x32xf32>
    %506 = vector.shape_cast %502 : vector<2x32xf32> to vector<2x1x32xf32>
    %507 = tpu.concatenate %503, %504, %505, %506 in 1 : vector<2x1x32xf32>, vector<2x1x32xf32>, vector<2x1x32xf32>, vector<2x1x32xf32> -> vector<2x4x32xf32>
    %508 = vector.shape_cast %507 : vector<2x4x32xf32> to vector<8x32xf32>
    %c0_75 = arith.constant 0 : index
    %c0_76 = arith.constant 0 : index
    %509 = vector.load %arg16[%c0_75, %c0_76] : memref<32x32xf32, #tpu.memory_space<vmem>>, vector<32x32xf32>
    %cst_77 = arith.constant dense<0.000000e+00> : vector<8x32xf32>
    %510 = tpu.matmul %508, %509, %cst_77 {dimension_numbers = #tpu.dot_dimension_numbers<[1], [0], [0], [1], [0, 0, 1, 1], [], []>} : vector<8x32xf32>, vector<32x32xf32>, vector<8x32xf32> -> vector<8x32xf32>
    %511 = vector.shape_cast %510 : vector<8x32xf32> to vector<2x4x32xf32>
    %512 = vector.shape_cast %355 : vector<2x8x32xf32> to vector<2x1x8x32xf32>
    %513 = vector.shape_cast %511 : vector<2x4x32xf32> to vector<2x4x1x32xf32>
    %514 = vector.broadcast %512 : vector<2x1x8x32xf32> to vector<2x4x8x32xf32>
    %515 = vector.broadcast %513 : vector<2x4x1x32xf32> to vector<2x4x8x32xf32>
    %516 = arith.addf %514, %515 : vector<2x4x8x32xf32>
    %517 = math.tanh %516 : vector<2x4x8x32xf32>
    %c0_78 = arith.constant 0 : index
    %c0_79 = arith.constant 0 : index
    %518 = vector.load %arg17[%c0_78, %c0_79] : memref<1x32xf32, #tpu.memory_space<vmem>>, vector<1x32xf32>
    %519 = vector.shape_cast %518 : vector<1x32xf32> to vector<1x1x1x32xf32>
    %520 = vector.broadcast %519 : vector<1x1x1x32xf32> to vector<2x4x8x32xf32>
    %521 = arith.mulf %517, %520 : vector<2x4x8x32xf32>
    %cst_80 = arith.constant dense<0.000000e+00> : vector<2x4x8xf32>
    %522 = vector.multi_reduction <add>, %521, %cst_80 [3] : vector<2x4x8x32xf32> to vector<2x4x8xf32>
    %cst_81 = arith.constant dense<0xFF800000> : vector<2x4xf32>
    %523 = vector.multi_reduction <maximumf>, %522, %cst_81 [2] : vector<2x4x8xf32> to vector<2x4xf32>
    %524 = vector.shape_cast %523 : vector<2x4xf32> to vector<2x4x1xf32>
    %525 = vector.broadcast %524 : vector<2x4x1xf32> to vector<2x4x8xf32>
    %526 = arith.subf %522, %525 : vector<2x4x8xf32>
    %527 = math.exp %526 : vector<2x4x8xf32>
    %cst_82 = arith.constant dense<0.000000e+00> : vector<2x4xf32>
    %528 = vector.multi_reduction <add>, %527, %cst_82 [2] : vector<2x4x8xf32> to vector<2x4xf32>
    %529 = vector.shape_cast %528 : vector<2x4xf32> to vector<2x4x1xf32>
    %530 = vector.broadcast %529 : vector<2x4x1xf32> to vector<2x4x8xf32>
    %531 = arith.divf %527, %530 : vector<2x4x8xf32>
    %cst_83 = arith.constant dense<0.000000e+00> : vector<2x4x32xf32>
    %532 = tpu.matmul %531, %355, %cst_83 {dimension_numbers = #tpu.dot_dimension_numbers<[2], [1], [1], [2], [0, 0, 0, 1, 1, 2], [0], [0]>} : vector<2x4x8xf32>, vector<2x8x32xf32>, vector<2x4x32xf32> -> vector<2x4x32xf32>
    %533 = vector.shape_cast %532 : vector<2x4x32xf32> to vector<8x32xf32>
    %c0_84 = arith.constant 0 : index
    %c0_85 = arith.constant 0 : index
    %534 = vector.load %arg18[%c0_84, %c0_85] : memref<32x32xf32, #tpu.memory_space<vmem>>, vector<32x32xf32>
    %cst_86 = arith.constant dense<0.000000e+00> : vector<8x32xf32>
    %535 = tpu.matmul %533, %534, %cst_86 {dimension_numbers = #tpu.dot_dimension_numbers<[1], [0], [0], [1], [0, 0, 1, 1], [], []>} : vector<8x32xf32>, vector<32x32xf32>, vector<8x32xf32> -> vector<8x32xf32>
    %536 = vector.shape_cast %535 : vector<8x32xf32> to vector<2x4x32xf32>
    %537 = vector.shape_cast %353 : vector<2x8x32xf32> to vector<2x1x8x32xf32>
    %538 = vector.shape_cast %536 : vector<2x4x32xf32> to vector<2x4x1x32xf32>
    %539 = vector.broadcast %537 : vector<2x1x8x32xf32> to vector<2x4x8x32xf32>
    %540 = vector.broadcast %538 : vector<2x4x1x32xf32> to vector<2x4x8x32xf32>
    %541 = arith.addf %539, %540 : vector<2x4x8x32xf32>
    %542 = math.tanh %541 : vector<2x4x8x32xf32>
    %c0_87 = arith.constant 0 : index
    %c0_88 = arith.constant 0 : index
    %543 = vector.load %arg19[%c0_87, %c0_88] : memref<1x32xf32, #tpu.memory_space<vmem>>, vector<1x32xf32>
    %544 = vector.shape_cast %543 : vector<1x32xf32> to vector<1x1x1x32xf32>
    %545 = vector.broadcast %544 : vector<1x1x1x32xf32> to vector<2x4x8x32xf32>
    %546 = arith.mulf %542, %545 : vector<2x4x8x32xf32>
    %cst_89 = arith.constant dense<0.000000e+00> : vector<2x4x8xf32>
    %547 = vector.multi_reduction <add>, %546, %cst_89 [3] : vector<2x4x8x32xf32> to vector<2x4x8xf32>
    %c0_90 = arith.constant 0 : index
    %c0_91 = arith.constant 0 : index
    %c0_92 = arith.constant 0 : index
    %548 = vector.load %arg20[%c0_90, %c0_91, %c0_92] : memref<2x4x8xf32, #tpu.memory_space<vmem>>, vector<2x4x8xf32>
    tpu.vector_store %arg20[%c0_90, %c0_91, %c0_92], %547 {strides = array<i32>} : memref<2x4x8xf32, #tpu.memory_space<vmem>>, vector<2x4x8xf32>,
    return
  }
}

</mosaic_0001>

<llo_original>
// kernel: tpu_custom_call.1
$region0: #{tpu_custom_call.1}
  #allocation0 [shape = 'u32[]', space=smem, size = 0x4, offset = 0x4, fixed_abs, tag = 'smem constant byte address 0x4 - core index']
  #allocation1 [shape = 'u32[144,128]{1,0:T(1,128)}', space=vmem, size = 0x12000, scoped, tag = 'internal scratch']
  %s0 = inlined_call_operand.hbm [shape: s32[2,3], index: 0, kind: input, shape index: {}]
  %s1 = inlined_call_operand.hbm [shape: f32[16,16,32], index: 1, kind: input, shape index: {}]
  %s2 = inlined_call_operand.hbm [shape: f32[32,384], index: 2, kind: input, shape index: {}]
  %s3 = inlined_call_operand.hbm [shape: f32[1,96], index: 3, kind: input, shape index: {}]
  %s4 = inlined_call_operand.hbm [shape: f32[96,256], index: 4, kind: input, shape index: {}]
  %s5 = inlined_call_operand.hbm [shape: f32[64,256], index: 5, kind: input, shape index: {}]
  %s6 = inlined_call_operand.hbm [shape: f32[1,256], index: 6, kind: input, shape index: {}]
  %s7 = inlined_call_operand.hbm [shape: f32[1,64], index: 7, kind: input, shape index: {}]
  %s8 = inlined_call_operand.hbm [shape: f32[1,64], index: 8, kind: input, shape index: {}]
  %s9 = inlined_call_operand.hbm [shape: f32[64,64], index: 9, kind: input, shape index: {}]
  %s10 = inlined_call_operand.hbm [shape: f32[1,64], index: 10, kind: input, shape index: {}]
  %s11 = inlined_call_operand.hbm [shape: f32[64,128], index: 11, kind: input, shape index: {}]
  %s12 = inlined_call_operand.hbm [shape: f32[32,128], index: 12, kind: input, shape index: {}]
  %s13 = inlined_call_operand.hbm [shape: f32[1,128], index: 13, kind: input, shape index: {}]
  %s14 = inlined_call_operand.hbm [shape: f32[1,32], index: 14, kind: input, shape index: {}]
  %s15 = inlined_call_operand.hbm [shape: f32[1,32], index: 15, kind: input, shape index: {}]
  %s16 = inlined_call_operand.hbm [shape: f32[32,32], index: 16, kind: input, shape index: {}]
  %s17 = inlined_call_operand.hbm [shape: f32[1,32], index: 17, kind: input, shape index: {}]
  %s18 = inlined_call_operand.vmem [shape: f32[32,32], index: 18, kind: input, shape index: {}]
  %s19 = inlined_call_operand.vmem [shape: f32[1,32], index: 19, kind: input, shape index: {}]
  %s20 = inlined_call_operand.hbm [shape: f32[2,4,8], index: 20, kind: output, shape index: {}]
  %s21 = sld [smem:[#allocation0]]
  $region162: #{tpu_custom_call.1} parent=0
    _
  %s23 = ssub.s32 1, %s21
  %s24 = scalar_select 0, %s23, %s21
  $region1: #{tpu_custom_call.1} parent=0
    #allocation2 [shape = 'u8[1024]{0}', space=smem, size = 0x400, scoped, tag = 'input window, operand 0, single buffered']
    #allocation3 [shape = 's32[1]{0}', space=sflag, size = 0x4, scoped, tag = 'scoped memory for tpu_custom_call.1']
    #allocation4 [shape = 's32[1]{0}', space=sflag, size = 0x4, scoped, tag = 'scoped memory for tpu_custom_call.1']
    #allocation5 [shape = 's32[1]{0}', space=sflag, size = 0x4, scoped, tag = 'scoped memory for tpu_custom_call.1']
    #allocation6 [shape = 'u8[131072]{0}', space=vmem, size = 0x20000, scoped, tag = 'input window, operand 1, single buffered']
    #allocation7 [shape = 'u8[49152]{0}', space=vmem, size = 0xc000, scoped, tag = 'input window, operand 2, single buffered']
    #allocation8 [shape = 's32[1]{0}', space=sflag, size = 0x4, scoped, tag = 'scoped memory for tpu_custom_call.1']
    #allocation9 [shape = 'u8[512]{0}', space=vmem, size = 0x400, scoped, tag = 'input window, operand 3, single buffered']
    #allocation10 [shape = 'u8[98304]{0}', space=vmem, size = 0x18000, scoped, tag = 'input window, operand 4, single buffered']
    #allocation11 [shape = 's32[1]{0}', space=sflag, size = 0x4, scoped, tag = 'scoped memory for tpu_custom_call.1']
    #allocation12 [shape = 'u8[65536]{0}', space=vmem, size = 0x10000, scoped, tag = 'input window, operand 5, single buffered']
    #allocation13 [shape = 'u8[1024]{0}', space=vmem, size = 0x400, scoped, tag = 'input window, operand 6, single buffered']
    #allocation14 [shape = 's32[1]{0}', space=sflag, size = 0x4, scoped, tag = 'scoped memory for tpu_custom_call.1']
    #allocation15 [shape = 'u8[512]{0}', space=vmem, size = 0x400, scoped, tag = 'input window, operand 7, single buffered']
    #allocation16 [shape = 'u8[512]{0}', space=vmem, size = 0x400, scoped, tag = 'input window, operand 8, single buffered']
    #allocation17 [shape = 's32[1]{0}', space=sflag, size = 0x4, scoped, tag = 'scoped memory for tpu_custom_call.1']
    #allocation18 [shape = 'u8[32768]{0}', space=vmem, size = 0x8000, scoped, tag = 'input window, operand 9, single buffered']
    #allocation19 [shape = 'u8[512]{0}', space=vmem, size = 0x400, scoped, tag = 'input window, operand 10, single buffered']
    #allocation20 [shape = 's32[1]{0}', space=sflag, size = 0x4, scoped, tag = 'scoped memory for tpu_custom_call.1']
    #allocation21 [shape = 'u8[32768]{0}', space=vmem, size = 0x8000, scoped, tag = 'input window, operand 11, single buffered']
    #allocation22 [shape = 'u8[16384]{0}', space=vmem, size = 0x4000, scoped, tag = 'input window, operand 12, single buffered']
    #allocation23 [shape = 's32[1]{0}', space=sflag, size = 0x4, scoped, tag = 'scoped memory for tpu_custom_call.1']
    #allocation24 [shape = 'u8[512]{0}', space=vmem, size = 0x400, scoped, tag = 'input window, operand 13, single buffered']
    #allocation25 [shape = 'u8[512]{0}', space=vmem, size = 0x400, scoped, tag = 'input window, operand 14, single buffered']
    #allocation26 [shape = 's32[1]{0}', space=sflag, size = 0x4, scoped, tag = 'scoped memory for tpu_custom_call.1']
    #allocation27 [shape = 'u8[512]{0}', space=vmem, size = 0x400, scoped, tag = 'input window, operand 15, single buffered']
    #allocation28 [shape = 'u8[16384]{0}', space=vmem, size = 0x4000, scoped, tag = 'input window, operand 16, single buffered']
    #allocation29 [shape = 's32[1]{0}', space=sflag, size = 0x4, scoped, tag = 'scoped memory for tpu_custom_call.1']
    #allocation30 [shape = 'u8[512]{0}', space=vmem, size = 0x400, scoped, tag = 'input window, operand 17, single buffered']
    #allocation31 [shape = 'u8[4096]{0}', space=vmem, size = 0x1000, scoped, tag = 'output window, operand 0, single buffered']
    %25 = vsyncpa [#allocation5], 0
    %26 = vsyncpa [#allocation3], 0
    %27 = vsyncpa [#allocation8], 0
    %28 = vsyncpa [#allocation11], 0
    %29 = vsyncpa [#allocation14], 0
    %30 = vsyncpa [#allocation17], 0
    %31 = vsyncpa [#allocation20], 0
    %32 = vsyncpa [#allocation23], 0
    %33 = vsyncpa [#allocation26], 0
    %34 = vsyncpa [#allocation29], 0
    %35 = vsyncpa [#allocation4], 0
    // Predicated region
    $region2: #{tpu_custom_call.1} parent=1 // pred_check
      _
    $region3: #{tpu_custom_call.1} parent=1 // pred_check_branch
      %37 = sbr.rel (0) target = $region5
    $region4: #{tpu_custom_call.1} parent=1 // pred_region
      %s39 = ssub.s32 32, 32
      %40 = vsyncadd [#allocation5], %s39
      %43 = dma.hbm_to_smem %s0, 32, [#allocation2], [#allocation5]
    $region5: #{tpu_custom_call.1} parent=1 // pred_fallthru
      _
    // Predicated region
    $region6: #{tpu_custom_call.1} parent=1 // pred_check
      _
    $region7: #{tpu_custom_call.1} parent=1 // pred_check_branch
      %45 = sbr.rel (0) target = $region9
    $region8: #{tpu_custom_call.1} parent=1 // pred_region
      %s47 = ssub.s32 4096, 4096
      %48 = vsyncadd [#allocation3], %s47
      %s49 = sshll.u32 [#allocation6], 4
      %s50 = int_to_ptr.vmem [resolvable:$true] %s49
      %55 = dma.hbm_to_vmem [thread:$0]  %s1, 4096, %s50, [#allocation3], 128, 128, 8
    $region9: #{tpu_custom_call.1} parent=1 // pred_fallthru
      _
    // Predicated region
    $region10: #{tpu_custom_call.1} parent=1 // pred_check
      _
    $region11: #{tpu_custom_call.1} parent=1 // pred_check_branch
      %57 = sbr.rel (0) target = $region13
    $region12: #{tpu_custom_call.1} parent=1 // pred_region
      %s59 = ssub.s32 1536, 1536
      %60 = vsyncadd [#allocation8], %s59
      %s61 = sshll.u32 [#allocation7], 4
      %s62 = int_to_ptr.vmem [resolvable:$true] %s61
      %67 = dma.hbm_to_vmem [thread:$0]  %s2, 1536, %s62, [#allocation8], 384, 384, 24
    $region13: #{tpu_custom_call.1} parent=1 // pred_fallthru
      _
    // Predicated region
    $region14: #{tpu_custom_call.1} parent=1 // pred_check
      _
    $region15: #{tpu_custom_call.1} parent=1 // pred_check_branch
      %69 = sbr.rel (0) target = $region17
    $region16: #{tpu_custom_call.1} parent=1 // pred_region
      %s71 = ssub.s32 16, 16
      %72 = vsyncadd [#allocation8], %s71
      %s74 = sshll.u32 [#allocation9], 4
      %s75 = int_to_ptr.vmem [resolvable:$true] %s74
      %77 = dma.hbm_to_vmem [thread:$0]  %s3, 16, %s75, [#allocation8]
    $region17: #{tpu_custom_call.1} parent=1 // pred_fallthru
      _
    // Predicated region
    $region18: #{tpu_custom_call.1} parent=1 // pred_check
      _
    $region19: #{tpu_custom_call.1} parent=1 // pred_check_branch
      %79 = sbr.rel (0) target = $region21
    $region20: #{tpu_custom_call.1} parent=1 // pred_region
      %s81 = ssub.s32 3072, 3072
      %82 = vsyncadd [#allocation11], %s81
      %s83 = sshll.u32 [#allocation10], 4
      %s84 = int_to_ptr.vmem [resolvable:$true] %s83
      %89 = dma.hbm_to_vmem [thread:$0]  %s4, 3072, %s84, [#allocation11], 256, 256, 16
    $region21: #{tpu_custom_call.1} parent=1 // pred_fallthru
      _
    // Predicated region
    $region22: #{tpu_custom_call.1} parent=1 // pred_check
      _
    $region23: #{tpu_custom_call.1} parent=1 // pred_check_branch
      %91 = sbr.rel (0) target = $region25
    $region24: #{tpu_custom_call.1} parent=1 // pred_region
      %s93 = ssub.s32 2048, 2048
      %94 = vsyncadd [#allocation11], %s93
      %s95 = sshll.u32 [#allocation12], 4
      %s96 = int_to_ptr.vmem [resolvable:$true] %s95
      %101 = dma.hbm_to_vmem [thread:$0]  %s5, 2048, %s96, [#allocation11], 256, 256, 16
    $region25: #{tpu_custom_call.1} parent=1 // pred_fallthru
      _
    // Predicated region
    $region26: #{tpu_custom_call.1} parent=1 // pred_check
      _
    $region27: #{tpu_custom_call.1} parent=1 // pred_check_branch
      %103 = sbr.rel (0) target = $region29
    $region28: #{tpu_custom_call.1} parent=1 // pred_region
      %s105 = ssub.s32 32, 32
      %106 = vsyncadd [#allocation14], %s105
      %s108 = sshll.u32 [#allocation13], 4
      %s109 = int_to_ptr.vmem [resolvable:$true] %s108
      %111 = dma.hbm_to_vmem [thread:$0]  %s6, 32, %s109, [#allocation14]
    $region29: #{tpu_custom_call.1} parent=1 // pred_fallthru
      _
    // Predicated region
    $region30: #{tpu_custom_call.1} parent=1 // pred_check
      _
    $region31: #{tpu_custom_call.1} parent=1 // pred_check_branch
      %113 = sbr.rel (0) target = $region33
    $region32: #{tpu_custom_call.1} parent=1 // pred_region
      %s115 = ssub.s32 16, 16
      %116 = vsyncadd [#allocation14], %s115
      %s118 = sshll.u32 [#allocation15], 4
      %s119 = int_to_ptr.vmem [resolvable:$true] %s118
      %121 = dma.hbm_to_vmem [thread:$0]  %s7, 16, %s119, [#allocation14]
    $region33: #{tpu_custom_call.1} parent=1 // pred_fallthru
      _
    // Predicated region
    $region34: #{tpu_custom_call.1} parent=1 // pred_check
      _
    $region35: #{tpu_custom_call.1} parent=1 // pred_check_branch
      %123 = sbr.rel (0) target = $region37
    $region36: #{tpu_custom_call.1} parent=1 // pred_region
      %s125 = ssub.s32 16, 16
      %126 = vsyncadd [#allocation17], %s125
      %s128 = sshll.u32 [#allocation16], 4
      %s129 = int_to_ptr.vmem [resolvable:$true] %s128
      %131 = dma.hbm_to_vmem [thread:$0]  %s8, 16, %s129, [#allocation17]
    $region37: #{tpu_custom_call.1} parent=1 // pred_fallthru
      _
    // Predicated region
    $region38: #{tpu_custom_call.1} parent=1 // pred_check
      _
    $region39: #{tpu_custom_call.1} parent=1 // pred_check_branch
      %133 = sbr.rel (0) target = $region41
    $region40: #{tpu_custom_call.1} parent=1 // pred_region
      %s135 = ssub.s32 1024, 1024
      %136 = vsyncadd [#allocation17], %s135
      %s137 = sshll.u32 [#allocation18], 4
      %s138 = int_to_ptr.vmem [resolvable:$true] %s137
      %143 = dma.hbm_to_vmem [thread:$0]  %s9, 1024, %s138, [#allocation17], 128, 128, 8
    $region41: #{tpu_custom_call.1} parent=1 // pred_fallthru
      _
    // Predicated region
    $region42: #{tpu_custom_call.1} parent=1 // pred_check
      _
    $region43: #{tpu_custom_call.1} parent=1 // pred_check_branch
      %145 = sbr.rel (0) target = $region45
    $region44: #{tpu_custom_call.1} parent=1 // pred_region
      %s147 = ssub.s32 16, 16
      %148 = vsyncadd [#allocation20], %s147
      %s150 = sshll.u32 [#allocation19], 4
      %s151 = int_to_ptr.vmem [resolvable:$true] %s150
      %153 = dma.hbm_to_vmem [thread:$0]  %s10, 16, %s151, [#allocation20]
    $region45: #{tpu_custom_call.1} parent=1 // pred_fallthru
      _
    // Predicated region
    $region46: #{tpu_custom_call.1} parent=1 // pred_check
      _
    $region47: #{tpu_custom_call.1} parent=1 // pred_check_branch
      %155 = sbr.rel (0) target = $region49
    $region48: #{tpu_custom_call.1} parent=1 // pred_region
      %s157 = ssub.s32 1024, 1024
      %158 = vsyncadd [#allocation20], %s157
      %s159 = sshll.u32 [#allocation21], 4
      %s160 = int_to_ptr.vmem [resolvable:$true] %s159
      %165 = dma.hbm_to_vmem [thread:$0]  %s11, 1024, %s160, [#allocation20], 128, 128, 8
    $region49: #{tpu_custom_call.1} parent=1 // pred_fallthru
      _
    // Predicated region
    $region50: #{tpu_custom_call.1} parent=1 // pred_check
      _
    $region51: #{tpu_custom_call.1} parent=1 // pred_check_branch
      %167 = sbr.rel (0) target = $region53
    $region52: #{tpu_custom_call.1} parent=1 // pred_region
      %s169 = ssub.s32 512, 512
      %170 = vsyncadd [#allocation23], %s169
      %s171 = sshll.u32 [#allocation22], 4
      %s172 = int_to_ptr.vmem [resolvable:$true] %s171
      %177 = dma.hbm_to_vmem [thread:$0]  %s12, 512, %s172, [#allocation23], 128, 128, 8
    $region53: #{tpu_custom_call.1} parent=1 // pred_fallthru
      _
    // Predicated region
    $region54: #{tpu_custom_call.1} parent=1 // pred_check
      _
    $region55: #{tpu_custom_call.1} parent=1 // pred_check_branch
      %179 = sbr.rel (0) target = $region57
    $region56: #{tpu_custom_call.1} parent=1 // pred_region
      %s181 = ssub.s32 16, 16
      %182 = vsyncadd [#allocation23], %s181
      %s184 = sshll.u32 [#allocation24], 4
      %s185 = int_to_ptr.vmem [resolvable:$true] %s184
      %187 = dma.hbm_to_vmem [thread:$0]  %s13, 16, %s185, [#allocation23]
    $region57: #{tpu_custom_call.1} parent=1 // pred_fallthru
      _
    // Predicated region
    $region58: #{tpu_custom_call.1} parent=1 // pred_check
      _
    $region59: #{tpu_custom_call.1} parent=1 // pred_check_branch
      %189 = sbr.rel (0) target = $region61
    $region60: #{tpu_custom_call.1} parent=1 // pred_region
      %s191 = ssub.s32 16, 16
      %192 = vsyncadd [#allocation26], %s191
      %s194 = sshll.u32 [#allocation25], 4
      %s195 = int_to_ptr.vmem [resolvable:$true] %s194
      %197 = dma.hbm_to_vmem [thread:$0]  %s14, 16, %s195, [#allocation26]
    $region61: #{tpu_custom_call.1} parent=1 // pred_fallthru
      _
    // Predicated region
    $region62: #{tpu_custom_call.1} parent=1 // pred_check
      _
    $region63: #{tpu_custom_call.1} parent=1 // pred_check_branch
      %199 = sbr.rel (0) target = $region65
    $region64: #{tpu_custom_call.1} parent=1 // pred_region
      %s201 = ssub.s32 16, 16
      %202 = vsyncadd [#allocation26], %s201
      %s204 = sshll.u32 [#allocation27], 4
      %s205 = int_to_ptr.vmem [resolvable:$true] %s204
      %207 = dma.hbm_to_vmem [thread:$0]  %s15, 16, %s205, [#allocation26]
    $region65: #{tpu_custom_call.1} parent=1 // pred_fallthru
      _
    // Predicated region
    $region66: #{tpu_custom_call.1} parent=1 // pred_check
      _
    $region67: #{tpu_custom_call.1} parent=1 // pred_check_branch
      %209 = sbr.rel (0) target = $region69
    $region68: #{tpu_custom_call.1} parent=1 // pred_region
      %s211 = ssub.s32 512, 512
      %212 = vsyncadd [#allocation29], %s211
      %s213 = sshll.u32 [#allocation28], 4
      %s214 = int_to_ptr.vmem [resolvable:$true] %s213
      %219 = dma.hbm_to_vmem [thread:$0]  %s16, 512, %s214, [#allocation29], 128, 128, 8
    $region69: #{tpu_custom_call.1} parent=1 // pred_fallthru
      _
    // Predicated region
    $region70: #{tpu_custom_call.1} parent=1 // pred_check
      _
    $region71: #{tpu_custom_call.1} parent=1 // pred_check_branch
      %221 = sbr.rel (0) target = $region73
    $region72: #{tpu_custom_call.1} parent=1 // pred_region
      %s223 = ssub.s32 16, 16
      %224 = vsyncadd [#allocation29], %s223
      %s226 = sshll.u32 [#allocation30], 4
      %s227 = int_to_ptr.vmem [resolvable:$true] %s226
      %229 = dma.hbm_to_vmem [thread:$0]  %s17, 16, %s227, [#allocation29]
    $region73: #{tpu_custom_call.1} parent=1 // pred_fallthru
      _
    // Predicated region
    $region74: #{tpu_custom_call.1} parent=1 // pred_check
      _
    $region75: #{tpu_custom_call.1} parent=1 // pred_check_branch
      %231 = sbr.rel (0) target = $region77
    $region76: #{tpu_custom_call.1} parent=1 // pred_region
      _
    $region77: #{tpu_custom_call.1} parent=1 // pred_fallthru
      _
    // Predicated region
    $region78: #{tpu_custom_call.1} parent=1 // pred_check
      _
    $region79: #{tpu_custom_call.1} parent=1 // pred_check_branch
      %233 = sbr.rel (0) target = $region81
    $region80: #{tpu_custom_call.1} parent=1 // pred_region
      _
    $region81: #{tpu_custom_call.1} parent=1 // pred_fallthru
      _
    // Predicated region
    $region82: #{tpu_custom_call.1} parent=1 // pred_check
      _
    $region83: #{tpu_custom_call.1} parent=1 // pred_check_branch
      %235 = sbr.rel (0) target = $region85
    $region84: #{tpu_custom_call.1} parent=1 // pred_region
      %236 = dma.done [#allocation5], 32
    $region85: #{tpu_custom_call.1} parent=1 // pred_fallthru
      _
    // Predicated region
    $region86: #{tpu_custom_call.1} parent=1 // pred_check
      _
    $region87: #{tpu_custom_call.1} parent=1 // pred_check_branch
      %238 = sbr.rel (0) target = $region89
    $region88: #{tpu_custom_call.1} parent=1 // pred_region
      %239 = dma.done [#allocation3], 4096
    $region89: #{tpu_custom_call.1} parent=1 // pred_fallthru
      _
    // Predicated region
    $region90: #{tpu_custom_call.1} parent=1 // pred_check
      _
    $region91: #{tpu_custom_call.1} parent=1 // pred_check_branch
      %241 = sbr.rel (0) target = $region93
    $region92: #{tpu_custom_call.1} parent=1 // pred_region
      %242 = dma.done [#allocation8], 1536
    $region93: #{tpu_custom_call.1} parent=1 // pred_fallthru
      _
    // Predicated region
    $region94: #{tpu_custom_call.1} parent=1 // pred_check
      _
    $region95: #{tpu_custom_call.1} parent=1 // pred_check_branch
      %244 = sbr.rel (0) target = $region97
    $region96: #{tpu_custom_call.1} parent=1 // pred_region
      %245 = dma.done [#allocation8], 16
    $region97: #{tpu_custom_call.1} parent=1 // pred_fallthru
      _
    // Predicated region
    $region98: #{tpu_custom_call.1} parent=1 // pred_check
      _
    $region99: #{tpu_custom_call.1} parent=1 // pred_check_branch
      %247 = sbr.rel (0) target = $region101
    $region100: #{tpu_custom_call.1} parent=1 // pred_region
      %248 = dma.done [#allocation11], 3072
    $region101: #{tpu_custom_call.1} parent=1 // pred_fallthru
      _
    // Predicated region
    $region102: #{tpu_custom_call.1} parent=1 // pred_check
      _
    $region103: #{tpu_custom_call.1} parent=1 // pred_check_branch
      %250 = sbr.rel (0) target = $region105
    $region104: #{tpu_custom_call.1} parent=1 // pred_region
      %251 = dma.done [#allocation11], 2048
    $region105: #{tpu_custom_call.1} parent=1 // pred_fallthru
      _
    // Predicated region
    $region106: #{tpu_custom_call.1} parent=1 // pred_check
      _
    $region107: #{tpu_custom_call.1} parent=1 // pred_check_branch
      %253 = sbr.rel (0) target = $region109
    $region108: #{tpu_custom_call.1} parent=1 // pred_region
      %254 = dma.done [#allocation14], 32
    $region109: #{tpu_custom_call.1} parent=1 // pred_fallthru
      _
    // Predicated region
    $region110: #{tpu_custom_call.1} parent=1 // pred_check
      _
    $region111: #{tpu_custom_call.1} parent=1 // pred_check_branch
      %256 = sbr.rel (0) target = $region113
    $region112: #{tpu_custom_call.1} parent=1 // pred_region
      %257 = dma.done [#allocation14], 16
    $region113: #{tpu_custom_call.1} parent=1 // pred_fallthru
      _
    // Predicated region
    $region114: #{tpu_custom_call.1} parent=1 // pred_check
      _
    $region115: #{tpu_custom_call.1} parent=1 // pred_check_branch
      %259 = sbr.rel (0) target = $region117
    $region116: #{tpu_custom_call.1} parent=1 // pred_region
      %260 = dma.done [#allocation17], 16
    $region117: #{tpu_custom_call.1} parent=1 // pred_fallthru
      _
    // Predicated region
    $region118: #{tpu_custom_call.1} parent=1 // pred_check
      _
    $region119: #{tpu_custom_call.1} parent=1 // pred_check_branch
      %262 = sbr.rel (0) target = $region121
    $region120: #{tpu_custom_call.1} parent=1 // pred_region
      %263 = dma.done [#allocation17], 1024
    $region121: #{tpu_custom_call.1} parent=1 // pred_fallthru
      _
    // Predicated region
    $region122: #{tpu_custom_call.1} parent=1 // pred_check
      _
    $region123: #{tpu_custom_call.1} parent=1 // pred_check_branch
      %265 = sbr.rel (0) target = $region125
    $region124: #{tpu_custom_call.1} parent=1 // pred_region
      %266 = dma.done [#allocation20], 16
    $region125: #{tpu_custom_call.1} parent=1 // pred_fallthru
      _
    // Predicated region
    $region126: #{tpu_custom_call.1} parent=1 // pred_check
      _
    $region127: #{tpu_custom_call.1} parent=1 // pred_check_branch
      %268 = sbr.rel (0) target = $region129
    $region128: #{tpu_custom_call.1} parent=1 // pred_region
      %269 = dma.done [#allocation20], 1024
    $region129: #{tpu_custom_call.1} parent=1 // pred_fallthru
      _
    // Predicated region
    $region130: #{tpu_custom_call.1} parent=1 // pred_check
      _
    $region131: #{tpu_custom_call.1} parent=1 // pred_check_branch
      %271 = sbr.rel (0) target = $region133
    $region132: #{tpu_custom_call.1} parent=1 // pred_region
      %272 = dma.done [#allocation23], 512
    $region133: #{tpu_custom_call.1} parent=1 // pred_fallthru
      _
    // Predicated region
    $region134: #{tpu_custom_call.1} parent=1 // pred_check
      _
    $region135: #{tpu_custom_call.1} parent=1 // pred_check_branch
      %274 = sbr.rel (0) target = $region137
    $region136: #{tpu_custom_call.1} parent=1 // pred_region
      %275 = dma.done [#allocation23], 16
    $region137: #{tpu_custom_call.1} parent=1 // pred_fallthru
      _
    // Predicated region
    $region138: #{tpu_custom_call.1} parent=1 // pred_check
      _
    $region139: #{tpu_custom_call.1} parent=1 // pred_check_branch
      %277 = sbr.rel (0) target = $region141
    $region140: #{tpu_custom_call.1} parent=1 // pred_region
      %278 = dma.done [#allocation26], 16
    $region141: #{tpu_custom_call.1} parent=1 // pred_fallthru
      _
    // Predicated region
    $region142: #{tpu_custom_call.1} parent=1 // pred_check
      _
    $region143: #{tpu_custom_call.1} parent=1 // pred_check_branch
      %280 = sbr.rel (0) target = $region145
    $region144: #{tpu_custom_call.1} parent=1 // pred_region
      %281 = dma.done [#allocation26], 16
    $region145: #{tpu_custom_call.1} parent=1 // pred_fallthru
      _
    // Predicated region
    $region146: #{tpu_custom_call.1} parent=1 // pred_check
      _
    $region147: #{tpu_custom_call.1} parent=1 // pred_check_branch
      %283 = sbr.rel (0) target = $region149
    $region148: #{tpu_custom_call.1} parent=1 // pred_region
      %284 = dma.done [#allocation29], 512
    $region149: #{tpu_custom_call.1} parent=1 // pred_fallthru
      _
    // Predicated region
    $region150: #{tpu_custom_call.1} parent=1 // pred_check
      _
    $region151: #{tpu_custom_call.1} parent=1 // pred_check_branch
      %286 = sbr.rel (0) target = $region153
    $region152: #{tpu_custom_call.1} parent=1 // pred_region
      %287 = dma.done [#allocation29], 16
    $region153: #{tpu_custom_call.1} parent=1 // pred_fallthru
      _
    %288 = sfence
    %v289 = vld [vmem:[#allocation6] sm:$0xff]
    %v290 = vld [vmem:[#allocation6 + $0x8] sm:$0xff]
    %v291 = vld [vmem:[#allocation6 + $0x10] sm:$0xff]
    %v292 = vld [vmem:[#allocation6 + $0x18] sm:$0xff]
    %v293 = vld [vmem:[#allocation6 + $0x20] sm:$0xff]
    %v294 = vld [vmem:[#allocation6 + $0x28] sm:$0xff]
    %v295 = vld [vmem:[#allocation6 + $0x30] sm:$0xff]
    %v296 = vld [vmem:[#allocation6 + $0x38] sm:$0xff]
    %v297 = vld [vmem:[#allocation6 + $0x40] sm:$0xff]
    %v298 = vld [vmem:[#allocation6 + $0x48] sm:$0xff]
    %v299 = vld [vmem:[#allocation6 + $0x50] sm:$0xff]
    %v300 = vld [vmem:[#allocation6 + $0x58] sm:$0xff]
    %v301 = vld [vmem:[#allocation6 + $0x60] sm:$0xff]
    %v302 = vld [vmem:[#allocation6 + $0x68] sm:$0xff]
    %v303 = vld [vmem:[#allocation6 + $0x70] sm:$0xff]
    %v304 = vld [vmem:[#allocation6 + $0x78] sm:$0xff]
    %v305 = vld [vmem:[#allocation6 + $0x80] sm:$0xff]
    %v306 = vld [vmem:[#allocation6 + $0x88] sm:$0xff]
    %v307 = vld [vmem:[#allocation6 + $0x90] sm:$0xff]
    %v308 = vld [vmem:[#allocation6 + $0x98] sm:$0xff]
    %v309 = vld [vmem:[#allocation6 + $0xa0] sm:$0xff]
    %v310 = vld [vmem:[#allocation6 + $0xa8] sm:$0xff]
    %v311 = vld [vmem:[#allocation6 + $0xb0] sm:$0xff]
    %v312 = vld [vmem:[#allocation6 + $0xb8] sm:$0xff]
    %v313 = vld [vmem:[#allocation6 + $0xc0] sm:$0xff]
    %v314 = vld [vmem:[#allocation6 + $0xc8] sm:$0xff]
    %v315 = vld [vmem:[#allocation6 + $0xd0] sm:$0xff]
    %v316 = vld [vmem:[#allocation6 + $0xd8] sm:$0xff]
    %v317 = vld [vmem:[#allocation6 + $0xe0] sm:$0xff]
    %v318 = vld [vmem:[#allocation6 + $0xe8] sm:$0xff]
    %v319 = vld [vmem:[#allocation6 + $0xf0] sm:$0xff]
    %v320 = vld [vmem:[#allocation6 + $0xf8] sm:$0xff]
    %v321 = vld [vmem:[#allocation7] sm:$0xff]
    %v322 = vld [vmem:[#allocation7 + $0x8] sm:$0xff]
    %v323 = vld [vmem:[#allocation7 + $0x10] sm:$0xff]
    %v324 = vld [vmem:[#allocation7 + $0x18] sm:$0xff]
    %v325 = vld [vmem:[#allocation7 + $0x20] sm:$0xff]
    %v326 = vld [vmem:[#allocation7 + $0x28] sm:$0xff]
    %v327 = vld [vmem:[#allocation7 + $0x30] sm:$0xff]
    %v328 = vld [vmem:[#allocation7 + $0x38] sm:$0xff]
    %v329 = vld [vmem:[#allocation7 + $0x40] sm:$0xff]
    %v330 = vld [vmem:[#allocation7 + $0x48] sm:$0xff]
    %v331 = vld [vmem:[#allocation7 + $0x50] sm:$0xff]
    %v332 = vld [vmem:[#allocation7 + $0x58] sm:$0xff]
    %vm333 = vcmask 261120
    %v335 = vsel %vm333, %v289, 0
    %v338 = vsel %vm333, %v290, 0
    %v341 = vsel %vm333, %v291, 0
    %v344 = vsel %vm333, %v292, 0
    %v347 = vsel %vm333, %v293, 0
    %v350 = vsel %vm333, %v294, 0
    %v353 = vsel %vm333, %v295, 0
    %v356 = vsel %vm333, %v296, 0
    %v359 = vsel %vm333, %v297, 0
    %v362 = vsel %vm333, %v298, 0
    %v365 = vsel %vm333, %v299, 0
    %v368 = vsel %vm333, %v300, 0
    %v371 = vsel %vm333, %v301, 0
    %v374 = vsel %vm333, %v302, 0
    %v377 = vsel %vm333, %v303, 0
    %v380 = vsel %vm333, %v304, 0
    %v383 = vsel %vm333, %v305, 0
    %v386 = vsel %vm333, %v306, 0
    %v389 = vsel %vm333, %v307, 0
    %v392 = vsel %vm333, %v308, 0
    %v395 = vsel %vm333, %v309, 0
    %v398 = vsel %vm333, %v310, 0
    %v401 = vsel %vm333, %v311, 0
    %v404 = vsel %vm333, %v312, 0
    %v407 = vsel %vm333, %v313, 0
    %v410 = vsel %vm333, %v314, 0
    %v413 = vsel %vm333, %v315, 0
    %v416 = vsel %vm333, %v316, 0
    %v419 = vsel %vm333, %v317, 0
    %v422 = vsel %vm333, %v318, 0
    %v425 = vsel %vm333, %v319, 0
    %v428 = vsel %vm333, %v320, 0
    %430 = vmatprep.subr.mxu0 0.0
    %431 = vmatpush1.msra.mxu0 0.0
    %432 = vmatprep.subr.mxu0 0.0
    %433 = vmatpush1.msra.mxu0 0.0
    %434 = vmatprep.subr.mxu0 0.0
    %435 = vmatpush1.msra.mxu0 0.0
    %436 = vmatprep.subr.mxu0 0.0
    %437 = vmatpush1.msra.mxu0 0.0
    %438 = vmatprep.subr.mxu0 0.0
    %439 = vmatpush1.msra.mxu0 0.0
    %440 = vmatprep.subr.mxu0 0.0
    %441 = vmatpush1.msra.mxu0 0.0
    %442 = vmatprep.subr.mxu0 0.0
    %443 = vmatpush1.msra.mxu0 0.0
    %444 = vmatprep.subr.mxu0 0.0
    %445 = vmatpush1.msra.mxu0 0.0
    %446 = vmatprep.subr.mxu0 0.0
    %447 = vmatpush1.msra.mxu0 0.0
    %448 = vmatprep.subr.mxu0 0.0
    %449 = vmatpush1.msra.mxu0 0.0
    %450 = vmatprep.subr.mxu0 0.0
    %451 = vmatpush1.msra.mxu0 0.0
    %452 = vmatprep.subr.mxu0 0.0
    %453 = vmatpush1.msra.mxu0 0.0
    %454 = vmatprep.subr.mxu0 %v331
    %455 = vmatpush1.msra.mxu0 %v330
    %456 = vmatprep.subr.mxu0 %v328
    %457 = vmatpush1.msra.mxu0 %v327
    %458 = vmatprep.subr.mxu0 %v325
    %459 = vmatpush1.msra.mxu0 %v324
    %460 = vmatprep.subr.mxu0 %v322
    %461 = vmatpush1.msra.mxu0 %v321
    %462 = vmatprep.subr.mxu0 0.0
    %463 = vmatpush2.msra.mxu0 0.0
    %464 = vmatprep.subr.mxu0 0.0
    %465 = vmatpush2.msra.mxu0 0.0
    %466 = vmatprep.subr.mxu0 0.0
    %467 = vmatpush2.msra.mxu0 0.0
    %468 = vmatprep.subr.mxu0 0.0
    %469 = vmatpush2.msra.mxu0 0.0
    %470 = vmatprep.subr.mxu0 0.0
    %471 = vmatpush2.msra.mxu0 0.0
    %472 = vmatprep.subr.mxu0 0.0
    %473 = vmatpush2.msra.mxu0 0.0
    %474 = vmatprep.subr.mxu0 0.0
    %475 = vmatpush2.msra.mxu0 0.0
    %476 = vmatprep.subr.mxu0 0.0
    %477 = vmatpush2.msra.mxu0 0.0
    %478 = vmatprep.subr.mxu0 0.0
    %479 = vmatpush2.msra.mxu0 0.0
    %480 = vmatprep.subr.mxu0 0.0
    %481 = vmatpush2.msra.mxu0 0.0
    %482 = vmatprep.subr.mxu0 0.0
    %483 = vmatpush2.msra.mxu0 0.0
    %484 = vmatprep.subr.mxu0 0.0
    %485 = vmatpush2.msra.mxu0 0.0
    %486 = vmatprep.subr.mxu0 0.0
    %487 = vmatpush2.msra.mxu0 0.0
    %488 = vmatprep.subr.mxu0 0.0
    %489 = vmatpush2.msra.mxu0 0.0
    %490 = vmatprep.subr.mxu0 0.0
    %491 = vmatpush2.msra.mxu0 0.0
    %492 = vmatprep.subr.mxu0 0.0
    %493 = vmatpush2.msra.mxu0 0.0
    %494 = vmatprep.mubr.f32.mxu0 0.0
    %495 = vmatmul.mubr.f32.gmra.mxu0 %v335
    %v496 = vpop.f32.mrf.mxu0
    %v497 = vadd.f32 0.0, %v496
    %v498 = vpop.f32.mrf.mxu0
    %v499 = vadd.f32 0.0, %v498
    %500 = vmatprep.mubr.f32.mxu0 0.0
    %501 = vmatmul.mubr.f32.gmra.mxu0 %v338
    %v502 = vpop.f32.mrf.mxu0
    %v503 = vadd.f32 0.0, %v502
    %v504 = vpop.f32.mrf.mxu0
    %v505 = vadd.f32 0.0, %v504
    %506 = vmatprep.mubr.f32.mxu0 0.0
    %507 = vmatmul.mubr.f32.gmra.mxu0 %v341
    %v508 = vpop.f32.mrf.mxu0
    %v509 = vadd.f32 0.0, %v508
    %v510 = vpop.f32.mrf.mxu0
    %v511 = vadd.f32 0.0, %v510
    %512 = vmatprep.mubr.f32.mxu0 0.0
    %513 = vmatmul.mubr.f32.gmra.mxu0 %v344
    %v514 = vpop.f32.mrf.mxu0
    %v515 = vadd.f32 0.0, %v514
    %v516 = vpop.f32.mrf.mxu0
    %v517 = vadd.f32 0.0, %v516
    %518 = vmatprep.mubr.f32.mxu0 0.0
    %519 = vmatmul.mubr.f32.gmra.mxu0 %v347
    %v520 = vpop.f32.mrf.mxu0
    %v521 = vadd.f32 0.0, %v520
    %v522 = vpop.f32.mrf.mxu0
    %v523 = vadd.f32 0.0, %v522
    %524 = vmatprep.mubr.f32.mxu0 0.0
    %525 = vmatmul.mubr.f32.gmra.mxu0 %v350
    %v526 = vpop.f32.mrf.mxu0
    %v527 = vadd.f32 0.0, %v526
    %v528 = vpop.f32.mrf.mxu0
    %v529 = vadd.f32 0.0, %v528
    %530 = vmatprep.mubr.f32.mxu0 0.0
    %531 = vmatmul.mubr.f32.gmra.mxu0 %v353
    %v532 = vpop.f32.mrf.mxu0
    %v533 = vadd.f32 0.0, %v532
    %v534 = vpop.f32.mrf.mxu0
    %v535 = vadd.f32 0.0, %v534
    %536 = vmatprep.mubr.f32.mxu0 0.0
    %537 = vmatmul.mubr.f32.gmra.mxu0 %v356
    %v538 = vpop.f32.mrf.mxu0
    %v539 = vadd.f32 0.0, %v538
    %v540 = vpop.f32.mrf.mxu0
    %v541 = vadd.f32 0.0, %v540
    %542 = vmatprep.mubr.f32.mxu0 0.0
    %543 = vmatmul.mubr.f32.gmra.mxu0 %v359
    %v544 = vpop.f32.mrf.mxu0
    %v545 = vadd.f32 0.0, %v544
    %v546 = vpop.f32.mrf.mxu0
    %v547 = vadd.f32 0.0, %v546
    %548 = vmatprep.mubr.f32.mxu0 0.0
    %549 = vmatmul.mubr.f32.gmra.mxu0 %v362
    %v550 = vpop.f32.mrf.mxu0
    %v551 = vadd.f32 0.0, %v550
    %v552 = vpop.f32.mrf.mxu0
    %v553 = vadd.f32 0.0, %v552
    %554 = vmatprep.mubr.f32.mxu0 0.0
    %555 = vmatmul.mubr.f32.gmra.mxu0 %v365
    %v556 = vpop.f32.mrf.mxu0
    %v557 = vadd.f32 0.0, %v556
    %v558 = vpop.f32.mrf.mxu0
    %v559 = vadd.f32 0.0, %v558
    %560 = vmatprep.mubr.f32.mxu0 0.0
    %561 = vmatmul.mubr.f32.gmra.mxu0 %v368
    %v562 = vpop.f32.mrf.mxu0
    %v563 = vadd.f32 0.0, %v562
    %v564 = vpop.f32.mrf.mxu0
    %v565 = vadd.f32 0.0, %v564
    %566 = vmatprep.mubr.f32.mxu0 0.0
    %567 = vmatmul.mubr.f32.gmra.mxu0 %v371
    %v568 = vpop.f32.mrf.mxu0
    %v569 = vadd.f32 0.0, %v568
    %v570 = vpop.f32.mrf.mxu0
    %v571 = vadd.f32 0.0, %v570
    %572 = vmatprep.mubr.f32.mxu0 0.0
    %573 = vmatmul.mubr.f32.gmra.mxu0 %v374
    %v574 = vpop.f32.mrf.mxu0
    %v575 = vadd.f32 0.0, %v574
    %v576 = vpop.f32.mrf.mxu0
    %v577 = vadd.f32 0.0, %v576
    %578 = vmatprep.mubr.f32.mxu0 0.0
    %579 = vmatmul.mubr.f32.gmra.mxu0 %v377
    %v580 = vpop.f32.mrf.mxu0
    %v581 = vadd.f32 0.0, %v580
    %v582 = vpop.f32.mrf.mxu0
    %v583 = vadd.f32 0.0, %v582
    %584 = vmatprep.mubr.f32.mxu0 0.0
    %585 = vmatmul.mubr.f32.gmra.mxu0 %v380
    %v586 = vpop.f32.mrf.mxu0
    %v587 = vadd.f32 0.0, %v586
    %v588 = vpop.f32.mrf.mxu0
    %v589 = vadd.f32 0.0, %v588
    %590 = vmatprep.mubr.f32.mxu0 0.0
    %591 = vmatmul.mubr.f32.gmra.mxu0 %v383
    %v592 = vpop.f32.mrf.mxu0
    %v593 = vadd.f32 0.0, %v592
    %v594 = vpop.f32.mrf.mxu0
    %v595 = vadd.f32 0.0, %v594
    %596 = vmatprep.mubr.f32.mxu0 0.0
    %597 = vmatmul.mubr.f32.gmra.mxu0 %v386
    %v598 = vpop.f32.mrf.mxu0
    %v599 = vadd.f32 0.0, %v598
    %v600 = vpop.f32.mrf.mxu0
    %v601 = vadd.f32 0.0, %v600
    %602 = vmatprep.mubr.f32.mxu0 0.0
    %603 = vmatmul.mubr.f32.gmra.mxu0 %v389
    %v604 = vpop.f32.mrf.mxu0
    %v605 = vadd.f32 0.0, %v604
    %v606 = vpop.f32.mrf.mxu0
    %v607 = vadd.f32 0.0, %v606
    %608 = vmatprep.mubr.f32.mxu0 0.0
    %609 = vmatmul.mubr.f32.gmra.mxu0 %v392
    %v610 = vpop.f32.mrf.mxu0
    %v611 = vadd.f32 0.0, %v610
    %v612 = vpop.f32.mrf.mxu0
    %v613 = vadd.f32 0.0, %v612
    %614 = vmatprep.mubr.f32.mxu0 0.0
    %615 = vmatmul.mubr.f32.gmra.mxu0 %v395
    %v616 = vpop.f32.mrf.mxu0
    %v617 = vadd.f32 0.0, %v616
    %v618 = vpop.f32.mrf.mxu0
    %v619 = vadd.f32 0.0, %v618
    %620 = vmatprep.mubr.f32.mxu0 0.0
    %621 = vmatmul.mubr.f32.gmra.mxu0 %v398
    %v622 = vpop.f32.mrf.mxu0
    %v623 = vadd.f32 0.0, %v622
    %v624 = vpop.f32.mrf.mxu0
    %v625 = vadd.f32 0.0, %v624
    %626 = vmatprep.mubr.f32.mxu0 0.0
    %627 = vmatmul.mubr.f32.gmra.mxu0 %v401
    %v628 = vpop.f32.mrf.mxu0
    %v629 = vadd.f32 0.0, %v628
    %v630 = vpop.f32.mrf.mxu0
    %v631 = vadd.f32 0.0, %v630
    %632 = vmatprep.mubr.f32.mxu0 0.0
    %633 = vmatmul.mubr.f32.gmra.mxu0 %v404
    %v634 = vpop.f32.mrf.mxu0
    %v635 = vadd.f32 0.0, %v634
    %v636 = vpop.f32.mrf.mxu0
    %v637 = vadd.f32 0.0, %v636
    %638 = vmatprep.mubr.f32.mxu0 0.0
    %639 = vmatmul.mubr.f32.gmra.mxu0 %v407
    %v640 = vpop.f32.mrf.mxu0
    %v641 = vadd.f32 0.0, %v640
    %v642 = vpop.f32.mrf.mxu0
    %v643 = vadd.f32 0.0, %v642
    %644 = vmatprep.mubr.f32.mxu0 0.0
    %645 = vmatmul.mubr.f32.gmra.mxu0 %v410
    %v646 = vpop.f32.mrf.mxu0
    %v647 = vadd.f32 0.0, %v646
    %v648 = vpop.f32.mrf.mxu0
    %v649 = vadd.f32 0.0, %v648
    %650 = vmatprep.mubr.f32.mxu0 0.0
    %651 = vmatmul.mubr.f32.gmra.mxu0 %v413
    %v652 = vpop.f32.mrf.mxu0
    %v653 = vadd.f32 0.0, %v652
    %v654 = vpop.f32.mrf.mxu0
    %v655 = vadd.f32 0.0, %v654
    %656 = vmatprep.mubr.f32.mxu0 0.0
    %657 = vmatmul.mubr.f32.gmra.mxu0 %v416
    %v658 = vpop.f32.mrf.mxu0
    %v659 = vadd.f32 0.0, %v658
    %v660 = vpop.f32.mrf.mxu0
    %v661 = vadd.f32 0.0, %v660
    %662 = vmatprep.mubr.f32.mxu0 0.0
    %663 = vmatmul.mubr.f32.gmra.mxu0 %v419
    %v664 = vpop.f32.mrf.mxu0
    %v665 = vadd.f32 0.0, %v664
    %v666 = vpop.f32.mrf.mxu0
    %v667 = vadd.f32 0.0, %v666
    %668 = vmatprep.mubr.f32.mxu0 0.0
    %669 = vmatmul.mubr.f32.gmra.mxu0 %v422
    %v670 = vpop.f32.mrf.mxu0
    %v671 = vadd.f32 0.0, %v670
    %v672 = vpop.f32.mrf.mxu0
    %v673 = vadd.f32 0.0, %v672
    %674 = vmatprep.mubr.f32.mxu0 0.0
    %675 = vmatmul.mubr.f32.gmra.mxu0 %v425
    %v676 = vpop.f32.mrf.mxu0
    %v677 = vadd.f32 0.0, %v676
    %v678 = vpop.f32.mrf.mxu0
    %v679 = vadd.f32 0.0, %v678
    %680 = vmatprep.mubr.f32.mxu0 0.0
    %681 = vmatmul.mubr.f32.gmra.mxu0 %v428
    %v682 = vpop.f32.mrf.mxu0
    %v683 = vadd.f32 0.0, %v682
    %v684 = vpop.f32.mrf.mxu0
    %v685 = vadd.f32 0.0, %v684
    %686 = vdwg.mxu0
    %687 = vmatprep.subr.mxu0 0.0
    %688 = vmatpush1.msra.mxu0 0.0
    %689 = vmatprep.subr.mxu0 0.0
    %690 = vmatpush1.msra.mxu0 0.0
    %691 = vmatprep.subr.mxu0 0.0
    %692 = vmatpush1.msra.mxu0 0.0
    %693 = vmatprep.subr.mxu0 0.0
    %694 = vmatpush1.msra.mxu0 0.0
    %695 = vmatprep.subr.mxu0 0.0
    %696 = vmatpush1.msra.mxu0 0.0
    %697 = vmatprep.subr.mxu0 0.0
    %698 = vmatpush1.msra.mxu0 0.0
    %699 = vmatprep.subr.mxu0 0.0
    %700 = vmatpush1.msra.mxu0 0.0
    %701 = vmatprep.subr.mxu0 0.0
    %702 = vmatpush1.msra.mxu0 0.0
    %703 = vmatprep.subr.mxu0 0.0
    %704 = vmatpush1.msra.mxu0 0.0
    %705 = vmatprep.subr.mxu0 0.0
    %706 = vmatpush1.msra.mxu0 0.0
    %707 = vmatprep.subr.mxu0 0.0
    %708 = vmatpush1.msra.mxu0 0.0
    %709 = vmatprep.subr.mxu0 0.0
    %710 = vmatpush1.msra.mxu0 0.0
    %711 = vmatprep.subr.mxu0 0.0
    %712 = vmatpush1.msra.mxu0 %v332
    %713 = vmatprep.subr.mxu0 0.0
    %714 = vmatpush1.msra.mxu0 %v329
    %715 = vmatprep.subr.mxu0 0.0
    %716 = vmatpush1.msra.mxu0 %v326
    %717 = vmatprep.subr.mxu0 0.0
    %718 = vmatpush1.msra.mxu0 %v323
    %719 = vmatprep.subr.mxu0 0.0
    %720 = vmatpush2.msra.mxu0 0.0
    %721 = vmatprep.subr.mxu0 0.0
    %722 = vmatpush2.msra.mxu0 0.0
    %723 = vmatprep.subr.mxu0 0.0
    %724 = vmatpush2.msra.mxu0 0.0
    %725 = vmatprep.subr.mxu0 0.0
    %726 = vmatpush2.msra.mxu0 0.0
    %727 = vmatprep.subr.mxu0 0.0
    %728 = vmatpush2.msra.mxu0 0.0
    %729 = vmatprep.subr.mxu0 0.0
    %730 = vmatpush2.msra.mxu0 0.0
    %731 = vmatprep.subr.mxu0 0.0
    %732 = vmatpush2.msra.mxu0 0.0
    %733 = vmatprep.subr.mxu0 0.0
    %734 = vmatpush2.msra.mxu0 0.0
    %735 = vmatprep.subr.mxu0 0.0
    %736 = vmatpush2.msra.mxu0 0.0
    %737 = vmatprep.subr.mxu0 0.0
    %738 = vmatpush2.msra.mxu0 0.0
    %739 = vmatprep.subr.mxu0 0.0
    %740 = vmatpush2.msra.mxu0 0.0
    %741 = vmatprep.subr.mxu0 0.0
    %742 = vmatpush2.msra.mxu0 0.0
    %743 = vmatprep.subr.mxu0 0.0
    %744 = vmatpush2.msra.mxu0 0.0
    %745 = vmatprep.subr.mxu0 0.0
    %746 = vmatpush2.msra.mxu0 0.0
    %747 = vmatprep.subr.mxu0 0.0
    %748 = vmatpush2.msra.mxu0 0.0
    %749 = vmatprep.subr.mxu0 0.0
    %750 = vmatpush2.msra.mxu0 0.0
    %751 = vmatprep.mubr.f32.mxu0 0.0
    %752 = vmatmul.mubr.f32.gmra.mxu0 %v335
    %v753 = vpop.f32.mrf.mxu0
    %v754 = vadd.f32 0.0, %v753
    %v755 = vpop.f32.mrf.mxu0
    %756 = vmatprep.mubr.f32.mxu0 0.0
    %757 = vmatmul.mubr.f32.gmra.mxu0 %v338
    %v758 = vpop.f32.mrf.mxu0
    %v759 = vadd.f32 0.0, %v758
    %v760 = vpop.f32.mrf.mxu0
    %761 = vmatprep.mubr.f32.mxu0 0.0
    %762 = vmatmul.mubr.f32.gmra.mxu0 %v341
    %v763 = vpop.f32.mrf.mxu0
    %v764 = vadd.f32 0.0, %v763
    %v765 = vpop.f32.mrf.mxu0
    %766 = vmatprep.mubr.f32.mxu0 0.0
    %767 = vmatmul.mubr.f32.gmra.mxu0 %v344
    %v768 = vpop.f32.mrf.mxu0
    %v769 = vadd.f32 0.0, %v768
    %v770 = vpop.f32.mrf.mxu0
    %771 = vmatprep.mubr.f32.mxu0 0.0
    %772 = vmatmul.mubr.f32.gmra.mxu0 %v347
    %v773 = vpop.f32.mrf.mxu0
    %v774 = vadd.f32 0.0, %v773
    %v775 = vpop.f32.mrf.mxu0
    %776 = vmatprep.mubr.f32.mxu0 0.0
    %777 = vmatmul.mubr.f32.gmra.mxu0 %v350
    %v778 = vpop.f32.mrf.mxu0
    %v779 = vadd.f32 0.0, %v778
    %v780 = vpop.f32.mrf.mxu0
    %781 = vmatprep.mubr.f32.mxu0 0.0
    %782 = vmatmul.mubr.f32.gmra.mxu0 %v353
    %v783 = vpop.f32.mrf.mxu0
    %v784 = vadd.f32 0.0, %v783
    %v785 = vpop.f32.mrf.mxu0
    %786 = vmatprep.mubr.f32.mxu0 0.0
    %787 = vmatmul.mubr.f32.gmra.mxu0 %v356
    %v788 = vpop.f32.mrf.mxu0
    %v789 = vadd.f32 0.0, %v788
    %v790 = vpop.f32.mrf.mxu0
    %791 = vmatprep.mubr.f32.mxu0 0.0
    %792 = vmatmul.mubr.f32.gmra.mxu0 %v359
    %v793 = vpop.f32.mrf.mxu0
    %v794 = vadd.f32 0.0, %v793
    %v795 = vpop.f32.mrf.mxu0
    %796 = vmatprep.mubr.f32.mxu0 0.0
    %797 = vmatmul.mubr.f32.gmra.mxu0 %v362
    %v798 = vpop.f32.mrf.mxu0
    %v799 = vadd.f32 0.0, %v798
    %v800 = vpop.f32.mrf.mxu0
    %801 = vmatprep.mubr.f32.mxu0 0.0
    %802 = vmatmul.mubr.f32.gmra.mxu0 %v365
    %v803 = vpop.f32.mrf.mxu0
    %v804 = vadd.f32 0.0, %v803
    %v805 = vpop.f32.mrf.mxu0
    %806 = vmatprep.mubr.f32.mxu0 0.0
    %807 = vmatmul.mubr.f32.gmra.mxu0 %v368
    %v808 = vpop.f32.mrf.mxu0
    %v809 = vadd.f32 0.0, %v808
    %v810 = vpop.f32.mrf.mxu0
    %811 = vmatprep.mubr.f32.mxu0 0.0
    %812 = vmatmul.mubr.f32.gmra.mxu0 %v371
    %v813 = vpop.f32.mrf.mxu0
    %v814 = vadd.f32 0.0, %v813
    %v815 = vpop.f32.mrf.mxu0
    %816 = vmatprep.mubr.f32.mxu0 0.0
    %817 = vmatmul.mubr.f32.gmra.mxu0 %v374
    %v818 = vpop.f32.mrf.mxu0
    %v819 = vadd.f32 0.0, %v818
    %v820 = vpop.f32.mrf.mxu0
    %821 = vmatprep.mubr.f32.mxu0 0.0
    %822 = vmatmul.mubr.f32.gmra.mxu0 %v377
    %v823 = vpop.f32.mrf.mxu0
    %v824 = vadd.f32 0.0, %v823
    %v825 = vpop.f32.mrf.mxu0
    %826 = vmatprep.mubr.f32.mxu0 0.0
    %827 = vmatmul.mubr.f32.gmra.mxu0 %v380
    %v828 = vpop.f32.mrf.mxu0
    %v829 = vadd.f32 0.0, %v828
    %v830 = vpop.f32.mrf.mxu0
    %831 = vmatprep.mubr.f32.mxu0 0.0
    %832 = vmatmul.mubr.f32.gmra.mxu0 %v383
    %v833 = vpop.f32.mrf.mxu0
    %v834 = vadd.f32 0.0, %v833
    %v835 = vpop.f32.mrf.mxu0
    %836 = vmatprep.mubr.f32.mxu0 0.0
    %837 = vmatmul.mubr.f32.gmra.mxu0 %v386
    %v838 = vpop.f32.mrf.mxu0
    %v839 = vadd.f32 0.0, %v838
    %v840 = vpop.f32.mrf.mxu0
    %841 = vmatprep.mubr.f32.mxu0 0.0
    %842 = vmatmul.mubr.f32.gmra.mxu0 %v389
    %v843 = vpop.f32.mrf.mxu0
    %v844 = vadd.f32 0.0, %v843
    %v845 = vpop.f32.mrf.mxu0
    %846 = vmatprep.mubr.f32.mxu0 0.0
    %847 = vmatmul.mubr.f32.gmra.mxu0 %v392
    %v848 = vpop.f32.mrf.mxu0
    %v849 = vadd.f32 0.0, %v848
    %v850 = vpop.f32.mrf.mxu0
    %851 = vmatprep.mubr.f32.mxu0 0.0
    %852 = vmatmul.mubr.f32.gmra.mxu0 %v395
    %v853 = vpop.f32.mrf.mxu0
    %v854 = vadd.f32 0.0, %v853
    %v855 = vpop.f32.mrf.mxu0
    %856 = vmatprep.mubr.f32.mxu0 0.0
    %857 = vmatmul.mubr.f32.gmra.mxu0 %v398
    %v858 = vpop.f32.mrf.mxu0
    %v859 = vadd.f32 0.0, %v858
    %v860 = vpop.f32.mrf.mxu0
    %861 = vmatprep.mubr.f32.mxu0 0.0
    %862 = vmatmul.mubr.f32.gmra.mxu0 %v401
    %v863 = vpop.f32.mrf.mxu0
    %v864 = vadd.f32 0.0, %v863
    %v865 = vpop.f32.mrf.mxu0
    %866 = vmatprep.mubr.f32.mxu0 0.0
    %867 = vmatmul.mubr.f32.gmra.mxu0 %v404
    %v868 = vpop.f32.mrf.mxu0
    %v869 = vadd.f32 0.0, %v868
    %v870 = vpop.f32.mrf.mxu0
    %871 = vmatprep.mubr.f32.mxu0 0.0
    %872 = vmatmul.mubr.f32.gmra.mxu0 %v407
    %v873 = vpop.f32.mrf.mxu0
    %v874 = vadd.f32 0.0, %v873
    %v875 = vpop.f32.mrf.mxu0
    %876 = vmatprep.mubr.f32.mxu0 0.0
    %877 = vmatmul.mubr.f32.gmra.mxu0 %v410
    %v878 = vpop.f32.mrf.mxu0
    %v879 = vadd.f32 0.0, %v878
    %v880 = vpop.f32.mrf.mxu0
    %881 = vmatprep.mubr.f32.mxu0 0.0
    %882 = vmatmul.mubr.f32.gmra.mxu0 %v413
    %v883 = vpop.f32.mrf.mxu0
    %v884 = vadd.f32 0.0, %v883
    %v885 = vpop.f32.mrf.mxu0
    %886 = vmatprep.mubr.f32.mxu0 0.0
    %887 = vmatmul.mubr.f32.gmra.mxu0 %v416
    %v888 = vpop.f32.mrf.mxu0
    %v889 = vadd.f32 0.0, %v888
    %v890 = vpop.f32.mrf.mxu0
    %891 = vmatprep.mubr.f32.mxu0 0.0
    %892 = vmatmul.mubr.f32.gmra.mxu0 %v419
    %v893 = vpop.f32.mrf.mxu0
    %v894 = vadd.f32 0.0, %v893
    %v895 = vpop.f32.mrf.mxu0
    %896 = vmatprep.mubr.f32.mxu0 0.0
    %897 = vmatmul.mubr.f32.gmra.mxu0 %v422
    %v898 = vpop.f32.mrf.mxu0
    %v899 = vadd.f32 0.0, %v898
    %v900 = vpop.f32.mrf.mxu0
    %901 = vmatprep.mubr.f32.mxu0 0.0
    %902 = vmatmul.mubr.f32.gmra.mxu0 %v425
    %v903 = vpop.f32.mrf.mxu0
    %v904 = vadd.f32 0.0, %v903
    %v905 = vpop.f32.mrf.mxu0
    %906 = vmatprep.mubr.f32.mxu0 0.0
    %907 = vmatmul.mubr.f32.gmra.mxu0 %v428
    %v908 = vpop.f32.mrf.mxu0
    %v909 = vadd.f32 0.0, %v908
    %v910 = vpop.f32.mrf.mxu0
    %911 = vdwg.mxu0
    %v912 = vld [vmem:[#allocation9] sm:$0x1]
    %vm945 = vcmask 1046528
    %v946 = vrot.slane %v497, 1
    %v947 = vrot.slane %v503, 1
    %v948 = vsel %vm945, %v946, %v947
    %v949 = vrot.slane %v509, 1
    %v950 = vrot.slane %v515, 1
    %v951 = vsel %vm945, %v949, %v950
    %v952 = vrot.slane %v521, 1
    %v953 = vrot.slane %v527, 1
    %v954 = vsel %vm945, %v952, %v953
    %v955 = vrot.slane %v533, 1
    %v956 = vrot.slane %v539, 1
    %v957 = vsel %vm945, %v955, %v956
    %v958 = vrot.slane %v545, 1
    %v959 = vrot.slane %v551, 1
    %v960 = vsel %vm945, %v958, %v959
    %v961 = vrot.slane %v557, 1
    %v962 = vrot.slane %v563, 1
    %v963 = vsel %vm945, %v961, %v962
    %v964 = vrot.slane %v569, 1
    %v965 = vrot.slane %v575, 1
    %v966 = vsel %vm945, %v964, %v965
    %v967 = vrot.slane %v581, 1
    %v968 = vrot.slane %v587, 1
    %v969 = vsel %vm945, %v967, %v968
    %v970 = vrot.slane %v593, 1
    %v971 = vrot.slane %v599, 1
    %v972 = vsel %vm945, %v970, %v971
    %v973 = vrot.slane %v605, 1
    %v974 = vrot.slane %v611, 1
    %v975 = vsel %vm945, %v973, %v974
    %v976 = vrot.slane %v617, 1
    %v977 = vrot.slane %v623, 1
    %v978 = vsel %vm945, %v976, %v977
    %v979 = vrot.slane %v629, 1
    %v980 = vrot.slane %v635, 1
    %v981 = vsel %vm945, %v979, %v980
    %v982 = vrot.slane %v641, 1
    %v983 = vrot.slane %v647, 1
    %v984 = vsel %vm945, %v982, %v983
    %v985 = vrot.slane %v653, 1
    %v986 = vrot.slane %v659, 1
    %v987 = vsel %vm945, %v985, %v986
    %v988 = vrot.slane %v665, 1
    %v989 = vrot.slane %v671, 1
    %v990 = vsel %vm945, %v988, %v989
    %v991 = vrot.slane %v677, 1
    %v992 = vrot.slane %v683, 1
    %v993 = vsel %vm945, %v991, %v992
    %994 = vrot.lane.b32.xlu0 %v948, 96
    %v995 = vpop.permute.xlu0 %994
    %996 = vrot.lane.b32.xlu0 %v947, 96
    %v997 = vpop.permute.xlu0 %996
    %998 = vrot.lane.b32.xlu0 %v951, 96
    %v999 = vpop.permute.xlu0 %998
    %1000 = vrot.lane.b32.xlu0 %v950, 96
    %v1001 = vpop.permute.xlu0 %1000
    %1002 = vrot.lane.b32.xlu0 %v954, 96
    %v1003 = vpop.permute.xlu0 %1002
    %1004 = vrot.lane.b32.xlu0 %v953, 96
    %v1005 = vpop.permute.xlu0 %1004
    %1006 = vrot.lane.b32.xlu0 %v957, 96
    %v1007 = vpop.permute.xlu0 %1006
    %1008 = vrot.lane.b32.xlu0 %v956, 96
    %v1009 = vpop.permute.xlu0 %1008
    %1010 = vrot.lane.b32.xlu0 %v960, 96
    %v1011 = vpop.permute.xlu0 %1010
    %1012 = vrot.lane.b32.xlu0 %v959, 96
    %v1013 = vpop.permute.xlu0 %1012
    %1014 = vrot.lane.b32.xlu0 %v963, 96
    %v1015 = vpop.permute.xlu0 %1014
    %1016 = vrot.lane.b32.xlu0 %v962, 96
    %v1017 = vpop.permute.xlu0 %1016
    %1018 = vrot.lane.b32.xlu0 %v966, 96
    %v1019 = vpop.permute.xlu0 %1018
    %1020 = vrot.lane.b32.xlu0 %v965, 96
    %v1021 = vpop.permute.xlu0 %1020
    %1022 = vrot.lane.b32.xlu0 %v969, 96
    %v1023 = vpop.permute.xlu0 %1022
    %1024 = vrot.lane.b32.xlu0 %v968, 96
    %v1025 = vpop.permute.xlu0 %1024
    %1026 = vrot.lane.b32.xlu0 %v972, 96
    %v1027 = vpop.permute.xlu0 %1026
    %1028 = vrot.lane.b32.xlu0 %v971, 96
    %v1029 = vpop.permute.xlu0 %1028
    %1030 = vrot.lane.b32.xlu0 %v975, 96
    %v1031 = vpop.permute.xlu0 %1030
    %1032 = vrot.lane.b32.xlu0 %v974, 96
    %v1033 = vpop.permute.xlu0 %1032
    %1034 = vrot.lane.b32.xlu0 %v978, 96
    %v1035 = vpop.permute.xlu0 %1034
    %1036 = vrot.lane.b32.xlu0 %v977, 96
    %v1037 = vpop.permute.xlu0 %1036
    %1038 = vrot.lane.b32.xlu0 %v981, 96
    %v1039 = vpop.permute.xlu0 %1038
    %1040 = vrot.lane.b32.xlu0 %v980, 96
    %v1041 = vpop.permute.xlu0 %1040
    %1042 = vrot.lane.b32.xlu0 %v984, 96
    %v1043 = vpop.permute.xlu0 %1042
    %1044 = vrot.lane.b32.xlu0 %v983, 96
    %v1045 = vpop.permute.xlu0 %1044
    %1046 = vrot.lane.b32.xlu0 %v987, 96
    %v1047 = vpop.permute.xlu0 %1046
    %1048 = vrot.lane.b32.xlu0 %v986, 96
    %v1049 = vpop.permute.xlu0 %1048
    %1050 = vrot.lane.b32.xlu0 %v990, 96
    %v1051 = vpop.permute.xlu0 %1050
    %1052 = vrot.lane.b32.xlu0 %v989, 96
    %v1053 = vpop.permute.xlu0 %1052
    %1054 = vrot.lane.b32.xlu0 %v993, 96
    %v1055 = vpop.permute.xlu0 %1054
    %1056 = vrot.lane.b32.xlu0 %v992, 96
    %v1057 = vpop.permute.xlu0 %1056
    %v1090 = vadd.f32 %v497, %v995
    %v1091 = vadd.f32 %v503, %v997
    %v1092 = vadd.f32 %v509, %v999
    %v1093 = vadd.f32 %v515, %v1001
    %v1094 = vadd.f32 %v521, %v1003
    %v1095 = vadd.f32 %v527, %v1005
    %v1096 = vadd.f32 %v533, %v1007
    %v1097 = vadd.f32 %v539, %v1009
    %v1098 = vadd.f32 %v545, %v1011
    %v1099 = vadd.f32 %v551, %v1013
    %v1100 = vadd.f32 %v557, %v1015
    %v1101 = vadd.f32 %v563, %v1017
    %v1102 = vadd.f32 %v569, %v1019
    %v1103 = vadd.f32 %v575, %v1021
    %v1104 = vadd.f32 %v581, %v1023
    %v1105 = vadd.f32 %v587, %v1025
    %v1106 = vadd.f32 %v593, %v1027
    %v1107 = vadd.f32 %v599, %v1029
    %v1108 = vadd.f32 %v605, %v1031
    %v1109 = vadd.f32 %v611, %v1033
    %v1110 = vadd.f32 %v617, %v1035
    %v1111 = vadd.f32 %v623, %v1037
    %v1112 = vadd.f32 %v629, %v1039
    %v1113 = vadd.f32 %v635, %v1041
    %v1114 = vadd.f32 %v641, %v1043
    %v1115 = vadd.f32 %v647, %v1045
    %v1116 = vadd.f32 %v653, %v1047
    %v1117 = vadd.f32 %v659, %v1049
    %v1118 = vadd.f32 %v665, %v1051
    %v1119 = vadd.f32 %v671, %v1053
    %v1120 = vadd.f32 %v677, %v1055
    %v1121 = vadd.f32 %v683, %v1057
    %vm1122 = vcmask 1045504
    %v1123 = vrot.slane %v497, 2
    %v1124 = vrot.slane %v503, 2
    %v1125 = vsel %vm1122, %v1123, %v1124
    %v1126 = vrot.slane %v509, 2
    %v1127 = vrot.slane %v515, 2
    %v1128 = vsel %vm1122, %v1126, %v1127
    %v1129 = vrot.slane %v521, 2
    %v1130 = vrot.slane %v527, 2
    %v1131 = vsel %vm1122, %v1129, %v1130
    %v1132 = vrot.slane %v533, 2
    %v1133 = vrot.slane %v539, 2
    %v1134 = vsel %vm1122, %v1132, %v1133
    %v1135 = vrot.slane %v545, 2
    %v1136 = vrot.slane %v551, 2
    %v1137 = vsel %vm1122, %v1135, %v1136
    %v1138 = vrot.slane %v557, 2
    %v1139 = vrot.slane %v563, 2
    %v1140 = vsel %vm1122, %v1138, %v1139
    %v1141 = vrot.slane %v569, 2
    %v1142 = vrot.slane %v575, 2
    %v1143 = vsel %vm1122, %v1141, %v1142
    %v1144 = vrot.slane %v581, 2
    %v1145 = vrot.slane %v587, 2
    %v1146 = vsel %vm1122, %v1144, %v1145
    %v1147 = vrot.slane %v593, 2
    %v1148 = vrot.slane %v599, 2
    %v1149 = vsel %vm1122, %v1147, %v1148
    %v1150 = vrot.slane %v605, 2
    %v1151 = vrot.slane %v611, 2
    %v1152 = vsel %vm1122, %v1150, %v1151
    %v1153 = vrot.slane %v617, 2
    %v1154 = vrot.slane %v623, 2
    %v1155 = vsel %vm1122, %v1153, %v1154
    %v1156 = vrot.slane %v629, 2
    %v1157 = vrot.slane %v635, 2
    %v1158 = vsel %vm1122, %v1156, %v1157
    %v1159 = vrot.slane %v641, 2
    %v1160 = vrot.slane %v647, 2
    %v1161 = vsel %vm1122, %v1159, %v1160
    %v1162 = vrot.slane %v653, 2
    %v1163 = vrot.slane %v659, 2
    %v1164 = vsel %vm1122, %v1162, %v1163
    %v1165 = vrot.slane %v665, 2
    %v1166 = vrot.slane %v671, 2
    %v1167 = vsel %vm1122, %v1165, %v1166
    %v1168 = vrot.slane %v677, 2
    %v1169 = vrot.slane %v683, 2
    %v1170 = vsel %vm1122, %v1168, %v1169
    %1171 = vrot.lane.b32.xlu0 %v1125, 64
    %v1172 = vpop.permute.xlu0 %1171
    %1173 = vrot.lane.b32.xlu0 %v1124, 64
    %v1174 = vpop.permute.xlu0 %1173
    %1175 = vrot.lane.b32.xlu0 %v1128, 64
    %v1176 = vpop.permute.xlu0 %1175
    %1177 = vrot.lane.b32.xlu0 %v1127, 64
    %v1178 = vpop.permute.xlu0 %1177
    %1179 = vrot.lane.b32.xlu0 %v1131, 64
    %v1180 = vpop.permute.xlu0 %1179
    %1181 = vrot.lane.b32.xlu0 %v1130, 64
    %v1182 = vpop.permute.xlu0 %1181
    %1183 = vrot.lane.b32.xlu0 %v1134, 64
    %v1184 = vpop.permute.xlu0 %1183
    %1185 = vrot.lane.b32.xlu0 %v1133, 64
    %v1186 = vpop.permute.xlu0 %1185
    %1187 = vrot.lane.b32.xlu0 %v1137, 64
    %v1188 = vpop.permute.xlu0 %1187
    %1189 = vrot.lane.b32.xlu0 %v1136, 64
    %v1190 = vpop.permute.xlu0 %1189
    %1191 = vrot.lane.b32.xlu0 %v1140, 64
    %v1192 = vpop.permute.xlu0 %1191
    %1193 = vrot.lane.b32.xlu0 %v1139, 64
    %v1194 = vpop.permute.xlu0 %1193
    %1195 = vrot.lane.b32.xlu0 %v1143, 64
    %v1196 = vpop.permute.xlu0 %1195
    %1197 = vrot.lane.b32.xlu0 %v1142, 64
    %v1198 = vpop.permute.xlu0 %1197
    %1199 = vrot.lane.b32.xlu0 %v1146, 64
    %v1200 = vpop.permute.xlu0 %1199
    %1201 = vrot.lane.b32.xlu0 %v1145, 64
    %v1202 = vpop.permute.xlu0 %1201
    %1203 = vrot.lane.b32.xlu0 %v1149, 64
    %v1204 = vpop.permute.xlu0 %1203
    %1205 = vrot.lane.b32.xlu0 %v1148, 64
    %v1206 = vpop.permute.xlu0 %1205
    %1207 = vrot.lane.b32.xlu0 %v1152, 64
    %v1208 = vpop.permute.xlu0 %1207
    %1209 = vrot.lane.b32.xlu0 %v1151, 64
    %v1210 = vpop.permute.xlu0 %1209
    %1211 = vrot.lane.b32.xlu0 %v1155, 64
    %v1212 = vpop.permute.xlu0 %1211
    %1213 = vrot.lane.b32.xlu0 %v1154, 64
    %v1214 = vpop.permute.xlu0 %1213
    %1215 = vrot.lane.b32.xlu0 %v1158, 64
    %v1216 = vpop.permute.xlu0 %1215
    %1217 = vrot.lane.b32.xlu0 %v1157, 64
    %v1218 = vpop.permute.xlu0 %1217
    %1219 = vrot.lane.b32.xlu0 %v1161, 64
    %v1220 = vpop.permute.xlu0 %1219
    %1221 = vrot.lane.b32.xlu0 %v1160, 64
    %v1222 = vpop.permute.xlu0 %1221
    %1223 = vrot.lane.b32.xlu0 %v1164, 64
    %v1224 = vpop.permute.xlu0 %1223
    %1225 = vrot.lane.b32.xlu0 %v1163, 64
    %v1226 = vpop.permute.xlu0 %1225
    %1227 = vrot.lane.b32.xlu0 %v1167, 64
    %v1228 = vpop.permute.xlu0 %1227
    %1229 = vrot.lane.b32.xlu0 %v1166, 64
    %v1230 = vpop.permute.xlu0 %1229
    %1231 = vrot.lane.b32.xlu0 %v1170, 64
    %v1232 = vpop.permute.xlu0 %1231
    %1233 = vrot.lane.b32.xlu0 %v1169, 64
    %v1234 = vpop.permute.xlu0 %1233
    %v1267 = vadd.f32 %v1090, %v1172
    %v1268 = vadd.f32 %v1091, %v1174
    %v1269 = vadd.f32 %v1092, %v1176
    %v1270 = vadd.f32 %v1093, %v1178
    %v1271 = vadd.f32 %v1094, %v1180
    %v1272 = vadd.f32 %v1095, %v1182
    %v1273 = vadd.f32 %v1096, %v1184
    %v1274 = vadd.f32 %v1097, %v1186
    %v1275 = vadd.f32 %v1098, %v1188
    %v1276 = vadd.f32 %v1099, %v1190
    %v1277 = vadd.f32 %v1100, %v1192
    %v1278 = vadd.f32 %v1101, %v1194
    %v1279 = vadd.f32 %v1102, %v1196
    %v1280 = vadd.f32 %v1103, %v1198
    %v1281 = vadd.f32 %v1104, %v1200
    %v1282 = vadd.f32 %v1105, %v1202
    %v1283 = vadd.f32 %v1106, %v1204
    %v1284 = vadd.f32 %v1107, %v1206
    %v1285 = vadd.f32 %v1108, %v1208
    %v1286 = vadd.f32 %v1109, %v1210
    %v1287 = vadd.f32 %v1110, %v1212
    %v1288 = vadd.f32 %v1111, %v1214
    %v1289 = vadd.f32 %v1112, %v1216
    %v1290 = vadd.f32 %v1113, %v1218
    %v1291 = vadd.f32 %v1114, %v1220
    %v1292 = vadd.f32 %v1115, %v1222
    %v1293 = vadd.f32 %v1116, %v1224
    %v1294 = vadd.f32 %v1117, %v1226
    %v1295 = vadd.f32 %v1118, %v1228
    %v1296 = vadd.f32 %v1119, %v1230
    %v1297 = vadd.f32 %v1120, %v1232
    %v1298 = vadd.f32 %v1121, %v1234
    %v1300 = vlaneseq
    %v1301 = vshrl.u32 %v1300, 7
    %v1302 = vsub.s32 0, %v1301
    %v1303 = vrot.slane %v912, %v1302
    %v1305 = vadd.f32 %v1267, %v1303
    %v1306 = vadd.f32 %v1268, %v1303
    %v1307 = vadd.f32 %v1269, %v1303
    %v1308 = vadd.f32 %v1270, %v1303
    %v1309 = vadd.f32 %v1271, %v1303
    %v1310 = vadd.f32 %v1272, %v1303
    %v1311 = vadd.f32 %v1273, %v1303
    %v1312 = vadd.f32 %v1274, %v1303
    %v1313 = vadd.f32 %v1275, %v1303
    %v1314 = vadd.f32 %v1276, %v1303
    %v1315 = vadd.f32 %v1277, %v1303
    %v1316 = vadd.f32 %v1278, %v1303
    %v1317 = vadd.f32 %v1279, %v1303
    %v1318 = vadd.f32 %v1280, %v1303
    %v1319 = vadd.f32 %v1281, %v1303
    %v1320 = vadd.f32 %v1282, %v1303
    %v1321 = vadd.f32 %v1283, %v1303
    %v1322 = vadd.f32 %v1284, %v1303
    %v1323 = vadd.f32 %v1285, %v1303
    %v1324 = vadd.f32 %v1286, %v1303
    %v1325 = vadd.f32 %v1287, %v1303
    %v1326 = vadd.f32 %v1288, %v1303
    %v1327 = vadd.f32 %v1289, %v1303
    %v1328 = vadd.f32 %v1290, %v1303
    %v1329 = vadd.f32 %v1291, %v1303
    %v1330 = vadd.f32 %v1292, %v1303
    %v1331 = vadd.f32 %v1293, %v1303
    %v1332 = vadd.f32 %v1294, %v1303
    %v1333 = vadd.f32 %v1295, %v1303
    %v1334 = vadd.f32 %v1296, %v1303
    %v1335 = vadd.f32 %v1297, %v1303
    %v1336 = vadd.f32 %v1298, %v1303
    %v1337 = vmax.f32 %v1305, 0.0
    %v1338 = vmax.f32 %v1306, 0.0
    %v1339 = vmax.f32 %v1307, 0.0
    %v1340 = vmax.f32 %v1308, 0.0
    %v1341 = vmax.f32 %v1309, 0.0
    %v1342 = vmax.f32 %v1310, 0.0
    %v1343 = vmax.f32 %v1311, 0.0
    %v1344 = vmax.f32 %v1312, 0.0
    %v1345 = vmax.f32 %v1313, 0.0
    %v1346 = vmax.f32 %v1314, 0.0
    %v1347 = vmax.f32 %v1315, 0.0
    %v1348 = vmax.f32 %v1316, 0.0
    %v1349 = vmax.f32 %v1317, 0.0
    %v1350 = vmax.f32 %v1318, 0.0
    %v1351 = vmax.f32 %v1319, 0.0
    %v1352 = vmax.f32 %v1320, 0.0
    %v1353 = vmax.f32 %v1321, 0.0
    %v1354 = vmax.f32 %v1322, 0.0
    %v1355 = vmax.f32 %v1323, 0.0
    %v1356 = vmax.f32 %v1324, 0.0
    %v1357 = vmax.f32 %v1325, 0.0
    %v1358 = vmax.f32 %v1326, 0.0
    %v1359 = vmax.f32 %v1327, 0.0
    %v1360 = vmax.f32 %v1328, 0.0
    %v1361 = vmax.f32 %v1329, 0.0
    %v1362 = vmax.f32 %v1330, 0.0
    %v1363 = vmax.f32 %v1331, 0.0
    %v1364 = vmax.f32 %v1332, 0.0
    %v1365 = vmax.f32 %v1333, 0.0
    %v1366 = vmax.f32 %v1334, 0.0
    %v1367 = vmax.f32 %v1335, 0.0
    %v1368 = vmax.f32 %v1336, 0.0
    %v1369 = vsel %vm333, %v1337, -inf
    %vm1370 = vcmask 259072
    %v1371 = vsel %vm1370, %v1338, -inf
    %v1372 = vmax.f32 %v1369, %v1371
    %v1373 = vrot.slane %v1372, 4
    %v1374 = vmax.f32 %v1372, %v1373
    %v1375 = vrot.slane %v1374, 2
    %v1376 = vmax.f32 %v1374, %v1375
    %v1377 = vrot.slane %v1376, 1
    %v1378 = vmax.f32 %v1376, %v1377
    %v1379 = vsel %vm333, %v1339, -inf
    %v1380 = vsel %vm1370, %v1340, -inf
    %v1381 = vmax.f32 %v1379, %v1380
    %v1382 = vrot.slane %v1381, 4
    %v1383 = vmax.f32 %v1381, %v1382
    %v1384 = vrot.slane %v1383, 2
    %v1385 = vmax.f32 %v1383, %v1384
    %v1386 = vrot.slane %v1385, 1
    %v1387 = vmax.f32 %v1385, %v1386
    %v1388 = vsel %vm333, %v1341, -inf
    %v1389 = vsel %vm1370, %v1342, -inf
    %v1390 = vmax.f32 %v1388, %v1389
    %v1391 = vrot.slane %v1390, 4
    %v1392 = vmax.f32 %v1390, %v1391
    %v1393 = vrot.slane %v1392, 2
    %v1394 = vmax.f32 %v1392, %v1393
    %v1395 = vrot.slane %v1394, 1
    %v1396 = vmax.f32 %v1394, %v1395
    %v1397 = vsel %vm333, %v1343, -inf
    %v1398 = vsel %vm1370, %v1344, -inf
    %v1399 = vmax.f32 %v1397, %v1398
    %v1400 = vrot.slane %v1399, 4
    %v1401 = vmax.f32 %v1399, %v1400
    %v1402 = vrot.slane %v1401, 2
    %v1403 = vmax.f32 %v1401, %v1402
    %v1404 = vrot.slane %v1403, 1
    %v1405 = vmax.f32 %v1403, %v1404
    %v1406 = vsel %vm333, %v1345, -inf
    %v1407 = vsel %vm1370, %v1346, -inf
    %v1408 = vmax.f32 %v1406, %v1407
    %v1409 = vrot.slane %v1408, 4
    %v1410 = vmax.f32 %v1408, %v1409
    %v1411 = vrot.slane %v1410, 2
    %v1412 = vmax.f32 %v1410, %v1411
    %v1413 = vrot.slane %v1412, 1
    %v1414 = vmax.f32 %v1412, %v1413
    %v1415 = vsel %vm333, %v1347, -inf
    %v1416 = vsel %vm1370, %v1348, -inf
    %v1417 = vmax.f32 %v1415, %v1416
    %v1418 = vrot.slane %v1417, 4
    %v1419 = vmax.f32 %v1417, %v1418
    %v1420 = vrot.slane %v1419, 2
    %v1421 = vmax.f32 %v1419, %v1420
    %v1422 = vrot.slane %v1421, 1
    %v1423 = vmax.f32 %v1421, %v1422
    %v1424 = vsel %vm333, %v1349, -inf
    %v1425 = vsel %vm1370, %v1350, -inf
    %v1426 = vmax.f32 %v1424, %v1425
    %v1427 = vrot.slane %v1426, 4
    %v1428 = vmax.f32 %v1426, %v1427
    %v1429 = vrot.slane %v1428, 2
    %v1430 = vmax.f32 %v1428, %v1429
    %v1431 = vrot.slane %v1430, 1
    %v1432 = vmax.f32 %v1430, %v1431
    %v1433 = vsel %vm333, %v1351, -inf
    %v1434 = vsel %vm1370, %v1352, -inf
    %v1435 = vmax.f32 %v1433, %v1434
    %v1436 = vrot.slane %v1435, 4
    %v1437 = vmax.f32 %v1435, %v1436
    %v1438 = vrot.slane %v1437, 2
    %v1439 = vmax.f32 %v1437, %v1438
    %v1440 = vrot.slane %v1439, 1
    %v1441 = vmax.f32 %v1439, %v1440
    %v1442 = vsel %vm333, %v1353, -inf
    %v1443 = vsel %vm1370, %v1354, -inf
    %v1444 = vmax.f32 %v1442, %v1443
    %v1445 = vrot.slane %v1444, 4
    %v1446 = vmax.f32 %v1444, %v1445
    %v1447 = vrot.slane %v1446, 2
    %v1448 = vmax.f32 %v1446, %v1447
    %v1449 = vrot.slane %v1448, 1
    %v1450 = vmax.f32 %v1448, %v1449
    %v1451 = vsel %vm333, %v1355, -inf
    %v1452 = vsel %vm1370, %v1356, -inf
    %v1453 = vmax.f32 %v1451, %v1452
    %v1454 = vrot.slane %v1453, 4
    %v1455 = vmax.f32 %v1453, %v1454
    %v1456 = vrot.slane %v1455, 2
    %v1457 = vmax.f32 %v1455, %v1456
    %v1458 = vrot.slane %v1457, 1
    %v1459 = vmax.f32 %v1457, %v1458
    %v1460 = vsel %vm333, %v1357, -inf
    %v1461 = vsel %vm1370, %v1358, -inf
    %v1462 = vmax.f32 %v1460, %v1461
    %v1463 = vrot.slane %v1462, 4
    %v1464 = vmax.f32 %v1462, %v1463
    %v1465 = vrot.slane %v1464, 2
    %v1466 = vmax.f32 %v1464, %v1465
    %v1467 = vrot.slane %v1466, 1
    %v1468 = vmax.f32 %v1466, %v1467
    %v1469 = vsel %vm333, %v1359, -inf
    %v1470 = vsel %vm1370, %v1360, -inf
    %v1471 = vmax.f32 %v1469, %v1470
    %v1472 = vrot.slane %v1471, 4
    %v1473 = vmax.f32 %v1471, %v1472
    %v1474 = vrot.slane %v1473, 2
    %v1475 = vmax.f32 %v1473, %v1474
    %v1476 = vrot.slane %v1475, 1
    %v1477 = vmax.f32 %v1475, %v1476
    %v1478 = vsel %vm333, %v1361, -inf
    %v1479 = vsel %vm1370, %v1362, -inf
    %v1480 = vmax.f32 %v1478, %v1479
    %v1481 = vrot.slane %v1480, 4
    %v1482 = vmax.f32 %v1480, %v1481
    %v1483 = vrot.slane %v1482, 2
    %v1484 = vmax.f32 %v1482, %v1483
    %v1485 = vrot.slane %v1484, 1
    %v1486 = vmax.f32 %v1484, %v1485
    %v1487 = vsel %vm333, %v1363, -inf
    %v1488 = vsel %vm1370, %v1364, -inf
    %v1489 = vmax.f32 %v1487, %v1488
    %v1490 = vrot.slane %v1489, 4
    %v1491 = vmax.f32 %v1489, %v1490
    %v1492 = vrot.slane %v1491, 2
    %v1493 = vmax.f32 %v1491, %v1492
    %v1494 = vrot.slane %v1493, 1
    %v1495 = vmax.f32 %v1493, %v1494
    %v1496 = vsel %vm333, %v1365, -inf
    %v1497 = vsel %vm1370, %v1366, -inf
    %v1498 = vmax.f32 %v1496, %v1497
    %v1499 = vrot.slane %v1498, 4
    %v1500 = vmax.f32 %v1498, %v1499
    %v1501 = vrot.slane %v1500, 2
    %v1502 = vmax.f32 %v1500, %v1501
    %v1503 = vrot.slane %v1502, 1
    %v1504 = vmax.f32 %v1502, %v1503
    %v1505 = vsel %vm333, %v1367, -inf
    %v1506 = vsel %vm1370, %v1368, -inf
    %v1507 = vmax.f32 %v1505, %v1506
    %v1508 = vrot.slane %v1507, 4
    %v1509 = vmax.f32 %v1507, %v1508
    %v1510 = vrot.slane %v1509, 2
    %v1511 = vmax.f32 %v1509, %v1510
    %v1512 = vrot.slane %v1511, 1
    %v1513 = vmax.f32 %v1511, %v1512
    %v1546 = vrot.slane %v499, 1
    %v1547 = vrot.slane %v505, 1
    %v1548 = vsel %vm945, %v1546, %v1547
    %v1549 = vrot.slane %v511, 1
    %v1550 = vrot.slane %v517, 1
    %v1551 = vsel %vm945, %v1549, %v1550
    %v1552 = vrot.slane %v523, 1
    %v1553 = vrot.slane %v529, 1
    %v1554 = vsel %vm945, %v1552, %v1553
    %v1555 = vrot.slane %v535, 1
    %v1556 = vrot.slane %v541, 1
    %v1557 = vsel %vm945, %v1555, %v1556
    %v1558 = vrot.slane %v547, 1
    %v1559 = vrot.slane %v553, 1
    %v1560 = vsel %vm945, %v1558, %v1559
    %v1561 = vrot.slane %v559, 1
    %v1562 = vrot.slane %v565, 1
    %v1563 = vsel %vm945, %v1561, %v1562
    %v1564 = vrot.slane %v571, 1
    %v1565 = vrot.slane %v577, 1
    %v1566 = vsel %vm945, %v1564, %v1565
    %v1567 = vrot.slane %v583, 1
    %v1568 = vrot.slane %v589, 1
    %v1569 = vsel %vm945, %v1567, %v1568
    %v1570 = vrot.slane %v595, 1
    %v1571 = vrot.slane %v601, 1
    %v1572 = vsel %vm945, %v1570, %v1571
    %v1573 = vrot.slane %v607, 1
    %v1574 = vrot.slane %v613, 1
    %v1575 = vsel %vm945, %v1573, %v1574
    %v1576 = vrot.slane %v619, 1
    %v1577 = vrot.slane %v625, 1
    %v1578 = vsel %vm945, %v1576, %v1577
    %v1579 = vrot.slane %v631, 1
    %v1580 = vrot.slane %v637, 1
    %v1581 = vsel %vm945, %v1579, %v1580
    %v1582 = vrot.slane %v643, 1
    %v1583 = vrot.slane %v649, 1
    %v1584 = vsel %vm945, %v1582, %v1583
    %v1585 = vrot.slane %v655, 1
    %v1586 = vrot.slane %v661, 1
    %v1587 = vsel %vm945, %v1585, %v1586
    %v1588 = vrot.slane %v667, 1
    %v1589 = vrot.slane %v673, 1
    %v1590 = vsel %vm945, %v1588, %v1589
    %v1591 = vrot.slane %v679, 1
    %v1592 = vrot.slane %v685, 1
    %v1593 = vsel %vm945, %v1591, %v1592
    %1594 = vrot.lane.b32.xlu0 %v1548, 96
    %v1595 = vpop.permute.xlu0 %1594
    %1596 = vrot.lane.b32.xlu0 %v1547, 96
    %v1597 = vpop.permute.xlu0 %1596
    %1598 = vrot.lane.b32.xlu0 %v1551, 96
    %v1599 = vpop.permute.xlu0 %1598
    %1600 = vrot.lane.b32.xlu0 %v1550, 96
    %v1601 = vpop.permute.xlu0 %1600
    %1602 = vrot.lane.b32.xlu0 %v1554, 96
    %v1603 = vpop.permute.xlu0 %1602
    %1604 = vrot.lane.b32.xlu0 %v1553, 96
    %v1605 = vpop.permute.xlu0 %1604
    %1606 = vrot.lane.b32.xlu0 %v1557, 96
    %v1607 = vpop.permute.xlu0 %1606
    %1608 = vrot.lane.b32.xlu0 %v1556, 96
    %v1609 = vpop.permute.xlu0 %1608
    %1610 = vrot.lane.b32.xlu0 %v1560, 96
    %v1611 = vpop.permute.xlu0 %1610
    %1612 = vrot.lane.b32.xlu0 %v1559, 96
    %v1613 = vpop.permute.xlu0 %1612
    %1614 = vrot.lane.b32.xlu0 %v1563, 96
    %v1615 = vpop.permute.xlu0 %1614
    %1616 = vrot.lane.b32.xlu0 %v1562, 96
    %v1617 = vpop.permute.xlu0 %1616
    %1618 = vrot.lane.b32.xlu0 %v1566, 96
    %v1619 = vpop.permute.xlu0 %1618
    %1620 = vrot.lane.b32.xlu0 %v1565, 96
    %v1621 = vpop.permute.xlu0 %1620
    %1622 = vrot.lane.b32.xlu0 %v1569, 96
    %v1623 = vpop.permute.xlu0 %1622
    %1624 = vrot.lane.b32.xlu0 %v1568, 96
    %v1625 = vpop.permute.xlu0 %1624
    %1626 = vrot.lane.b32.xlu0 %v1572, 96
    %v1627 = vpop.permute.xlu0 %1626
    %1628 = vrot.lane.b32.xlu0 %v1571, 96
    %v1629 = vpop.permute.xlu0 %1628
    %1630 = vrot.lane.b32.xlu0 %v1575, 96
    %v1631 = vpop.permute.xlu0 %1630
    %1632 = vrot.lane.b32.xlu0 %v1574, 96
    %v1633 = vpop.permute.xlu0 %1632
    %1634 = vrot.lane.b32.xlu0 %v1578, 96
    %v1635 = vpop.permute.xlu0 %1634
    %1636 = vrot.lane.b32.xlu0 %v1577, 96
    %v1637 = vpop.permute.xlu0 %1636
    %1638 = vrot.lane.b32.xlu0 %v1581, 96
    %v1639 = vpop.permute.xlu0 %1638
    %1640 = vrot.lane.b32.xlu0 %v1580, 96
    %v1641 = vpop.permute.xlu0 %1640
    %1642 = vrot.lane.b32.xlu0 %v1584, 96
    %v1643 = vpop.permute.xlu0 %1642
    %1644 = vrot.lane.b32.xlu0 %v1583, 96
    %v1645 = vpop.permute.xlu0 %1644
    %1646 = vrot.lane.b32.xlu0 %v1587, 96
    %v1647 = vpop.permute.xlu0 %1646
    %1648 = vrot.lane.b32.xlu0 %v1586, 96
    %v1649 = vpop.permute.xlu0 %1648
    %1650 = vrot.lane.b32.xlu0 %v1590, 96
    %v1651 = vpop.permute.xlu0 %1650
    %1652 = vrot.lane.b32.xlu0 %v1589, 96
    %v1653 = vpop.permute.xlu0 %1652
    %1654 = vrot.lane.b32.xlu0 %v1593, 96
    %v1655 = vpop.permute.xlu0 %1654
    %1656 = vrot.lane.b32.xlu0 %v1592, 96
    %v1657 = vpop.permute.xlu0 %1656
    %v1690 = vadd.f32 %v497, %v1595
    %v1691 = vadd.f32 %v503, %v1597
    %v1692 = vadd.f32 %v509, %v1599
    %v1693 = vadd.f32 %v515, %v1601
    %v1694 = vadd.f32 %v521, %v1603
    %v1695 = vadd.f32 %v527, %v1605
    %v1696 = vadd.f32 %v533, %v1607
    %v1697 = vadd.f32 %v539, %v1609
    %v1698 = vadd.f32 %v545, %v1611
    %v1699 = vadd.f32 %v551, %v1613
    %v1700 = vadd.f32 %v557, %v1615
    %v1701 = vadd.f32 %v563, %v1617
    %v1702 = vadd.f32 %v569, %v1619
    %v1703 = vadd.f32 %v575, %v1621
    %v1704 = vadd.f32 %v581, %v1623
    %v1705 = vadd.f32 %v587, %v1625
    %v1706 = vadd.f32 %v593, %v1627
    %v1707 = vadd.f32 %v599, %v1629
    %v1708 = vadd.f32 %v605, %v1631
    %v1709 = vadd.f32 %v611, %v1633
    %v1710 = vadd.f32 %v617, %v1635
    %v1711 = vadd.f32 %v623, %v1637
    %v1712 = vadd.f32 %v629, %v1639
    %v1713 = vadd.f32 %v635, %v1641
    %v1714 = vadd.f32 %v641, %v1643
    %v1715 = vadd.f32 %v647, %v1645
    %v1716 = vadd.f32 %v653, %v1647
    %v1717 = vadd.f32 %v659, %v1649
    %v1718 = vadd.f32 %v665, %v1651
    %v1719 = vadd.f32 %v671, %v1653
    %v1720 = vadd.f32 %v677, %v1655
    %v1721 = vadd.f32 %v683, %v1657
    %v1722 = vrot.slane %v499, 2
    %v1723 = vrot.slane %v505, 2
    %v1724 = vsel %vm1122, %v1722, %v1723
    %v1725 = vrot.slane %v511, 2
    %v1726 = vrot.slane %v517, 2
    %v1727 = vsel %vm1122, %v1725, %v1726
    %v1728 = vrot.slane %v523, 2
    %v1729 = vrot.slane %v529, 2
    %v1730 = vsel %vm1122, %v1728, %v1729
    %v1731 = vrot.slane %v535, 2
    %v1732 = vrot.slane %v541, 2
    %v1733 = vsel %vm1122, %v1731, %v1732
    %v1734 = vrot.slane %v547, 2
    %v1735 = vrot.slane %v553, 2
    %v1736 = vsel %vm1122, %v1734, %v1735
    %v1737 = vrot.slane %v559, 2
    %v1738 = vrot.slane %v565, 2
    %v1739 = vsel %vm1122, %v1737, %v1738
    %v1740 = vrot.slane %v571, 2
    %v1741 = vrot.slane %v577, 2
    %v1742 = vsel %vm1122, %v1740, %v1741
    %v1743 = vrot.slane %v583, 2
    %v1744 = vrot.slane %v589, 2
    %v1745 = vsel %vm1122, %v1743, %v1744
    %v1746 = vrot.slane %v595, 2
    %v1747 = vrot.slane %v601, 2
    %v1748 = vsel %vm1122, %v1746, %v1747
    %v1749 = vrot.slane %v607, 2
    %v1750 = vrot.slane %v613, 2
    %v1751 = vsel %vm1122, %v1749, %v1750
    %v1752 = vrot.slane %v619, 2
    %v1753 = vrot.slane %v625, 2
    %v1754 = vsel %vm1122, %v1752, %v1753
    %v1755 = vrot.slane %v631, 2
    %v1756 = vrot.slane %v637, 2
    %v1757 = vsel %vm1122, %v1755, %v1756
    %v1758 = vrot.slane %v643, 2
    %v1759 = vrot.slane %v649, 2
    %v1760 = vsel %vm1122, %v1758, %v1759
    %v1761 = vrot.slane %v655, 2
    %v1762 = vrot.slane %v661, 2
    %v1763 = vsel %vm1122, %v1761, %v1762
    %v1764 = vrot.slane %v667, 2
    %v1765 = vrot.slane %v673, 2
    %v1766 = vsel %vm1122, %v1764, %v1765
    %v1767 = vrot.slane %v679, 2
    %v1768 = vrot.slane %v685, 2
    %v1769 = vsel %vm1122, %v1767, %v1768
    %1770 = vrot.lane.b32.xlu0 %v1724, 64
    %v1771 = vpop.permute.xlu0 %1770
    %1772 = vrot.lane.b32.xlu0 %v1723, 64
    %v1773 = vpop.permute.xlu0 %1772
    %1774 = vrot.lane.b32.xlu0 %v1727, 64
    %v1775 = vpop.permute.xlu0 %1774
    %1776 = vrot.lane.b32.xlu0 %v1726, 64
    %v1777 = vpop.permute.xlu0 %1776
    %1778 = vrot.lane.b32.xlu0 %v1730, 64
    %v1779 = vpop.permute.xlu0 %1778
    %1780 = vrot.lane.b32.xlu0 %v1729, 64
    %v1781 = vpop.permute.xlu0 %1780
    %1782 = vrot.lane.b32.xlu0 %v1733, 64
    %v1783 = vpop.permute.xlu0 %1782
    %1784 = vrot.lane.b32.xlu0 %v1732, 64
    %v1785 = vpop.permute.xlu0 %1784
    %1786 = vrot.lane.b32.xlu0 %v1736, 64
    %v1787 = vpop.permute.xlu0 %1786
    %1788 = vrot.lane.b32.xlu0 %v1735, 64
    %v1789 = vpop.permute.xlu0 %1788
    %1790 = vrot.lane.b32.xlu0 %v1739, 64
    %v1791 = vpop.permute.xlu0 %1790
    %1792 = vrot.lane.b32.xlu0 %v1738, 64
    %v1793 = vpop.permute.xlu0 %1792
    %1794 = vrot.lane.b32.xlu0 %v1742, 64
    %v1795 = vpop.permute.xlu0 %1794
    %1796 = vrot.lane.b32.xlu0 %v1741, 64
    %v1797 = vpop.permute.xlu0 %1796
    %1798 = vrot.lane.b32.xlu0 %v1745, 64
    %v1799 = vpop.permute.xlu0 %1798
    %1800 = vrot.lane.b32.xlu0 %v1744, 64
    %v1801 = vpop.permute.xlu0 %1800
    %1802 = vrot.lane.b32.xlu0 %v1748, 64
    %v1803 = vpop.permute.xlu0 %1802
    %1804 = vrot.lane.b32.xlu0 %v1747, 64
    %v1805 = vpop.permute.xlu0 %1804
    %1806 = vrot.lane.b32.xlu0 %v1751, 64
    %v1807 = vpop.permute.xlu0 %1806
    %1808 = vrot.lane.b32.xlu0 %v1750, 64
    %v1809 = vpop.permute.xlu0 %1808
    %1810 = vrot.lane.b32.xlu0 %v1754, 64
    %v1811 = vpop.permute.xlu0 %1810
    %1812 = vrot.lane.b32.xlu0 %v1753, 64
    %v1813 = vpop.permute.xlu0 %1812
    %1814 = vrot.lane.b32.xlu0 %v1757, 64
    %v1815 = vpop.permute.xlu0 %1814
    %1816 = vrot.lane.b32.xlu0 %v1756, 64
    %v1817 = vpop.permute.xlu0 %1816
    %1818 = vrot.lane.b32.xlu0 %v1760, 64
    %v1819 = vpop.permute.xlu0 %1818
    %1820 = vrot.lane.b32.xlu0 %v1759, 64
    %v1821 = vpop.permute.xlu0 %1820
    %1822 = vrot.lane.b32.xlu0 %v1763, 64
    %v1823 = vpop.permute.xlu0 %1822
    %1824 = vrot.lane.b32.xlu0 %v1762, 64
    %v1825 = vpop.permute.xlu0 %1824
    %1826 = vrot.lane.b32.xlu0 %v1766, 64
    %v1827 = vpop.permute.xlu0 %1826
    %1828 = vrot.lane.b32.xlu0 %v1765, 64
    %v1829 = vpop.permute.xlu0 %1828
    %1830 = vrot.lane.b32.xlu0 %v1769, 64
    %v1831 = vpop.permute.xlu0 %1830
    %1832 = vrot.lane.b32.xlu0 %v1768, 64
    %v1833 = vpop.permute.xlu0 %1832
    %v1866 = vadd.f32 %v1690, %v1771
    %v1867 = vadd.f32 %v1691, %v1773
    %v1868 = vadd.f32 %v1692, %v1775
    %v1869 = vadd.f32 %v1693, %v1777
    %v1870 = vadd.f32 %v1694, %v1779
    %v1871 = vadd.f32 %v1695, %v1781
    %v1872 = vadd.f32 %v1696, %v1783
    %v1873 = vadd.f32 %v1697, %v1785
    %v1874 = vadd.f32 %v1698, %v1787
    %v1875 = vadd.f32 %v1699, %v1789
    %v1876 = vadd.f32 %v1700, %v1791
    %v1877 = vadd.f32 %v1701, %v1793
    %v1878 = vadd.f32 %v1702, %v1795
    %v1879 = vadd.f32 %v1703, %v1797
    %v1880 = vadd.f32 %v1704, %v1799
    %v1881 = vadd.f32 %v1705, %v1801
    %v1882 = vadd.f32 %v1706, %v1803
    %v1883 = vadd.f32 %v1707, %v1805
    %v1884 = vadd.f32 %v1708, %v1807
    %v1885 = vadd.f32 %v1709, %v1809
    %v1886 = vadd.f32 %v1710, %v1811
    %v1887 = vadd.f32 %v1711, %v1813
    %v1888 = vadd.f32 %v1712, %v1815
    %v1889 = vadd.f32 %v1713, %v1817
    %v1890 = vadd.f32 %v1714, %v1819
    %v1891 = vadd.f32 %v1715, %v1821
    %v1892 = vadd.f32 %v1716, %v1823
    %v1893 = vadd.f32 %v1717, %v1825
    %v1894 = vadd.f32 %v1718, %v1827
    %v1895 = vadd.f32 %v1719, %v1829
    %v1896 = vadd.f32 %v1720, %v1831
    %v1897 = vadd.f32 %v1721, %v1833
    %vm1898 = vcmask 1044480
    %v1899 = vrot.slane %v499, 3
    %v1900 = vrot.slane %v505, 3
    %v1901 = vsel %vm1898, %v1899, %v1900
    %v1902 = vrot.slane %v511, 3
    %v1903 = vrot.slane %v517, 3
    %v1904 = vsel %vm1898, %v1902, %v1903
    %v1905 = vrot.slane %v523, 3
    %v1906 = vrot.slane %v529, 3
    %v1907 = vsel %vm1898, %v1905, %v1906
    %v1908 = vrot.slane %v535, 3
    %v1909 = vrot.slane %v541, 3
    %v1910 = vsel %vm1898, %v1908, %v1909
    %v1911 = vrot.slane %v547, 3
    %v1912 = vrot.slane %v553, 3
    %v1913 = vsel %vm1898, %v1911, %v1912
    %v1914 = vrot.slane %v559, 3
    %v1915 = vrot.slane %v565, 3
    %v1916 = vsel %vm1898, %v1914, %v1915
    %v1917 = vrot.slane %v571, 3
    %v1918 = vrot.slane %v577, 3
    %v1919 = vsel %vm1898, %v1917, %v1918
    %v1920 = vrot.slane %v583, 3
    %v1921 = vrot.slane %v589, 3
    %v1922 = vsel %vm1898, %v1920, %v1921
    %v1923 = vrot.slane %v595, 3
    %v1924 = vrot.slane %v601, 3
    %v1925 = vsel %vm1898, %v1923, %v1924
    %v1926 = vrot.slane %v607, 3
    %v1927 = vrot.slane %v613, 3
    %v1928 = vsel %vm1898, %v1926, %v1927
    %v1929 = vrot.slane %v619, 3
    %v1930 = vrot.slane %v625, 3
    %v1931 = vsel %vm1898, %v1929, %v1930
    %v1932 = vrot.slane %v631, 3
    %v1933 = vrot.slane %v637, 3
    %v1934 = vsel %vm1898, %v1932, %v1933
    %v1935 = vrot.slane %v643, 3
    %v1936 = vrot.slane %v649, 3
    %v1937 = vsel %vm1898, %v1935, %v1936
    %v1938 = vrot.slane %v655, 3
    %v1939 = vrot.slane %v661, 3
    %v1940 = vsel %vm1898, %v1938, %v1939
    %v1941 = vrot.slane %v667, 3
    %v1942 = vrot.slane %v673, 3
    %v1943 = vsel %vm1898, %v1941, %v1942
    %v1944 = vrot.slane %v679, 3
    %v1945 = vrot.slane %v685, 3
    %v1946 = vsel %vm1898, %v1944, %v1945
    %1947 = vrot.lane.b32.xlu0 %v1901, 32
    %v1948 = vpop.permute.xlu0 %1947
    %1949 = vrot.lane.b32.xlu0 %v1900, 32
    %v1950 = vpop.permute.xlu0 %1949
    %1951 = vrot.lane.b32.xlu0 %v1904, 32
    %v1952 = vpop.permute.xlu0 %1951
    %1953 = vrot.lane.b32.xlu0 %v1903, 32
    %v1954 = vpop.permute.xlu0 %1953
    %1955 = vrot.lane.b32.xlu0 %v1907, 32
    %v1956 = vpop.permute.xlu0 %1955
    %1957 = vrot.lane.b32.xlu0 %v1906, 32
    %v1958 = vpop.permute.xlu0 %1957
    %1959 = vrot.lane.b32.xlu0 %v1910, 32
    %v1960 = vpop.permute.xlu0 %1959
    %1961 = vrot.lane.b32.xlu0 %v1909, 32
    %v1962 = vpop.permute.xlu0 %1961
    %1963 = vrot.lane.b32.xlu0 %v1913, 32
    %v1964 = vpop.permute.xlu0 %1963
    %1965 = vrot.lane.b32.xlu0 %v1912, 32
    %v1966 = vpop.permute.xlu0 %1965
    %1967 = vrot.lane.b32.xlu0 %v1916, 32
    %v1968 = vpop.permute.xlu0 %1967
    %1969 = vrot.lane.b32.xlu0 %v1915, 32
    %v1970 = vpop.permute.xlu0 %1969
    %1971 = vrot.lane.b32.xlu0 %v1919, 32
    %v1972 = vpop.permute.xlu0 %1971
    %1973 = vrot.lane.b32.xlu0 %v1918, 32
    %v1974 = vpop.permute.xlu0 %1973
    %1975 = vrot.lane.b32.xlu0 %v1922, 32
    %v1976 = vpop.permute.xlu0 %1975
    %1977 = vrot.lane.b32.xlu0 %v1921, 32
    %v1978 = vpop.permute.xlu0 %1977
    %1979 = vrot.lane.b32.xlu0 %v1925, 32
    %v1980 = vpop.permute.xlu0 %1979
    %1981 = vrot.lane.b32.xlu0 %v1924, 32
    %v1982 = vpop.permute.xlu0 %1981
    %1983 = vrot.lane.b32.xlu0 %v1928, 32
    %v1984 = vpop.permute.xlu0 %1983
    %1985 = vrot.lane.b32.xlu0 %v1927, 32
    %v1986 = vpop.permute.xlu0 %1985
    %1987 = vrot.lane.b32.xlu0 %v1931, 32
    %v1988 = vpop.permute.xlu0 %1987
    %1989 = vrot.lane.b32.xlu0 %v1930, 32
    %v1990 = vpop.permute.xlu0 %1989
    %1991 = vrot.lane.b32.xlu0 %v1934, 32
    %v1992 = vpop.permute.xlu0 %1991
    %1993 = vrot.lane.b32.xlu0 %v1933, 32
    %v1994 = vpop.permute.xlu0 %1993
    %1995 = vrot.lane.b32.xlu0 %v1937, 32
    %v1996 = vpop.permute.xlu0 %1995
    %1997 = vrot.lane.b32.xlu0 %v1936, 32
    %v1998 = vpop.permute.xlu0 %1997
    %1999 = vrot.lane.b32.xlu0 %v1940, 32
    %v2000 = vpop.permute.xlu0 %1999
    %2001 = vrot.lane.b32.xlu0 %v1939, 32
    %v2002 = vpop.permute.xlu0 %2001
    %2003 = vrot.lane.b32.xlu0 %v1943, 32
    %v2004 = vpop.permute.xlu0 %2003
    %2005 = vrot.lane.b32.xlu0 %v1942, 32
    %v2006 = vpop.permute.xlu0 %2005
    %2007 = vrot.lane.b32.xlu0 %v1946, 32
    %v2008 = vpop.permute.xlu0 %2007
    %2009 = vrot.lane.b32.xlu0 %v1945, 32
    %v2010 = vpop.permute.xlu0 %2009
    %v2043 = vadd.f32 %v1866, %v1948
    %v2044 = vadd.f32 %v1867, %v1950
    %v2045 = vadd.f32 %v1868, %v1952
    %v2046 = vadd.f32 %v1869, %v1954
    %v2047 = vadd.f32 %v1870, %v1956
    %v2048 = vadd.f32 %v1871, %v1958
    %v2049 = vadd.f32 %v1872, %v1960
    %v2050 = vadd.f32 %v1873, %v1962
    %v2051 = vadd.f32 %v1874, %v1964
    %v2052 = vadd.f32 %v1875, %v1966
    %v2053 = vadd.f32 %v1876, %v1968
    %v2054 = vadd.f32 %v1877, %v1970
    %v2055 = vadd.f32 %v1878, %v1972
    %v2056 = vadd.f32 %v1879, %v1974
    %v2057 = vadd.f32 %v1880, %v1976
    %v2058 = vadd.f32 %v1881, %v1978
    %v2059 = vadd.f32 %v1882, %v1980
    %v2060 = vadd.f32 %v1883, %v1982
    %v2061 = vadd.f32 %v1884, %v1984
    %v2062 = vadd.f32 %v1885, %v1986
    %v2063 = vadd.f32 %v1886, %v1988
    %v2064 = vadd.f32 %v1887, %v1990
    %v2065 = vadd.f32 %v1888, %v1992
    %v2066 = vadd.f32 %v1889, %v1994
    %v2067 = vadd.f32 %v1890, %v1996
    %v2068 = vadd.f32 %v1891, %v1998
    %v2069 = vadd.f32 %v1892, %v2000
    %v2070 = vadd.f32 %v1893, %v2002
    %v2071 = vadd.f32 %v1894, %v2004
    %v2072 = vadd.f32 %v1895, %v2006
    %v2073 = vadd.f32 %v1896, %v2008
    %v2074 = vadd.f32 %v1897, %v2010
    %2075 = vrot.lane.b32.xlu0 %v1303, 64
    %v2076 = vpop.permute.xlu0 %2075
    %v2078 = vadd.f32 %v2043, %v2076
    %v2079 = vadd.f32 %v2044, %v2076
    %v2080 = vadd.f32 %v2045, %v2076
    %v2081 = vadd.f32 %v2046, %v2076
    %v2082 = vadd.f32 %v2047, %v2076
    %v2083 = vadd.f32 %v2048, %v2076
    %v2084 = vadd.f32 %v2049, %v2076
    %v2085 = vadd.f32 %v2050, %v2076
    %v2086 = vadd.f32 %v2051, %v2076
    %v2087 = vadd.f32 %v2052, %v2076
    %v2088 = vadd.f32 %v2053, %v2076
    %v2089 = vadd.f32 %v2054, %v2076
    %v2090 = vadd.f32 %v2055, %v2076
    %v2091 = vadd.f32 %v2056, %v2076
    %v2092 = vadd.f32 %v2057, %v2076
    %v2093 = vadd.f32 %v2058, %v2076
    %v2094 = vadd.f32 %v2059, %v2076
    %v2095 = vadd.f32 %v2060, %v2076
    %v2096 = vadd.f32 %v2061, %v2076
    %v2097 = vadd.f32 %v2062, %v2076
    %v2098 = vadd.f32 %v2063, %v2076
    %v2099 = vadd.f32 %v2064, %v2076
    %v2100 = vadd.f32 %v2065, %v2076
    %v2101 = vadd.f32 %v2066, %v2076
    %v2102 = vadd.f32 %v2067, %v2076
    %v2103 = vadd.f32 %v2068, %v2076
    %v2104 = vadd.f32 %v2069, %v2076
    %v2105 = vadd.f32 %v2070, %v2076
    %v2106 = vadd.f32 %v2071, %v2076
    %v2107 = vadd.f32 %v2072, %v2076
    %v2108 = vadd.f32 %v2073, %v2076
    %v2109 = vadd.f32 %v2074, %v2076
    %v2110 = vmax.f32 %v2078, 0.0
    %v2111 = vmax.f32 %v2079, 0.0
    %v2112 = vmax.f32 %v2080, 0.0
    %v2113 = vmax.f32 %v2081, 0.0
    %v2114 = vmax.f32 %v2082, 0.0
    %v2115 = vmax.f32 %v2083, 0.0
    %v2116 = vmax.f32 %v2084, 0.0
    %v2117 = vmax.f32 %v2085, 0.0
    %v2118 = vmax.f32 %v2086, 0.0
    %v2119 = vmax.f32 %v2087, 0.0
    %v2120 = vmax.f32 %v2088, 0.0
    %v2121 = vmax.f32 %v2089, 0.0
    %v2122 = vmax.f32 %v2090, 0.0
    %v2123 = vmax.f32 %v2091, 0.0
    %v2124 = vmax.f32 %v2092, 0.0
    %v2125 = vmax.f32 %v2093, 0.0
    %v2126 = vmax.f32 %v2094, 0.0
    %v2127 = vmax.f32 %v2095, 0.0
    %v2128 = vmax.f32 %v2096, 0.0
    %v2129 = vmax.f32 %v2097, 0.0
    %v2130 = vmax.f32 %v2098, 0.0
    %v2131 = vmax.f32 %v2099, 0.0
    %v2132 = vmax.f32 %v2100, 0.0
    %v2133 = vmax.f32 %v2101, 0.0
    %v2134 = vmax.f32 %v2102, 0.0
    %v2135 = vmax.f32 %v2103, 0.0
    %v2136 = vmax.f32 %v2104, 0.0
    %v2137 = vmax.f32 %v2105, 0.0
    %v2138 = vmax.f32 %v2106, 0.0
    %v2139 = vmax.f32 %v2107, 0.0
    %v2140 = vmax.f32 %v2108, 0.0
    %v2141 = vmax.f32 %v2109, 0.0
    %vm2142 = vcmask 1048320
    %v2143 = vsel %vm2142, %v2110, -inf
    %vm2144 = vcmask 1045248
    %v2145 = vsel %vm2144, %v2111, -inf
    %v2146 = vmax.f32 %v2143, %v2145
    %v2147 = vrot.slane %v2146, 4
    %v2148 = vmax.f32 %v2146, %v2147
    %v2149 = vrot.slane %v2148, 2
    %v2150 = vmax.f32 %v2148, %v2149
    %v2151 = vrot.slane %v2150, 1
    %v2152 = vmax.f32 %v2150, %v2151
    %v2153 = vsel %vm2142, %v2112, -inf
    %v2154 = vsel %vm2144, %v2113, -inf
    %v2155 = vmax.f32 %v2153, %v2154
    %v2156 = vrot.slane %v2155, 4
    %v2157 = vmax.f32 %v2155, %v2156
    %v2158 = vrot.slane %v2157, 2
    %v2159 = vmax.f32 %v2157, %v2158
    %v2160 = vrot.slane %v2159, 1
    %v2161 = vmax.f32 %v2159, %v2160
    %v2162 = vsel %vm2142, %v2114, -inf
    %v2163 = vsel %vm2144, %v2115, -inf
    %v2164 = vmax.f32 %v2162, %v2163
    %v2165 = vrot.slane %v2164, 4
    %v2166 = vmax.f32 %v2164, %v2165
    %v2167 = vrot.slane %v2166, 2
    %v2168 = vmax.f32 %v2166, %v2167
    %v2169 = vrot.slane %v2168, 1
    %v2170 = vmax.f32 %v2168, %v2169
    %v2171 = vsel %vm2142, %v2116, -inf
    %v2172 = vsel %vm2144, %v2117, -inf
    %v2173 = vmax.f32 %v2171, %v2172
    %v2174 = vrot.slane %v2173, 4
    %v2175 = vmax.f32 %v2173, %v2174
    %v2176 = vrot.slane %v2175, 2
    %v2177 = vmax.f32 %v2175, %v2176
    %v2178 = vrot.slane %v2177, 1
    %v2179 = vmax.f32 %v2177, %v2178
    %v2180 = vsel %vm2142, %v2118, -inf
    %v2181 = vsel %vm2144, %v2119, -inf
    %v2182 = vmax.f32 %v2180, %v2181
    %v2183 = vrot.slane %v2182, 4
    %v2184 = vmax.f32 %v2182, %v2183
    %v2185 = vrot.slane %v2184, 2
    %v2186 = vmax.f32 %v2184, %v2185
    %v2187 = vrot.slane %v2186, 1
    %v2188 = vmax.f32 %v2186, %v2187
    %v2189 = vsel %vm2142, %v2120, -inf
    %v2190 = vsel %vm2144, %v2121, -inf
    %v2191 = vmax.f32 %v2189, %v2190
    %v2192 = vrot.slane %v2191, 4
    %v2193 = vmax.f32 %v2191, %v2192
    %v2194 = vrot.slane %v2193, 2
    %v2195 = vmax.f32 %v2193, %v2194
    %v2196 = vrot.slane %v2195, 1
    %v2197 = vmax.f32 %v2195, %v2196
    %v2198 = vsel %vm2142, %v2122, -inf
    %v2199 = vsel %vm2144, %v2123, -inf
    %v2200 = vmax.f32 %v2198, %v2199
    %v2201 = vrot.slane %v2200, 4
    %v2202 = vmax.f32 %v2200, %v2201
    %v2203 = vrot.slane %v2202, 2
    %v2204 = vmax.f32 %v2202, %v2203
    %v2205 = vrot.slane %v2204, 1
    %v2206 = vmax.f32 %v2204, %v2205
    %v2207 = vsel %vm2142, %v2124, -inf
    %v2208 = vsel %vm2144, %v2125, -inf
    %v2209 = vmax.f32 %v2207, %v2208
    %v2210 = vrot.slane %v2209, 4
    %v2211 = vmax.f32 %v2209, %v2210
    %v2212 = vrot.slane %v2211, 2
    %v2213 = vmax.f32 %v2211, %v2212
    %v2214 = vrot.slane %v2213, 1
    %v2215 = vmax.f32 %v2213, %v2214
    %v2216 = vsel %vm2142, %v2126, -inf
    %v2217 = vsel %vm2144, %v2127, -inf
    %v2218 = vmax.f32 %v2216, %v2217
    %v2219 = vrot.slane %v2218, 4
    %v2220 = vmax.f32 %v2218, %v2219
    %v2221 = vrot.slane %v2220, 2
    %v2222 = vmax.f32 %v2220, %v2221
    %v2223 = vrot.slane %v2222, 1
    %v2224 = vmax.f32 %v2222, %v2223
    %v2225 = vsel %vm2142, %v2128, -inf
    %v2226 = vsel %vm2144, %v2129, -inf
    %v2227 = vmax.f32 %v2225, %v2226
    %v2228 = vrot.slane %v2227, 4
    %v2229 = vmax.f32 %v2227, %v2228
    %v2230 = vrot.slane %v2229, 2
    %v2231 = vmax.f32 %v2229, %v2230
    %v2232 = vrot.slane %v2231, 1
    %v2233 = vmax.f32 %v2231, %v2232
    %v2234 = vsel %vm2142, %v2130, -inf
    %v2235 = vsel %vm2144, %v2131, -inf
    %v2236 = vmax.f32 %v2234, %v2235
    %v2237 = vrot.slane %v2236, 4
    %v2238 = vmax.f32 %v2236, %v2237
    %v2239 = vrot.slane %v2238, 2
    %v2240 = vmax.f32 %v2238, %v2239
    %v2241 = vrot.slane %v2240, 1
    %v2242 = vmax.f32 %v2240, %v2241
    %v2243 = vsel %vm2142, %v2132, -inf
    %v2244 = vsel %vm2144, %v2133, -inf
    %v2245 = vmax.f32 %v2243, %v2244
    %v2246 = vrot.slane %v2245, 4
    %v2247 = vmax.f32 %v2245, %v2246
    %v2248 = vrot.slane %v2247, 2
    %v2249 = vmax.f32 %v2247, %v2248
    %v2250 = vrot.slane %v2249, 1
    %v2251 = vmax.f32 %v2249, %v2250
    %v2252 = vsel %vm2142, %v2134, -inf
    %v2253 = vsel %vm2144, %v2135, -inf
    %v2254 = vmax.f32 %v2252, %v2253
    %v2255 = vrot.slane %v2254, 4
    %v2256 = vmax.f32 %v2254, %v2255
    %v2257 = vrot.slane %v2256, 2
    %v2258 = vmax.f32 %v2256, %v2257
    %v2259 = vrot.slane %v2258, 1
    %v2260 = vmax.f32 %v2258, %v2259
    %v2261 = vsel %vm2142, %v2136, -inf
    %v2262 = vsel %vm2144, %v2137, -inf
    %v2263 = vmax.f32 %v2261, %v2262
    %v2264 = vrot.slane %v2263, 4
    %v2265 = vmax.f32 %v2263, %v2264
    %v2266 = vrot.slane %v2265, 2
    %v2267 = vmax.f32 %v2265, %v2266
    %v2268 = vrot.slane %v2267, 1
    %v2269 = vmax.f32 %v2267, %v2268
    %v2270 = vsel %vm2142, %v2138, -inf
    %v2271 = vsel %vm2144, %v2139, -inf
    %v2272 = vmax.f32 %v2270, %v2271
    %v2273 = vrot.slane %v2272, 4
    %v2274 = vmax.f32 %v2272, %v2273
    %v2275 = vrot.slane %v2274, 2
    %v2276 = vmax.f32 %v2274, %v2275
    %v2277 = vrot.slane %v2276, 1
    %v2278 = vmax.f32 %v2276, %v2277
    %v2279 = vsel %vm2142, %v2140, -inf
    %v2280 = vsel %vm2144, %v2141, -inf
    %v2281 = vmax.f32 %v2279, %v2280
    %v2282 = vrot.slane %v2281, 4
    %v2283 = vmax.f32 %v2281, %v2282
    %v2284 = vrot.slane %v2283, 2
    %v2285 = vmax.f32 %v2283, %v2284
    %v2286 = vrot.slane %v2285, 1
    %v2287 = vmax.f32 %v2285, %v2286
    %v2320 = vrot.slane %v754, 1
    %v2321 = vrot.slane %v759, 1
    %v2322 = vsel %vm945, %v2320, %v2321
    %v2323 = vrot.slane %v764, 1
    %v2324 = vrot.slane %v769, 1
    %v2325 = vsel %vm945, %v2323, %v2324
    %v2326 = vrot.slane %v774, 1
    %v2327 = vrot.slane %v779, 1
    %v2328 = vsel %vm945, %v2326, %v2327
    %v2329 = vrot.slane %v784, 1
    %v2330 = vrot.slane %v789, 1
    %v2331 = vsel %vm945, %v2329, %v2330
    %v2332 = vrot.slane %v794, 1
    %v2333 = vrot.slane %v799, 1
    %v2334 = vsel %vm945, %v2332, %v2333
    %v2335 = vrot.slane %v804, 1
    %v2336 = vrot.slane %v809, 1
    %v2337 = vsel %vm945, %v2335, %v2336
    %v2338 = vrot.slane %v814, 1
    %v2339 = vrot.slane %v819, 1
    %v2340 = vsel %vm945, %v2338, %v2339
    %v2341 = vrot.slane %v824, 1
    %v2342 = vrot.slane %v829, 1
    %v2343 = vsel %vm945, %v2341, %v2342
    %v2344 = vrot.slane %v834, 1
    %v2345 = vrot.slane %v839, 1
    %v2346 = vsel %vm945, %v2344, %v2345
    %v2347 = vrot.slane %v844, 1
    %v2348 = vrot.slane %v849, 1
    %v2349 = vsel %vm945, %v2347, %v2348
    %v2350 = vrot.slane %v854, 1
    %v2351 = vrot.slane %v859, 1
    %v2352 = vsel %vm945, %v2350, %v2351
    %v2353 = vrot.slane %v864, 1
    %v2354 = vrot.slane %v869, 1
    %v2355 = vsel %vm945, %v2353, %v2354
    %v2356 = vrot.slane %v874, 1
    %v2357 = vrot.slane %v879, 1
    %v2358 = vsel %vm945, %v2356, %v2357
    %v2359 = vrot.slane %v884, 1
    %v2360 = vrot.slane %v889, 1
    %v2361 = vsel %vm945, %v2359, %v2360
    %v2362 = vrot.slane %v894, 1
    %v2363 = vrot.slane %v899, 1
    %v2364 = vsel %vm945, %v2362, %v2363
    %v2365 = vrot.slane %v904, 1
    %v2366 = vrot.slane %v909, 1
    %v2367 = vsel %vm945, %v2365, %v2366
    %2368 = vrot.lane.b32.xlu0 %v2322, 96
    %v2369 = vpop.permute.xlu0 %2368
    %2370 = vrot.lane.b32.xlu0 %v2321, 96
    %v2371 = vpop.permute.xlu0 %2370
    %2372 = vrot.lane.b32.xlu0 %v2325, 96
    %v2373 = vpop.permute.xlu0 %2372
    %2374 = vrot.lane.b32.xlu0 %v2324, 96
    %v2375 = vpop.permute.xlu0 %2374
    %2376 = vrot.lane.b32.xlu0 %v2328, 96
    %v2377 = vpop.permute.xlu0 %2376
    %2378 = vrot.lane.b32.xlu0 %v2327, 96
    %v2379 = vpop.permute.xlu0 %2378
    %2380 = vrot.lane.b32.xlu0 %v2331, 96
    %v2381 = vpop.permute.xlu0 %2380
    %2382 = vrot.lane.b32.xlu0 %v2330, 96
    %v2383 = vpop.permute.xlu0 %2382
    %2384 = vrot.lane.b32.xlu0 %v2334, 96
    %v2385 = vpop.permute.xlu0 %2384
    %2386 = vrot.lane.b32.xlu0 %v2333, 96
    %v2387 = vpop.permute.xlu0 %2386
    %2388 = vrot.lane.b32.xlu0 %v2337, 96
    %v2389 = vpop.permute.xlu0 %2388
    %2390 = vrot.lane.b32.xlu0 %v2336, 96
    %v2391 = vpop.permute.xlu0 %2390
    %2392 = vrot.lane.b32.xlu0 %v2340, 96
    %v2393 = vpop.permute.xlu0 %2392
    %2394 = vrot.lane.b32.xlu0 %v2339, 96
    %v2395 = vpop.permute.xlu0 %2394
    %2396 = vrot.lane.b32.xlu0 %v2343, 96
    %v2397 = vpop.permute.xlu0 %2396
    %2398 = vrot.lane.b32.xlu0 %v2342, 96
    %v2399 = vpop.permute.xlu0 %2398
    %2400 = vrot.lane.b32.xlu0 %v2346, 96
    %v2401 = vpop.permute.xlu0 %2400
    %2402 = vrot.lane.b32.xlu0 %v2345, 96
    %v2403 = vpop.permute.xlu0 %2402
    %2404 = vrot.lane.b32.xlu0 %v2349, 96
    %v2405 = vpop.permute.xlu0 %2404
    %2406 = vrot.lane.b32.xlu0 %v2348, 96
    %v2407 = vpop.permute.xlu0 %2406
    %2408 = vrot.lane.b32.xlu0 %v2352, 96
    %v2409 = vpop.permute.xlu0 %2408
    %2410 = vrot.lane.b32.xlu0 %v2351, 96
    %v2411 = vpop.permute.xlu0 %2410
    %2412 = vrot.lane.b32.xlu0 %v2355, 96
    %v2413 = vpop.permute.xlu0 %2412
    %2414 = vrot.lane.b32.xlu0 %v2354, 96
    %v2415 = vpop.permute.xlu0 %2414
    %2416 = vrot.lane.b32.xlu0 %v2358, 96
    %v2417 = vpop.permute.xlu0 %2416
    %2418 = vrot.lane.b32.xlu0 %v2357, 96
    %v2419 = vpop.permute.xlu0 %2418
    %2420 = vrot.lane.b32.xlu0 %v2361, 96
    %v2421 = vpop.permute.xlu0 %2420
    %2422 = vrot.lane.b32.xlu0 %v2360, 96
    %v2423 = vpop.permute.xlu0 %2422
    %2424 = vrot.lane.b32.xlu0 %v2364, 96
    %v2425 = vpop.permute.xlu0 %2424
    %2426 = vrot.lane.b32.xlu0 %v2363, 96
    %v2427 = vpop.permute.xlu0 %2426
    %2428 = vrot.lane.b32.xlu0 %v2367, 96
    %v2429 = vpop.permute.xlu0 %2428
    %2430 = vrot.lane.b32.xlu0 %v2366, 96
    %v2431 = vpop.permute.xlu0 %2430
    %v2464 = vadd.f32 %v499, %v2369
    %v2465 = vadd.f32 %v505, %v2371
    %v2466 = vadd.f32 %v511, %v2373
    %v2467 = vadd.f32 %v517, %v2375
    %v2468 = vadd.f32 %v523, %v2377
    %v2469 = vadd.f32 %v529, %v2379
    %v2470 = vadd.f32 %v535, %v2381
    %v2471 = vadd.f32 %v541, %v2383
    %v2472 = vadd.f32 %v547, %v2385
    %v2473 = vadd.f32 %v553, %v2387
    %v2474 = vadd.f32 %v559, %v2389
    %v2475 = vadd.f32 %v565, %v2391
    %v2476 = vadd.f32 %v571, %v2393
    %v2477 = vadd.f32 %v577, %v2395
    %v2478 = vadd.f32 %v583, %v2397
    %v2479 = vadd.f32 %v589, %v2399
    %v2480 = vadd.f32 %v595, %v2401
    %v2481 = vadd.f32 %v601, %v2403
    %v2482 = vadd.f32 %v607, %v2405
    %v2483 = vadd.f32 %v613, %v2407
    %v2484 = vadd.f32 %v619, %v2409
    %v2485 = vadd.f32 %v625, %v2411
    %v2486 = vadd.f32 %v631, %v2413
    %v2487 = vadd.f32 %v637, %v2415
    %v2488 = vadd.f32 %v643, %v2417
    %v2489 = vadd.f32 %v649, %v2419
    %v2490 = vadd.f32 %v655, %v2421
    %v2491 = vadd.f32 %v661, %v2423
    %v2492 = vadd.f32 %v667, %v2425
    %v2493 = vadd.f32 %v673, %v2427
    %v2494 = vadd.f32 %v679, %v2429
    %v2495 = vadd.f32 %v685, %v2431
    %v2496 = vrot.slane %v754, 2
    %v2497 = vrot.slane %v759, 2
    %v2498 = vsel %vm1122, %v2496, %v2497
    %v2499 = vrot.slane %v764, 2
    %v2500 = vrot.slane %v769, 2
    %v2501 = vsel %vm1122, %v2499, %v2500
    %v2502 = vrot.slane %v774, 2
    %v2503 = vrot.slane %v779, 2
    %v2504 = vsel %vm1122, %v2502, %v2503
    %v2505 = vrot.slane %v784, 2
    %v2506 = vrot.slane %v789, 2
    %v2507 = vsel %vm1122, %v2505, %v2506
    %v2508 = vrot.slane %v794, 2
    %v2509 = vrot.slane %v799, 2
    %v2510 = vsel %vm1122, %v2508, %v2509
    %v2511 = vrot.slane %v804, 2
    %v2512 = vrot.slane %v809, 2
    %v2513 = vsel %vm1122, %v2511, %v2512
    %v2514 = vrot.slane %v814, 2
    %v2515 = vrot.slane %v819, 2
    %v2516 = vsel %vm1122, %v2514, %v2515
    %v2517 = vrot.slane %v824, 2
    %v2518 = vrot.slane %v829, 2
    %v2519 = vsel %vm1122, %v2517, %v2518
    %v2520 = vrot.slane %v834, 2
    %v2521 = vrot.slane %v839, 2
    %v2522 = vsel %vm1122, %v2520, %v2521
    %v2523 = vrot.slane %v844, 2
    %v2524 = vrot.slane %v849, 2
    %v2525 = vsel %vm1122, %v2523, %v2524
    %v2526 = vrot.slane %v854, 2
    %v2527 = vrot.slane %v859, 2
    %v2528 = vsel %vm1122, %v2526, %v2527
    %v2529 = vrot.slane %v864, 2
    %v2530 = vrot.slane %v869, 2
    %v2531 = vsel %vm1122, %v2529, %v2530
    %v2532 = vrot.slane %v874, 2
    %v2533 = vrot.slane %v879, 2
    %v2534 = vsel %vm1122, %v2532, %v2533
    %v2535 = vrot.slane %v884, 2
    %v2536 = vrot.slane %v889, 2
    %v2537 = vsel %vm1122, %v2535, %v2536
    %v2538 = vrot.slane %v894, 2
    %v2539 = vrot.slane %v899, 2
    %v2540 = vsel %vm1122, %v2538, %v2539
    %v2541 = vrot.slane %v904, 2
    %v2542 = vrot.slane %v909, 2
    %v2543 = vsel %vm1122, %v2541, %v2542
    %2544 = vrot.lane.b32.xlu0 %v2498, 64
    %v2545 = vpop.permute.xlu0 %2544
    %2546 = vrot.lane.b32.xlu0 %v2497, 64
    %v2547 = vpop.permute.xlu0 %2546
    %2548 = vrot.lane.b32.xlu0 %v2501, 64
    %v2549 = vpop.permute.xlu0 %2548
    %2550 = vrot.lane.b32.xlu0 %v2500, 64
    %v2551 = vpop.permute.xlu0 %2550
    %2552 = vrot.lane.b32.xlu0 %v2504, 64
    %v2553 = vpop.permute.xlu0 %2552
    %2554 = vrot.lane.b32.xlu0 %v2503, 64
    %v2555 = vpop.permute.xlu0 %2554
    %2556 = vrot.lane.b32.xlu0 %v2507, 64
    %v2557 = vpop.permute.xlu0 %2556
    %2558 = vrot.lane.b32.xlu0 %v2506, 64
    %v2559 = vpop.permute.xlu0 %2558
    %2560 = vrot.lane.b32.xlu0 %v2510, 64
    %v2561 = vpop.permute.xlu0 %2560
    %2562 = vrot.lane.b32.xlu0 %v2509, 64
    %v2563 = vpop.permute.xlu0 %2562
    %2564 = vrot.lane.b32.xlu0 %v2513, 64
    %v2565 = vpop.permute.xlu0 %2564
    %2566 = vrot.lane.b32.xlu0 %v2512, 64
    %v2567 = vpop.permute.xlu0 %2566
    %2568 = vrot.lane.b32.xlu0 %v2516, 64
    %v2569 = vpop.permute.xlu0 %2568
    %2570 = vrot.lane.b32.xlu0 %v2515, 64
    %v2571 = vpop.permute.xlu0 %2570
    %2572 = vrot.lane.b32.xlu0 %v2519, 64
    %v2573 = vpop.permute.xlu0 %2572
    %2574 = vrot.lane.b32.xlu0 %v2518, 64
    %v2575 = vpop.permute.xlu0 %2574
    %2576 = vrot.lane.b32.xlu0 %v2522, 64
    %v2577 = vpop.permute.xlu0 %2576
    %2578 = vrot.lane.b32.xlu0 %v2521, 64
    %v2579 = vpop.permute.xlu0 %2578
    %2580 = vrot.lane.b32.xlu0 %v2525, 64
    %v2581 = vpop.permute.xlu0 %2580
    %2582 = vrot.lane.b32.xlu0 %v2524, 64
    %v2583 = vpop.permute.xlu0 %2582
    %2584 = vrot.lane.b32.xlu0 %v2528, 64
    %v2585 = vpop.permute.xlu0 %2584
    %2586 = vrot.lane.b32.xlu0 %v2527, 64
    %v2587 = vpop.permute.xlu0 %2586
    %2588 = vrot.lane.b32.xlu0 %v2531, 64
    %v2589 = vpop.permute.xlu0 %2588
    %2590 = vrot.lane.b32.xlu0 %v2530, 64
    %v2591 = vpop.permute.xlu0 %2590
    %2592 = vrot.lane.b32.xlu0 %v2534, 64
    %v2593 = vpop.permute.xlu0 %2592
    %2594 = vrot.lane.b32.xlu0 %v2533, 64
    %v2595 = vpop.permute.xlu0 %2594
    %2596 = vrot.lane.b32.xlu0 %v2537, 64
    %v2597 = vpop.permute.xlu0 %2596
    %2598 = vrot.lane.b32.xlu0 %v2536, 64
    %v2599 = vpop.permute.xlu0 %2598
    %2600 = vrot.lane.b32.xlu0 %v2540, 64
    %v2601 = vpop.permute.xlu0 %2600
    %2602 = vrot.lane.b32.xlu0 %v2539, 64
    %v2603 = vpop.permute.xlu0 %2602
    %2604 = vrot.lane.b32.xlu0 %v2543, 64
    %v2605 = vpop.permute.xlu0 %2604
    %2606 = vrot.lane.b32.xlu0 %v2542, 64
    %v2607 = vpop.permute.xlu0 %2606
    %v2640 = vadd.f32 %v2464, %v2545
    %v2641 = vadd.f32 %v2465, %v2547
    %v2642 = vadd.f32 %v2466, %v2549
    %v2643 = vadd.f32 %v2467, %v2551
    %v2644 = vadd.f32 %v2468, %v2553
    %v2645 = vadd.f32 %v2469, %v2555
    %v2646 = vadd.f32 %v2470, %v2557
    %v2647 = vadd.f32 %v2471, %v2559
    %v2648 = vadd.f32 %v2472, %v2561
    %v2649 = vadd.f32 %v2473, %v2563
    %v2650 = vadd.f32 %v2474, %v2565
    %v2651 = vadd.f32 %v2475, %v2567
    %v2652 = vadd.f32 %v2476, %v2569
    %v2653 = vadd.f32 %v2477, %v2571
    %v2654 = vadd.f32 %v2478, %v2573
    %v2655 = vadd.f32 %v2479, %v2575
    %v2656 = vadd.f32 %v2480, %v2577
    %v2657 = vadd.f32 %v2481, %v2579
    %v2658 = vadd.f32 %v2482, %v2581
    %v2659 = vadd.f32 %v2483, %v2583
    %v2660 = vadd.f32 %v2484, %v2585
    %v2661 = vadd.f32 %v2485, %v2587
    %v2662 = vadd.f32 %v2486, %v2589
    %v2663 = vadd.f32 %v2487, %v2591
    %v2664 = vadd.f32 %v2488, %v2593
    %v2665 = vadd.f32 %v2489, %v2595
    %v2666 = vadd.f32 %v2490, %v2597
    %v2667 = vadd.f32 %v2491, %v2599
    %v2668 = vadd.f32 %v2492, %v2601
    %v2669 = vadd.f32 %v2493, %v2603
    %v2670 = vadd.f32 %v2494, %v2605
    %v2671 = vadd.f32 %v2495, %v2607
    %v2672 = vrot.slane %v754, 3
    %v2673 = vrot.slane %v759, 3
    %v2674 = vsel %vm1898, %v2672, %v2673
    %v2675 = vrot.slane %v764, 3
    %v2676 = vrot.slane %v769, 3
    %v2677 = vsel %vm1898, %v2675, %v2676
    %v2678 = vrot.slane %v774, 3
    %v2679 = vrot.slane %v779, 3
    %v2680 = vsel %vm1898, %v2678, %v2679
    %v2681 = vrot.slane %v784, 3
    %v2682 = vrot.slane %v789, 3
    %v2683 = vsel %vm1898, %v2681, %v2682
    %v2684 = vrot.slane %v794, 3
    %v2685 = vrot.slane %v799, 3
    %v2686 = vsel %vm1898, %v2684, %v2685
    %v2687 = vrot.slane %v804, 3
    %v2688 = vrot.slane %v809, 3
    %v2689 = vsel %vm1898, %v2687, %v2688
    %v2690 = vrot.slane %v814, 3
    %v2691 = vrot.slane %v819, 3
    %v2692 = vsel %vm1898, %v2690, %v2691
    %v2693 = vrot.slane %v824, 3
    %v2694 = vrot.slane %v829, 3
    %v2695 = vsel %vm1898, %v2693, %v2694
    %v2696 = vrot.slane %v834, 3
    %v2697 = vrot.slane %v839, 3
    %v2698 = vsel %vm1898, %v2696, %v2697
    %v2699 = vrot.slane %v844, 3
    %v2700 = vrot.slane %v849, 3
    %v2701 = vsel %vm1898, %v2699, %v2700
    %v2702 = vrot.slane %v854, 3
    %v2703 = vrot.slane %v859, 3
    %v2704 = vsel %vm1898, %v2702, %v2703
    %v2705 = vrot.slane %v864, 3
    %v2706 = vrot.slane %v869, 3
    %v2707 = vsel %vm1898, %v2705, %v2706
    %v2708 = vrot.slane %v874, 3
    %v2709 = vrot.slane %v879, 3
    %v2710 = vsel %vm1898, %v2708, %v2709
    %v2711 = vrot.slane %v884, 3
    %v2712 = vrot.slane %v889, 3
    %v2713 = vsel %vm1898, %v2711, %v2712
    %v2714 = vrot.slane %v894, 3
    %v2715 = vrot.slane %v899, 3
    %v2716 = vsel %vm1898, %v2714, %v2715
    %v2717 = vrot.slane %v904, 3
    %v2718 = vrot.slane %v909, 3
    %v2719 = vsel %vm1898, %v2717, %v2718
    %2720 = vrot.lane.b32.xlu0 %v2674, 32
    %v2721 = vpop.permute.xlu0 %2720
    %2722 = vrot.lane.b32.xlu0 %v2673, 32
    %v2723 = vpop.permute.xlu0 %2722
    %2724 = vrot.lane.b32.xlu0 %v2677, 32
    %v2725 = vpop.permute.xlu0 %2724
    %2726 = vrot.lane.b32.xlu0 %v2676, 32
    %v2727 = vpop.permute.xlu0 %2726
    %2728 = vrot.lane.b32.xlu0 %v2680, 32
    %v2729 = vpop.permute.xlu0 %2728
    %2730 = vrot.lane.b32.xlu0 %v2679, 32
    %v2731 = vpop.permute.xlu0 %2730
    %2732 = vrot.lane.b32.xlu0 %v2683, 32
    %v2733 = vpop.permute.xlu0 %2732
    %2734 = vrot.lane.b32.xlu0 %v2682, 32
    %v2735 = vpop.permute.xlu0 %2734
    %2736 = vrot.lane.b32.xlu0 %v2686, 32
    %v2737 = vpop.permute.xlu0 %2736
    %2738 = vrot.lane.b32.xlu0 %v2685, 32
    %v2739 = vpop.permute.xlu0 %2738
    %2740 = vrot.lane.b32.xlu0 %v2689, 32
    %v2741 = vpop.permute.xlu0 %2740
    %2742 = vrot.lane.b32.xlu0 %v2688, 32
    %v2743 = vpop.permute.xlu0 %2742
    %2744 = vrot.lane.b32.xlu0 %v2692, 32
    %v2745 = vpop.permute.xlu0 %2744
    %2746 = vrot.lane.b32.xlu0 %v2691, 32
    %v2747 = vpop.permute.xlu0 %2746
    %2748 = vrot.lane.b32.xlu0 %v2695, 32
    %v2749 = vpop.permute.xlu0 %2748
    %2750 = vrot.lane.b32.xlu0 %v2694, 32
    %v2751 = vpop.permute.xlu0 %2750
    %2752 = vrot.lane.b32.xlu0 %v2698, 32
    %v2753 = vpop.permute.xlu0 %2752
    %2754 = vrot.lane.b32.xlu0 %v2697, 32
    %v2755 = vpop.permute.xlu0 %2754
    %2756 = vrot.lane.b32.xlu0 %v2701, 32
    %v2757 = vpop.permute.xlu0 %2756
    %2758 = vrot.lane.b32.xlu0 %v2700, 32
    %v2759 = vpop.permute.xlu0 %2758
    %2760 = vrot.lane.b32.xlu0 %v2704, 32
    %v2761 = vpop.permute.xlu0 %2760
    %2762 = vrot.lane.b32.xlu0 %v2703, 32
    %v2763 = vpop.permute.xlu0 %2762
    %2764 = vrot.lane.b32.xlu0 %v2707, 32
    %v2765 = vpop.permute.xlu0 %2764
    %2766 = vrot.lane.b32.xlu0 %v2706, 32
    %v2767 = vpop.permute.xlu0 %2766
    %2768 = vrot.lane.b32.xlu0 %v2710, 32
    %v2769 = vpop.permute.xlu0 %2768
    %2770 = vrot.lane.b32.xlu0 %v2709, 32
    %v2771 = vpop.permute.xlu0 %2770
    %2772 = vrot.lane.b32.xlu0 %v2713, 32
    %v2773 = vpop.permute.xlu0 %2772
    %2774 = vrot.lane.b32.xlu0 %v2712, 32
    %v2775 = vpop.permute.xlu0 %2774
    %2776 = vrot.lane.b32.xlu0 %v2716, 32
    %v2777 = vpop.permute.xlu0 %2776
    %2778 = vrot.lane.b32.xlu0 %v2715, 32
    %v2779 = vpop.permute.xlu0 %2778
    %2780 = vrot.lane.b32.xlu0 %v2719, 32
    %v2781 = vpop.permute.xlu0 %2780
    %2782 = vrot.lane.b32.xlu0 %v2718, 32
    %v2783 = vpop.permute.xlu0 %2782
    %v2816 = vadd.f32 %v2640, %v2721
    %v2817 = vadd.f32 %v2641, %v2723
    %v2818 = vadd.f32 %v2642, %v2725
    %v2819 = vadd.f32 %v2643, %v2727
    %v2820 = vadd.f32 %v2644, %v2729
    %v2821 = vadd.f32 %v2645, %v2731
    %v2822 = vadd.f32 %v2646, %v2733
    %v2823 = vadd.f32 %v2647, %v2735
    %v2824 = vadd.f32 %v2648, %v2737
    %v2825 = vadd.f32 %v2649, %v2739
    %v2826 = vadd.f32 %v2650, %v2741
    %v2827 = vadd.f32 %v2651, %v2743
    %v2828 = vadd.f32 %v2652, %v2745
    %v2829 = vadd.f32 %v2653, %v2747
    %v2830 = vadd.f32 %v2654, %v2749
    %v2831 = vadd.f32 %v2655, %v2751
    %v2832 = vadd.f32 %v2656, %v2753
    %v2833 = vadd.f32 %v2657, %v2755
    %v2834 = vadd.f32 %v2658, %v2757
    %v2835 = vadd.f32 %v2659, %v2759
    %v2836 = vadd.f32 %v2660, %v2761
    %v2837 = vadd.f32 %v2661, %v2763
    %v2838 = vadd.f32 %v2662, %v2765
    %v2839 = vadd.f32 %v2663, %v2767
    %v2840 = vadd.f32 %v2664, %v2769
    %v2841 = vadd.f32 %v2665, %v2771
    %v2842 = vadd.f32 %v2666, %v2773
    %v2843 = vadd.f32 %v2667, %v2775
    %v2844 = vadd.f32 %v2668, %v2777
    %v2845 = vadd.f32 %v2669, %v2779
    %v2846 = vadd.f32 %v2670, %v2781
    %v2847 = vadd.f32 %v2671, %v2783
    %vm2848 = vcmask 1043456
    %v2849 = vrot.slane %v754, 4
    %v2850 = vrot.slane %v759, 4
    %v2851 = vsel %vm2848, %v2849, %v2850
    %v2852 = vrot.slane %v764, 4
    %v2853 = vrot.slane %v769, 4
    %v2854 = vsel %vm2848, %v2852, %v2853
    %v2855 = vrot.slane %v774, 4
    %v2856 = vrot.slane %v779, 4
    %v2857 = vsel %vm2848, %v2855, %v2856
    %v2858 = vrot.slane %v784, 4
    %v2859 = vrot.slane %v789, 4
    %v2860 = vsel %vm2848, %v2858, %v2859
    %v2861 = vrot.slane %v794, 4
    %v2862 = vrot.slane %v799, 4
    %v2863 = vsel %vm2848, %v2861, %v2862
    %v2864 = vrot.slane %v804, 4
    %v2865 = vrot.slane %v809, 4
    %v2866 = vsel %vm2848, %v2864, %v2865
    %v2867 = vrot.slane %v814, 4
    %v2868 = vrot.slane %v819, 4
    %v2869 = vsel %vm2848, %v2867, %v2868
    %v2870 = vrot.slane %v824, 4
    %v2871 = vrot.slane %v829, 4
    %v2872 = vsel %vm2848, %v2870, %v2871
    %v2873 = vrot.slane %v834, 4
    %v2874 = vrot.slane %v839, 4
    %v2875 = vsel %vm2848, %v2873, %v2874
    %v2876 = vrot.slane %v844, 4
    %v2877 = vrot.slane %v849, 4
    %v2878 = vsel %vm2848, %v2876, %v2877
    %v2879 = vrot.slane %v854, 4
    %v2880 = vrot.slane %v859, 4
    %v2881 = vsel %vm2848, %v2879, %v2880
    %v2882 = vrot.slane %v864, 4
    %v2883 = vrot.slane %v869, 4
    %v2884 = vsel %vm2848, %v2882, %v2883
    %v2885 = vrot.slane %v874, 4
    %v2886 = vrot.slane %v879, 4
    %v2887 = vsel %vm2848, %v2885, %v2886
    %v2888 = vrot.slane %v884, 4
    %v2889 = vrot.slane %v889, 4
    %v2890 = vsel %vm2848, %v2888, %v2889
    %v2891 = vrot.slane %v894, 4
    %v2892 = vrot.slane %v899, 4
    %v2893 = vsel %vm2848, %v2891, %v2892
    %v2894 = vrot.slane %v904, 4
    %v2895 = vrot.slane %v909, 4
    %v2896 = vsel %vm2848, %v2894, %v2895
    %v2929 = vadd.f32 %v2816, %v2851
    %v2930 = vadd.f32 %v2817, %v2850
    %v2931 = vadd.f32 %v2818, %v2854
    %v2932 = vadd.f32 %v2819, %v2853
    %v2933 = vadd.f32 %v2820, %v2857
    %v2934 = vadd.f32 %v2821, %v2856
    %v2935 = vadd.f32 %v2822, %v2860
    %v2936 = vadd.f32 %v2823, %v2859
    %v2937 = vadd.f32 %v2824, %v2863
    %v2938 = vadd.f32 %v2825, %v2862
    %v2939 = vadd.f32 %v2826, %v2866
    %v2940 = vadd.f32 %v2827, %v2865
    %v2941 = vadd.f32 %v2828, %v2869
    %v2942 = vadd.f32 %v2829, %v2868
    %v2943 = vadd.f32 %v2830, %v2872
    %v2944 = vadd.f32 %v2831, %v2871
    %v2945 = vadd.f32 %v2832, %v2875
    %v2946 = vadd.f32 %v2833, %v2874
    %v2947 = vadd.f32 %v2834, %v2878
    %v2948 = vadd.f32 %v2835, %v2877
    %v2949 = vadd.f32 %v2836, %v2881
    %v2950 = vadd.f32 %v2837, %v2880
    %v2951 = vadd.f32 %v2838, %v2884
    %v2952 = vadd.f32 %v2839, %v2883
    %v2953 = vadd.f32 %v2840, %v2887
    %v2954 = vadd.f32 %v2841, %v2886
    %v2955 = vadd.f32 %v2842, %v2890
    %v2956 = vadd.f32 %v2843, %v2889
    %v2957 = vadd.f32 %v2844, %v2893
    %v2958 = vadd.f32 %v2845, %v2892
    %v2959 = vadd.f32 %v2846, %v2896
    %v2960 = vadd.f32 %v2847, %v2895
    %2961 = vrot.lane.b32.xlu0 %v1303, 32
    %v2962 = vpop.permute.xlu0 %2961
    %v2964 = vadd.f32 %v2929, %v2962
    %v2965 = vadd.f32 %v2930, %v2962
    %v2966 = vadd.f32 %v2931, %v2962
    %v2967 = vadd.f32 %v2932, %v2962
    %v2968 = vadd.f32 %v2933, %v2962
    %v2969 = vadd.f32 %v2934, %v2962
    %v2970 = vadd.f32 %v2935, %v2962
    %v2971 = vadd.f32 %v2936, %v2962
    %v2972 = vadd.f32 %v2937, %v2962
    %v2973 = vadd.f32 %v2938, %v2962
    %v2974 = vadd.f32 %v2939, %v2962
    %v2975 = vadd.f32 %v2940, %v2962
    %v2976 = vadd.f32 %v2941, %v2962
    %v2977 = vadd.f32 %v2942, %v2962
    %v2978 = vadd.f32 %v2943, %v2962
    %v2979 = vadd.f32 %v2944, %v2962
    %v2980 = vadd.f32 %v2945, %v2962
    %v2981 = vadd.f32 %v2946, %v2962
    %v2982 = vadd.f32 %v2947, %v2962
    %v2983 = vadd.f32 %v2948, %v2962
    %v2984 = vadd.f32 %v2949, %v2962
    %v2985 = vadd.f32 %v2950, %v2962
    %v2986 = vadd.f32 %v2951, %v2962
    %v2987 = vadd.f32 %v2952, %v2962
    %v2988 = vadd.f32 %v2953, %v2962
    %v2989 = vadd.f32 %v2954, %v2962
    %v2990 = vadd.f32 %v2955, %v2962
    %v2991 = vadd.f32 %v2956, %v2962
    %v2992 = vadd.f32 %v2957, %v2962
    %v2993 = vadd.f32 %v2958, %v2962
    %v2994 = vadd.f32 %v2959, %v2962
    %v2995 = vadd.f32 %v2960, %v2962
    %v2996 = vmax.f32 %v2964, 0.0
    %v2997 = vmax.f32 %v2965, 0.0
    %v2998 = vmax.f32 %v2966, 0.0
    %v2999 = vmax.f32 %v2967, 0.0
    %v3000 = vmax.f32 %v2968, 0.0
    %v3001 = vmax.f32 %v2969, 0.0
    %v3002 = vmax.f32 %v2970, 0.0
    %v3003 = vmax.f32 %v2971, 0.0
    %v3004 = vmax.f32 %v2972, 0.0
    %v3005 = vmax.f32 %v2973, 0.0
    %v3006 = vmax.f32 %v2974, 0.0
    %v3007 = vmax.f32 %v2975, 0.0
    %v3008 = vmax.f32 %v2976, 0.0
    %v3009 = vmax.f32 %v2977, 0.0
    %v3010 = vmax.f32 %v2978, 0.0
    %v3011 = vmax.f32 %v2979, 0.0
    %v3012 = vmax.f32 %v2980, 0.0
    %v3013 = vmax.f32 %v2981, 0.0
    %v3014 = vmax.f32 %v2982, 0.0
    %v3015 = vmax.f32 %v2983, 0.0
    %v3016 = vmax.f32 %v2984, 0.0
    %v3017 = vmax.f32 %v2985, 0.0
    %v3018 = vmax.f32 %v2986, 0.0
    %v3019 = vmax.f32 %v2987, 0.0
    %v3020 = vmax.f32 %v2988, 0.0
    %v3021 = vmax.f32 %v2989, 0.0
    %v3022 = vmax.f32 %v2990, 0.0
    %v3023 = vmax.f32 %v2991, 0.0
    %v3024 = vmax.f32 %v2992, 0.0
    %v3025 = vmax.f32 %v2993, 0.0
    %v3026 = vmax.f32 %v2994, 0.0
    %v3027 = vmax.f32 %v2995, 0.0
    %v3028 = vsel %vm2142, %v2996, -inf
    %vm3029 = vcmask 1044224
    %v3030 = vsel %vm3029, %v2997, -inf
    %v3031 = vmax.f32 %v3028, %v3030
    %v3032 = vrot.slane %v3031, 4
    %v3033 = vmax.f32 %v3031, %v3032
    %v3034 = vrot.slane %v3033, 2
    %v3035 = vmax.f32 %v3033, %v3034
    %v3036 = vrot.slane %v3035, 1
    %v3037 = vmax.f32 %v3035, %v3036
    %v3038 = vsel %vm2142, %v2998, -inf
    %v3039 = vsel %vm3029, %v2999, -inf
    %v3040 = vmax.f32 %v3038, %v3039
    %v3041 = vrot.slane %v3040, 4
    %v3042 = vmax.f32 %v3040, %v3041
    %v3043 = vrot.slane %v3042, 2
    %v3044 = vmax.f32 %v3042, %v3043
    %v3045 = vrot.slane %v3044, 1
    %v3046 = vmax.f32 %v3044, %v3045
    %v3047 = vsel %vm2142, %v3000, -inf
    %v3048 = vsel %vm3029, %v3001, -inf
    %v3049 = vmax.f32 %v3047, %v3048
    %v3050 = vrot.slane %v3049, 4
    %v3051 = vmax.f32 %v3049, %v3050
    %v3052 = vrot.slane %v3051, 2
    %v3053 = vmax.f32 %v3051, %v3052
    %v3054 = vrot.slane %v3053, 1
    %v3055 = vmax.f32 %v3053, %v3054
    %v3056 = vsel %vm2142, %v3002, -inf
    %v3057 = vsel %vm3029, %v3003, -inf
    %v3058 = vmax.f32 %v3056, %v3057
    %v3059 = vrot.slane %v3058, 4
    %v3060 = vmax.f32 %v3058, %v3059
    %v3061 = vrot.slane %v3060, 2
    %v3062 = vmax.f32 %v3060, %v3061
    %v3063 = vrot.slane %v3062, 1
    %v3064 = vmax.f32 %v3062, %v3063
    %v3065 = vsel %vm2142, %v3004, -inf
    %v3066 = vsel %vm3029, %v3005, -inf
    %v3067 = vmax.f32 %v3065, %v3066
    %v3068 = vrot.slane %v3067, 4
    %v3069 = vmax.f32 %v3067, %v3068
    %v3070 = vrot.slane %v3069, 2
    %v3071 = vmax.f32 %v3069, %v3070
    %v3072 = vrot.slane %v3071, 1
    %v3073 = vmax.f32 %v3071, %v3072
    %v3074 = vsel %vm2142, %v3006, -inf
    %v3075 = vsel %vm3029, %v3007, -inf
    %v3076 = vmax.f32 %v3074, %v3075
    %v3077 = vrot.slane %v3076, 4
    %v3078 = vmax.f32 %v3076, %v3077
    %v3079 = vrot.slane %v3078, 2
    %v3080 = vmax.f32 %v3078, %v3079
    %v3081 = vrot.slane %v3080, 1
    %v3082 = vmax.f32 %v3080, %v3081
    %v3083 = vsel %vm2142, %v3008, -inf
    %v3084 = vsel %vm3029, %v3009, -inf
    %v3085 = vmax.f32 %v3083, %v3084
    %v3086 = vrot.slane %v3085, 4
    %v3087 = vmax.f32 %v3085, %v3086
    %v3088 = vrot.slane %v3087, 2
    %v3089 = vmax.f32 %v3087, %v3088
    %v3090 = vrot.slane %v3089, 1
    %v3091 = vmax.f32 %v3089, %v3090
    %v3092 = vsel %vm2142, %v3010, -inf
    %v3093 = vsel %vm3029, %v3011, -inf
    %v3094 = vmax.f32 %v3092, %v3093
    %v3095 = vrot.slane %v3094, 4
    %v3096 = vmax.f32 %v3094, %v3095
    %v3097 = vrot.slane %v3096, 2
    %v3098 = vmax.f32 %v3096, %v3097
    %v3099 = vrot.slane %v3098, 1
    %v3100 = vmax.f32 %v3098, %v3099
    %v3101 = vsel %vm2142, %v3012, -inf
    %v3102 = vsel %vm3029, %v3013, -inf
    %v3103 = vmax.f32 %v3101, %v3102
    %v3104 = vrot.slane %v3103, 4
    %v3105 = vmax.f32 %v3103, %v3104
    %v3106 = vrot.slane %v3105, 2
    %v3107 = vmax.f32 %v3105, %v3106
    %v3108 = vrot.slane %v3107, 1
    %v3109 = vmax.f32 %v3107, %v3108
    %v3110 = vsel %vm2142, %v3014, -inf
    %v3111 = vsel %vm3029, %v3015, -inf
    %v3112 = vmax.f32 %v3110, %v3111
    %v3113 = vrot.slane %v3112, 4
    %v3114 = vmax.f32 %v3112, %v3113
    %v3115 = vrot.slane %v3114, 2
    %v3116 = vmax.f32 %v3114, %v3115
    %v3117 = vrot.slane %v3116, 1
    %v3118 = vmax.f32 %v3116, %v3117
    %v3119 = vsel %vm2142, %v3016, -inf
    %v3120 = vsel %vm3029, %v3017, -inf
    %v3121 = vmax.f32 %v3119, %v3120
    %v3122 = vrot.slane %v3121, 4
    %v3123 = vmax.f32 %v3121, %v3122
    %v3124 = vrot.slane %v3123, 2
    %v3125 = vmax.f32 %v3123, %v3124
    %v3126 = vrot.slane %v3125, 1
    %v3127 = vmax.f32 %v3125, %v3126
    %v3128 = vsel %vm2142, %v3018, -inf
    %v3129 = vsel %vm3029, %v3019, -inf
    %v3130 = vmax.f32 %v3128, %v3129
    %v3131 = vrot.slane %v3130, 4
    %v3132 = vmax.f32 %v3130, %v3131
    %v3133 = vrot.slane %v3132, 2
    %v3134 = vmax.f32 %v3132, %v3133
    %v3135 = vrot.slane %v3134, 1
    %v3136 = vmax.f32 %v3134, %v3135
    %v3137 = vsel %vm2142, %v3020, -inf
    %v3138 = vsel %vm3029, %v3021, -inf
    %v3139 = vmax.f32 %v3137, %v3138
    %v3140 = vrot.slane %v3139, 4
    %v3141 = vmax.f32 %v3139, %v3140
    %v3142 = vrot.slane %v3141, 2
    %v3143 = vmax.f32 %v3141, %v3142
    %v3144 = vrot.slane %v3143, 1
    %v3145 = vmax.f32 %v3143, %v3144
    %v3146 = vsel %vm2142, %v3022, -inf
    %v3147 = vsel %vm3029, %v3023, -inf
    %v3148 = vmax.f32 %v3146, %v3147
    %v3149 = vrot.slane %v3148, 4
    %v3150 = vmax.f32 %v3148, %v3149
    %v3151 = vrot.slane %v3150, 2
    %v3152 = vmax.f32 %v3150, %v3151
    %v3153 = vrot.slane %v3152, 1
    %v3154 = vmax.f32 %v3152, %v3153
    %v3155 = vsel %vm2142, %v3024, -inf
    %v3156 = vsel %vm3029, %v3025, -inf
    %v3157 = vmax.f32 %v3155, %v3156
    %v3158 = vrot.slane %v3157, 4
    %v3159 = vmax.f32 %v3157, %v3158
    %v3160 = vrot.slane %v3159, 2
    %v3161 = vmax.f32 %v3159, %v3160
    %v3162 = vrot.slane %v3161, 1
    %v3163 = vmax.f32 %v3161, %v3162
    %v3164 = vsel %vm2142, %v3026, -inf
    %v3165 = vsel %vm3029, %v3027, -inf
    %v3166 = vmax.f32 %v3164, %v3165
    %v3167 = vrot.slane %v3166, 4
    %v3168 = vmax.f32 %v3166, %v3167
    %v3169 = vrot.slane %v3168, 2
    %v3170 = vmax.f32 %v3168, %v3169
    %v3171 = vrot.slane %v3170, 1
    %v3172 = vmax.f32 %v3170, %v3171
    %vm3189 = vcmask 1041409
    %v3190 = vsel %vm3189, %v1387, %v1378
    %vm3191 = vcmask 1042434
    %v3192 = vsel %vm3191, %v1396, %v3190
    %vm3193 = vcmask 1043459
    %v3194 = vsel %vm3193, %v1405, %v3192
    %vm3195 = vcmask 1044484
    %v3196 = vsel %vm3195, %v1414, %v3194
    %vm3197 = vcmask 1045509
    %v3198 = vsel %vm3197, %v1423, %v3196
    %vm3199 = vcmask 1046534
    %v3200 = vsel %vm3199, %v1432, %v3198
    %vm3201 = vcmask 1047559
    %v3202 = vsel %vm3201, %v1441, %v3200
    %v3203 = vsel %vm3189, %v1459, %v1450
    %v3204 = vsel %vm3191, %v1468, %v3203
    %v3205 = vsel %vm3193, %v1477, %v3204
    %v3206 = vsel %vm3195, %v1486, %v3205
    %v3207 = vsel %vm3197, %v1495, %v3206
    %v3208 = vsel %vm3199, %v1504, %v3207
    %v3209 = vsel %vm3201, %v1513, %v3208
    %v3228 = vsel %vm3189, %v2161, %v2152
    %v3229 = vsel %vm3191, %v2170, %v3228
    %v3230 = vsel %vm3193, %v2179, %v3229
    %v3231 = vsel %vm3195, %v2188, %v3230
    %v3232 = vsel %vm3197, %v2197, %v3231
    %v3233 = vsel %vm3199, %v2206, %v3232
    %v3234 = vsel %vm3201, %v2215, %v3233
    %v3235 = vsel %vm3189, %v2233, %v2224
    %v3236 = vsel %vm3191, %v2242, %v3235
    %v3237 = vsel %vm3193, %v2251, %v3236
    %v3238 = vsel %vm3195, %v2260, %v3237
    %v3239 = vsel %vm3197, %v2269, %v3238
    %v3240 = vsel %vm3199, %v2278, %v3239
    %v3241 = vsel %vm3201, %v2287, %v3240
    %3242 = vrot.lane.b32.xlu0 %v3234, 64
    %v3243 = vpop.permute.xlu0 %3242
    %3244 = vrot.lane.b32.xlu0 %v3241, 64
    %v3245 = vpop.permute.xlu0 %3244
    %v3264 = vsel %vm3189, %v3046, %v3037
    %v3265 = vsel %vm3191, %v3055, %v3264
    %v3266 = vsel %vm3193, %v3064, %v3265
    %v3267 = vsel %vm3195, %v3073, %v3266
    %v3268 = vsel %vm3197, %v3082, %v3267
    %v3269 = vsel %vm3199, %v3091, %v3268
    %v3270 = vsel %vm3201, %v3100, %v3269
    %v3271 = vsel %vm3189, %v3118, %v3109
    %v3272 = vsel %vm3191, %v3127, %v3271
    %v3273 = vsel %vm3193, %v3136, %v3272
    %v3274 = vsel %vm3195, %v3145, %v3273
    %v3275 = vsel %vm3197, %v3154, %v3274
    %v3276 = vsel %vm3199, %v3163, %v3275
    %v3277 = vsel %vm3201, %v3172, %v3276
    %3278 = vrot.lane.b32.xlu0 %v3270, 96
    %v3279 = vpop.permute.xlu0 %3278
    %3280 = vrot.lane.b32.xlu0 %v3277, 96
    %v3281 = vpop.permute.xlu0 %3280
    %v3284 = vsel %vm333, %v3202, %v3243
    %v3285 = vsel %vm333, %v3209, %v3245
    %vm3286 = vcmask 523264
    %v3287 = vsel %vm3286, %v3284, %v3279
    %v3288 = vsel %vm3286, %v3285, %v3281
    %v3289 = vld [vmem:[#allocation10] sm:$0xff]
    %v3290 = vld [vmem:[#allocation10 + $0x8] sm:$0xff]
    %v3291 = vld [vmem:[#allocation10 + $0x10] sm:$0xff]
    %v3292 = vld [vmem:[#allocation10 + $0x18] sm:$0xff]
    %v3293 = vld [vmem:[#allocation10 + $0x20] sm:$0xff]
    %v3294 = vld [vmem:[#allocation10 + $0x28] sm:$0xff]
    %v3295 = vld [vmem:[#allocation10 + $0x30] sm:$0xff]
    %v3296 = vld [vmem:[#allocation10 + $0x38] sm:$0xff]
    %v3297 = vld [vmem:[#allocation10 + $0x40] sm:$0xff]
    %v3298 = vld [vmem:[#allocation10 + $0x48] sm:$0xff]
    %v3299 = vld [vmem:[#allocation10 + $0x50] sm:$0xff]
    %v3300 = vld [vmem:[#allocation10 + $0x58] sm:$0xff]
    %v3301 = vld [vmem:[#allocation10 + $0x60] sm:$0xff]
    %v3302 = vld [vmem:[#allocation10 + $0x68] sm:$0xff]
    %v3303 = vld [vmem:[#allocation10 + $0x70] sm:$0xff]
    %v3304 = vld [vmem:[#allocation10 + $0x78] sm:$0xff]
    %v3305 = vld [vmem:[#allocation10 + $0x80] sm:$0xff]
    %v3306 = vld [vmem:[#allocation10 + $0x88] sm:$0xff]
    %v3307 = vld [vmem:[#allocation10 + $0x90] sm:$0xff]
    %v3308 = vld [vmem:[#allocation10 + $0x98] sm:$0xff]
    %v3309 = vld [vmem:[#allocation10 + $0xa0] sm:$0xff]
    %v3310 = vld [vmem:[#allocation10 + $0xa8] sm:$0xff]
    %v3311 = vld [vmem:[#allocation10 + $0xb0] sm:$0xff]
    %v3312 = vld [vmem:[#allocation10 + $0xb8] sm:$0xff]
    %vm3313 = vcmask 785408
    %v3315 = vsel %vm3313, %v3287, 0
    %v3318 = vsel %vm3313, %v3288, 0
    %3320 = vmatprep.subr.mxu0 0.0
    %3321 = vmatpush1.msra.mxu0 0.0
    %3322 = vmatprep.subr.mxu0 0.0
    %3323 = vmatpush1.msra.mxu0 0.0
    %3324 = vmatprep.subr.mxu0 0.0
    %3325 = vmatpush1.msra.mxu0 0.0
    %3326 = vmatprep.subr.mxu0 0.0
    %3327 = vmatpush1.msra.mxu0 0.0
    %3328 = vmatprep.subr.mxu0 %v3312
    %3329 = vmatpush1.msra.mxu0 %v3311
    %3330 = vmatprep.subr.mxu0 %v3310
    %3331 = vmatpush1.msra.mxu0 %v3309
    %3332 = vmatprep.subr.mxu0 %v3308
    %3333 = vmatpush1.msra.mxu0 %v3307
    %3334 = vmatprep.subr.mxu0 %v3306
    %3335 = vmatpush1.msra.mxu0 %v3305
    %3336 = vmatprep.subr.mxu0 %v3304
    %3337 = vmatpush1.msra.mxu0 %v3303
    %3338 = vmatprep.subr.mxu0 %v3302
    %3339 = vmatpush1.msra.mxu0 %v3301
    %3340 = vmatprep.subr.mxu0 %v3300
    %3341 = vmatpush1.msra.mxu0 %v3299
    %3342 = vmatprep.subr.mxu0 %v3298
    %3343 = vmatpush1.msra.mxu0 %v3297
    %3344 = vmatprep.subr.mxu0 %v3296
    %3345 = vmatpush1.msra.mxu0 %v3295
    %3346 = vmatprep.subr.mxu0 %v3294
    %3347 = vmatpush1.msra.mxu0 %v3293
    %3348 = vmatprep.subr.mxu0 %v3292
    %3349 = vmatpush1.msra.mxu0 %v3291
    %3350 = vmatprep.subr.mxu0 %v3290
    %3351 = vmatpush1.msra.mxu0 %v3289
    %3352 = vmatprep.subr.mxu0 0.0
    %3353 = vmatpush2.msra.mxu0 0.0
    %3354 = vmatprep.subr.mxu0 0.0
    %3355 = vmatpush2.msra.mxu0 0.0
    %3356 = vmatprep.subr.mxu0 0.0
    %3357 = vmatpush2.msra.mxu0 0.0
    %3358 = vmatprep.subr.mxu0 0.0
    %3359 = vmatpush2.msra.mxu0 0.0
    %3360 = vmatprep.subr.mxu0 0.0
    %3361 = vmatpush2.msra.mxu0 0.0
    %3362 = vmatprep.subr.mxu0 0.0
    %3363 = vmatpush2.msra.mxu0 0.0
    %3364 = vmatprep.subr.mxu0 0.0
    %3365 = vmatpush2.msra.mxu0 0.0
    %3366 = vmatprep.subr.mxu0 0.0
    %3367 = vmatpush2.msra.mxu0 0.0
    %3368 = vmatprep.subr.mxu0 0.0
    %3369 = vmatpush2.msra.mxu0 0.0
    %3370 = vmatprep.subr.mxu0 0.0
    %3371 = vmatpush2.msra.mxu0 0.0
    %3372 = vmatprep.subr.mxu0 0.0
    %3373 = vmatpush2.msra.mxu0 0.0
    %3374 = vmatprep.subr.mxu0 0.0
    %3375 = vmatpush2.msra.mxu0 0.0
    %3376 = vmatprep.subr.mxu0 0.0
    %3377 = vmatpush2.msra.mxu0 0.0
    %3378 = vmatprep.subr.mxu0 0.0
    %3379 = vmatpush2.msra.mxu0 0.0
    %3380 = vmatprep.subr.mxu0 0.0
    %3381 = vmatpush2.msra.mxu0 0.0
    %3382 = vmatprep.subr.mxu0 0.0
    %3383 = vmatpush2.msra.mxu0 0.0
    %3384 = vmatprep.mubr.f32.mxu0 0.0
    %3385 = vmatmul.mubr.f32.gmra.mxu0 %v3315
    %v3386 = vpop.f32.mrf.mxu0
    %v3387 = vadd.f32 0.0, %v3386
    %v3388 = vpop.f32.mrf.mxu0
    %v3389 = vadd.f32 0.0, %v3388
    %3390 = vmatprep.mubr.f32.mxu0 0.0
    %3391 = vmatmul.mubr.f32.gmra.mxu0 %v3318
    %v3392 = vpop.f32.mrf.mxu0
    %v3393 = vadd.f32 0.0, %v3392
    %v3394 = vpop.f32.mrf.mxu0
    %v3395 = vadd.f32 0.0, %v3394
    %3396 = vdwg.mxu0
    %v3397 = vld [vmem:[#allocation12] sm:$0xff]
    %v3398 = vld [vmem:[#allocation12 + $0x8] sm:$0xff]
    %v3399 = vld [vmem:[#allocation12 + $0x10] sm:$0xff]
    %v3400 = vld [vmem:[#allocation12 + $0x18] sm:$0xff]
    %v3401 = vld [vmem:[#allocation12 + $0x20] sm:$0xff]
    %v3402 = vld [vmem:[#allocation12 + $0x28] sm:$0xff]
    %v3403 = vld [vmem:[#allocation12 + $0x30] sm:$0xff]
    %v3404 = vld [vmem:[#allocation12 + $0x38] sm:$0xff]
    %v3405 = vld [vmem:[#allocation12 + $0x40] sm:$0xff]
    %v3406 = vld [vmem:[#allocation12 + $0x48] sm:$0xff]
    %v3407 = vld [vmem:[#allocation12 + $0x50] sm:$0xff]
    %v3408 = vld [vmem:[#allocation12 + $0x58] sm:$0xff]
    %v3409 = vld [vmem:[#allocation12 + $0x60] sm:$0xff]
    %v3410 = vld [vmem:[#allocation12 + $0x68] sm:$0xff]
    %v3411 = vld [vmem:[#allocation12 + $0x70] sm:$0xff]
    %v3412 = vld [vmem:[#allocation12 + $0x78] sm:$0xff]
    %v3413 = vld [vmem:[#allocation13] sm:$0x3]
    %v3414 = vld [vmem:[#allocation15] sm:$0x1]
    %v3416 = vlaneseq
    %v3417 = vshrl.u32 %v3416, 7
    %v3418 = vsub.s32 0, %v3417
    %v3419 = vrot.slane %v3414, %v3418
    %v3420 = vld [vmem:[#allocation16] sm:$0x1]
    %v3422 = vlaneseq
    %v3423 = vshrl.u32 %v3422, 7
    %v3424 = vsub.s32 0, %v3423
    %v3425 = vrot.slane %v3420, %v3424
    %v3429 = vrot.slane %v3393, 7
    %v3430 = vsel %vm3189, %v3429, %v3387
    %v3434 = vrot.slane %v3389, 7
    %v3435 = vrot.slane %v3395, 6
    %v3436 = vsel %vm3189, %v3435, %v3434
    %v3438 = vsel %vm3286, %v3419, 0
    %3440 = vmatprep.subr.mxu0 0.0
    %3441 = vmatpush1.msra.mxu0 0.0
    %3442 = vmatprep.subr.mxu0 0.0
    %3443 = vmatpush1.msra.mxu0 0.0
    %3444 = vmatprep.subr.mxu0 0.0
    %3445 = vmatpush1.msra.mxu0 0.0
    %3446 = vmatprep.subr.mxu0 0.0
    %3447 = vmatpush1.msra.mxu0 0.0
    %3448 = vmatprep.subr.mxu0 0.0
    %3449 = vmatpush1.msra.mxu0 0.0
    %3450 = vmatprep.subr.mxu0 0.0
    %3451 = vmatpush1.msra.mxu0 0.0
    %3452 = vmatprep.subr.mxu0 0.0
    %3453 = vmatpush1.msra.mxu0 0.0
    %3454 = vmatprep.subr.mxu0 0.0
    %3455 = vmatpush1.msra.mxu0 0.0
    %3456 = vmatprep.subr.mxu0 %v3412
    %3457 = vmatpush1.msra.mxu0 %v3411
    %3458 = vmatprep.subr.mxu0 %v3410
    %3459 = vmatpush1.msra.mxu0 %v3409
    %3460 = vmatprep.subr.mxu0 %v3408
    %3461 = vmatpush1.msra.mxu0 %v3407
    %3462 = vmatprep.subr.mxu0 %v3406
    %3463 = vmatpush1.msra.mxu0 %v3405
    %3464 = vmatprep.subr.mxu0 %v3404
    %3465 = vmatpush1.msra.mxu0 %v3403
    %3466 = vmatprep.subr.mxu0 %v3402
    %3467 = vmatpush1.msra.mxu0 %v3401
    %3468 = vmatprep.subr.mxu0 %v3400
    %3469 = vmatpush1.msra.mxu0 %v3399
    %3470 = vmatprep.subr.mxu0 %v3398
    %3471 = vmatpush1.msra.mxu0 %v3397
    %3472 = vmatprep.subr.mxu0 0.0
    %3473 = vmatpush2.msra.mxu0 0.0
    %3474 = vmatprep.subr.mxu0 0.0
    %3475 = vmatpush2.msra.mxu0 0.0
    %3476 = vmatprep.subr.mxu0 0.0
    %3477 = vmatpush2.msra.mxu0 0.0
    %3478 = vmatprep.subr.mxu0 0.0
    %3479 = vmatpush2.msra.mxu0 0.0
    %3480 = vmatprep.subr.mxu0 0.0
    %3481 = vmatpush2.msra.mxu0 0.0
    %3482 = vmatprep.subr.mxu0 0.0
    %3483 = vmatpush2.msra.mxu0 0.0
    %3484 = vmatprep.subr.mxu0 0.0
    %3485 = vmatpush2.msra.mxu0 0.0
    %3486 = vmatprep.subr.mxu0 0.0
    %3487 = vmatpush2.msra.mxu0 0.0
    %3488 = vmatprep.subr.mxu0 0.0
    %3489 = vmatpush2.msra.mxu0 0.0
    %3490 = vmatprep.subr.mxu0 0.0
    %3491 = vmatpush2.msra.mxu0 0.0
    %3492 = vmatprep.subr.mxu0 0.0
    %3493 = vmatpush2.msra.mxu0 0.0
    %3494 = vmatprep.subr.mxu0 0.0
    %3495 = vmatpush2.msra.mxu0 0.0
    %3496 = vmatprep.subr.mxu0 0.0
    %3497 = vmatpush2.msra.mxu0 0.0
    %3498 = vmatprep.subr.mxu0 0.0
    %3499 = vmatpush2.msra.mxu0 0.0
    %3500 = vmatprep.subr.mxu0 0.0
    %3501 = vmatpush2.msra.mxu0 0.0
    %3502 = vmatprep.subr.mxu0 0.0
    %3503 = vmatpush2.msra.mxu0 0.0
    %3504 = vmatprep.mubr.f32.mxu0 0.0
    %3505 = vmatmul.mubr.f32.gmra.mxu0 %v3438
    %v3506 = vpop.f32.mrf.mxu0
    %v3507 = vadd.f32 0.0, %v3506
    %v3508 = vpop.f32.mrf.mxu0
    %v3509 = vadd.f32 0.0, %v3508
    %3510 = vdwg.mxu0
    %v3511 = vadd.f32 %v3430, %v3507
    %v3512 = vadd.f32 %v3436, %v3509
    %v3514 = vlaneseq
    %v3515 = vshrl.u32 %v3514, 7
    %v3516 = vsub.s32 0, %v3515
    %v3517 = vrot.slane %v3413, %v3516
    %v3518 = vlaneseq
    %v3519 = vshrl.u32 %v3518, 7
    %v3520 = vsub.s32 1, %v3519
    %v3521 = vrot.slane %v3413, %v3520
    %v3524 = vadd.f32 %v3511, %v3517
    %v3525 = vadd.f32 %v3512, %v3521
    %v3526 = vxor.u32 %v3524, 2147483648
    %v3527 = vxor.u32 %v3525, 2147483648
    %v3528 = vmul.f32 %v3526, 1.442695
    %v3529 = vpow.pop %v3528
    %v3530 = vmul.f32 %v3527, 1.442695
    %v3531 = vpow.pop %v3530
    %v3532 = vadd.f32 %v3529, 1.0
    %v3533 = vadd.f32 %v3531, 1.0
    %v3534 = vrcp.pop %v3532
    %v3535 = vmul.f32 1.0, %v3534
    %v3536 = vrcp.pop %v3533
    %v3537 = vmul.f32 1.0, %v3536
    %v3538 = vtanh.pop %v3524
    %v3539 = vtanh.pop %v3525
    %3541 = vrot.lane.b32.xlu0 %v3537, 32
    %v3542 = vpop.permute.xlu0 %3541
    %v3544 = vsel %vm333, %v3535, %v3542
    %3546 = vrot.lane.b32.xlu0 %v3535, 96
    %v3547 = vpop.permute.xlu0 %3546
    %v3549 = vsel %vm333, %v3547, %v3537
    %3551 = vrot.lane.b32.xlu0 %v3538, 64
    %v3552 = vpop.permute.xlu0 %3551
    %3555 = vrot.lane.b32.xlu0 %v3539, 96
    %v3556 = vpop.permute.xlu0 %3555
    %v3558 = vsel %vm333, %v3552, %v3556
    %3559 = vrot.lane.b32.xlu0 %v3535, 32
    %v3560 = vpop.permute.xlu0 %3559
    %3562 = vrot.lane.b32.xlu0 %v3537, 64
    %v3563 = vpop.permute.xlu0 %3562
    %v3565 = vsel %vm333, %v3560, %v3563
    %v3566 = vmul.f32 %v3549, %v3425
    %v3567 = vmul.f32 %v3544, %v3558
    %v3568 = vadd.f32 %v3566, %v3567
    %v3569 = vtanh.pop %v3568
    %v3570 = vmul.f32 %v3565, %v3569
    %v3571 = vsel %vm3191, %v3429, %v3387
    %v3573 = vrot.slane %v3389, 5
    %v3574 = vrot.slane %v3395, 4
    %v3575 = vsel %vm3191, %v3574, %v3573
    %v3578 = vsel %vm3286, %v3570, 0
    %3580 = vmatprep.subr.mxu0 0.0
    %3581 = vmatpush1.msra.mxu0 0.0
    %3582 = vmatprep.subr.mxu0 0.0
    %3583 = vmatpush1.msra.mxu0 0.0
    %3584 = vmatprep.subr.mxu0 0.0
    %3585 = vmatpush1.msra.mxu0 0.0
    %3586 = vmatprep.subr.mxu0 0.0
    %3587 = vmatpush1.msra.mxu0 0.0
    %3588 = vmatprep.subr.mxu0 0.0
    %3589 = vmatpush1.msra.mxu0 0.0
    %3590 = vmatprep.subr.mxu0 0.0
    %3591 = vmatpush1.msra.mxu0 0.0
    %3592 = vmatprep.subr.mxu0 0.0
    %3593 = vmatpush1.msra.mxu0 0.0
    %3594 = vmatprep.subr.mxu0 0.0
    %3595 = vmatpush1.msra.mxu0 0.0
    %3596 = vmatprep.subr.mxu0 %v3412
    %3597 = vmatpush1.msra.mxu0 %v3411
    %3598 = vmatprep.subr.mxu0 %v3410
    %3599 = vmatpush1.msra.mxu0 %v3409
    %3600 = vmatprep.subr.mxu0 %v3408
    %3601 = vmatpush1.msra.mxu0 %v3407
    %3602 = vmatprep.subr.mxu0 %v3406
    %3603 = vmatpush1.msra.mxu0 %v3405
    %3604 = vmatprep.subr.mxu0 %v3404
    %3605 = vmatpush1.msra.mxu0 %v3403
    %3606 = vmatprep.subr.mxu0 %v3402
    %3607 = vmatpush1.msra.mxu0 %v3401
    %3608 = vmatprep.subr.mxu0 %v3400
    %3609 = vmatpush1.msra.mxu0 %v3399
    %3610 = vmatprep.subr.mxu0 %v3398
    %3611 = vmatpush1.msra.mxu0 %v3397
    %3612 = vmatprep.subr.mxu0 0.0
    %3613 = vmatpush2.msra.mxu0 0.0
    %3614 = vmatprep.subr.mxu0 0.0
    %3615 = vmatpush2.msra.mxu0 0.0
    %3616 = vmatprep.subr.mxu0 0.0
    %3617 = vmatpush2.msra.mxu0 0.0
    %3618 = vmatprep.subr.mxu0 0.0
    %3619 = vmatpush2.msra.mxu0 0.0
    %3620 = vmatprep.subr.mxu0 0.0
    %3621 = vmatpush2.msra.mxu0 0.0
    %3622 = vmatprep.subr.mxu0 0.0
    %3623 = vmatpush2.msra.mxu0 0.0
    %3624 = vmatprep.subr.mxu0 0.0
    %3625 = vmatpush2.msra.mxu0 0.0
    %3626 = vmatprep.subr.mxu0 0.0
    %3627 = vmatpush2.msra.mxu0 0.0
    %3628 = vmatprep.subr.mxu0 0.0
    %3629 = vmatpush2.msra.mxu0 0.0
    %3630 = vmatprep.subr.mxu0 0.0
    %3631 = vmatpush2.msra.mxu0 0.0
    %3632 = vmatprep.subr.mxu0 0.0
    %3633 = vmatpush2.msra.mxu0 0.0
    %3634 = vmatprep.subr.mxu0 0.0
    %3635 = vmatpush2.msra.mxu0 0.0
    %3636 = vmatprep.subr.mxu0 0.0
    %3637 = vmatpush2.msra.mxu0 0.0
    %3638 = vmatprep.subr.mxu0 0.0
    %3639 = vmatpush2.msra.mxu0 0.0
    %3640 = vmatprep.subr.mxu0 0.0
    %3641 = vmatpush2.msra.mxu0 0.0
    %3642 = vmatprep.subr.mxu0 0.0
    %3643 = vmatpush2.msra.mxu0 0.0
    %3644 = vmatprep.mubr.f32.mxu0 0.0
    %3645 = vmatmul.mubr.f32.gmra.mxu0 %v3578
    %v3646 = vpop.f32.mrf.mxu0
    %v3647 = vadd.f32 0.0, %v3646
    %v3648 = vpop.f32.mrf.mxu0
    %v3649 = vadd.f32 0.0, %v3648
    %3650 = vdwg.mxu0
    %v3653 = vrot.slane %v3647, 7
    %v3654 = vrot.slane %v3649, 7
    %v3657 = vadd.f32 %v3571, %v3653
    %v3658 = vadd.f32 %v3575, %v3654
    %v3659 = vadd.f32 %v3657, %v3517
    %v3660 = vadd.f32 %v3658, %v3521
    %v3661 = vxor.u32 %v3659, 2147483648
    %v3662 = vxor.u32 %v3660, 2147483648
    %v3663 = vmul.f32 %v3661, 1.442695
    %v3664 = vpow.pop %v3663
    %v3665 = vmul.f32 %v3662, 1.442695
    %v3666 = vpow.pop %v3665
    %v3667 = vadd.f32 %v3664, 1.0
    %v3668 = vadd.f32 %v3666, 1.0
    %v3669 = vrcp.pop %v3667
    %v3670 = vmul.f32 1.0, %v3669
    %v3671 = vrcp.pop %v3668
    %v3672 = vmul.f32 1.0, %v3671
    %v3673 = vtanh.pop %v3659
    %v3674 = vtanh.pop %v3660
    %3676 = vrot.lane.b32.xlu0 %v3672, 32
    %v3677 = vpop.permute.xlu0 %3676
    %v3679 = vsel %vm333, %v3670, %v3677
    %3681 = vrot.lane.b32.xlu0 %v3670, 96
    %v3682 = vpop.permute.xlu0 %3681
    %v3684 = vsel %vm333, %v3682, %v3672
    %3686 = vrot.lane.b32.xlu0 %v3673, 64
    %v3687 = vpop.permute.xlu0 %3686
    %3690 = vrot.lane.b32.xlu0 %v3674, 96
    %v3691 = vpop.permute.xlu0 %3690
    %v3693 = vsel %vm333, %v3687, %v3691
    %3694 = vrot.lane.b32.xlu0 %v3670, 32
    %v3695 = vpop.permute.xlu0 %3694
    %3697 = vrot.lane.b32.xlu0 %v3672, 64
    %v3698 = vpop.permute.xlu0 %3697
    %v3700 = vsel %vm333, %v3695, %v3698
    %v3702 = vrot.slane %v3568, 7
    %v3704 = vmul.f32 %v3684, %v3702
    %v3705 = vmul.f32 %v3679, %v3693
    %v3706 = vadd.f32 %v3704, %v3705
    %v3707 = vtanh.pop %v3706
    %v3708 = vmul.f32 %v3700, %v3707
    %v3709 = vsel %vm3193, %v3429, %v3387
    %v3711 = vrot.slane %v3389, 3
    %v3712 = vrot.slane %v3395, 2
    %v3713 = vsel %vm3193, %v3712, %v3711
    %v3716 = vrot.slane %v3708, 1
    %v3717 = vsel %vm3286, %v3716, 0
    %3719 = vmatprep.subr.mxu0 0.0
    %3720 = vmatpush1.msra.mxu0 0.0
    %3721 = vmatprep.subr.mxu0 0.0
    %3722 = vmatpush1.msra.mxu0 0.0
    %3723 = vmatprep.subr.mxu0 0.0
    %3724 = vmatpush1.msra.mxu0 0.0
    %3725 = vmatprep.subr.mxu0 0.0
    %3726 = vmatpush1.msra.mxu0 0.0
    %3727 = vmatprep.subr.mxu0 0.0
    %3728 = vmatpush1.msra.mxu0 0.0
    %3729 = vmatprep.subr.mxu0 0.0
    %3730 = vmatpush1.msra.mxu0 0.0
    %3731 = vmatprep.subr.mxu0 0.0
    %3732 = vmatpush1.msra.mxu0 0.0
    %3733 = vmatprep.subr.mxu0 0.0
    %3734 = vmatpush1.msra.mxu0 0.0
    %3735 = vmatprep.subr.mxu0 %v3412
    %3736 = vmatpush1.msra.mxu0 %v3411
    %3737 = vmatprep.subr.mxu0 %v3410
    %3738 = vmatpush1.msra.mxu0 %v3409
    %3739 = vmatprep.subr.mxu0 %v3408
    %3740 = vmatpush1.msra.mxu0 %v3407
    %3741 = vmatprep.subr.mxu0 %v3406
    %3742 = vmatpush1.msra.mxu0 %v3405
    %3743 = vmatprep.subr.mxu0 %v3404
    %3744 = vmatpush1.msra.mxu0 %v3403
    %3745 = vmatprep.subr.mxu0 %v3402
    %3746 = vmatpush1.msra.mxu0 %v3401
    %3747 = vmatprep.subr.mxu0 %v3400
    %3748 = vmatpush1.msra.mxu0 %v3399
    %3749 = vmatprep.subr.mxu0 %v3398
    %3750 = vmatpush1.msra.mxu0 %v3397
    %3751 = vmatprep.subr.mxu0 0.0
    %3752 = vmatpush2.msra.mxu0 0.0
    %3753 = vmatprep.subr.mxu0 0.0
    %3754 = vmatpush2.msra.mxu0 0.0
    %3755 = vmatprep.subr.mxu0 0.0
    %3756 = vmatpush2.msra.mxu0 0.0
    %3757 = vmatprep.subr.mxu0 0.0
    %3758 = vmatpush2.msra.mxu0 0.0
    %3759 = vmatprep.subr.mxu0 0.0
    %3760 = vmatpush2.msra.mxu0 0.0
    %3761 = vmatprep.subr.mxu0 0.0
    %3762 = vmatpush2.msra.mxu0 0.0
    %3763 = vmatprep.subr.mxu0 0.0
    %3764 = vmatpush2.msra.mxu0 0.0
    %3765 = vmatprep.subr.mxu0 0.0
    %3766 = vmatpush2.msra.mxu0 0.0
    %3767 = vmatprep.subr.mxu0 0.0
    %3768 = vmatpush2.msra.mxu0 0.0
    %3769 = vmatprep.subr.mxu0 0.0
    %3770 = vmatpush2.msra.mxu0 0.0
    %3771 = vmatprep.subr.mxu0 0.0
    %3772 = vmatpush2.msra.mxu0 0.0
    %3773 = vmatprep.subr.mxu0 0.0
    %3774 = vmatpush2.msra.mxu0 0.0
    %3775 = vmatprep.subr.mxu0 0.0
    %3776 = vmatpush2.msra.mxu0 0.0
    %3777 = vmatprep.subr.mxu0 0.0
    %3778 = vmatpush2.msra.mxu0 0.0
    %3779 = vmatprep.subr.mxu0 0.0
    %3780 = vmatpush2.msra.mxu0 0.0
    %3781 = vmatprep.subr.mxu0 0.0
    %3782 = vmatpush2.msra.mxu0 0.0
    %3783 = vmatprep.mubr.f32.mxu0 0.0
    %3784 = vmatmul.mubr.f32.gmra.mxu0 %v3717
    %v3785 = vpop.f32.mrf.mxu0
    %v3786 = vadd.f32 0.0, %v3785
    %v3787 = vpop.f32.mrf.mxu0
    %v3788 = vadd.f32 0.0, %v3787
    %3789 = vdwg.mxu0
    %v3792 = vrot.slane %v3786, 6
    %v3793 = vrot.slane %v3788, 6
    %v3796 = vadd.f32 %v3709, %v3792
    %v3797 = vadd.f32 %v3713, %v3793
    %v3798 = vadd.f32 %v3796, %v3517
    %v3799 = vadd.f32 %v3797, %v3521
    %v3800 = vxor.u32 %v3798, 2147483648
    %v3801 = vxor.u32 %v3799, 2147483648
    %v3802 = vmul.f32 %v3800, 1.442695
    %v3803 = vpow.pop %v3802
    %v3804 = vmul.f32 %v3801, 1.442695
    %v3805 = vpow.pop %v3804
    %v3806 = vadd.f32 %v3803, 1.0
    %v3807 = vadd.f32 %v3805, 1.0
    %v3808 = vrcp.pop %v3806
    %v3809 = vmul.f32 1.0, %v3808
    %v3810 = vrcp.pop %v3807
    %v3811 = vmul.f32 1.0, %v3810
    %v3812 = vtanh.pop %v3798
    %v3813 = vtanh.pop %v3799
    %3815 = vrot.lane.b32.xlu0 %v3811, 32
    %v3816 = vpop.permute.xlu0 %3815
    %v3818 = vsel %vm333, %v3809, %v3816
    %3820 = vrot.lane.b32.xlu0 %v3809, 96
    %v3821 = vpop.permute.xlu0 %3820
    %v3823 = vsel %vm333, %v3821, %v3811
    %3825 = vrot.lane.b32.xlu0 %v3812, 64
    %v3826 = vpop.permute.xlu0 %3825
    %3829 = vrot.lane.b32.xlu0 %v3813, 96
    %v3830 = vpop.permute.xlu0 %3829
    %v3832 = vsel %vm333, %v3826, %v3830
    %3833 = vrot.lane.b32.xlu0 %v3809, 32
    %v3834 = vpop.permute.xlu0 %3833
    %3836 = vrot.lane.b32.xlu0 %v3811, 64
    %v3837 = vpop.permute.xlu0 %3836
    %v3839 = vsel %vm333, %v3834, %v3837
    %v3841 = vrot.slane %v3706, 7
    %v3843 = vmul.f32 %v3823, %v3841
    %v3844 = vmul.f32 %v3818, %v3832
    %v3845 = vadd.f32 %v3843, %v3844
    %v3846 = vtanh.pop %v3845
    %v3847 = vmul.f32 %v3839, %v3846
    %v3848 = vsel %vm3195, %v3429, %v3387
    %v3850 = vrot.slane %v3389, 1
    %v3851 = vsel %vm3195, %v3395, %v3850
    %v3854 = vrot.slane %v3847, 2
    %v3855 = vsel %vm3286, %v3854, 0
    %3857 = vmatprep.subr.mxu0 0.0
    %3858 = vmatpush1.msra.mxu0 0.0
    %3859 = vmatprep.subr.mxu0 0.0
    %3860 = vmatpush1.msra.mxu0 0.0
    %3861 = vmatprep.subr.mxu0 0.0
    %3862 = vmatpush1.msra.mxu0 0.0
    %3863 = vmatprep.subr.mxu0 0.0
    %3864 = vmatpush1.msra.mxu0 0.0
    %3865 = vmatprep.subr.mxu0 0.0
    %3866 = vmatpush1.msra.mxu0 0.0
    %3867 = vmatprep.subr.mxu0 0.0
    %3868 = vmatpush1.msra.mxu0 0.0
    %3869 = vmatprep.subr.mxu0 0.0
    %3870 = vmatpush1.msra.mxu0 0.0
    %3871 = vmatprep.subr.mxu0 0.0
    %3872 = vmatpush1.msra.mxu0 0.0
    %3873 = vmatprep.subr.mxu0 %v3412
    %3874 = vmatpush1.msra.mxu0 %v3411
    %3875 = vmatprep.subr.mxu0 %v3410
    %3876 = vmatpush1.msra.mxu0 %v3409
    %3877 = vmatprep.subr.mxu0 %v3408
    %3878 = vmatpush1.msra.mxu0 %v3407
    %3879 = vmatprep.subr.mxu0 %v3406
    %3880 = vmatpush1.msra.mxu0 %v3405
    %3881 = vmatprep.subr.mxu0 %v3404
    %3882 = vmatpush1.msra.mxu0 %v3403
    %3883 = vmatprep.subr.mxu0 %v3402
    %3884 = vmatpush1.msra.mxu0 %v3401
    %3885 = vmatprep.subr.mxu0 %v3400
    %3886 = vmatpush1.msra.mxu0 %v3399
    %3887 = vmatprep.subr.mxu0 %v3398
    %3888 = vmatpush1.msra.mxu0 %v3397
    %3889 = vmatprep.subr.mxu0 0.0
    %3890 = vmatpush2.msra.mxu0 0.0
    %3891 = vmatprep.subr.mxu0 0.0
    %3892 = vmatpush2.msra.mxu0 0.0
    %3893 = vmatprep.subr.mxu0 0.0
    %3894 = vmatpush2.msra.mxu0 0.0
    %3895 = vmatprep.subr.mxu0 0.0
    %3896 = vmatpush2.msra.mxu0 0.0
    %3897 = vmatprep.subr.mxu0 0.0
    %3898 = vmatpush2.msra.mxu0 0.0
    %3899 = vmatprep.subr.mxu0 0.0
    %3900 = vmatpush2.msra.mxu0 0.0
    %3901 = vmatprep.subr.mxu0 0.0
    %3902 = vmatpush2.msra.mxu0 0.0
    %3903 = vmatprep.subr.mxu0 0.0
    %3904 = vmatpush2.msra.mxu0 0.0
    %3905 = vmatprep.subr.mxu0 0.0
    %3906 = vmatpush2.msra.mxu0 0.0
    %3907 = vmatprep.subr.mxu0 0.0
    %3908 = vmatpush2.msra.mxu0 0.0
    %3909 = vmatprep.subr.mxu0 0.0
    %3910 = vmatpush2.msra.mxu0 0.0
    %3911 = vmatprep.subr.mxu0 0.0
    %3912 = vmatpush2.msra.mxu0 0.0
    %3913 = vmatprep.subr.mxu0 0.0
    %3914 = vmatpush2.msra.mxu0 0.0
    %3915 = vmatprep.subr.mxu0 0.0
    %3916 = vmatpush2.msra.mxu0 0.0
    %3917 = vmatprep.subr.mxu0 0.0
    %3918 = vmatpush2.msra.mxu0 0.0
    %3919 = vmatprep.subr.mxu0 0.0
    %3920 = vmatpush2.msra.mxu0 0.0
    %3921 = vmatprep.mubr.f32.mxu0 0.0
    %3922 = vmatmul.mubr.f32.gmra.mxu0 %v3855
    %v3923 = vpop.f32.mrf.mxu0
    %v3924 = vadd.f32 0.0, %v3923
    %v3925 = vpop.f32.mrf.mxu0
    %v3926 = vadd.f32 0.0, %v3925
    %3927 = vdwg.mxu0
    %v3930 = vrot.slane %v3924, 5
    %v3931 = vrot.slane %v3926, 5
    %v3934 = vadd.f32 %v3848, %v3930
    %v3935 = vadd.f32 %v3851, %v3931
    %v3936 = vadd.f32 %v3934, %v3517
    %v3937 = vadd.f32 %v3935, %v3521
    %v3938 = vxor.u32 %v3936, 2147483648
    %v3939 = vxor.u32 %v3937, 2147483648
    %v3940 = vmul.f32 %v3938, 1.442695
    %v3941 = vpow.pop %v3940
    %v3942 = vmul.f32 %v3939, 1.442695
    %v3943 = vpow.pop %v3942
    %v3944 = vadd.f32 %v3941, 1.0
    %v3945 = vadd.f32 %v3943, 1.0
    %v3946 = vrcp.pop %v3944
    %v3947 = vmul.f32 1.0, %v3946
    %v3948 = vrcp.pop %v3945
    %v3949 = vmul.f32 1.0, %v3948
    %v3950 = vtanh.pop %v3936
    %v3951 = vtanh.pop %v3937
    %3953 = vrot.lane.b32.xlu0 %v3949, 32
    %v3954 = vpop.permute.xlu0 %3953
    %v3956 = vsel %vm333, %v3947, %v3954
    %3958 = vrot.lane.b32.xlu0 %v3947, 96
    %v3959 = vpop.permute.xlu0 %3958
    %v3961 = vsel %vm333, %v3959, %v3949
    %3963 = vrot.lane.b32.xlu0 %v3950, 64
    %v3964 = vpop.permute.xlu0 %3963
    %3967 = vrot.lane.b32.xlu0 %v3951, 96
    %v3968 = vpop.permute.xlu0 %3967
    %v3970 = vsel %vm333, %v3964, %v3968
    %3971 = vrot.lane.b32.xlu0 %v3947, 32
    %v3972 = vpop.permute.xlu0 %3971
    %3974 = vrot.lane.b32.xlu0 %v3949, 64
    %v3975 = vpop.permute.xlu0 %3974
    %v3977 = vsel %vm333, %v3972, %v3975
    %v3979 = vrot.slane %v3845, 7
    %v3981 = vmul.f32 %v3961, %v3979
    %v3982 = vmul.f32 %v3956, %v3970
    %v3983 = vadd.f32 %v3981, %v3982
    %v3984 = vtanh.pop %v3983
    %v3985 = vmul.f32 %v3977, %v3984
    %v3986 = vsel %vm3197, %v3429, %v3387
    %v3988 = vsel %vm3197, %v3435, %v3434
    %v3991 = vrot.slane %v3985, 3
    %v3992 = vsel %vm3286, %v3991, 0
    %3994 = vmatprep.subr.mxu0 0.0
    %3995 = vmatpush1.msra.mxu0 0.0
    %3996 = vmatprep.subr.mxu0 0.0
    %3997 = vmatpush1.msra.mxu0 0.0
    %3998 = vmatprep.subr.mxu0 0.0
    %3999 = vmatpush1.msra.mxu0 0.0
    %4000 = vmatprep.subr.mxu0 0.0
    %4001 = vmatpush1.msra.mxu0 0.0
    %4002 = vmatprep.subr.mxu0 0.0
    %4003 = vmatpush1.msra.mxu0 0.0
    %4004 = vmatprep.subr.mxu0 0.0
    %4005 = vmatpush1.msra.mxu0 0.0
    %4006 = vmatprep.subr.mxu0 0.0
    %4007 = vmatpush1.msra.mxu0 0.0
    %4008 = vmatprep.subr.mxu0 0.0
    %4009 = vmatpush1.msra.mxu0 0.0
    %4010 = vmatprep.subr.mxu0 %v3412
    %4011 = vmatpush1.msra.mxu0 %v3411
    %4012 = vmatprep.subr.mxu0 %v3410
    %4013 = vmatpush1.msra.mxu0 %v3409
    %4014 = vmatprep.subr.mxu0 %v3408
    %4015 = vmatpush1.msra.mxu0 %v3407
    %4016 = vmatprep.subr.mxu0 %v3406
    %4017 = vmatpush1.msra.mxu0 %v3405
    %4018 = vmatprep.subr.mxu0 %v3404
    %4019 = vmatpush1.msra.mxu0 %v3403
    %4020 = vmatprep.subr.mxu0 %v3402
    %4021 = vmatpush1.msra.mxu0 %v3401
    %4022 = vmatprep.subr.mxu0 %v3400
    %4023 = vmatpush1.msra.mxu0 %v3399
    %4024 = vmatprep.subr.mxu0 %v3398
    %4025 = vmatpush1.msra.mxu0 %v3397
    %4026 = vmatprep.subr.mxu0 0.0
    %4027 = vmatpush2.msra.mxu0 0.0
    %4028 = vmatprep.subr.mxu0 0.0
    %4029 = vmatpush2.msra.mxu0 0.0
    %4030 = vmatprep.subr.mxu0 0.0
    %4031 = vmatpush2.msra.mxu0 0.0
    %4032 = vmatprep.subr.mxu0 0.0
    %4033 = vmatpush2.msra.mxu0 0.0
    %4034 = vmatprep.subr.mxu0 0.0
    %4035 = vmatpush2.msra.mxu0 0.0
    %4036 = vmatprep.subr.mxu0 0.0
    %4037 = vmatpush2.msra.mxu0 0.0
    %4038 = vmatprep.subr.mxu0 0.0
    %4039 = vmatpush2.msra.mxu0 0.0
    %4040 = vmatprep.subr.mxu0 0.0
    %4041 = vmatpush2.msra.mxu0 0.0
    %4042 = vmatprep.subr.mxu0 0.0
    %4043 = vmatpush2.msra.mxu0 0.0
    %4044 = vmatprep.subr.mxu0 0.0
    %4045 = vmatpush2.msra.mxu0 0.0
    %4046 = vmatprep.subr.mxu0 0.0
    %4047 = vmatpush2.msra.mxu0 0.0
    %4048 = vmatprep.subr.mxu0 0.0
    %4049 = vmatpush2.msra.mxu0 0.0
    %4050 = vmatprep.subr.mxu0 0.0
    %4051 = vmatpush2.msra.mxu0 0.0
    %4052 = vmatprep.subr.mxu0 0.0
    %4053 = vmatpush2.msra.mxu0 0.0
    %4054 = vmatprep.subr.mxu0 0.0
    %4055 = vmatpush2.msra.mxu0 0.0
    %4056 = vmatprep.subr.mxu0 0.0
    %4057 = vmatpush2.msra.mxu0 0.0
    %4058 = vmatprep.mubr.f32.mxu0 0.0
    %4059 = vmatmul.mubr.f32.gmra.mxu0 %v3992
    %v4060 = vpop.f32.mrf.mxu0
    %v4061 = vadd.f32 0.0, %v4060
    %v4062 = vpop.f32.mrf.mxu0
    %v4063 = vadd.f32 0.0, %v4062
    %4064 = vdwg.mxu0
    %v4067 = vrot.slane %v4061, 4
    %v4068 = vrot.slane %v4063, 4
    %v4071 = vadd.f32 %v3986, %v4067
    %v4072 = vadd.f32 %v3988, %v4068
    %v4073 = vadd.f32 %v4071, %v3517
    %v4074 = vadd.f32 %v4072, %v3521
    %v4075 = vxor.u32 %v4073, 2147483648
    %v4076 = vxor.u32 %v4074, 2147483648
    %v4077 = vmul.f32 %v4075, 1.442695
    %v4078 = vpow.pop %v4077
    %v4079 = vmul.f32 %v4076, 1.442695
    %v4080 = vpow.pop %v4079
    %v4081 = vadd.f32 %v4078, 1.0
    %v4082 = vadd.f32 %v4080, 1.0
    %v4083 = vrcp.pop %v4081
    %v4084 = vmul.f32 1.0, %v4083
    %v4085 = vrcp.pop %v4082
    %v4086 = vmul.f32 1.0, %v4085
    %v4087 = vtanh.pop %v4073
    %v4088 = vtanh.pop %v4074
    %4090 = vrot.lane.b32.xlu0 %v4086, 32
    %v4091 = vpop.permute.xlu0 %4090
    %v4093 = vsel %vm333, %v4084, %v4091
    %4095 = vrot.lane.b32.xlu0 %v4084, 96
    %v4096 = vpop.permute.xlu0 %4095
    %v4098 = vsel %vm333, %v4096, %v4086
    %4100 = vrot.lane.b32.xlu0 %v4087, 64
    %v4101 = vpop.permute.xlu0 %4100
    %4104 = vrot.lane.b32.xlu0 %v4088, 96
    %v4105 = vpop.permute.xlu0 %4104
    %v4107 = vsel %vm333, %v4101, %v4105
    %4108 = vrot.lane.b32.xlu0 %v4084, 32
    %v4109 = vpop.permute.xlu0 %4108
    %4111 = vrot.lane.b32.xlu0 %v4086, 64
    %v4112 = vpop.permute.xlu0 %4111
    %v4114 = vsel %vm333, %v4109, %v4112
    %v4116 = vrot.slane %v3983, 7
    %v4118 = vmul.f32 %v4098, %v4116
    %v4119 = vmul.f32 %v4093, %v4107
    %v4120 = vadd.f32 %v4118, %v4119
    %v4121 = vtanh.pop %v4120
    %v4122 = vmul.f32 %v4114, %v4121
    %v4123 = vsel %vm3199, %v3429, %v3387
    %v4125 = vsel %vm3199, %v3574, %v3573
    %v4128 = vrot.slane %v4122, 4
    %v4129 = vsel %vm3286, %v4128, 0
    %4131 = vmatprep.subr.mxu0 0.0
    %4132 = vmatpush1.msra.mxu0 0.0
    %4133 = vmatprep.subr.mxu0 0.0
    %4134 = vmatpush1.msra.mxu0 0.0
    %4135 = vmatprep.subr.mxu0 0.0
    %4136 = vmatpush1.msra.mxu0 0.0
    %4137 = vmatprep.subr.mxu0 0.0
    %4138 = vmatpush1.msra.mxu0 0.0
    %4139 = vmatprep.subr.mxu0 0.0
    %4140 = vmatpush1.msra.mxu0 0.0
    %4141 = vmatprep.subr.mxu0 0.0
    %4142 = vmatpush1.msra.mxu0 0.0
    %4143 = vmatprep.subr.mxu0 0.0
    %4144 = vmatpush1.msra.mxu0 0.0
    %4145 = vmatprep.subr.mxu0 0.0
    %4146 = vmatpush1.msra.mxu0 0.0
    %4147 = vmatprep.subr.mxu0 %v3412
    %4148 = vmatpush1.msra.mxu0 %v3411
    %4149 = vmatprep.subr.mxu0 %v3410
    %4150 = vmatpush1.msra.mxu0 %v3409
    %4151 = vmatprep.subr.mxu0 %v3408
    %4152 = vmatpush1.msra.mxu0 %v3407
    %4153 = vmatprep.subr.mxu0 %v3406
    %4154 = vmatpush1.msra.mxu0 %v3405
    %4155 = vmatprep.subr.mxu0 %v3404
    %4156 = vmatpush1.msra.mxu0 %v3403
    %4157 = vmatprep.subr.mxu0 %v3402
    %4158 = vmatpush1.msra.mxu0 %v3401
    %4159 = vmatprep.subr.mxu0 %v3400
    %4160 = vmatpush1.msra.mxu0 %v3399
    %4161 = vmatprep.subr.mxu0 %v3398
    %4162 = vmatpush1.msra.mxu0 %v3397
    %4163 = vmatprep.subr.mxu0 0.0
    %4164 = vmatpush2.msra.mxu0 0.0
    %4165 = vmatprep.subr.mxu0 0.0
    %4166 = vmatpush2.msra.mxu0 0.0
    %4167 = vmatprep.subr.mxu0 0.0
    %4168 = vmatpush2.msra.mxu0 0.0
    %4169 = vmatprep.subr.mxu0 0.0
    %4170 = vmatpush2.msra.mxu0 0.0
    %4171 = vmatprep.subr.mxu0 0.0
    %4172 = vmatpush2.msra.mxu0 0.0
    %4173 = vmatprep.subr.mxu0 0.0
    %4174 = vmatpush2.msra.mxu0 0.0
    %4175 = vmatprep.subr.mxu0 0.0
    %4176 = vmatpush2.msra.mxu0 0.0
    %4177 = vmatprep.subr.mxu0 0.0
    %4178 = vmatpush2.msra.mxu0 0.0
    %4179 = vmatprep.subr.mxu0 0.0
    %4180 = vmatpush2.msra.mxu0 0.0
    %4181 = vmatprep.subr.mxu0 0.0
    %4182 = vmatpush2.msra.mxu0 0.0
    %4183 = vmatprep.subr.mxu0 0.0
    %4184 = vmatpush2.msra.mxu0 0.0
    %4185 = vmatprep.subr.mxu0 0.0
    %4186 = vmatpush2.msra.mxu0 0.0
    %4187 = vmatprep.subr.mxu0 0.0
    %4188 = vmatpush2.msra.mxu0 0.0
    %4189 = vmatprep.subr.mxu0 0.0
    %4190 = vmatpush2.msra.mxu0 0.0
    %4191 = vmatprep.subr.mxu0 0.0
    %4192 = vmatpush2.msra.mxu0 0.0
    %4193 = vmatprep.subr.mxu0 0.0
    %4194 = vmatpush2.msra.mxu0 0.0
    %4195 = vmatprep.mubr.f32.mxu0 0.0
    %4196 = vmatmul.mubr.f32.gmra.mxu0 %v4129
    %v4197 = vpop.f32.mrf.mxu0
    %v4198 = vadd.f32 0.0, %v4197
    %v4199 = vpop.f32.mrf.mxu0
    %v4200 = vadd.f32 0.0, %v4199
    %4201 = vdwg.mxu0
    %v4204 = vrot.slane %v4198, 3
    %v4205 = vrot.slane %v4200, 3
    %v4208 = vadd.f32 %v4123, %v4204
    %v4209 = vadd.f32 %v4125, %v4205
    %v4210 = vadd.f32 %v4208, %v3517
    %v4211 = vadd.f32 %v4209, %v3521
    %v4212 = vxor.u32 %v4210, 2147483648
    %v4213 = vxor.u32 %v4211, 2147483648
    %v4214 = vmul.f32 %v4212, 1.442695
    %v4215 = vpow.pop %v4214
    %v4216 = vmul.f32 %v4213, 1.442695
    %v4217 = vpow.pop %v4216
    %v4218 = vadd.f32 %v4215, 1.0
    %v4219 = vadd.f32 %v4217, 1.0
    %v4220 = vrcp.pop %v4218
    %v4221 = vmul.f32 1.0, %v4220
    %v4222 = vrcp.pop %v4219
    %v4223 = vmul.f32 1.0, %v4222
    %v4224 = vtanh.pop %v4210
    %v4225 = vtanh.pop %v4211
    %4227 = vrot.lane.b32.xlu0 %v4223, 32
    %v4228 = vpop.permute.xlu0 %4227
    %v4230 = vsel %vm333, %v4221, %v4228
    %4232 = vrot.lane.b32.xlu0 %v4221, 96
    %v4233 = vpop.permute.xlu0 %4232
    %v4235 = vsel %vm333, %v4233, %v4223
    %4237 = vrot.lane.b32.xlu0 %v4224, 64
    %v4238 = vpop.permute.xlu0 %4237
    %4241 = vrot.lane.b32.xlu0 %v4225, 96
    %v4242 = vpop.permute.xlu0 %4241
    %v4244 = vsel %vm333, %v4238, %v4242
    %4245 = vrot.lane.b32.xlu0 %v4221, 32
    %v4246 = vpop.permute.xlu0 %4245
    %4248 = vrot.lane.b32.xlu0 %v4223, 64
    %v4249 = vpop.permute.xlu0 %4248
    %v4251 = vsel %vm333, %v4246, %v4249
    %v4253 = vrot.slane %v4120, 7
    %v4255 = vmul.f32 %v4235, %v4253
    %v4256 = vmul.f32 %v4230, %v4244
    %v4257 = vadd.f32 %v4255, %v4256
    %v4258 = vtanh.pop %v4257
    %v4259 = vmul.f32 %v4251, %v4258
    %v4260 = vsel %vm3201, %v3429, %v3387
    %v4262 = vsel %vm3201, %v3712, %v3711
    %v4265 = vrot.slane %v4259, 5
    %v4266 = vsel %vm3286, %v4265, 0
    %4268 = vmatprep.subr.mxu0 0.0
    %4269 = vmatpush1.msra.mxu0 0.0
    %4270 = vmatprep.subr.mxu0 0.0
    %4271 = vmatpush1.msra.mxu0 0.0
    %4272 = vmatprep.subr.mxu0 0.0
    %4273 = vmatpush1.msra.mxu0 0.0
    %4274 = vmatprep.subr.mxu0 0.0
    %4275 = vmatpush1.msra.mxu0 0.0
    %4276 = vmatprep.subr.mxu0 0.0
    %4277 = vmatpush1.msra.mxu0 0.0
    %4278 = vmatprep.subr.mxu0 0.0
    %4279 = vmatpush1.msra.mxu0 0.0
    %4280 = vmatprep.subr.mxu0 0.0
    %4281 = vmatpush1.msra.mxu0 0.0
    %4282 = vmatprep.subr.mxu0 0.0
    %4283 = vmatpush1.msra.mxu0 0.0
    %4284 = vmatprep.subr.mxu0 %v3412
    %4285 = vmatpush1.msra.mxu0 %v3411
    %4286 = vmatprep.subr.mxu0 %v3410
    %4287 = vmatpush1.msra.mxu0 %v3409
    %4288 = vmatprep.subr.mxu0 %v3408
    %4289 = vmatpush1.msra.mxu0 %v3407
    %4290 = vmatprep.subr.mxu0 %v3406
    %4291 = vmatpush1.msra.mxu0 %v3405
    %4292 = vmatprep.subr.mxu0 %v3404
    %4293 = vmatpush1.msra.mxu0 %v3403
    %4294 = vmatprep.subr.mxu0 %v3402
    %4295 = vmatpush1.msra.mxu0 %v3401
    %4296 = vmatprep.subr.mxu0 %v3400
    %4297 = vmatpush1.msra.mxu0 %v3399
    %4298 = vmatprep.subr.mxu0 %v3398
    %4299 = vmatpush1.msra.mxu0 %v3397
    %4300 = vmatprep.subr.mxu0 0.0
    %4301 = vmatpush2.msra.mxu0 0.0
    %4302 = vmatprep.subr.mxu0 0.0
    %4303 = vmatpush2.msra.mxu0 0.0
    %4304 = vmatprep.subr.mxu0 0.0
    %4305 = vmatpush2.msra.mxu0 0.0
    %4306 = vmatprep.subr.mxu0 0.0
    %4307 = vmatpush2.msra.mxu0 0.0
    %4308 = vmatprep.subr.mxu0 0.0
    %4309 = vmatpush2.msra.mxu0 0.0
    %4310 = vmatprep.subr.mxu0 0.0
    %4311 = vmatpush2.msra.mxu0 0.0
    %4312 = vmatprep.subr.mxu0 0.0
    %4313 = vmatpush2.msra.mxu0 0.0
    %4314 = vmatprep.subr.mxu0 0.0
    %4315 = vmatpush2.msra.mxu0 0.0
    %4316 = vmatprep.subr.mxu0 0.0
    %4317 = vmatpush2.msra.mxu0 0.0
    %4318 = vmatprep.subr.mxu0 0.0
    %4319 = vmatpush2.msra.mxu0 0.0
    %4320 = vmatprep.subr.mxu0 0.0
    %4321 = vmatpush2.msra.mxu0 0.0
    %4322 = vmatprep.subr.mxu0 0.0
    %4323 = vmatpush2.msra.mxu0 0.0
    %4324 = vmatprep.subr.mxu0 0.0
    %4325 = vmatpush2.msra.mxu0 0.0
    %4326 = vmatprep.subr.mxu0 0.0
    %4327 = vmatpush2.msra.mxu0 0.0
    %4328 = vmatprep.subr.mxu0 0.0
    %4329 = vmatpush2.msra.mxu0 0.0
    %4330 = vmatprep.subr.mxu0 0.0
    %4331 = vmatpush2.msra.mxu0 0.0
    %4332 = vmatprep.mubr.f32.mxu0 0.0
    %4333 = vmatmul.mubr.f32.gmra.mxu0 %v4266
    %v4334 = vpop.f32.mrf.mxu0
    %v4335 = vadd.f32 0.0, %v4334
    %v4336 = vpop.f32.mrf.mxu0
    %v4337 = vadd.f32 0.0, %v4336
    %4338 = vdwg.mxu0
    %v4341 = vrot.slane %v4335, 2
    %v4342 = vrot.slane %v4337, 2
    %v4345 = vadd.f32 %v4260, %v4341
    %v4346 = vadd.f32 %v4262, %v4342
    %v4347 = vadd.f32 %v4345, %v3517
    %v4348 = vadd.f32 %v4346, %v3521
    %v4349 = vxor.u32 %v4347, 2147483648
    %v4350 = vxor.u32 %v4348, 2147483648
    %v4351 = vmul.f32 %v4349, 1.442695
    %v4352 = vpow.pop %v4351
    %v4353 = vmul.f32 %v4350, 1.442695
    %v4354 = vpow.pop %v4353
    %v4355 = vadd.f32 %v4352, 1.0
    %v4356 = vadd.f32 %v4354, 1.0
    %v4357 = vrcp.pop %v4355
    %v4358 = vmul.f32 1.0, %v4357
    %v4359 = vrcp.pop %v4356
    %v4360 = vmul.f32 1.0, %v4359
    %v4361 = vtanh.pop %v4347
    %v4362 = vtanh.pop %v4348
    %4364 = vrot.lane.b32.xlu0 %v4360, 32
    %v4365 = vpop.permute.xlu0 %4364
    %v4367 = vsel %vm333, %v4358, %v4365
    %4369 = vrot.lane.b32.xlu0 %v4358, 96
    %v4370 = vpop.permute.xlu0 %4369
    %v4372 = vsel %vm333, %v4370, %v4360
    %4374 = vrot.lane.b32.xlu0 %v4361, 64
    %v4375 = vpop.permute.xlu0 %4374
    %4378 = vrot.lane.b32.xlu0 %v4362, 96
    %v4379 = vpop.permute.xlu0 %4378
    %v4381 = vsel %vm333, %v4375, %v4379
    %4382 = vrot.lane.b32.xlu0 %v4358, 32
    %v4383 = vpop.permute.xlu0 %4382
    %4385 = vrot.lane.b32.xlu0 %v4360, 64
    %v4386 = vpop.permute.xlu0 %4385
    %v4388 = vsel %vm333, %v4383, %v4386
    %v4390 = vrot.slane %v4257, 7
    %v4392 = vmul.f32 %v4372, %v4390
    %v4393 = vmul.f32 %v4367, %v4381
    %v4394 = vadd.f32 %v4392, %v4393
    %v4395 = vtanh.pop %v4394
    %v4396 = vmul.f32 %v4388, %v4395
    %v4402 = vrot.slane %v4396, 6
    %v4403 = vsel %vm3286, %v4402, 0
    %4405 = vmatprep.subr.mxu0 0.0
    %4406 = vmatpush1.msra.mxu0 0.0
    %4407 = vmatprep.subr.mxu0 0.0
    %4408 = vmatpush1.msra.mxu0 0.0
    %4409 = vmatprep.subr.mxu0 0.0
    %4410 = vmatpush1.msra.mxu0 0.0
    %4411 = vmatprep.subr.mxu0 0.0
    %4412 = vmatpush1.msra.mxu0 0.0
    %4413 = vmatprep.subr.mxu0 0.0
    %4414 = vmatpush1.msra.mxu0 0.0
    %4415 = vmatprep.subr.mxu0 0.0
    %4416 = vmatpush1.msra.mxu0 0.0
    %4417 = vmatprep.subr.mxu0 0.0
    %4418 = vmatpush1.msra.mxu0 0.0
    %4419 = vmatprep.subr.mxu0 0.0
    %4420 = vmatpush1.msra.mxu0 0.0
    %4421 = vmatprep.subr.mxu0 %v3412
    %4422 = vmatpush1.msra.mxu0 %v3411
    %4423 = vmatprep.subr.mxu0 %v3410
    %4424 = vmatpush1.msra.mxu0 %v3409
    %4425 = vmatprep.subr.mxu0 %v3408
    %4426 = vmatpush1.msra.mxu0 %v3407
    %4427 = vmatprep.subr.mxu0 %v3406
    %4428 = vmatpush1.msra.mxu0 %v3405
    %4429 = vmatprep.subr.mxu0 %v3404
    %4430 = vmatpush1.msra.mxu0 %v3403
    %4431 = vmatprep.subr.mxu0 %v3402
    %4432 = vmatpush1.msra.mxu0 %v3401
    %4433 = vmatprep.subr.mxu0 %v3400
    %4434 = vmatpush1.msra.mxu0 %v3399
    %4435 = vmatprep.subr.mxu0 %v3398
    %4436 = vmatpush1.msra.mxu0 %v3397
    %4437 = vmatprep.subr.mxu0 0.0
    %4438 = vmatpush2.msra.mxu0 0.0
    %4439 = vmatprep.subr.mxu0 0.0
    %4440 = vmatpush2.msra.mxu0 0.0
    %4441 = vmatprep.subr.mxu0 0.0
    %4442 = vmatpush2.msra.mxu0 0.0
    %4443 = vmatprep.subr.mxu0 0.0
    %4444 = vmatpush2.msra.mxu0 0.0
    %4445 = vmatprep.subr.mxu0 0.0
    %4446 = vmatpush2.msra.mxu0 0.0
    %4447 = vmatprep.subr.mxu0 0.0
    %4448 = vmatpush2.msra.mxu0 0.0
    %4449 = vmatprep.subr.mxu0 0.0
    %4450 = vmatpush2.msra.mxu0 0.0
    %4451 = vmatprep.subr.mxu0 0.0
    %4452 = vmatpush2.msra.mxu0 0.0
    %4453 = vmatprep.subr.mxu0 0.0
    %4454 = vmatpush2.msra.mxu0 0.0
    %4455 = vmatprep.subr.mxu0 0.0
    %4456 = vmatpush2.msra.mxu0 0.0
    %4457 = vmatprep.subr.mxu0 0.0
    %4458 = vmatpush2.msra.mxu0 0.0
    %4459 = vmatprep.subr.mxu0 0.0
    %4460 = vmatpush2.msra.mxu0 0.0
    %4461 = vmatprep.subr.mxu0 0.0
    %4462 = vmatpush2.msra.mxu0 0.0
    %4463 = vmatprep.subr.mxu0 0.0
    %4464 = vmatpush2.msra.mxu0 0.0
    %4465 = vmatprep.subr.mxu0 0.0
    %4466 = vmatpush2.msra.mxu0 0.0
    %4467 = vmatprep.subr.mxu0 0.0
    %4468 = vmatpush2.msra.mxu0 0.0
    %4469 = vmatprep.mubr.f32.mxu0 0.0
    %4470 = vmatmul.mubr.f32.gmra.mxu0 %v4403
    %v4471 = vpop.f32.mrf.mxu0
    %v4472 = vadd.f32 0.0, %v4471
    %v4473 = vpop.f32.mrf.mxu0
    %v4474 = vadd.f32 0.0, %v4473
    %4475 = vdwg.mxu0
    %v4478 = vrot.slane %v4472, 1
    %v4479 = vrot.slane %v4474, 1
    %v4482 = vadd.f32 %v3387, %v4478
    %v4483 = vadd.f32 %v3850, %v4479
    %v4484 = vadd.f32 %v3429, %v4478
    %v4485 = vadd.f32 %v3395, %v4479
    %v4486 = vadd.f32 %v4482, %v3517
    %v4487 = vadd.f32 %v4483, %v3521
    %v4488 = vadd.f32 %v4484, %v3517
    %v4489 = vadd.f32 %v4485, %v3521
    %v4490 = vxor.u32 %v4486, 2147483648
    %v4491 = vxor.u32 %v4487, 2147483648
    %v4492 = vxor.u32 %v4488, 2147483648
    %v4493 = vxor.u32 %v4489, 2147483648
    %v4494 = vmul.f32 %v4490, 1.442695
    %v4495 = vpow.pop %v4494
    %v4496 = vmul.f32 %v4491, 1.442695
    %v4497 = vpow.pop %v4496
    %v4498 = vmul.f32 %v4492, 1.442695
    %v4499 = vpow.pop %v4498
    %v4500 = vmul.f32 %v4493, 1.442695
    %v4501 = vpow.pop %v4500
    %v4502 = vadd.f32 %v4495, 1.0
    %v4503 = vadd.f32 %v4497, 1.0
    %v4504 = vadd.f32 %v4499, 1.0
    %v4505 = vadd.f32 %v4501, 1.0
    %v4506 = vrcp.pop %v4502
    %v4507 = vmul.f32 1.0, %v4506
    %v4508 = vrcp.pop %v4503
    %v4509 = vmul.f32 1.0, %v4508
    %v4510 = vrcp.pop %v4504
    %v4511 = vmul.f32 1.0, %v4510
    %v4512 = vrcp.pop %v4505
    %v4513 = vmul.f32 1.0, %v4512
    %v4514 = vtanh.pop %v4486
    %v4515 = vtanh.pop %v4487
    %v4516 = vtanh.pop %v4488
    %v4517 = vtanh.pop %v4489
    %4520 = vrot.lane.b32.xlu0 %v4509, 32
    %v4521 = vpop.permute.xlu0 %4520
    %4522 = vrot.lane.b32.xlu0 %v4513, 32
    %v4523 = vpop.permute.xlu0 %4522
    %v4526 = vsel %vm333, %v4507, %v4521
    %v4527 = vsel %vm333, %v4511, %v4523
    %4530 = vrot.lane.b32.xlu0 %v4507, 96
    %v4531 = vpop.permute.xlu0 %4530
    %4532 = vrot.lane.b32.xlu0 %v4511, 96
    %v4533 = vpop.permute.xlu0 %4532
    %v4536 = vsel %vm333, %v4531, %v4509
    %v4537 = vsel %vm333, %v4533, %v4513
    %4540 = vrot.lane.b32.xlu0 %v4514, 64
    %v4541 = vpop.permute.xlu0 %4540
    %4542 = vrot.lane.b32.xlu0 %v4516, 64
    %v4543 = vpop.permute.xlu0 %4542
    %4548 = vrot.lane.b32.xlu0 %v4515, 96
    %v4549 = vpop.permute.xlu0 %4548
    %4550 = vrot.lane.b32.xlu0 %v4517, 96
    %v4551 = vpop.permute.xlu0 %4550
    %v4554 = vsel %vm333, %v4541, %v4549
    %v4555 = vsel %vm333, %v4543, %v4551
    %4556 = vrot.lane.b32.xlu0 %v4507, 32
    %v4557 = vpop.permute.xlu0 %4556
    %4558 = vrot.lane.b32.xlu0 %v4511, 32
    %v4559 = vpop.permute.xlu0 %4558
    %4562 = vrot.lane.b32.xlu0 %v4509, 64
    %v4563 = vpop.permute.xlu0 %4562
    %4564 = vrot.lane.b32.xlu0 %v4513, 64
    %v4565 = vpop.permute.xlu0 %4564
    %v4568 = vsel %vm333, %v4557, %v4563
    %v4569 = vsel %vm333, %v4559, %v4565
    %v4571 = vrot.slane %v4394, 7
    %v4573 = vmul.f32 %v4536, %v4571
    %v4574 = vmul.f32 %v4537, %v4571
    %v4575 = vmul.f32 %v4526, %v4554
    %v4576 = vmul.f32 %v4527, %v4555
    %v4577 = vadd.f32 %v4573, %v4575
    %v4578 = vadd.f32 %v4574, %v4576
    %v4579 = vtanh.pop %v4577
    %v4580 = vtanh.pop %v4578
    %v4581 = vmul.f32 %v4568, %v4579
    %v4582 = vmul.f32 %v4569, %v4580
    %vm4585 = vcmask 1040384
    %v4586 = vrot.slane %v4581, 7
    %v4587 = vrot.slane %v4582, 7
    %v4588 = vsel %vm4585, %v4586, %v4587
    %v4590 = vsel %vm333, %v3570, %v4588
    %v4591 = vrot.slane %v4396, 5
    %v4593 = vsel %vm333, %v3708, %v4591
    %v4594 = vrot.slane %v4259, 3
    %v4596 = vsel %vm333, %v3847, %v4594
    %v4597 = vrot.slane %v4122, 1
    %v4599 = vsel %vm333, %v3985, %v4597
    %v4600 = vrot.slane %v3985, 7
    %v4602 = vsel %vm333, %v4122, %v4600
    %v4603 = vrot.slane %v3847, 5
    %v4605 = vsel %vm333, %v4259, %v4603
    %v4606 = vrot.slane %v3708, 3
    %v4608 = vsel %vm333, %v4396, %v4606
    %v4609 = vrot.slane %v3570, 1
    %v4611 = vsel %vm333, %v4581, %v4609
    %v4612 = vsel %vm333, %v4582, %v4609
    %v4615 = vunpack.c.l.s4 1966171168
    %v4616 = vunpack.c.0.s8 %v4615
    %v4617 = vlaneseq
    %v4618 = vshrl.u32 %v4617, 7
    %v4619 = vsub.s32 %v4616, %v4618
    %v4620 = vrot.slane %v4590, %v4619
    %v4621 = vcombine.high %v4620, %v4620
    %v4623 = vunpack.c.l.s4 1966171168
    %v4624 = vunpack.c.0.s8 %v4623
    %v4625 = vlaneseq
    %v4626 = vshrl.u32 %v4625, 7
    %v4627 = vsub.s32 %v4624, %v4626
    %v4628 = vrot.slane %v4620, %v4627
    %v4630 = vunpack.c.l.s4 1966171168
    %v4631 = vunpack.c.0.s8 %v4630
    %v4632 = vlaneseq
    %v4633 = vshrl.u32 %v4632, 7
    %v4634 = vsub.s32 %v4631, %v4633
    %v4635 = vrot.slane %v4621, %v4634
    %v4640 = vunpack.c.l.s4 1966171168
    %v4641 = vunpack.c.0.s8 %v4640
    %v4642 = vlaneseq
    %v4643 = vshrl.u32 %v4642, 7
    %v4644 = vsub.s32 %v4641, %v4643
    %v4645 = vrot.slane %v4593, %v4644
    %v4646 = vcombine.high %v4645, %v4645
    %v4648 = vunpack.c.l.s4 1966171168
    %v4649 = vunpack.c.0.s8 %v4648
    %v4650 = vlaneseq
    %v4651 = vshrl.u32 %v4650, 7
    %v4652 = vsub.s32 %v4649, %v4651
    %v4653 = vrot.slane %v4645, %v4652
    %v4655 = vunpack.c.l.s4 1966171168
    %v4656 = vunpack.c.0.s8 %v4655
    %v4657 = vlaneseq
    %v4658 = vshrl.u32 %v4657, 7
    %v4659 = vsub.s32 %v4656, %v4658
    %v4660 = vrot.slane %v4646, %v4659
    %v4661 = vcombine.high %v4653, %v4653
    %v4664 = vunpack.c.l.s4 1966171168
    %v4665 = vunpack.c.0.s8 %v4664
    %v4666 = vlaneseq
    %v4667 = vshrl.u32 %v4666, 7
    %v4668 = vsub.s32 %v4665, %v4667
    %v4669 = vrot.slane %v4596, %v4668
    %v4670 = vcombine.high %v4669, %v4669
    %v4672 = vunpack.c.l.s4 1966171168
    %v4673 = vunpack.c.0.s8 %v4672
    %v4674 = vlaneseq
    %v4675 = vshrl.u32 %v4674, 7
    %v4676 = vsub.s32 %v4673, %v4675
    %v4677 = vrot.slane %v4669, %v4676
    %v4679 = vunpack.c.l.s4 1966171168
    %v4680 = vunpack.c.0.s8 %v4679
    %v4681 = vlaneseq
    %v4682 = vshrl.u32 %v4681, 7
    %v4683 = vsub.s32 %v4680, %v4682
    %v4684 = vrot.slane %v4670, %v4683
    %v4685 = vcombine.high %v4677, %v4677
    %v4686 = vcombine.high %v4684, %v4684
    %v4688 = vcombine.high %v4599, %v4599
    %v4690 = vunpack.c.l.s4 1966171168
    %v4691 = vunpack.c.0.s8 %v4690
    %v4692 = vlaneseq
    %v4693 = vshrl.u32 %v4692, 7
    %v4694 = vsub.s32 %v4691, %v4693
    %v4695 = vrot.slane %v4599, %v4694
    %v4697 = vunpack.c.l.s4 1966171168
    %v4698 = vunpack.c.0.s8 %v4697
    %v4699 = vlaneseq
    %v4700 = vshrl.u32 %v4699, 7
    %v4701 = vsub.s32 %v4698, %v4700
    %v4702 = vrot.slane %v4688, %v4701
    %v4703 = vcombine.high %v4695, %v4695
    %v4705 = vunpack.c.l.s4 1966171168
    %v4706 = vunpack.c.0.s8 %v4705
    %v4707 = vlaneseq
    %v4708 = vshrl.u32 %v4707, 7
    %v4709 = vsub.s32 %v4706, %v4708
    %v4710 = vrot.slane %v4702, %v4709
    %v4712 = vunpack.c.l.s4 1966171168
    %v4713 = vunpack.c.0.s8 %v4712
    %v4714 = vlaneseq
    %v4715 = vshrl.u32 %v4714, 7
    %v4716 = vsub.s32 %v4713, %v4715
    %v4717 = vrot.slane %v4703, %v4716
    %v4718 = vcombine.high %v4717, %v4717
    %v4720 = vcombine.high %v4602, %v4602
    %v4722 = vunpack.c.l.s4 1966171168
    %v4723 = vunpack.c.0.s8 %v4722
    %v4724 = vlaneseq
    %v4725 = vshrl.u32 %v4724, 7
    %v4726 = vsub.s32 %v4723, %v4725
    %v4727 = vrot.slane %v4720, %v4726
    %v4728 = vcombine.high %v4727, %v4727
    %v4730 = vunpack.c.l.s4 1966171168
    %v4731 = vunpack.c.0.s8 %v4730
    %v4732 = vlaneseq
    %v4733 = vshrl.u32 %v4732, 7
    %v4734 = vsub.s32 %v4731, %v4733
    %v4735 = vrot.slane %v4727, %v4734
    %v4737 = vunpack.c.l.s4 1966171168
    %v4738 = vunpack.c.0.s8 %v4737
    %v4739 = vlaneseq
    %v4740 = vshrl.u32 %v4739, 7
    %v4741 = vsub.s32 %v4738, %v4740
    %v4742 = vrot.slane %v4728, %v4741
    %v4744 = vcombine.high %v4605, %v4605
    %v4746 = vunpack.c.l.s4 1966171168
    %v4747 = vunpack.c.0.s8 %v4746
    %v4748 = vlaneseq
    %v4749 = vshrl.u32 %v4748, 7
    %v4750 = vsub.s32 %v4747, %v4749
    %v4751 = vrot.slane %v4744, %v4750
    %v4752 = vcombine.high %v4751, %v4751
    %v4754 = vunpack.c.l.s4 1966171168
    %v4755 = vunpack.c.0.s8 %v4754
    %v4756 = vlaneseq
    %v4757 = vshrl.u32 %v4756, 7
    %v4758 = vsub.s32 %v4755, %v4757
    %v4759 = vrot.slane %v4751, %v4758
    %v4761 = vunpack.c.l.s4 1966171168
    %v4762 = vunpack.c.0.s8 %v4761
    %v4763 = vlaneseq
    %v4764 = vshrl.u32 %v4763, 7
    %v4765 = vsub.s32 %v4762, %v4764
    %v4766 = vrot.slane %v4752, %v4765
    %v4767 = vcombine.high %v4759, %v4759
    %v4769 = vcombine.high %v4608, %v4608
    %v4771 = vunpack.c.l.s4 1966171168
    %v4772 = vunpack.c.0.s8 %v4771
    %v4773 = vlaneseq
    %v4774 = vshrl.u32 %v4773, 7
    %v4775 = vsub.s32 %v4772, %v4774
    %v4776 = vrot.slane %v4769, %v4775
    %v4777 = vcombine.high %v4776, %v4776
    %v4779 = vunpack.c.l.s4 1966171168
    %v4780 = vunpack.c.0.s8 %v4779
    %v4781 = vlaneseq
    %v4782 = vshrl.u32 %v4781, 7
    %v4783 = vsub.s32 %v4780, %v4782
    %v4784 = vrot.slane %v4776, %v4783
    %v4786 = vunpack.c.l.s4 1966171168
    %v4787 = vunpack.c.0.s8 %v4786
    %v4788 = vlaneseq
    %v4789 = vshrl.u32 %v4788, 7
    %v4790 = vsub.s32 %v4787, %v4789
    %v4791 = vrot.slane %v4777, %v4790
    %v4792 = vcombine.high %v4784, %v4784
    %v4793 = vcombine.high %v4791, %v4791
    %v4796 = vcombine.high %v4611, %v4611
    %v4798 = vunpack.c.l.s4 1966171168
    %v4799 = vunpack.c.0.s8 %v4798
    %v4800 = vlaneseq
    %v4801 = vshrl.u32 %v4800, 7
    %v4802 = vsub.s32 %v4799, %v4801
    %v4803 = vrot.slane %v4796, %v4802
    %v4804 = vcombine.high %v4803, %v4803
    %v4806 = vunpack.c.l.s4 1966171168
    %v4807 = vunpack.c.0.s8 %v4806
    %v4808 = vlaneseq
    %v4809 = vshrl.u32 %v4808, 7
    %v4810 = vsub.s32 %v4807, %v4809
    %v4811 = vrot.slane %v4804, %v4810
    %v4812 = vcombine.high %v4811, %v4811
    %v4814 = vunpack.c.l.s4 1966171168
    %v4815 = vunpack.c.0.s8 %v4814
    %v4816 = vlaneseq
    %v4817 = vshrl.u32 %v4816, 7
    %v4818 = vsub.s32 %v4815, %v4817
    %v4819 = vrot.slane %v4612, %v4818
    %v4821 = vunpack.c.l.s4 1966171168
    %v4822 = vunpack.c.0.s8 %v4821
    %v4823 = vlaneseq
    %v4824 = vshrl.u32 %v4823, 7
    %v4825 = vsub.s32 %v4822, %v4824
    %v4826 = vrot.slane %v4819, %v4825
    %v4827 = vlaneseq
    %v4828 = vshrl.u32 %v4827, 7
    %v4829 = vsub.s32 0, %v4828
    %v4830 = vrot.slane %v4660, %v4829
    %v4831 = vlaneseq
    %v4832 = vshrl.u32 %v4831, 7
    %v4833 = vsub.s32 0, %v4832
    %v4834 = vrot.slane %v4661, %v4833
    %v4837 = vlaneseq
    %v4838 = vshrl.u32 %v4837, 7
    %v4839 = vsub.s32 0, %v4838
    %v4840 = vrot.slane %v4685, %v4839
    %v4841 = vlaneseq
    %v4842 = vshrl.u32 %v4841, 7
    %v4843 = vsub.s32 0, %v4842
    %v4844 = vrot.slane %v4686, %v4843
    %v4847 = vlaneseq
    %v4848 = vshrl.u32 %v4847, 7
    %v4849 = vsub.s32 0, %v4848
    %v4850 = vrot.slane %v4718, %v4849
    %v4851 = vlaneseq
    %v4852 = vshrl.u32 %v4851, 7
    %v4853 = vsub.s32 0, %v4852
    %v4854 = vrot.slane %v4710, %v4853
    %v4857 = vlaneseq
    %v4858 = vshrl.u32 %v4857, 7
    %v4859 = vsub.s32 0, %v4858
    %v4860 = vrot.slane %v4735, %v4859
    %v4861 = vlaneseq
    %v4862 = vshrl.u32 %v4861, 7
    %v4863 = vsub.s32 0, %v4862
    %v4864 = vrot.slane %v4742, %v4863
    %v4867 = vlaneseq
    %v4868 = vshrl.u32 %v4867, 7
    %v4869 = vsub.s32 0, %v4868
    %v4870 = vrot.slane %v4766, %v4869
    %v4871 = vlaneseq
    %v4872 = vshrl.u32 %v4871, 7
    %v4873 = vsub.s32 0, %v4872
    %v4874 = vrot.slane %v4767, %v4873
    %v4877 = vlaneseq
    %v4878 = vshrl.u32 %v4877, 7
    %v4879 = vsub.s32 0, %v4878
    %v4880 = vrot.slane %v4792, %v4879
    %v4881 = vlaneseq
    %v4882 = vshrl.u32 %v4881, 7
    %v4883 = vsub.s32 0, %v4882
    %v4884 = vrot.slane %v4793, %v4883
    %v4887 = vlaneseq
    %v4888 = vshrl.u32 %v4887, 7
    %v4889 = vsub.s32 0, %v4888
    %v4890 = vrot.slane %v4812, %v4889
    %v4891 = vlaneseq
    %v4892 = vshrl.u32 %v4891, 7
    %v4893 = vsub.s32 0, %v4892
    %v4894 = vrot.slane %v4826, %v4893
    %v4897 = vsel %vm4585, %v4628, %v4830
    %v4898 = vsel %vm4585, %v4635, %v4834
    %vm4899 = vcmask 1041408
    %v4900 = vsel %vm4899, %v4897, %v4840
    %v4901 = vsel %vm4899, %v4898, %v4844
    %vm4902 = vcmask 1042432
    %v4903 = vsel %vm4902, %v4900, %v4850
    %v4904 = vsel %vm4902, %v4901, %v4854
    %v4905 = vsel %vm2848, %v4903, %v4860
    %v4906 = vsel %vm2848, %v4904, %v4864
    %v4907 = vsel %vm1898, %v4905, %v4870
    %v4908 = vsel %vm1898, %v4906, %v4874
    %v4909 = vsel %vm1122, %v4907, %v4880
    %v4910 = vsel %vm1122, %v4908, %v4884
    %v4911 = vsel %vm945, %v4909, %v4890
    %v4912 = vsel %vm945, %v4910, %v4894
    %v4913 = vld [vmem:[#allocation18] sm:$0xff]
    %v4914 = vld [vmem:[#allocation18 + $0x8] sm:$0xff]
    %v4915 = vld [vmem:[#allocation18 + $0x10] sm:$0xff]
    %v4916 = vld [vmem:[#allocation18 + $0x18] sm:$0xff]
    %v4917 = vld [vmem:[#allocation18 + $0x20] sm:$0xff]
    %v4918 = vld [vmem:[#allocation18 + $0x28] sm:$0xff]
    %v4919 = vld [vmem:[#allocation18 + $0x30] sm:$0xff]
    %v4920 = vld [vmem:[#allocation18 + $0x38] sm:$0xff]
    %v4922 = vsel %vm3286, %v4911, 0
    %v4925 = vsel %vm3286, %v4912, 0
    %4927 = vmatprep.subr.mxu0 0.0
    %4928 = vmatpush1.msra.mxu0 0.0
    %4929 = vmatprep.subr.mxu0 0.0
    %4930 = vmatpush1.msra.mxu0 0.0
    %4931 = vmatprep.subr.mxu0 0.0
    %4932 = vmatpush1.msra.mxu0 0.0
    %4933 = vmatprep.subr.mxu0 0.0
    %4934 = vmatpush1.msra.mxu0 0.0
    %4935 = vmatprep.subr.mxu0 0.0
    %4936 = vmatpush1.msra.mxu0 0.0
    %4937 = vmatprep.subr.mxu0 0.0
    %4938 = vmatpush1.msra.mxu0 0.0
    %4939 = vmatprep.subr.mxu0 0.0
    %4940 = vmatpush1.msra.mxu0 0.0
    %4941 = vmatprep.subr.mxu0 0.0
    %4942 = vmatpush1.msra.mxu0 0.0
    %4943 = vmatprep.subr.mxu0 0.0
    %4944 = vmatpush1.msra.mxu0 %v4920
    %4945 = vmatprep.subr.mxu0 0.0
    %4946 = vmatpush1.msra.mxu0 %v4919
    %4947 = vmatprep.subr.mxu0 0.0
    %4948 = vmatpush1.msra.mxu0 %v4918
    %4949 = vmatprep.subr.mxu0 0.0
    %4950 = vmatpush1.msra.mxu0 %v4917
    %4951 = vmatprep.subr.mxu0 0.0
    %4952 = vmatpush1.msra.mxu0 %v4916
    %4953 = vmatprep.subr.mxu0 0.0
    %4954 = vmatpush1.msra.mxu0 %v4915
    %4955 = vmatprep.subr.mxu0 0.0
    %4956 = vmatpush1.msra.mxu0 %v4914
    %4957 = vmatprep.subr.mxu0 0.0
    %4958 = vmatpush1.msra.mxu0 %v4913
    %4959 = vmatprep.subr.mxu0 0.0
    %4960 = vmatpush2.msra.mxu0 0.0
    %4961 = vmatprep.subr.mxu0 0.0
    %4962 = vmatpush2.msra.mxu0 0.0
    %4963 = vmatprep.subr.mxu0 0.0
    %4964 = vmatpush2.msra.mxu0 0.0
    %4965 = vmatprep.subr.mxu0 0.0
    %4966 = vmatpush2.msra.mxu0 0.0
    %4967 = vmatprep.subr.mxu0 0.0
    %4968 = vmatpush2.msra.mxu0 0.0
    %4969 = vmatprep.subr.mxu0 0.0
    %4970 = vmatpush2.msra.mxu0 0.0
    %4971 = vmatprep.subr.mxu0 0.0
    %4972 = vmatpush2.msra.mxu0 0.0
    %4973 = vmatprep.subr.mxu0 0.0
    %4974 = vmatpush2.msra.mxu0 0.0
    %4975 = vmatprep.subr.mxu0 0.0
    %4976 = vmatpush2.msra.mxu0 0.0
    %4977 = vmatprep.subr.mxu0 0.0
    %4978 = vmatpush2.msra.mxu0 0.0
    %4979 = vmatprep.subr.mxu0 0.0
    %4980 = vmatpush2.msra.mxu0 0.0
    %4981 = vmatprep.subr.mxu0 0.0
    %4982 = vmatpush2.msra.mxu0 0.0
    %4983 = vmatprep.subr.mxu0 0.0
    %4984 = vmatpush2.msra.mxu0 0.0
    %4985 = vmatprep.subr.mxu0 0.0
    %4986 = vmatpush2.msra.mxu0 0.0
    %4987 = vmatprep.subr.mxu0 0.0
    %4988 = vmatpush2.msra.mxu0 0.0
    %4989 = vmatprep.subr.mxu0 0.0
    %4990 = vmatpush2.msra.mxu0 0.0
    %4991 = vmatprep.mubr.f32.mxu0 0.0
    %4992 = vmatmul.mubr.f32.gmra.mxu0 %v4922
    %v4993 = vpop.f32.mrf.mxu0
    %v4994 = vadd.f32 0.0, %v4993
    %v4995 = vpop.f32.mrf.mxu0
    %4996 = vmatprep.mubr.f32.mxu0 0.0
    %4997 = vmatmul.mubr.f32.gmra.mxu0 %v4925
    %v4998 = vpop.f32.mrf.mxu0
    %v4999 = vadd.f32 0.0, %v4998
    %v5000 = vpop.f32.mrf.mxu0
    %5001 = vdwg.mxu0
    %v5002 = vlaneseq
    %v5003 = vand.u32 %v5002, 127
    %v5004 = vld [vmem:[#allocation19] sm:$0x1]
    %v5006 = vlaneseq
    %v5007 = vshrl.u32 %v5006, 7
    %v5008 = vsub.s32 0, %v5007
    %v5009 = vrot.slane %v5004, %v5008
    %s5011 = sld [smem:[#allocation2]]
    %v5012 = vstv %s5011
    %vm5013 = vcmp.eq.s32.totalorder %v5003, %v5012
    %v5014 = vsel %vm5013, 1, 0
    %v5015 = vcvt.s32.f32 %v5014
    %s5016 = sld [smem:[#allocation2 + $0x1]]
    %v5017 = vstv %s5016
    %vm5018 = vcmp.eq.s32.totalorder %v5003, %v5017
    %v5019 = vsel %vm5018, 1, 0
    %v5020 = vcvt.s32.f32 %v5019
    %s5021 = sld [smem:[#allocation2 + $0x2]]
    %v5022 = vstv %s5021
    %vm5023 = vcmp.eq.s32.totalorder %v5003, %v5022
    %v5024 = vsel %vm5023, 1, 0
    %v5025 = vcvt.s32.f32 %v5024
    %v5026 = vsel %vm4585, %v5015, %v5020
    %v5027 = vsel %vm4899, %v5026, %v5025
    %vm5028 = vcmask 64512
    %v5030 = vsel %vm5028, %v5027, 0
    %5032 = vmatprep.subr.mxu0 0.0
    %5033 = vmatpush1.msra.mxu0 0.0
    %5034 = vmatprep.subr.mxu0 0.0
    %5035 = vmatpush1.msra.mxu0 0.0
    %5036 = vmatprep.subr.mxu0 0.0
    %5037 = vmatpush1.msra.mxu0 0.0
    %5038 = vmatprep.subr.mxu0 0.0
    %5039 = vmatpush1.msra.mxu0 0.0
    %5040 = vmatprep.subr.mxu0 0.0
    %5041 = vmatpush1.msra.mxu0 0.0
    %5042 = vmatprep.subr.mxu0 0.0
    %5043 = vmatpush1.msra.mxu0 0.0
    %5044 = vmatprep.subr.mxu0 0.0
    %5045 = vmatpush1.msra.mxu0 0.0
    %5046 = vmatprep.subr.mxu0 0.0
    %5047 = vmatpush1.msra.mxu0 0.0
    %5048 = vmatprep.subr.mxu0 0.0
    %5049 = vmatpush1.msra.mxu0 0.0
    %5050 = vmatprep.subr.mxu0 0.0
    %5051 = vmatpush1.msra.mxu0 0.0
    %5052 = vmatprep.subr.mxu0 0.0
    %5053 = vmatpush1.msra.mxu0 0.0
    %5054 = vmatprep.subr.mxu0 0.0
    %5055 = vmatpush1.msra.mxu0 0.0
    %5056 = vmatprep.subr.mxu0 0.0
    %5057 = vmatpush1.msra.mxu0 0.0
    %5058 = vmatprep.subr.mxu0 0.0
    %5059 = vmatpush1.msra.mxu0 0.0
    %5060 = vmatprep.subr.mxu0 0.0
    %5061 = vmatpush1.msra.mxu0 0.0
    %5062 = vmatprep.subr.mxu0 0.0
    %5063 = vmatpush1.msra.mxu0 %v4911
    %5064 = vmatprep.subr.mxu0 0.0
    %5065 = vmatpush2.msra.mxu0 0.0
    %5066 = vmatprep.subr.mxu0 0.0
    %5067 = vmatpush2.msra.mxu0 0.0
    %5068 = vmatprep.subr.mxu0 0.0
    %5069 = vmatpush2.msra.mxu0 0.0
    %5070 = vmatprep.subr.mxu0 0.0
    %5071 = vmatpush2.msra.mxu0 0.0
    %5072 = vmatprep.subr.mxu0 0.0
    %5073 = vmatpush2.msra.mxu0 0.0
    %5074 = vmatprep.subr.mxu0 0.0
    %5075 = vmatpush2.msra.mxu0 0.0
    %5076 = vmatprep.subr.mxu0 0.0
    %5077 = vmatpush2.msra.mxu0 0.0
    %5078 = vmatprep.subr.mxu0 0.0
    %5079 = vmatpush2.msra.mxu0 0.0
    %5080 = vmatprep.subr.mxu0 0.0
    %5081 = vmatpush2.msra.mxu0 0.0
    %5082 = vmatprep.subr.mxu0 0.0
    %5083 = vmatpush2.msra.mxu0 0.0
    %5084 = vmatprep.subr.mxu0 0.0
    %5085 = vmatpush2.msra.mxu0 0.0
    %5086 = vmatprep.subr.mxu0 0.0
    %5087 = vmatpush2.msra.mxu0 0.0
    %5088 = vmatprep.subr.mxu0 0.0
    %5089 = vmatpush2.msra.mxu0 0.0
    %5090 = vmatprep.subr.mxu0 0.0
    %5091 = vmatpush2.msra.mxu0 0.0
    %5092 = vmatprep.subr.mxu0 0.0
    %5093 = vmatpush2.msra.mxu0 0.0
    %5094 = vmatprep.subr.mxu0 0.0
    %5095 = vmatpush2.msra.mxu0 0.0
    %5096 = vmatprep.mubr.f32.mxu0 0.0
    %5097 = vmatmul.mubr.f32.gmra.mxu0 %v5030
    %v5098 = vpop.f32.mrf.mxu0
    %v5099 = vadd.f32 0.0, %v5098
    %v5100 = vpop.f32.mrf.mxu0
    %5101 = vdwg.mxu0
    %s5102 = sld [smem:[#allocation2 + $0x80]]
    %v5103 = vstv %s5102
    %vm5104 = vcmp.eq.s32.totalorder %v5003, %v5103
    %v5105 = vsel %vm5104, 1, 0
    %v5106 = vcvt.s32.f32 %v5105
    %s5107 = sld [smem:[#allocation2 + $0x81]]
    %v5108 = vstv %s5107
    %vm5109 = vcmp.eq.s32.totalorder %v5003, %v5108
    %v5110 = vsel %vm5109, 1, 0
    %v5111 = vcvt.s32.f32 %v5110
    %s5112 = sld [smem:[#allocation2 + $0x82]]
    %v5113 = vstv %s5112
    %vm5114 = vcmp.eq.s32.totalorder %v5003, %v5113
    %v5115 = vsel %vm5114, 1, 0
    %v5116 = vcvt.s32.f32 %v5115
    %v5117 = vsel %vm4585, %v5106, %v5111
    %v5118 = vsel %vm4899, %v5117, %v5116
    %v5120 = vsel %vm5028, %v5118, 0
    %5122 = vmatprep.subr.mxu0 0.0
    %5123 = vmatpush1.msra.mxu0 0.0
    %5124 = vmatprep.subr.mxu0 0.0
    %5125 = vmatpush1.msra.mxu0 0.0
    %5126 = vmatprep.subr.mxu0 0.0
    %5127 = vmatpush1.msra.mxu0 0.0
    %5128 = vmatprep.subr.mxu0 0.0
    %5129 = vmatpush1.msra.mxu0 0.0
    %5130 = vmatprep.subr.mxu0 0.0
    %5131 = vmatpush1.msra.mxu0 0.0
    %5132 = vmatprep.subr.mxu0 0.0
    %5133 = vmatpush1.msra.mxu0 0.0
    %5134 = vmatprep.subr.mxu0 0.0
    %5135 = vmatpush1.msra.mxu0 0.0
    %5136 = vmatprep.subr.mxu0 0.0
    %5137 = vmatpush1.msra.mxu0 0.0
    %5138 = vmatprep.subr.mxu0 0.0
    %5139 = vmatpush1.msra.mxu0 0.0
    %5140 = vmatprep.subr.mxu0 0.0
    %5141 = vmatpush1.msra.mxu0 0.0
    %5142 = vmatprep.subr.mxu0 0.0
    %5143 = vmatpush1.msra.mxu0 0.0
    %5144 = vmatprep.subr.mxu0 0.0
    %5145 = vmatpush1.msra.mxu0 0.0
    %5146 = vmatprep.subr.mxu0 0.0
    %5147 = vmatpush1.msra.mxu0 0.0
    %5148 = vmatprep.subr.mxu0 0.0
    %5149 = vmatpush1.msra.mxu0 0.0
    %5150 = vmatprep.subr.mxu0 0.0
    %5151 = vmatpush1.msra.mxu0 0.0
    %5152 = vmatprep.subr.mxu0 0.0
    %5153 = vmatpush1.msra.mxu0 %v4912
    %5154 = vmatprep.subr.mxu0 0.0
    %5155 = vmatpush2.msra.mxu0 0.0
    %5156 = vmatprep.subr.mxu0 0.0
    %5157 = vmatpush2.msra.mxu0 0.0
    %5158 = vmatprep.subr.mxu0 0.0
    %5159 = vmatpush2.msra.mxu0 0.0
    %5160 = vmatprep.subr.mxu0 0.0
    %5161 = vmatpush2.msra.mxu0 0.0
    %5162 = vmatprep.subr.mxu0 0.0
    %5163 = vmatpush2.msra.mxu0 0.0
    %5164 = vmatprep.subr.mxu0 0.0
    %5165 = vmatpush2.msra.mxu0 0.0
    %5166 = vmatprep.subr.mxu0 0.0
    %5167 = vmatpush2.msra.mxu0 0.0
    %5168 = vmatprep.subr.mxu0 0.0
    %5169 = vmatpush2.msra.mxu0 0.0
    %5170 = vmatprep.subr.mxu0 0.0
    %5171 = vmatpush2.msra.mxu0 0.0
    %5172 = vmatprep.subr.mxu0 0.0
    %5173 = vmatpush2.msra.mxu0 0.0
    %5174 = vmatprep.subr.mxu0 0.0
    %5175 = vmatpush2.msra.mxu0 0.0
    %5176 = vmatprep.subr.mxu0 0.0
    %5177 = vmatpush2.msra.mxu0 0.0
    %5178 = vmatprep.subr.mxu0 0.0
    %5179 = vmatpush2.msra.mxu0 0.0
    %5180 = vmatprep.subr.mxu0 0.0
    %5181 = vmatpush2.msra.mxu0 0.0
    %5182 = vmatprep.subr.mxu0 0.0
    %5183 = vmatpush2.msra.mxu0 0.0
    %5184 = vmatprep.subr.mxu0 0.0
    %5185 = vmatpush2.msra.mxu0 0.0
    %5186 = vmatprep.mubr.f32.mxu0 0.0
    %5187 = vmatmul.mubr.f32.gmra.mxu0 %v5120
    %v5188 = vpop.f32.mrf.mxu0
    %v5189 = vadd.f32 0.0, %v5188
    %v5190 = vpop.f32.mrf.mxu0
    %5191 = vdwg.mxu0
    %v5193 = vrot.slane %v5189, 7
    %v5195 = vsel %vm4585, %v5099, %v5193
    %v5197 = vrot.slane %v5099, 1
    %v5199 = vsel %vm4585, %v5197, %v5189
    %v5200 = vrot.slane %v5099, 2
    %v5202 = vrot.slane %v5189, 1
    %v5204 = vsel %vm4585, %v5200, %v5202
    %v5206 = vrot.slane %v5195, 6
    %v5209 = vrot.slane %v5199, 4
    %v5212 = vrot.slane %v5204, 2
    %v5214 = vsel %vm4899, %v5009, %v5206
    %v5215 = vsel %vm2848, %v5214, %v5209
    %v5216 = vsel %vm1122, %v5215, %v5212
    %v5217 = vld [vmem:[#allocation21] sm:$0xff]
    %v5218 = vld [vmem:[#allocation21 + $0x8] sm:$0xff]
    %v5219 = vld [vmem:[#allocation21 + $0x10] sm:$0xff]
    %v5220 = vld [vmem:[#allocation21 + $0x18] sm:$0xff]
    %v5221 = vld [vmem:[#allocation21 + $0x20] sm:$0xff]
    %v5222 = vld [vmem:[#allocation21 + $0x28] sm:$0xff]
    %v5223 = vld [vmem:[#allocation21 + $0x30] sm:$0xff]
    %v5224 = vld [vmem:[#allocation21 + $0x38] sm:$0xff]
    %v5226 = vsel %vm3286, %v5216, 0
    %5228 = vmatprep.subr.mxu0 0.0
    %5229 = vmatpush1.msra.mxu0 0.0
    %5230 = vmatprep.subr.mxu0 0.0
    %5231 = vmatpush1.msra.mxu0 0.0
    %5232 = vmatprep.subr.mxu0 0.0
    %5233 = vmatpush1.msra.mxu0 0.0
    %5234 = vmatprep.subr.mxu0 0.0
    %5235 = vmatpush1.msra.mxu0 0.0
    %5236 = vmatprep.subr.mxu0 0.0
    %5237 = vmatpush1.msra.mxu0 0.0
    %5238 = vmatprep.subr.mxu0 0.0
    %5239 = vmatpush1.msra.mxu0 0.0
    %5240 = vmatprep.subr.mxu0 0.0
    %5241 = vmatpush1.msra.mxu0 0.0
    %5242 = vmatprep.subr.mxu0 0.0
    %5243 = vmatpush1.msra.mxu0 0.0
    %5244 = vmatprep.subr.mxu0 0.0
    %5245 = vmatpush1.msra.mxu0 %v5224
    %5246 = vmatprep.subr.mxu0 0.0
    %5247 = vmatpush1.msra.mxu0 %v5223
    %5248 = vmatprep.subr.mxu0 0.0
    %5249 = vmatpush1.msra.mxu0 %v5222
    %5250 = vmatprep.subr.mxu0 0.0
    %5251 = vmatpush1.msra.mxu0 %v5221
    %5252 = vmatprep.subr.mxu0 0.0
    %5253 = vmatpush1.msra.mxu0 %v5220
    %5254 = vmatprep.subr.mxu0 0.0
    %5255 = vmatpush1.msra.mxu0 %v5219
    %5256 = vmatprep.subr.mxu0 0.0
    %5257 = vmatpush1.msra.mxu0 %v5218
    %5258 = vmatprep.subr.mxu0 0.0
    %5259 = vmatpush1.msra.mxu0 %v5217
    %5260 = vmatprep.subr.mxu0 0.0
    %5261 = vmatpush2.msra.mxu0 0.0
    %5262 = vmatprep.subr.mxu0 0.0
    %5263 = vmatpush2.msra.mxu0 0.0
    %5264 = vmatprep.subr.mxu0 0.0
    %5265 = vmatpush2.msra.mxu0 0.0
    %5266 = vmatprep.subr.mxu0 0.0
    %5267 = vmatpush2.msra.mxu0 0.0
    %5268 = vmatprep.subr.mxu0 0.0
    %5269 = vmatpush2.msra.mxu0 0.0
    %5270 = vmatprep.subr.mxu0 0.0
    %5271 = vmatpush2.msra.mxu0 0.0
    %5272 = vmatprep.subr.mxu0 0.0
    %5273 = vmatpush2.msra.mxu0 0.0
    %5274 = vmatprep.subr.mxu0 0.0
    %5275 = vmatpush2.msra.mxu0 0.0
    %5276 = vmatprep.subr.mxu0 0.0
    %5277 = vmatpush2.msra.mxu0 0.0
    %5278 = vmatprep.subr.mxu0 0.0
    %5279 = vmatpush2.msra.mxu0 0.0
    %5280 = vmatprep.subr.mxu0 0.0
    %5281 = vmatpush2.msra.mxu0 0.0
    %5282 = vmatprep.subr.mxu0 0.0
    %5283 = vmatpush2.msra.mxu0 0.0
    %5284 = vmatprep.subr.mxu0 0.0
    %5285 = vmatpush2.msra.mxu0 0.0
    %5286 = vmatprep.subr.mxu0 0.0
    %5287 = vmatpush2.msra.mxu0 0.0
    %5288 = vmatprep.subr.mxu0 0.0
    %5289 = vmatpush2.msra.mxu0 0.0
    %5290 = vmatprep.subr.mxu0 0.0
    %5291 = vmatpush2.msra.mxu0 0.0
    %5292 = vmatprep.mubr.f32.mxu0 0.0
    %5293 = vmatmul.mubr.f32.gmra.mxu0 %v5226
    %v5294 = vpop.f32.mrf.mxu0
    %v5295 = vadd.f32 0.0, %v5294
    %v5296 = vpop.f32.mrf.mxu0
    %5297 = vdwg.mxu0
    %v5299 = vcombine.high %v5295, %v5295
    %v5301 = vunpack.c.l.s4 1983009808
    %v5302 = vunpack.c.0.s8 %v5301
    %v5303 = vlaneseq
    %v5304 = vshrl.u32 %v5303, 7
    %v5305 = vsub.s32 %v5302, %v5304
    %v5306 = vrot.slane %v5295, %v5305
    %v5308 = vunpack.c.l.s4 1983009808
    %v5309 = vunpack.c.0.s8 %v5308
    %v5310 = vlaneseq
    %v5311 = vshrl.u32 %v5310, 7
    %v5312 = vsub.s32 %v5309, %v5311
    %v5313 = vrot.slane %v5299, %v5312
    %v5314 = vcombine.high %v5306, %v5306
    %v5315 = vcombine.high %v5313, %v5313
    %v5320 = vld [vmem:[#allocation22] sm:$0xff]
    %v5321 = vld [vmem:[#allocation22 + $0x8] sm:$0xff]
    %v5322 = vld [vmem:[#allocation22 + $0x10] sm:$0xff]
    %v5323 = vld [vmem:[#allocation22 + $0x18] sm:$0xff]
    %v5324 = vld [vmem:[#allocation24] sm:$0x1]
    %v5325 = vld [vmem:[#allocation25] sm:$0x1]
    %v5327 = vlaneseq
    %v5328 = vshrl.u32 %v5327, 7
    %v5329 = vsub.s32 0, %v5328
    %v5330 = vrot.slane %v5325, %v5329
    %v5331 = vld [vmem:[#allocation27] sm:$0x1]
    %v5333 = vlaneseq
    %v5334 = vshrl.u32 %v5333, 7
    %v5335 = vsub.s32 0, %v5334
    %v5336 = vrot.slane %v5331, %v5335
    %v5337 = vsel %vm333, %v5330, 0
    %5339 = vmatprep.subr.mxu0 0.0
    %5340 = vmatpush1.msra.mxu0 0.0
    %5341 = vmatprep.subr.mxu0 0.0
    %5342 = vmatpush1.msra.mxu0 0.0
    %5343 = vmatprep.subr.mxu0 0.0
    %5344 = vmatpush1.msra.mxu0 0.0
    %5345 = vmatprep.subr.mxu0 0.0
    %5346 = vmatpush1.msra.mxu0 0.0
    %5347 = vmatprep.subr.mxu0 0.0
    %5348 = vmatpush1.msra.mxu0 0.0
    %5349 = vmatprep.subr.mxu0 0.0
    %5350 = vmatpush1.msra.mxu0 0.0
    %5351 = vmatprep.subr.mxu0 0.0
    %5352 = vmatpush1.msra.mxu0 0.0
    %5353 = vmatprep.subr.mxu0 0.0
    %5354 = vmatpush1.msra.mxu0 0.0
    %5355 = vmatprep.subr.mxu0 0.0
    %5356 = vmatpush1.msra.mxu0 0.0
    %5357 = vmatprep.subr.mxu0 0.0
    %5358 = vmatpush1.msra.mxu0 0.0
    %5359 = vmatprep.subr.mxu0 0.0
    %5360 = vmatpush1.msra.mxu0 0.0
    %5361 = vmatprep.subr.mxu0 0.0
    %5362 = vmatpush1.msra.mxu0 0.0
    %5363 = vmatprep.subr.mxu0 0.0
    %5364 = vmatpush1.msra.mxu0 %v5323
    %5365 = vmatprep.subr.mxu0 0.0
    %5366 = vmatpush1.msra.mxu0 %v5322
    %5367 = vmatprep.subr.mxu0 0.0
    %5368 = vmatpush1.msra.mxu0 %v5321
    %5369 = vmatprep.subr.mxu0 0.0
    %5370 = vmatpush1.msra.mxu0 %v5320
    %5371 = vmatprep.subr.mxu0 0.0
    %5372 = vmatpush2.msra.mxu0 0.0
    %5373 = vmatprep.subr.mxu0 0.0
    %5374 = vmatpush2.msra.mxu0 0.0
    %5375 = vmatprep.subr.mxu0 0.0
    %5376 = vmatpush2.msra.mxu0 0.0
    %5377 = vmatprep.subr.mxu0 0.0
    %5378 = vmatpush2.msra.mxu0 0.0
    %5379 = vmatprep.subr.mxu0 0.0
    %5380 = vmatpush2.msra.mxu0 0.0
    %5381 = vmatprep.subr.mxu0 0.0
    %5382 = vmatpush2.msra.mxu0 0.0
    %5383 = vmatprep.subr.mxu0 0.0
    %5384 = vmatpush2.msra.mxu0 0.0
    %5385 = vmatprep.subr.mxu0 0.0
    %5386 = vmatpush2.msra.mxu0 0.0
    %5387 = vmatprep.subr.mxu0 0.0
    %5388 = vmatpush2.msra.mxu0 0.0
    %5389 = vmatprep.subr.mxu0 0.0
    %5390 = vmatpush2.msra.mxu0 0.0
    %5391 = vmatprep.subr.mxu0 0.0
    %5392 = vmatpush2.msra.mxu0 0.0
    %5393 = vmatprep.subr.mxu0 0.0
    %5394 = vmatpush2.msra.mxu0 0.0
    %5395 = vmatprep.subr.mxu0 0.0
    %5396 = vmatpush2.msra.mxu0 0.0
    %5397 = vmatprep.subr.mxu0 0.0
    %5398 = vmatpush2.msra.mxu0 0.0
    %5399 = vmatprep.subr.mxu0 0.0
    %5400 = vmatpush2.msra.mxu0 0.0
    %5401 = vmatprep.subr.mxu0 0.0
    %5402 = vmatpush2.msra.mxu0 0.0
    %5403 = vmatprep.mubr.f32.mxu0 0.0
    %5404 = vmatmul.mubr.f32.gmra.mxu0 %v5337
    %v5405 = vpop.f32.mrf.mxu0
    %v5406 = vadd.f32 0.0, %v5405
    %v5407 = vpop.f32.mrf.mxu0
    %5408 = vdwg.mxu0
    %v5409 = vadd.f32 %v5306, %v5406
    %v5411 = vlaneseq
    %v5412 = vshrl.u32 %v5411, 7
    %v5413 = vsub.s32 0, %v5412
    %v5414 = vrot.slane %v5324, %v5413
    %v5416 = vadd.f32 %v5409, %v5414
    %v5417 = vxor.u32 %v5416, 2147483648
    %v5418 = vmul.f32 %v5417, 1.442695
    %v5419 = vpow.pop %v5418
    %v5420 = vadd.f32 %v5419, 1.0
    %v5421 = vrcp.pop %v5420
    %v5422 = vmul.f32 1.0, %v5421
    %v5423 = vtanh.pop %v5416
    %v5425 = vunpack.c.l.s4 1983009808
    %v5426 = vunpack.c.0.s8 %v5425
    %v5427 = vlaneseq
    %v5428 = vshrl.u32 %v5427, 7
    %v5429 = vsub.s32 %v5426, %v5428
    %v5430 = vrot.slane %v5336, %v5429
    %5431 = vrot.lane.b32.xlu0 %v5430, 32
    %v5432 = vpop.permute.xlu0 %5431
    %v5434 = vmul.f32 %v5422, %v5432
    %5436 = vrot.lane.b32.xlu0 %v5423, 64
    %v5437 = vpop.permute.xlu0 %5436
    %v5439 = vmul.f32 %v5422, %v5437
    %5441 = vrot.lane.b32.xlu0 %v5439, 32
    %v5442 = vpop.permute.xlu0 %5441
    %v5444 = vadd.f32 %v5434, %v5442
    %v5445 = vtanh.pop %v5444
    %5447 = vrot.lane.b32.xlu0 %v5445, 64
    %v5448 = vpop.permute.xlu0 %5447
    %v5450 = vmul.f32 %v5422, %v5448
    %v5453 = vunpack.c.l.s4 1983009808
    %v5454 = vunpack.c.0.s8 %v5453
    %v5455 = vlaneseq
    %v5456 = vshrl.u32 %v5455, 7
    %v5457 = vsub.s32 %v5454, %v5456
    %v5458 = vrot.slane %v5450, %v5457
    %5459 = vrot.lane.b32.xlu0 %v5458, 32
    %v5460 = vpop.permute.xlu0 %5459
    %v5461 = vsel %vm333, %v5460, 0
    %5463 = vmatprep.subr.mxu0 0.0
    %5464 = vmatpush1.msra.mxu0 0.0
    %5465 = vmatprep.subr.mxu0 0.0
    %5466 = vmatpush1.msra.mxu0 0.0
    %5467 = vmatprep.subr.mxu0 0.0
    %5468 = vmatpush1.msra.mxu0 0.0
    %5469 = vmatprep.subr.mxu0 0.0
    %5470 = vmatpush1.msra.mxu0 0.0
    %5471 = vmatprep.subr.mxu0 0.0
    %5472 = vmatpush1.msra.mxu0 0.0
    %5473 = vmatprep.subr.mxu0 0.0
    %5474 = vmatpush1.msra.mxu0 0.0
    %5475 = vmatprep.subr.mxu0 0.0
    %5476 = vmatpush1.msra.mxu0 0.0
    %5477 = vmatprep.subr.mxu0 0.0
    %5478 = vmatpush1.msra.mxu0 0.0
    %5479 = vmatprep.subr.mxu0 0.0
    %5480 = vmatpush1.msra.mxu0 0.0
    %5481 = vmatprep.subr.mxu0 0.0
    %5482 = vmatpush1.msra.mxu0 0.0
    %5483 = vmatprep.subr.mxu0 0.0
    %5484 = vmatpush1.msra.mxu0 0.0
    %5485 = vmatprep.subr.mxu0 0.0
    %5486 = vmatpush1.msra.mxu0 0.0
    %5487 = vmatprep.subr.mxu0 0.0
    %5488 = vmatpush1.msra.mxu0 %v5323
    %5489 = vmatprep.subr.mxu0 0.0
    %5490 = vmatpush1.msra.mxu0 %v5322
    %5491 = vmatprep.subr.mxu0 0.0
    %5492 = vmatpush1.msra.mxu0 %v5321
    %5493 = vmatprep.subr.mxu0 0.0
    %5494 = vmatpush1.msra.mxu0 %v5320
    %5495 = vmatprep.subr.mxu0 0.0
    %5496 = vmatpush2.msra.mxu0 0.0
    %5497 = vmatprep.subr.mxu0 0.0
    %5498 = vmatpush2.msra.mxu0 0.0
    %5499 = vmatprep.subr.mxu0 0.0
    %5500 = vmatpush2.msra.mxu0 0.0
    %5501 = vmatprep.subr.mxu0 0.0
    %5502 = vmatpush2.msra.mxu0 0.0
    %5503 = vmatprep.subr.mxu0 0.0
    %5504 = vmatpush2.msra.mxu0 0.0
    %5505 = vmatprep.subr.mxu0 0.0
    %5506 = vmatpush2.msra.mxu0 0.0
    %5507 = vmatprep.subr.mxu0 0.0
    %5508 = vmatpush2.msra.mxu0 0.0
    %5509 = vmatprep.subr.mxu0 0.0
    %5510 = vmatpush2.msra.mxu0 0.0
    %5511 = vmatprep.subr.mxu0 0.0
    %5512 = vmatpush2.msra.mxu0 0.0
    %5513 = vmatprep.subr.mxu0 0.0
    %5514 = vmatpush2.msra.mxu0 0.0
    %5515 = vmatprep.subr.mxu0 0.0
    %5516 = vmatpush2.msra.mxu0 0.0
    %5517 = vmatprep.subr.mxu0 0.0
    %5518 = vmatpush2.msra.mxu0 0.0
    %5519 = vmatprep.subr.mxu0 0.0
    %5520 = vmatpush2.msra.mxu0 0.0
    %5521 = vmatprep.subr.mxu0 0.0
    %5522 = vmatpush2.msra.mxu0 0.0
    %5523 = vmatprep.subr.mxu0 0.0
    %5524 = vmatpush2.msra.mxu0 0.0
    %5525 = vmatprep.subr.mxu0 0.0
    %5526 = vmatpush2.msra.mxu0 0.0
    %5527 = vmatprep.mubr.f32.mxu0 0.0
    %5528 = vmatmul.mubr.f32.gmra.mxu0 %v5461
    %v5529 = vpop.f32.mrf.mxu0
    %v5530 = vadd.f32 0.0, %v5529
    %v5531 = vpop.f32.mrf.mxu0
    %5532 = vdwg.mxu0
    %v5533 = vadd.f32 %v5314, %v5530
    %v5534 = vadd.f32 %v5533, %v5414
    %v5535 = vxor.u32 %v5534, 2147483648
    %v5536 = vmul.f32 %v5535, 1.442695
    %v5537 = vpow.pop %v5536
    %v5538 = vadd.f32 %v5537, 1.0
    %v5539 = vrcp.pop %v5538
    %v5540 = vmul.f32 1.0, %v5539
    %v5541 = vtanh.pop %v5534
    %v5542 = vmul.f32 %v5540, %v5444
    %5544 = vrot.lane.b32.xlu0 %v5541, 64
    %v5545 = vpop.permute.xlu0 %5544
    %v5547 = vmul.f32 %v5540, %v5545
    %5549 = vrot.lane.b32.xlu0 %v5547, 32
    %v5550 = vpop.permute.xlu0 %5549
    %v5552 = vadd.f32 %v5542, %v5550
    %v5553 = vtanh.pop %v5552
    %5555 = vrot.lane.b32.xlu0 %v5553, 64
    %v5556 = vpop.permute.xlu0 %5555
    %v5558 = vmul.f32 %v5540, %v5556
    %v5561 = vunpack.c.l.s4 1983009808
    %v5562 = vunpack.c.0.s8 %v5561
    %v5563 = vlaneseq
    %v5564 = vshrl.u32 %v5563, 7
    %v5565 = vsub.s32 %v5562, %v5564
    %v5566 = vrot.slane %v5558, %v5565
    %5567 = vrot.lane.b32.xlu0 %v5566, 32
    %v5568 = vpop.permute.xlu0 %5567
    %v5569 = vsel %vm333, %v5568, 0
    %5571 = vmatprep.subr.mxu0 0.0
    %5572 = vmatpush1.msra.mxu0 0.0
    %5573 = vmatprep.subr.mxu0 0.0
    %5574 = vmatpush1.msra.mxu0 0.0
    %5575 = vmatprep.subr.mxu0 0.0
    %5576 = vmatpush1.msra.mxu0 0.0
    %5577 = vmatprep.subr.mxu0 0.0
    %5578 = vmatpush1.msra.mxu0 0.0
    %5579 = vmatprep.subr.mxu0 0.0
    %5580 = vmatpush1.msra.mxu0 0.0
    %5581 = vmatprep.subr.mxu0 0.0
    %5582 = vmatpush1.msra.mxu0 0.0
    %5583 = vmatprep.subr.mxu0 0.0
    %5584 = vmatpush1.msra.mxu0 0.0
    %5585 = vmatprep.subr.mxu0 0.0
    %5586 = vmatpush1.msra.mxu0 0.0
    %5587 = vmatprep.subr.mxu0 0.0
    %5588 = vmatpush1.msra.mxu0 0.0
    %5589 = vmatprep.subr.mxu0 0.0
    %5590 = vmatpush1.msra.mxu0 0.0
    %5591 = vmatprep.subr.mxu0 0.0
    %5592 = vmatpush1.msra.mxu0 0.0
    %5593 = vmatprep.subr.mxu0 0.0
    %5594 = vmatpush1.msra.mxu0 0.0
    %5595 = vmatprep.subr.mxu0 0.0
    %5596 = vmatpush1.msra.mxu0 %v5323
    %5597 = vmatprep.subr.mxu0 0.0
    %5598 = vmatpush1.msra.mxu0 %v5322
    %5599 = vmatprep.subr.mxu0 0.0
    %5600 = vmatpush1.msra.mxu0 %v5321
    %5601 = vmatprep.subr.mxu0 0.0
    %5602 = vmatpush1.msra.mxu0 %v5320
    %5603 = vmatprep.subr.mxu0 0.0
    %5604 = vmatpush2.msra.mxu0 0.0
    %5605 = vmatprep.subr.mxu0 0.0
    %5606 = vmatpush2.msra.mxu0 0.0
    %5607 = vmatprep.subr.mxu0 0.0
    %5608 = vmatpush2.msra.mxu0 0.0
    %5609 = vmatprep.subr.mxu0 0.0
    %5610 = vmatpush2.msra.mxu0 0.0
    %5611 = vmatprep.subr.mxu0 0.0
    %5612 = vmatpush2.msra.mxu0 0.0
    %5613 = vmatprep.subr.mxu0 0.0
    %5614 = vmatpush2.msra.mxu0 0.0
    %5615 = vmatprep.subr.mxu0 0.0
    %5616 = vmatpush2.msra.mxu0 0.0
    %5617 = vmatprep.subr.mxu0 0.0
    %5618 = vmatpush2.msra.mxu0 0.0
    %5619 = vmatprep.subr.mxu0 0.0
    %5620 = vmatpush2.msra.mxu0 0.0
    %5621 = vmatprep.subr.mxu0 0.0
    %5622 = vmatpush2.msra.mxu0 0.0
    %5623 = vmatprep.subr.mxu0 0.0
    %5624 = vmatpush2.msra.mxu0 0.0
    %5625 = vmatprep.subr.mxu0 0.0
    %5626 = vmatpush2.msra.mxu0 0.0
    %5627 = vmatprep.subr.mxu0 0.0
    %5628 = vmatpush2.msra.mxu0 0.0
    %5629 = vmatprep.subr.mxu0 0.0
    %5630 = vmatpush2.msra.mxu0 0.0
    %5631 = vmatprep.subr.mxu0 0.0
    %5632 = vmatpush2.msra.mxu0 0.0
    %5633 = vmatprep.subr.mxu0 0.0
    %5634 = vmatpush2.msra.mxu0 0.0
    %5635 = vmatprep.mubr.f32.mxu0 0.0
    %5636 = vmatmul.mubr.f32.gmra.mxu0 %v5569
    %v5637 = vpop.f32.mrf.mxu0
    %v5638 = vadd.f32 0.0, %v5637
    %v5639 = vpop.f32.mrf.mxu0
    %5640 = vdwg.mxu0
    %v5641 = vadd.f32 %v5313, %v5638
    %v5642 = vadd.f32 %v5641, %v5414
    %v5643 = vxor.u32 %v5642, 2147483648
    %v5644 = vmul.f32 %v5643, 1.442695
    %v5645 = vpow.pop %v5644
    %v5646 = vadd.f32 %v5645, 1.0
    %v5647 = vrcp.pop %v5646
    %v5648 = vmul.f32 1.0, %v5647
    %v5649 = vtanh.pop %v5642
    %v5650 = vmul.f32 %v5648, %v5552
    %5652 = vrot.lane.b32.xlu0 %v5649, 64
    %v5653 = vpop.permute.xlu0 %5652
    %v5655 = vmul.f32 %v5648, %v5653
    %5657 = vrot.lane.b32.xlu0 %v5655, 32
    %v5658 = vpop.permute.xlu0 %5657
    %v5660 = vadd.f32 %v5650, %v5658
    %v5661 = vtanh.pop %v5660
    %5663 = vrot.lane.b32.xlu0 %v5661, 64
    %v5664 = vpop.permute.xlu0 %5663
    %v5666 = vmul.f32 %v5648, %v5664
    %v5669 = vunpack.c.l.s4 1983009808
    %v5670 = vunpack.c.0.s8 %v5669
    %v5671 = vlaneseq
    %v5672 = vshrl.u32 %v5671, 7
    %v5673 = vsub.s32 %v5670, %v5672
    %v5674 = vrot.slane %v5666, %v5673
    %5675 = vrot.lane.b32.xlu0 %v5674, 32
    %v5676 = vpop.permute.xlu0 %5675
    %v5677 = vsel %vm333, %v5676, 0
    %5679 = vmatprep.subr.mxu0 0.0
    %5680 = vmatpush1.msra.mxu0 0.0
    %5681 = vmatprep.subr.mxu0 0.0
    %5682 = vmatpush1.msra.mxu0 0.0
    %5683 = vmatprep.subr.mxu0 0.0
    %5684 = vmatpush1.msra.mxu0 0.0
    %5685 = vmatprep.subr.mxu0 0.0
    %5686 = vmatpush1.msra.mxu0 0.0
    %5687 = vmatprep.subr.mxu0 0.0
    %5688 = vmatpush1.msra.mxu0 0.0
    %5689 = vmatprep.subr.mxu0 0.0
    %5690 = vmatpush1.msra.mxu0 0.0
    %5691 = vmatprep.subr.mxu0 0.0
    %5692 = vmatpush1.msra.mxu0 0.0
    %5693 = vmatprep.subr.mxu0 0.0
    %5694 = vmatpush1.msra.mxu0 0.0
    %5695 = vmatprep.subr.mxu0 0.0
    %5696 = vmatpush1.msra.mxu0 0.0
    %5697 = vmatprep.subr.mxu0 0.0
    %5698 = vmatpush1.msra.mxu0 0.0
    %5699 = vmatprep.subr.mxu0 0.0
    %5700 = vmatpush1.msra.mxu0 0.0
    %5701 = vmatprep.subr.mxu0 0.0
    %5702 = vmatpush1.msra.mxu0 0.0
    %5703 = vmatprep.subr.mxu0 0.0
    %5704 = vmatpush1.msra.mxu0 %v5323
    %5705 = vmatprep.subr.mxu0 0.0
    %5706 = vmatpush1.msra.mxu0 %v5322
    %5707 = vmatprep.subr.mxu0 0.0
    %5708 = vmatpush1.msra.mxu0 %v5321
    %5709 = vmatprep.subr.mxu0 0.0
    %5710 = vmatpush1.msra.mxu0 %v5320
    %5711 = vmatprep.subr.mxu0 0.0
    %5712 = vmatpush2.msra.mxu0 0.0
    %5713 = vmatprep.subr.mxu0 0.0
    %5714 = vmatpush2.msra.mxu0 0.0
    %5715 = vmatprep.subr.mxu0 0.0
    %5716 = vmatpush2.msra.mxu0 0.0
    %5717 = vmatprep.subr.mxu0 0.0
    %5718 = vmatpush2.msra.mxu0 0.0
    %5719 = vmatprep.subr.mxu0 0.0
    %5720 = vmatpush2.msra.mxu0 0.0
    %5721 = vmatprep.subr.mxu0 0.0
    %5722 = vmatpush2.msra.mxu0 0.0
    %5723 = vmatprep.subr.mxu0 0.0
    %5724 = vmatpush2.msra.mxu0 0.0
    %5725 = vmatprep.subr.mxu0 0.0
    %5726 = vmatpush2.msra.mxu0 0.0
    %5727 = vmatprep.subr.mxu0 0.0
    %5728 = vmatpush2.msra.mxu0 0.0
    %5729 = vmatprep.subr.mxu0 0.0
    %5730 = vmatpush2.msra.mxu0 0.0
    %5731 = vmatprep.subr.mxu0 0.0
    %5732 = vmatpush2.msra.mxu0 0.0
    %5733 = vmatprep.subr.mxu0 0.0
    %5734 = vmatpush2.msra.mxu0 0.0
    %5735 = vmatprep.subr.mxu0 0.0
    %5736 = vmatpush2.msra.mxu0 0.0
    %5737 = vmatprep.subr.mxu0 0.0
    %5738 = vmatpush2.msra.mxu0 0.0
    %5739 = vmatprep.subr.mxu0 0.0
    %5740 = vmatpush2.msra.mxu0 0.0
    %5741 = vmatprep.subr.mxu0 0.0
    %5742 = vmatpush2.msra.mxu0 0.0
    %5743 = vmatprep.mubr.f32.mxu0 0.0
    %5744 = vmatmul.mubr.f32.gmra.mxu0 %v5677
    %v5745 = vpop.f32.mrf.mxu0
    %v5746 = vadd.f32 0.0, %v5745
    %v5747 = vpop.f32.mrf.mxu0
    %5748 = vdwg.mxu0
    %v5749 = vadd.f32 %v5315, %v5746
    %v5750 = vadd.f32 %v5749, %v5414
    %v5751 = vxor.u32 %v5750, 2147483648
    %v5752 = vmul.f32 %v5751, 1.442695
    %v5753 = vpow.pop %v5752
    %v5754 = vadd.f32 %v5753, 1.0
    %v5755 = vrcp.pop %v5754
    %v5756 = vmul.f32 1.0, %v5755
    %v5757 = vtanh.pop %v5750
    %v5758 = vmul.f32 %v5756, %v5660
    %5760 = vrot.lane.b32.xlu0 %v5757, 64
    %v5761 = vpop.permute.xlu0 %5760
    %v5763 = vmul.f32 %v5756, %v5761
    %5765 = vrot.lane.b32.xlu0 %v5763, 32
    %v5766 = vpop.permute.xlu0 %5765
    %v5768 = vadd.f32 %v5758, %v5766
    %v5769 = vtanh.pop %v5768
    %5771 = vrot.lane.b32.xlu0 %v5769, 64
    %v5772 = vpop.permute.xlu0 %5771
    %v5774 = vmul.f32 %v5756, %v5772
    %v5776 = vunpack.c.l.s4 1966171168
    %v5777 = vunpack.c.0.s8 %v5776
    %v5778 = vlaneseq
    %v5779 = vshrl.u32 %v5778, 7
    %v5780 = vsub.s32 %v5777, %v5779
    %v5781 = vrot.slane %v5450, %v5780
    %v5782 = vcombine.high %v5781, %v5781
    %v5786 = vunpack.c.l.s4 1966171168
    %v5787 = vunpack.c.0.s8 %v5786
    %v5788 = vlaneseq
    %v5789 = vshrl.u32 %v5788, 7
    %v5790 = vsub.s32 %v5787, %v5789
    %v5791 = vrot.slane %v5558, %v5790
    %v5792 = vcombine.high %v5791, %v5791
    %v5794 = vunpack.c.l.s4 1966171168
    %v5795 = vunpack.c.0.s8 %v5794
    %v5796 = vlaneseq
    %v5797 = vshrl.u32 %v5796, 7
    %v5798 = vsub.s32 %v5795, %v5797
    %v5799 = vrot.slane %v5666, %v5798
    %v5800 = vcombine.high %v5799, %v5799
    %v5803 = vunpack.c.l.s4 1966171168
    %v5804 = vunpack.c.0.s8 %v5803
    %v5805 = vlaneseq
    %v5806 = vshrl.u32 %v5805, 7
    %v5807 = vsub.s32 %v5804, %v5806
    %v5808 = vrot.slane %v5774, %v5807
    %v5809 = vcombine.high %v5808, %v5808
    %v5810 = vlaneseq
    %v5811 = vshrl.u32 %v5810, 7
    %v5812 = vsub.s32 0, %v5811
    %v5813 = vrot.slane %v5791, %v5812
    %v5814 = vlaneseq
    %v5815 = vshrl.u32 %v5814, 7
    %v5816 = vsub.s32 0, %v5815
    %v5817 = vrot.slane %v5792, %v5816
    %v5820 = vlaneseq
    %v5821 = vshrl.u32 %v5820, 7
    %v5822 = vsub.s32 0, %v5821
    %v5823 = vrot.slane %v5799, %v5822
    %v5824 = vlaneseq
    %v5825 = vshrl.u32 %v5824, 7
    %v5826 = vsub.s32 0, %v5825
    %v5827 = vrot.slane %v5800, %v5826
    %v5830 = vlaneseq
    %v5831 = vshrl.u32 %v5830, 7
    %v5832 = vsub.s32 0, %v5831
    %v5833 = vrot.slane %v5808, %v5832
    %v5834 = vlaneseq
    %v5835 = vshrl.u32 %v5834, 7
    %v5836 = vsub.s32 0, %v5835
    %v5837 = vrot.slane %v5809, %v5836
    %v5840 = vsel %vm4585, %v5781, %v5813
    %v5841 = vsel %vm4585, %v5782, %v5817
    %v5842 = vsel %vm4899, %v5840, %v5823
    %v5843 = vsel %vm4899, %v5841, %v5827
    %v5844 = vsel %vm4902, %v5842, %v5833
    %v5845 = vsel %vm4902, %v5843, %v5837
    %v5846 = vld [vmem:[#allocation28] sm:$0xff]
    %v5847 = vld [vmem:[#allocation28 + $0x8] sm:$0xff]
    %v5848 = vld [vmem:[#allocation28 + $0x10] sm:$0xff]
    %v5849 = vld [vmem:[#allocation28 + $0x18] sm:$0xff]
    %v5852 = vcombine.low %v5844, %v5845
    %5853 = vrot.lane.b32.xlu0 %v5852, 32
    %v5854 = vpop.permute.xlu0 %5853
    %v5855 = vsel %vm333, %v5854, 0
    %5857 = vmatprep.subr.mxu0 0.0
    %5858 = vmatpush1.msra.mxu0 0.0
    %5859 = vmatprep.subr.mxu0 0.0
    %5860 = vmatpush1.msra.mxu0 0.0
    %5861 = vmatprep.subr.mxu0 0.0
    %5862 = vmatpush1.msra.mxu0 0.0
    %5863 = vmatprep.subr.mxu0 0.0
    %5864 = vmatpush1.msra.mxu0 0.0
    %5865 = vmatprep.subr.mxu0 0.0
    %5866 = vmatpush1.msra.mxu0 0.0
    %5867 = vmatprep.subr.mxu0 0.0
    %5868 = vmatpush1.msra.mxu0 0.0
    %5869 = vmatprep.subr.mxu0 0.0
    %5870 = vmatpush1.msra.mxu0 0.0
    %5871 = vmatprep.subr.mxu0 0.0
    %5872 = vmatpush1.msra.mxu0 0.0
    %5873 = vmatprep.subr.mxu0 0.0
    %5874 = vmatpush1.msra.mxu0 0.0
    %5875 = vmatprep.subr.mxu0 0.0
    %5876 = vmatpush1.msra.mxu0 0.0
    %5877 = vmatprep.subr.mxu0 0.0
    %5878 = vmatpush1.msra.mxu0 0.0
    %5879 = vmatprep.subr.mxu0 0.0
    %5880 = vmatpush1.msra.mxu0 0.0
    %5881 = vmatprep.subr.mxu0 0.0
    %5882 = vmatpush1.msra.mxu0 %v5849
    %5883 = vmatprep.subr.mxu0 0.0
    %5884 = vmatpush1.msra.mxu0 %v5848
    %5885 = vmatprep.subr.mxu0 0.0
    %5886 = vmatpush1.msra.mxu0 %v5847
    %5887 = vmatprep.subr.mxu0 0.0
    %5888 = vmatpush1.msra.mxu0 %v5846
    %5889 = vmatprep.subr.mxu0 0.0
    %5890 = vmatpush2.msra.mxu0 0.0
    %5891 = vmatprep.subr.mxu0 0.0
    %5892 = vmatpush2.msra.mxu0 0.0
    %5893 = vmatprep.subr.mxu0 0.0
    %5894 = vmatpush2.msra.mxu0 0.0
    %5895 = vmatprep.subr.mxu0 0.0
    %5896 = vmatpush2.msra.mxu0 0.0
    %5897 = vmatprep.subr.mxu0 0.0
    %5898 = vmatpush2.msra.mxu0 0.0
    %5899 = vmatprep.subr.mxu0 0.0
    %5900 = vmatpush2.msra.mxu0 0.0
    %5901 = vmatprep.subr.mxu0 0.0
    %5902 = vmatpush2.msra.mxu0 0.0
    %5903 = vmatprep.subr.mxu0 0.0
    %5904 = vmatpush2.msra.mxu0 0.0
    %5905 = vmatprep.subr.mxu0 0.0
    %5906 = vmatpush2.msra.mxu0 0.0
    %5907 = vmatprep.subr.mxu0 0.0
    %5908 = vmatpush2.msra.mxu0 0.0
    %5909 = vmatprep.subr.mxu0 0.0
    %5910 = vmatpush2.msra.mxu0 0.0
    %5911 = vmatprep.subr.mxu0 0.0
    %5912 = vmatpush2.msra.mxu0 0.0
    %5913 = vmatprep.subr.mxu0 0.0
    %5914 = vmatpush2.msra.mxu0 0.0
    %5915 = vmatprep.subr.mxu0 0.0
    %5916 = vmatpush2.msra.mxu0 0.0
    %5917 = vmatprep.subr.mxu0 0.0
    %5918 = vmatpush2.msra.mxu0 0.0
    %5919 = vmatprep.subr.mxu0 0.0
    %5920 = vmatpush2.msra.mxu0 0.0
    %5921 = vmatprep.mubr.f32.mxu0 0.0
    %5922 = vmatmul.mubr.f32.gmra.mxu0 %v5855
    %v5923 = vpop.f32.mrf.mxu0
    %v5924 = vadd.f32 0.0, %v5923
    %v5925 = vpop.f32.mrf.mxu0
    %5926 = vdwg.mxu0
    %v5928 = vcombine.high %v5924, %v5924
    %v5930 = vunpack.c.l.s4 1966171168
    %v5931 = vunpack.c.0.s8 %v5930
    %v5932 = vlaneseq
    %v5933 = vshrl.u32 %v5932, 7
    %v5934 = vsub.s32 %v5931, %v5933
    %v5935 = vrot.slane %v5924, %v5934
    %v5937 = vunpack.c.l.s4 1966171168
    %v5938 = vunpack.c.0.s8 %v5937
    %v5939 = vlaneseq
    %v5940 = vshrl.u32 %v5939, 7
    %v5941 = vsub.s32 %v5938, %v5940
    %v5942 = vrot.slane %v5928, %v5941
    %v5943 = vcombine.high %v5935, %v5935
    %v5944 = vcombine.high %v5942, %v5942
    %v5946 = vunpack.c.l.s4 1966171168
    %v5947 = vunpack.c.0.s8 %v5946
    %v5948 = vlaneseq
    %v5949 = vshrl.u32 %v5948, 7
    %v5950 = vsub.s32 %v5947, %v5949
    %v5951 = vrot.slane %v5935, %v5950
    %v5953 = vunpack.c.l.s4 1966171168
    %v5954 = vunpack.c.0.s8 %v5953
    %v5955 = vlaneseq
    %v5956 = vshrl.u32 %v5955, 7
    %v5957 = vsub.s32 %v5954, %v5956
    %v5958 = vrot.slane %v5942, %v5957
    %v5960 = vunpack.c.l.s4 1966171168
    %v5961 = vunpack.c.0.s8 %v5960
    %v5962 = vlaneseq
    %v5963 = vshrl.u32 %v5962, 7
    %v5964 = vsub.s32 %v5961, %v5963
    %v5965 = vrot.slane %v5943, %v5964
    %v5967 = vunpack.c.l.s4 1966171168
    %v5968 = vunpack.c.0.s8 %v5967
    %v5969 = vlaneseq
    %v5970 = vshrl.u32 %v5969, 7
    %v5971 = vsub.s32 %v5968, %v5970
    %v5972 = vrot.slane %v5944, %v5971
    %v5973 = vcombine.high %v5951, %v5951
    %v5974 = vcombine.high %v5958, %v5958
    %v5975 = vcombine.high %v5965, %v5965
    %v5976 = vcombine.high %v5972, %v5972
    %v5977 = vlaneseq
    %v5978 = vshrl.u32 %v5977, 7
    %v5979 = vsub.s32 0, %v5978
    %v5980 = vrot.slane %v5951, %v5979
    %v5981 = vlaneseq
    %v5982 = vshrl.u32 %v5981, 7
    %v5983 = vsub.s32 0, %v5982
    %v5984 = vrot.slane %v5965, %v5983
    %v5985 = vlaneseq
    %v5986 = vshrl.u32 %v5985, 7
    %v5987 = vsub.s32 0, %v5986
    %v5988 = vrot.slane %v5973, %v5987
    %v5989 = vlaneseq
    %v5990 = vshrl.u32 %v5989, 7
    %v5991 = vsub.s32 0, %v5990
    %v5992 = vrot.slane %v5975, %v5991
    %v5993 = vlaneseq
    %v5994 = vshrl.u32 %v5993, 7
    %v5995 = vsub.s32 0, %v5994
    %v5996 = vrot.slane %v5958, %v5995
    %v5997 = vlaneseq
    %v5998 = vshrl.u32 %v5997, 7
    %v5999 = vsub.s32 0, %v5998
    %v6000 = vrot.slane %v5972, %v5999
    %v6001 = vlaneseq
    %v6002 = vshrl.u32 %v6001, 7
    %v6003 = vsub.s32 0, %v6002
    %v6004 = vrot.slane %v5974, %v6003
    %v6005 = vlaneseq
    %v6006 = vshrl.u32 %v6005, 7
    %v6007 = vsub.s32 0, %v6006
    %v6008 = vrot.slane %v5976, %v6007
    %6009 = vrot.lane.b32.xlu0 %v5980, 32
    %v6010 = vpop.permute.xlu0 %6009
    %6011 = vrot.lane.b32.xlu0 %v5984, 32
    %v6012 = vpop.permute.xlu0 %6011
    %6013 = vrot.lane.b32.xlu0 %v5988, 32
    %v6014 = vpop.permute.xlu0 %6013
    %6015 = vrot.lane.b32.xlu0 %v5992, 32
    %v6016 = vpop.permute.xlu0 %6015
    %6017 = vrot.lane.b32.xlu0 %v5996, 32
    %v6018 = vpop.permute.xlu0 %6017
    %6019 = vrot.lane.b32.xlu0 %v6000, 32
    %v6020 = vpop.permute.xlu0 %6019
    %6021 = vrot.lane.b32.xlu0 %v6004, 32
    %v6022 = vpop.permute.xlu0 %6021
    %6023 = vrot.lane.b32.xlu0 %v6008, 32
    %v6024 = vpop.permute.xlu0 %6023
    %v6033 = vadd.f32 %v4994, %v6010
    %v6034 = vadd.f32 %v4994, %v6012
    %v6035 = vadd.f32 %v4994, %v6014
    %v6036 = vadd.f32 %v4994, %v6016
    %v6037 = vadd.f32 %v4999, %v6018
    %v6038 = vadd.f32 %v4999, %v6020
    %v6039 = vadd.f32 %v4999, %v6022
    %v6040 = vadd.f32 %v4999, %v6024
    %v6041 = vtanh.pop %v6033
    %v6042 = vtanh.pop %v6034
    %v6043 = vtanh.pop %v6035
    %v6044 = vtanh.pop %v6036
    %v6045 = vtanh.pop %v6037
    %v6046 = vtanh.pop %v6038
    %v6047 = vtanh.pop %v6039
    %v6048 = vtanh.pop %v6040
    %v6049 = vld [vmem:[#allocation30] sm:$0x1]
    %v6051 = vlaneseq
    %v6052 = vshrl.u32 %v6051, 7
    %v6053 = vsub.s32 0, %v6052
    %v6054 = vrot.slane %v6049, %v6053
    %6055 = vrot.lane.b32.xlu0 %v6054, 32
    %v6056 = vpop.permute.xlu0 %6055
    %v6058 = vmul.f32 %v6041, %v6056
    %v6059 = vmul.f32 %v6042, %v6056
    %v6060 = vmul.f32 %v6043, %v6056
    %v6061 = vmul.f32 %v6044, %v6056
    %v6062 = vmul.f32 %v6045, %v6056
    %v6063 = vmul.f32 %v6046, %v6056
    %v6064 = vmul.f32 %v6047, %v6056
    %v6065 = vmul.f32 %v6048, %v6056
    %6074 = vrot.lane.b32.xlu0 %v6058, 96
    %v6075 = vpop.permute.xlu0 %6074
    %6076 = vrot.lane.b32.xlu0 %v6059, 96
    %v6077 = vpop.permute.xlu0 %6076
    %6078 = vrot.lane.b32.xlu0 %v6060, 96
    %v6079 = vpop.permute.xlu0 %6078
    %6080 = vrot.lane.b32.xlu0 %v6061, 96
    %v6081 = vpop.permute.xlu0 %6080
    %6082 = vrot.lane.b32.xlu0 %v6062, 96
    %v6083 = vpop.permute.xlu0 %6082
    %6084 = vrot.lane.b32.xlu0 %v6063, 96
    %v6085 = vpop.permute.xlu0 %6084
    %6086 = vrot.lane.b32.xlu0 %v6064, 96
    %v6087 = vpop.permute.xlu0 %6086
    %6088 = vrot.lane.b32.xlu0 %v6065, 96
    %v6089 = vpop.permute.xlu0 %6088
    %v6098 = vsel %vm333, %v6075, 0.0
    %6099 = vadd.xlane.f32.xlu0 %v6098
    %v6100 = vpop.xlane.xlu0 %6099
    %v6101 = vsel %vm333, %v6077, 0.0
    %6102 = vadd.xlane.f32.xlu0 %v6101
    %v6103 = vpop.xlane.xlu0 %6102
    %v6104 = vsel %vm333, %v6079, 0.0
    %6105 = vadd.xlane.f32.xlu0 %v6104
    %v6106 = vpop.xlane.xlu0 %6105
    %v6107 = vsel %vm333, %v6081, 0.0
    %6108 = vadd.xlane.f32.xlu0 %v6107
    %v6109 = vpop.xlane.xlu0 %6108
    %v6110 = vsel %vm333, %v6083, 0.0
    %6111 = vadd.xlane.f32.xlu0 %v6110
    %v6112 = vpop.xlane.xlu0 %6111
    %v6113 = vsel %vm333, %v6085, 0.0
    %6114 = vadd.xlane.f32.xlu0 %v6113
    %v6115 = vpop.xlane.xlu0 %6114
    %v6116 = vsel %vm333, %v6087, 0.0
    %6117 = vadd.xlane.f32.xlu0 %v6116
    %v6118 = vpop.xlane.xlu0 %6117
    %v6119 = vsel %vm333, %v6089, 0.0
    %6120 = vadd.xlane.f32.xlu0 %v6119
    %v6121 = vpop.xlane.xlu0 %6120
    %v6130 = vlaneseq
    %v6131 = vshrl.u32 %v6130, 7
    %v6132 = vsub.s32 %v5003, %v6131
    %v6133 = vrot.slane %v6100, %v6132
    %v6134 = vlaneseq
    %v6135 = vshrl.u32 %v6134, 7
    %v6136 = vsub.s32 %v5003, %v6135
    %v6137 = vrot.slane %v6103, %v6136
    %v6138 = vlaneseq
    %v6139 = vshrl.u32 %v6138, 7
    %v6140 = vsub.s32 %v5003, %v6139
    %v6141 = vrot.slane %v6106, %v6140
    %v6142 = vlaneseq
    %v6143 = vshrl.u32 %v6142, 7
    %v6144 = vsub.s32 %v5003, %v6143
    %v6145 = vrot.slane %v6109, %v6144
    %v6146 = vlaneseq
    %v6147 = vshrl.u32 %v6146, 7
    %v6148 = vsub.s32 %v5003, %v6147
    %v6149 = vrot.slane %v6112, %v6148
    %v6150 = vlaneseq
    %v6151 = vshrl.u32 %v6150, 7
    %v6152 = vsub.s32 %v5003, %v6151
    %v6153 = vrot.slane %v6115, %v6152
    %v6154 = vlaneseq
    %v6155 = vshrl.u32 %v6154, 7
    %v6156 = vsub.s32 %v5003, %v6155
    %v6157 = vrot.slane %v6118, %v6156
    %v6158 = vlaneseq
    %v6159 = vshrl.u32 %v6158, 7
    %v6160 = vsub.s32 %v5003, %v6159
    %v6161 = vrot.slane %v6121, %v6160
    %v6162 = vsel %vm3189, %v6137, %v6133
    %v6163 = vsel %vm3191, %v6141, %v6162
    %v6164 = vsel %vm3193, %v6145, %v6163
    %v6165 = vsel %vm3189, %v6153, %v6149
    %v6166 = vsel %vm3191, %v6157, %v6165
    %v6167 = vsel %vm3193, %v6161, %v6166
    %vm6170 = vcmask 60416
    %v6171 = vsel %vm6170, %v6164, -inf
    %6172 = vmax.xlane.f32.xlu0 %v6171
    %v6173 = vpop.xlane.xlu0 %6172
    %v6174 = vsel %vm6170, %v6167, -inf
    %6175 = vmax.xlane.f32.xlu0 %v6174
    %v6176 = vpop.xlane.xlu0 %6175
    %v6179 = vlaneseq
    %v6180 = vshrl.u32 %v6179, 7
    %v6181 = vsub.s32 0, %v6180
    %v6182 = vrot.slane %v6173, %v6181
    %v6183 = vlaneseq
    %v6184 = vshrl.u32 %v6183, 7
    %v6185 = vsub.s32 1, %v6184
    %v6186 = vrot.slane %v6173, %v6185
    %v6187 = vlaneseq
    %v6188 = vshrl.u32 %v6187, 7
    %v6189 = vsub.s32 2, %v6188
    %v6190 = vrot.slane %v6173, %v6189
    %v6191 = vlaneseq
    %v6192 = vshrl.u32 %v6191, 7
    %v6193 = vsub.s32 3, %v6192
    %v6194 = vrot.slane %v6173, %v6193
    %v6195 = vlaneseq
    %v6196 = vshrl.u32 %v6195, 7
    %v6197 = vsub.s32 0, %v6196
    %v6198 = vrot.slane %v6176, %v6197
    %v6199 = vlaneseq
    %v6200 = vshrl.u32 %v6199, 7
    %v6201 = vsub.s32 1, %v6200
    %v6202 = vrot.slane %v6176, %v6201
    %v6203 = vlaneseq
    %v6204 = vshrl.u32 %v6203, 7
    %v6205 = vsub.s32 2, %v6204
    %v6206 = vrot.slane %v6176, %v6205
    %v6207 = vlaneseq
    %v6208 = vshrl.u32 %v6207, 7
    %v6209 = vsub.s32 3, %v6208
    %v6210 = vrot.slane %v6176, %v6209
    %v6219 = vsub.f32 %v6100, %v6182
    %v6220 = vsub.f32 %v6103, %v6186
    %v6221 = vsub.f32 %v6106, %v6190
    %v6222 = vsub.f32 %v6109, %v6194
    %v6223 = vsub.f32 %v6112, %v6198
    %v6224 = vsub.f32 %v6115, %v6202
    %v6225 = vsub.f32 %v6118, %v6206
    %v6226 = vsub.f32 %v6121, %v6210
    %v6227 = vmul.f32 %v6219, 1.442695
    %v6228 = vpow.pop %v6227
    %v6229 = vmul.f32 %v6220, 1.442695
    %v6230 = vpow.pop %v6229
    %v6231 = vmul.f32 %v6221, 1.442695
    %v6232 = vpow.pop %v6231
    %v6233 = vmul.f32 %v6222, 1.442695
    %v6234 = vpow.pop %v6233
    %v6235 = vmul.f32 %v6223, 1.442695
    %v6236 = vpow.pop %v6235
    %v6237 = vmul.f32 %v6224, 1.442695
    %v6238 = vpow.pop %v6237
    %v6239 = vmul.f32 %v6225, 1.442695
    %v6240 = vpow.pop %v6239
    %v6241 = vmul.f32 %v6226, 1.442695
    %v6242 = vpow.pop %v6241
    %6251 = vset.pattern.permute.xlu0 0
    %6252 = vperm.xlu0 %6251, %v6228
    %v6253 = vpop.permute.xlu0 %6252
    %6254 = vset.pattern.permute.xlu0 0
    %6255 = vperm.xlu0 %6254, %v6230
    %v6256 = vpop.permute.xlu0 %6255
    %6257 = vset.pattern.permute.xlu0 0
    %6258 = vperm.xlu0 %6257, %v6232
    %v6259 = vpop.permute.xlu0 %6258
    %6260 = vset.pattern.permute.xlu0 0
    %6261 = vperm.xlu0 %6260, %v6234
    %v6262 = vpop.permute.xlu0 %6261
    %6263 = vset.pattern.permute.xlu0 0
    %6264 = vperm.xlu0 %6263, %v6236
    %v6265 = vpop.permute.xlu0 %6264
    %6266 = vset.pattern.permute.xlu0 0
    %6267 = vperm.xlu0 %6266, %v6238
    %v6268 = vpop.permute.xlu0 %6267
    %6269 = vset.pattern.permute.xlu0 0
    %6270 = vperm.xlu0 %6269, %v6240
    %v6271 = vpop.permute.xlu0 %6270
    %6272 = vset.pattern.permute.xlu0 0
    %6273 = vperm.xlu0 %6272, %v6242
    %v6274 = vpop.permute.xlu0 %6273
    %v6275 = vlaneseq
    %v6276 = vshrl.u32 %v6275, 7
    %v6277 = vsub.s32 %v5003, %v6276
    %v6278 = vrot.slane %v6253, %v6277
    %v6279 = vlaneseq
    %v6280 = vshrl.u32 %v6279, 7
    %v6281 = vsub.s32 %v5003, %v6280
    %v6282 = vrot.slane %v6256, %v6281
    %v6283 = vlaneseq
    %v6284 = vshrl.u32 %v6283, 7
    %v6285 = vsub.s32 %v5003, %v6284
    %v6286 = vrot.slane %v6259, %v6285
    %v6287 = vlaneseq
    %v6288 = vshrl.u32 %v6287, 7
    %v6289 = vsub.s32 %v5003, %v6288
    %v6290 = vrot.slane %v6262, %v6289
    %v6291 = vlaneseq
    %v6292 = vshrl.u32 %v6291, 7
    %v6293 = vsub.s32 %v5003, %v6292
    %v6294 = vrot.slane %v6265, %v6293
    %v6295 = vlaneseq
    %v6296 = vshrl.u32 %v6295, 7
    %v6297 = vsub.s32 %v5003, %v6296
    %v6298 = vrot.slane %v6268, %v6297
    %v6299 = vlaneseq
    %v6300 = vshrl.u32 %v6299, 7
    %v6301 = vsub.s32 %v5003, %v6300
    %v6302 = vrot.slane %v6271, %v6301
    %v6303 = vlaneseq
    %v6304 = vshrl.u32 %v6303, 7
    %v6305 = vsub.s32 %v5003, %v6304
    %v6306 = vrot.slane %v6274, %v6305
    %v6307 = vsel %vm3189, %v6282, %v6278
    %v6308 = vsel %vm3191, %v6286, %v6307
    %v6309 = vsel %vm3193, %v6290, %v6308
    %v6310 = vsel %vm3189, %v6298, %v6294
    %v6311 = vsel %vm3191, %v6302, %v6310
    %v6312 = vsel %vm3193, %v6306, %v6311
    %v6315 = vsel %vm6170, %v6309, 0.0
    %6316 = vadd.xlane.f32.xlu0 %v6315
    %v6317 = vpop.xlane.xlu0 %6316
    %v6318 = vsel %vm6170, %v6312, 0.0
    %6319 = vadd.xlane.f32.xlu0 %v6318
    %v6320 = vpop.xlane.xlu0 %6319
    %v6323 = vlaneseq
    %v6324 = vshrl.u32 %v6323, 7
    %v6325 = vsub.s32 0, %v6324
    %v6326 = vrot.slane %v6317, %v6325
    %v6327 = vlaneseq
    %v6328 = vshrl.u32 %v6327, 7
    %v6329 = vsub.s32 1, %v6328
    %v6330 = vrot.slane %v6317, %v6329
    %v6331 = vlaneseq
    %v6332 = vshrl.u32 %v6331, 7
    %v6333 = vsub.s32 2, %v6332
    %v6334 = vrot.slane %v6317, %v6333
    %v6335 = vlaneseq
    %v6336 = vshrl.u32 %v6335, 7
    %v6337 = vsub.s32 3, %v6336
    %v6338 = vrot.slane %v6317, %v6337
    %v6339 = vlaneseq
    %v6340 = vshrl.u32 %v6339, 7
    %v6341 = vsub.s32 0, %v6340
    %v6342 = vrot.slane %v6320, %v6341
    %v6343 = vlaneseq
    %v6344 = vshrl.u32 %v6343, 7
    %v6345 = vsub.s32 1, %v6344
    %v6346 = vrot.slane %v6320, %v6345
    %v6347 = vlaneseq
    %v6348 = vshrl.u32 %v6347, 7
    %v6349 = vsub.s32 2, %v6348
    %v6350 = vrot.slane %v6320, %v6349
    %v6351 = vlaneseq
    %v6352 = vshrl.u32 %v6351, 7
    %v6353 = vsub.s32 3, %v6352
    %v6354 = vrot.slane %v6320, %v6353
    %v6363 = vrcp.pop %v6326
    %v6364 = vmul.f32 %v6228, %v6363
    %v6365 = vrcp.pop %v6330
    %v6366 = vmul.f32 %v6230, %v6365
    %v6367 = vrcp.pop %v6334
    %v6368 = vmul.f32 %v6232, %v6367
    %v6369 = vrcp.pop %v6338
    %v6370 = vmul.f32 %v6234, %v6369
    %v6371 = vrcp.pop %v6342
    %v6372 = vmul.f32 %v6236, %v6371
    %v6373 = vrcp.pop %v6346
    %v6374 = vmul.f32 %v6238, %v6373
    %v6375 = vrcp.pop %v6350
    %v6376 = vmul.f32 %v6240, %v6375
    %v6377 = vrcp.pop %v6354
    %v6378 = vmul.f32 %v6242, %v6377
    %6383 = vset.pattern.permute.xlu0 0
    %6384 = vperm.xlu0 %6383, %v6364
    %v6385 = vpop.permute.xlu0 %6384
    %6386 = vset.pattern.permute.xlu0 0
    %6387 = vperm.xlu0 %6386, %v6366
    %v6388 = vpop.permute.xlu0 %6387
    %6389 = vset.pattern.permute.xlu0 0
    %6390 = vperm.xlu0 %6389, %v6368
    %v6391 = vpop.permute.xlu0 %6390
    %6392 = vset.pattern.permute.xlu0 0
    %6393 = vperm.xlu0 %6392, %v6370
    %v6394 = vpop.permute.xlu0 %6393
    %v6395 = vlaneseq
    %v6396 = vshrl.u32 %v6395, 7
    %v6397 = vsub.s32 %v5003, %v6396
    %v6398 = vrot.slane %v6385, %v6397
    %v6399 = vlaneseq
    %v6400 = vshrl.u32 %v6399, 7
    %v6401 = vsub.s32 %v5003, %v6400
    %v6402 = vrot.slane %v6388, %v6401
    %v6403 = vlaneseq
    %v6404 = vshrl.u32 %v6403, 7
    %v6405 = vsub.s32 %v5003, %v6404
    %v6406 = vrot.slane %v6391, %v6405
    %v6407 = vlaneseq
    %v6408 = vshrl.u32 %v6407, 7
    %v6409 = vsub.s32 %v5003, %v6408
    %v6410 = vrot.slane %v6394, %v6409
    %v6411 = vsel %vm3189, %v6402, %v6398
    %v6412 = vsel %vm3191, %v6406, %v6411
    %v6413 = vsel %vm3193, %v6410, %v6412
    %6415 = vrot.lane.b32.xlu0 %v4994, 96
    %v6416 = vpop.permute.xlu0 %6415
    %v6418 = vsel %vm5028, %v6413, 0
    %6420 = vmatprep.subr.mxu0 0.0
    %6421 = vmatpush1.msra.mxu0 0.0
    %6422 = vmatprep.subr.mxu0 0.0
    %6423 = vmatpush1.msra.mxu0 0.0
    %6424 = vmatprep.subr.mxu0 0.0
    %6425 = vmatpush1.msra.mxu0 0.0
    %6426 = vmatprep.subr.mxu0 0.0
    %6427 = vmatpush1.msra.mxu0 0.0
    %6428 = vmatprep.subr.mxu0 0.0
    %6429 = vmatpush1.msra.mxu0 0.0
    %6430 = vmatprep.subr.mxu0 0.0
    %6431 = vmatpush1.msra.mxu0 0.0
    %6432 = vmatprep.subr.mxu0 0.0
    %6433 = vmatpush1.msra.mxu0 0.0
    %6434 = vmatprep.subr.mxu0 0.0
    %6435 = vmatpush1.msra.mxu0 0.0
    %6436 = vmatprep.subr.mxu0 0.0
    %6437 = vmatpush1.msra.mxu0 0.0
    %6438 = vmatprep.subr.mxu0 0.0
    %6439 = vmatpush1.msra.mxu0 0.0
    %6440 = vmatprep.subr.mxu0 0.0
    %6441 = vmatpush1.msra.mxu0 0.0
    %6442 = vmatprep.subr.mxu0 0.0
    %6443 = vmatpush1.msra.mxu0 0.0
    %6444 = vmatprep.subr.mxu0 0.0
    %6445 = vmatpush1.msra.mxu0 0.0
    %6446 = vmatprep.subr.mxu0 0.0
    %6447 = vmatpush1.msra.mxu0 0.0
    %6448 = vmatprep.subr.mxu0 0.0
    %6449 = vmatpush1.msra.mxu0 0.0
    %6450 = vmatprep.subr.mxu0 0.0
    %6451 = vmatpush1.msra.mxu0 %v6416
    %6452 = vmatprep.subr.mxu0 0.0
    %6453 = vmatpush2.msra.mxu0 0.0
    %6454 = vmatprep.subr.mxu0 0.0
    %6455 = vmatpush2.msra.mxu0 0.0
    %6456 = vmatprep.subr.mxu0 0.0
    %6457 = vmatpush2.msra.mxu0 0.0
    %6458 = vmatprep.subr.mxu0 0.0
    %6459 = vmatpush2.msra.mxu0 0.0
    %6460 = vmatprep.subr.mxu0 0.0
    %6461 = vmatpush2.msra.mxu0 0.0
    %6462 = vmatprep.subr.mxu0 0.0
    %6463 = vmatpush2.msra.mxu0 0.0
    %6464 = vmatprep.subr.mxu0 0.0
    %6465 = vmatpush2.msra.mxu0 0.0
    %6466 = vmatprep.subr.mxu0 0.0
    %6467 = vmatpush2.msra.mxu0 0.0
    %6468 = vmatprep.subr.mxu0 0.0
    %6469 = vmatpush2.msra.mxu0 0.0
    %6470 = vmatprep.subr.mxu0 0.0
    %6471 = vmatpush2.msra.mxu0 0.0
    %6472 = vmatprep.subr.mxu0 0.0
    %6473 = vmatpush2.msra.mxu0 0.0
    %6474 = vmatprep.subr.mxu0 0.0
    %6475 = vmatpush2.msra.mxu0 0.0
    %6476 = vmatprep.subr.mxu0 0.0
    %6477 = vmatpush2.msra.mxu0 0.0
    %6478 = vmatprep.subr.mxu0 0.0
    %6479 = vmatpush2.msra.mxu0 0.0
    %6480 = vmatprep.subr.mxu0 0.0
    %6481 = vmatpush2.msra.mxu0 0.0
    %6482 = vmatprep.subr.mxu0 0.0
    %6483 = vmatpush2.msra.mxu0 0.0
    %6484 = vmatprep.mubr.f32.mxu0 0.0
    %6485 = vmatmul.mubr.f32.gmra.mxu0 %v6418
    %v6486 = vpop.f32.mrf.mxu0
    %v6487 = vadd.f32 0.0, %v6486
    %v6488 = vpop.f32.mrf.mxu0
    %6489 = vdwg.mxu0
    %6494 = vset.pattern.permute.xlu0 0
    %6495 = vperm.xlu0 %6494, %v6372
    %v6496 = vpop.permute.xlu0 %6495
    %6497 = vset.pattern.permute.xlu0 0
    %6498 = vperm.xlu0 %6497, %v6374
    %v6499 = vpop.permute.xlu0 %6498
    %6500 = vset.pattern.permute.xlu0 0
    %6501 = vperm.xlu0 %6500, %v6376
    %v6502 = vpop.permute.xlu0 %6501
    %6503 = vset.pattern.permute.xlu0 0
    %6504 = vperm.xlu0 %6503, %v6378
    %v6505 = vpop.permute.xlu0 %6504
    %v6506 = vlaneseq
    %v6507 = vshrl.u32 %v6506, 7
    %v6508 = vsub.s32 %v5003, %v6507
    %v6509 = vrot.slane %v6496, %v6508
    %v6510 = vlaneseq
    %v6511 = vshrl.u32 %v6510, 7
    %v6512 = vsub.s32 %v5003, %v6511
    %v6513 = vrot.slane %v6499, %v6512
    %v6514 = vlaneseq
    %v6515 = vshrl.u32 %v6514, 7
    %v6516 = vsub.s32 %v5003, %v6515
    %v6517 = vrot.slane %v6502, %v6516
    %v6518 = vlaneseq
    %v6519 = vshrl.u32 %v6518, 7
    %v6520 = vsub.s32 %v5003, %v6519
    %v6521 = vrot.slane %v6505, %v6520
    %v6522 = vsel %vm3189, %v6513, %v6509
    %v6523 = vsel %vm3191, %v6517, %v6522
    %v6524 = vsel %vm3193, %v6521, %v6523
    %6526 = vrot.lane.b32.xlu0 %v4999, 96
    %v6527 = vpop.permute.xlu0 %6526
    %v6529 = vsel %vm5028, %v6524, 0
    %6531 = vmatprep.subr.mxu0 0.0
    %6532 = vmatpush1.msra.mxu0 0.0
    %6533 = vmatprep.subr.mxu0 0.0
    %6534 = vmatpush1.msra.mxu0 0.0
    %6535 = vmatprep.subr.mxu0 0.0
    %6536 = vmatpush1.msra.mxu0 0.0
    %6537 = vmatprep.subr.mxu0 0.0
    %6538 = vmatpush1.msra.mxu0 0.0
    %6539 = vmatprep.subr.mxu0 0.0
    %6540 = vmatpush1.msra.mxu0 0.0
    %6541 = vmatprep.subr.mxu0 0.0
    %6542 = vmatpush1.msra.mxu0 0.0
    %6543 = vmatprep.subr.mxu0 0.0
    %6544 = vmatpush1.msra.mxu0 0.0
    %6545 = vmatprep.subr.mxu0 0.0
    %6546 = vmatpush1.msra.mxu0 0.0
    %6547 = vmatprep.subr.mxu0 0.0
    %6548 = vmatpush1.msra.mxu0 0.0
    %6549 = vmatprep.subr.mxu0 0.0
    %6550 = vmatpush1.msra.mxu0 0.0
    %6551 = vmatprep.subr.mxu0 0.0
    %6552 = vmatpush1.msra.mxu0 0.0
    %6553 = vmatprep.subr.mxu0 0.0
    %6554 = vmatpush1.msra.mxu0 0.0
    %6555 = vmatprep.subr.mxu0 0.0
    %6556 = vmatpush1.msra.mxu0 0.0
    %6557 = vmatprep.subr.mxu0 0.0
    %6558 = vmatpush1.msra.mxu0 0.0
    %6559 = vmatprep.subr.mxu0 0.0
    %6560 = vmatpush1.msra.mxu0 0.0
    %6561 = vmatprep.subr.mxu0 0.0
    %6562 = vmatpush1.msra.mxu0 %v6527
    %6563 = vmatprep.subr.mxu0 0.0
    %6564 = vmatpush2.msra.mxu0 0.0
    %6565 = vmatprep.subr.mxu0 0.0
    %6566 = vmatpush2.msra.mxu0 0.0
    %6567 = vmatprep.subr.mxu0 0.0
    %6568 = vmatpush2.msra.mxu0 0.0
    %6569 = vmatprep.subr.mxu0 0.0
    %6570 = vmatpush2.msra.mxu0 0.0
    %6571 = vmatprep.subr.mxu0 0.0
    %6572 = vmatpush2.msra.mxu0 0.0
    %6573 = vmatprep.subr.mxu0 0.0
    %6574 = vmatpush2.msra.mxu0 0.0
    %6575 = vmatprep.subr.mxu0 0.0
    %6576 = vmatpush2.msra.mxu0 0.0
    %6577 = vmatprep.subr.mxu0 0.0
    %6578 = vmatpush2.msra.mxu0 0.0
    %6579 = vmatprep.subr.mxu0 0.0
    %6580 = vmatpush2.msra.mxu0 0.0
    %6581 = vmatprep.subr.mxu0 0.0
    %6582 = vmatpush2.msra.mxu0 0.0
    %6583 = vmatprep.subr.mxu0 0.0
    %6584 = vmatpush2.msra.mxu0 0.0
    %6585 = vmatprep.subr.mxu0 0.0
    %6586 = vmatpush2.msra.mxu0 0.0
    %6587 = vmatprep.subr.mxu0 0.0
    %6588 = vmatpush2.msra.mxu0 0.0
    %6589 = vmatprep.subr.mxu0 0.0
    %6590 = vmatpush2.msra.mxu0 0.0
    %6591 = vmatprep.subr.mxu0 0.0
    %6592 = vmatpush2.msra.mxu0 0.0
    %6593 = vmatprep.subr.mxu0 0.0
    %6594 = vmatpush2.msra.mxu0 0.0
    %6595 = vmatprep.mubr.f32.mxu0 0.0
    %6596 = vmatmul.mubr.f32.gmra.mxu0 %v6529
    %v6597 = vpop.f32.mrf.mxu0
    %v6598 = vadd.f32 0.0, %v6597
    %v6599 = vpop.f32.mrf.mxu0
    %6600 = vdwg.mxu0
    %v6601 = vld [vmem:[%s18] sm:$0xff]
    %v6602 = vld [vmem:[%s18 + $0x8] sm:$0xff]
    %v6603 = vld [vmem:[%s18 + $0x10] sm:$0xff]
    %v6604 = vld [vmem:[%s18 + $0x18] sm:$0xff]
    %v6607 = vcombine.low %v6487, %v6598
    %v6608 = vsel %vm333, %v6607, 0
    %6610 = vmatprep.subr.mxu0 0.0
    %6611 = vmatpush1.msra.mxu0 0.0
    %6612 = vmatprep.subr.mxu0 0.0
    %6613 = vmatpush1.msra.mxu0 0.0
    %6614 = vmatprep.subr.mxu0 0.0
    %6615 = vmatpush1.msra.mxu0 0.0
    %6616 = vmatprep.subr.mxu0 0.0
    %6617 = vmatpush1.msra.mxu0 0.0
    %6618 = vmatprep.subr.mxu0 0.0
    %6619 = vmatpush1.msra.mxu0 0.0
    %6620 = vmatprep.subr.mxu0 0.0
    %6621 = vmatpush1.msra.mxu0 0.0
    %6622 = vmatprep.subr.mxu0 0.0
    %6623 = vmatpush1.msra.mxu0 0.0
    %6624 = vmatprep.subr.mxu0 0.0
    %6625 = vmatpush1.msra.mxu0 0.0
    %6626 = vmatprep.subr.mxu0 0.0
    %6627 = vmatpush1.msra.mxu0 0.0
    %6628 = vmatprep.subr.mxu0 0.0
    %6629 = vmatpush1.msra.mxu0 0.0
    %6630 = vmatprep.subr.mxu0 0.0
    %6631 = vmatpush1.msra.mxu0 0.0
    %6632 = vmatprep.subr.mxu0 0.0
    %6633 = vmatpush1.msra.mxu0 0.0
    %6634 = vmatprep.subr.mxu0 0.0
    %6635 = vmatpush1.msra.mxu0 %v6604
    %6636 = vmatprep.subr.mxu0 0.0
    %6637 = vmatpush1.msra.mxu0 %v6603
    %6638 = vmatprep.subr.mxu0 0.0
    %6639 = vmatpush1.msra.mxu0 %v6602
    %6640 = vmatprep.subr.mxu0 0.0
    %6641 = vmatpush1.msra.mxu0 %v6601
    %6642 = vmatprep.subr.mxu0 0.0
    %6643 = vmatpush2.msra.mxu0 0.0
    %6644 = vmatprep.subr.mxu0 0.0
    %6645 = vmatpush2.msra.mxu0 0.0
    %6646 = vmatprep.subr.mxu0 0.0
    %6647 = vmatpush2.msra.mxu0 0.0
    %6648 = vmatprep.subr.mxu0 0.0
    %6649 = vmatpush2.msra.mxu0 0.0
    %6650 = vmatprep.subr.mxu0 0.0
    %6651 = vmatpush2.msra.mxu0 0.0
    %6652 = vmatprep.subr.mxu0 0.0
    %6653 = vmatpush2.msra.mxu0 0.0
    %6654 = vmatprep.subr.mxu0 0.0
    %6655 = vmatpush2.msra.mxu0 0.0
    %6656 = vmatprep.subr.mxu0 0.0
    %6657 = vmatpush2.msra.mxu0 0.0
    %6658 = vmatprep.subr.mxu0 0.0
    %6659 = vmatpush2.msra.mxu0 0.0
    %6660 = vmatprep.subr.mxu0 0.0
    %6661 = vmatpush2.msra.mxu0 0.0
    %6662 = vmatprep.subr.mxu0 0.0
    %6663 = vmatpush2.msra.mxu0 0.0
    %6664 = vmatprep.subr.mxu0 0.0
    %6665 = vmatpush2.msra.mxu0 0.0
    %6666 = vmatprep.subr.mxu0 0.0
    %6667 = vmatpush2.msra.mxu0 0.0
    %6668 = vmatprep.subr.mxu0 0.0
    %6669 = vmatpush2.msra.mxu0 0.0
    %6670 = vmatprep.subr.mxu0 0.0
    %6671 = vmatpush2.msra.mxu0 0.0
    %6672 = vmatprep.subr.mxu0 0.0
    %6673 = vmatpush2.msra.mxu0 0.0
    %6674 = vmatprep.mubr.f32.mxu0 0.0
    %6675 = vmatmul.mubr.f32.gmra.mxu0 %v6608
    %v6676 = vpop.f32.mrf.mxu0
    %v6677 = vadd.f32 0.0, %v6676
    %v6678 = vpop.f32.mrf.mxu0
    %6679 = vdwg.mxu0
    %v6681 = vcombine.high %v6677, %v6677
    %v6683 = vunpack.c.l.s4 1966171168
    %v6684 = vunpack.c.0.s8 %v6683
    %v6685 = vlaneseq
    %v6686 = vshrl.u32 %v6685, 7
    %v6687 = vsub.s32 %v6684, %v6686
    %v6688 = vrot.slane %v6677, %v6687
    %v6690 = vunpack.c.l.s4 1966171168
    %v6691 = vunpack.c.0.s8 %v6690
    %v6692 = vlaneseq
    %v6693 = vshrl.u32 %v6692, 7
    %v6694 = vsub.s32 %v6691, %v6693
    %v6695 = vrot.slane %v6681, %v6694
    %v6696 = vcombine.high %v6688, %v6688
    %v6697 = vcombine.high %v6695, %v6695
    %v6699 = vunpack.c.l.s4 1966171168
    %v6700 = vunpack.c.0.s8 %v6699
    %v6701 = vlaneseq
    %v6702 = vshrl.u32 %v6701, 7
    %v6703 = vsub.s32 %v6700, %v6702
    %v6704 = vrot.slane %v6688, %v6703
    %v6706 = vunpack.c.l.s4 1966171168
    %v6707 = vunpack.c.0.s8 %v6706
    %v6708 = vlaneseq
    %v6709 = vshrl.u32 %v6708, 7
    %v6710 = vsub.s32 %v6707, %v6709
    %v6711 = vrot.slane %v6695, %v6710
    %v6713 = vunpack.c.l.s4 1966171168
    %v6714 = vunpack.c.0.s8 %v6713
    %v6715 = vlaneseq
    %v6716 = vshrl.u32 %v6715, 7
    %v6717 = vsub.s32 %v6714, %v6716
    %v6718 = vrot.slane %v6696, %v6717
    %v6720 = vunpack.c.l.s4 1966171168
    %v6721 = vunpack.c.0.s8 %v6720
    %v6722 = vlaneseq
    %v6723 = vshrl.u32 %v6722, 7
    %v6724 = vsub.s32 %v6721, %v6723
    %v6725 = vrot.slane %v6697, %v6724
    %v6726 = vcombine.high %v6704, %v6704
    %v6727 = vcombine.high %v6711, %v6711
    %v6728 = vcombine.high %v6718, %v6718
    %v6729 = vcombine.high %v6725, %v6725
    %v6730 = vlaneseq
    %v6731 = vshrl.u32 %v6730, 7
    %v6732 = vsub.s32 0, %v6731
    %v6733 = vrot.slane %v6704, %v6732
    %v6734 = vlaneseq
    %v6735 = vshrl.u32 %v6734, 7
    %v6736 = vsub.s32 0, %v6735
    %v6737 = vrot.slane %v6718, %v6736
    %v6738 = vlaneseq
    %v6739 = vshrl.u32 %v6738, 7
    %v6740 = vsub.s32 0, %v6739
    %v6741 = vrot.slane %v6726, %v6740
    %v6742 = vlaneseq
    %v6743 = vshrl.u32 %v6742, 7
    %v6744 = vsub.s32 0, %v6743
    %v6745 = vrot.slane %v6728, %v6744
    %v6746 = vlaneseq
    %v6747 = vshrl.u32 %v6746, 7
    %v6748 = vsub.s32 0, %v6747
    %v6749 = vrot.slane %v6711, %v6748
    %v6750 = vlaneseq
    %v6751 = vshrl.u32 %v6750, 7
    %v6752 = vsub.s32 0, %v6751
    %v6753 = vrot.slane %v6725, %v6752
    %v6754 = vlaneseq
    %v6755 = vshrl.u32 %v6754, 7
    %v6756 = vsub.s32 0, %v6755
    %v6757 = vrot.slane %v6727, %v6756
    %v6758 = vlaneseq
    %v6759 = vshrl.u32 %v6758, 7
    %v6760 = vsub.s32 0, %v6759
    %v6761 = vrot.slane %v6729, %v6760
    %v6770 = vadd.f32 %v4994, %v6733
    %v6771 = vadd.f32 %v4994, %v6737
    %v6772 = vadd.f32 %v4994, %v6741
    %v6773 = vadd.f32 %v4994, %v6745
    %v6774 = vadd.f32 %v4999, %v6749
    %v6775 = vadd.f32 %v4999, %v6753
    %v6776 = vadd.f32 %v4999, %v6757
    %v6777 = vadd.f32 %v4999, %v6761
    %v6778 = vtanh.pop %v6770
    %v6779 = vtanh.pop %v6771
    %v6780 = vtanh.pop %v6772
    %v6781 = vtanh.pop %v6773
    %v6782 = vtanh.pop %v6774
    %v6783 = vtanh.pop %v6775
    %v6784 = vtanh.pop %v6776
    %v6785 = vtanh.pop %v6777
    %v6786 = vld [vmem:[%s19] sm:$0x1]
    %v6788 = vlaneseq
    %v6789 = vshrl.u32 %v6788, 7
    %v6790 = vsub.s32 0, %v6789
    %v6791 = vrot.slane %v6786, %v6790
    %v6793 = vmul.f32 %v6778, %v6791
    %v6794 = vmul.f32 %v6779, %v6791
    %v6795 = vmul.f32 %v6780, %v6791
    %v6796 = vmul.f32 %v6781, %v6791
    %v6797 = vmul.f32 %v6782, %v6791
    %v6798 = vmul.f32 %v6783, %v6791
    %v6799 = vmul.f32 %v6784, %v6791
    %v6800 = vmul.f32 %v6785, %v6791
    %v6801 = vsel %vm333, %v6793, 0.0
    %6802 = vadd.xlane.f32.xlu0 %v6801
    %v6803 = vpop.xlane.xlu0 %6802
    %v6804 = vsel %vm333, %v6794, 0.0
    %6805 = vadd.xlane.f32.xlu0 %v6804
    %v6806 = vpop.xlane.xlu0 %6805
    %v6807 = vsel %vm333, %v6795, 0.0
    %6808 = vadd.xlane.f32.xlu0 %v6807
    %v6809 = vpop.xlane.xlu0 %6808
    %v6810 = vsel %vm333, %v6796, 0.0
    %6811 = vadd.xlane.f32.xlu0 %v6810
    %v6812 = vpop.xlane.xlu0 %6811
    %v6813 = vsel %vm333, %v6797, 0.0
    %6814 = vadd.xlane.f32.xlu0 %v6813
    %v6815 = vpop.xlane.xlu0 %6814
    %v6816 = vsel %vm333, %v6798, 0.0
    %6817 = vadd.xlane.f32.xlu0 %v6816
    %v6818 = vpop.xlane.xlu0 %6817
    %v6819 = vsel %vm333, %v6799, 0.0
    %6820 = vadd.xlane.f32.xlu0 %v6819
    %v6821 = vpop.xlane.xlu0 %6820
    %v6822 = vsel %vm333, %v6800, 0.0
    %6823 = vadd.xlane.f32.xlu0 %v6822
    %v6824 = vpop.xlane.xlu0 %6823
    %v6833 = vlaneseq
    %v6834 = vshrl.u32 %v6833, 7
    %v6835 = vsub.s32 %v5003, %v6834
    %v6836 = vrot.slane %v6803, %v6835
    %v6837 = vlaneseq
    %v6838 = vshrl.u32 %v6837, 7
    %v6839 = vsub.s32 %v5003, %v6838
    %v6840 = vrot.slane %v6806, %v6839
    %v6841 = vlaneseq
    %v6842 = vshrl.u32 %v6841, 7
    %v6843 = vsub.s32 %v5003, %v6842
    %v6844 = vrot.slane %v6809, %v6843
    %v6845 = vlaneseq
    %v6846 = vshrl.u32 %v6845, 7
    %v6847 = vsub.s32 %v5003, %v6846
    %v6848 = vrot.slane %v6812, %v6847
    %v6849 = vlaneseq
    %v6850 = vshrl.u32 %v6849, 7
    %v6851 = vsub.s32 %v5003, %v6850
    %v6852 = vrot.slane %v6815, %v6851
    %v6853 = vlaneseq
    %v6854 = vshrl.u32 %v6853, 7
    %v6855 = vsub.s32 %v5003, %v6854
    %v6856 = vrot.slane %v6818, %v6855
    %v6857 = vlaneseq
    %v6858 = vshrl.u32 %v6857, 7
    %v6859 = vsub.s32 %v5003, %v6858
    %v6860 = vrot.slane %v6821, %v6859
    %v6861 = vlaneseq
    %v6862 = vshrl.u32 %v6861, 7
    %v6863 = vsub.s32 %v5003, %v6862
    %v6864 = vrot.slane %v6824, %v6863
    %v6865 = vsel %vm3189, %v6840, %v6836
    %v6866 = vsel %vm3191, %v6844, %v6865
    %v6867 = vsel %vm3193, %v6848, %v6866
    %v6868 = vsel %vm3189, %v6856, %v6852
    %v6869 = vsel %vm3191, %v6860, %v6868
    %v6870 = vsel %vm3193, %v6864, %v6869
    %6873 = vst.msk [vmem:[#allocation31] sm:$0xf] %vm6170, %v6867
    %6874 = vst.msk [vmem:[#allocation31 + $0x4] sm:$0xf] %vm6170, %v6870
    // Predicated region
    $region154: #{tpu_custom_call.1} parent=1 // pred_check
      _
    $region155: #{tpu_custom_call.1} parent=1 // pred_check_branch
      %6876 = sbr.rel (0) target = $region157
    $region156: #{tpu_custom_call.1} parent=1 // pred_region
      %s6878 = ssub.s32 128, 128
      %6879 = vsyncadd [#allocation4], %s6878
      %s6880 = sshll.u32 [#allocation31], 4
      %s6881 = int_to_ptr.vmem [resolvable:$true] %s6880
      %6886 = dma.vmem_to_hbm [thread:$0]  %s6881, 128, %s20, [#allocation4], 64, 64, 4
    $region157: #{tpu_custom_call.1} parent=1 // pred_fallthru
      _
    // Predicated region
    $region158: #{tpu_custom_call.1} parent=1 // pred_check
      _
    $region159: #{tpu_custom_call.1} parent=1 // pred_check_branch
      %6888 = sbr.rel (0) target = $region161
    $region160: #{tpu_custom_call.1} parent=1 // pred_region
      %6889 = dma.done [#allocation4], 128
    $region161: #{tpu_custom_call.1} parent=1 // pred_fallthru
      _
    %6890 = vsyncpa [#allocation3], 1
    %6891 = vsyncpa [#allocation8], 1
    %6892 = vsyncpa [#allocation11], 1
    %6893 = vsyncpa [#allocation14], 1
    %6894 = vsyncpa [#allocation17], 1
    %6895 = vsyncpa [#allocation20], 1
    %6896 = vsyncpa [#allocation23], 1
    %6897 = vsyncpa [#allocation26], 1
    %6898 = vsyncpa [#allocation29], 1
    %6899 = vsyncpa [#allocation4], 1
    %6900 = vsyncpa [#allocation5], 1

</llo_original>
